<compile_context>
chip_gen: v5e
topology: v5e:2x2
jax: 0.10.0
libtpu: 0.0.40
codegen_flags: <defaults>
</compile_context>

<pallas_src>
import jax
import jax.numpy as jnp
from jax.experimental import pallas as pl
from jax.experimental.pallas import tpu as pltpu


def fused_add_conv1x1_bn_kernel(a_ref, b_ref, w_ref, gb_ref, o_ref):
    # a_ref, b_ref : (Cin, M)          bf16 activations (N=1 NCHW, channel-major)
    # w_ref        : (tile_cout, Cin)  bf16 1x1-conv weight tile (original layout)
    # gb_ref       : (tile_cout, 2)    f32, column 0 = gamma, column 1 = beta
    # o_ref        : (tile_cout, M)    f32 output tile
    eps = jnp.float32(1e-3)                       # BatchNorm2d(..., eps=0.001)
    inv_m = jnp.float32(1.0 / a_ref.shape[1])

    # x619 = x618 + x603 (bf16 add on the VPU)
    x = a_ref[...] + b_ref[...]

    # x620 = 1x1 conv as matmul on the MXU: bf16 x bf16 -> f32 accumulation.
    y = jnp.dot(w_ref[...], x, preferred_element_type=jnp.float32)

    # x621 = BatchNorm2d in training mode: per-channel stats over the M spatial
    # positions (biased variance), all in f32.  Cout tiling is exact because
    # the statistics are per output channel.
    mean = jnp.sum(y, axis=1, keepdims=True) * inv_m
    centered = y - mean
    var = jnp.sum(centered * centered, axis=1, keepdims=True) * inv_m
    gamma = gb_ref[:, 0:1]
    beta = gb_ref[:, 1:2]
    scale = jax.lax.rsqrt(var + eps) * gamma      # (tile_cout, 1)
    o_ref[...] = centered * scale + beta
    # TODO(synk): running_mean/running_var buffer updates (momentum=0.01) are
    # PyTorch module state, not part of the returned forward tensor.


def _default_cout_tiles():
    # v7x has 2 TensorCores: give each >=2 pipelined grid steps.  On single-TC
    # v5e/v6e extra grid steps only add fixed per-step overhead, so keep 2.
    try:
        kind = jax.devices()[0].device_kind.lower()
    except Exception:
        return 2
    return 4 if "7" in kind else 2


def fused_add_conv1x1_bn(x618, x603, weight, gamma, beta, *, cout_tiles=None):
    """x618, x603: (1, Cin, H, W) f32; weight: (Cout, Cin); gamma/beta: (Cout,)."""
    N, Cin, H, W = x618.shape
    assert N == 1, "fast path exploits N == 1 (reshape is already channel-major)"
    Cout = weight.shape[0]
    M = H * W
    if cout_tiles is None:
        cout_tiles = _default_cout_tiles()
    assert Cout % cout_tiles == 0
    tile_cout = Cout // cout_tiles

    # N=1 NCHW -> (Cin, M): pure reshapes, no transpose / copy kernels.
    # Activations + weight cast to bf16 in the wrapper so the HBM DMA is halved
    # and both MXU operands are bf16 (native fast path on all generations).
    a = x618.reshape(Cin, M).astype(jnp.bfloat16)
    b = x603.reshape(Cin, M).astype(jnp.bfloat16)
    w = weight.astype(jnp.bfloat16)
    gb = jnp.stack([gamma, beta], axis=1).astype(jnp.float32)   # (Cout, 2)

    out_flat = pl.pallas_call(
        fused_add_conv1x1_bn_kernel,
        out_shape=jax.ShapeDtypeStruct((Cout, M), jnp.float32),
        grid=(cout_tiles,),
        in_specs=[
            # activations: constant index map -> stay VMEM-resident across Cout tiles
            pl.BlockSpec((Cin, M), lambda i: (0, 0)),
            pl.BlockSpec((Cin, M), lambda i: (0, 0)),
            # weight / packed BN params: tiled along Cout
            pl.BlockSpec((tile_cout, Cin), lambda i: (i, 0)),
            pl.BlockSpec((tile_cout, 2), lambda i: (i, 0)),
        ],
        out_specs=pl.BlockSpec((tile_cout, M), lambda i: (i, 0)),
        compiler_params=pltpu.CompilerParams(
            dimension_semantics=("parallel",),   # v7x: 2 TCs split the Cout tiles
            vmem_limit_bytes=16 << 20,
        ),
    )(a, b, w, gb)

    # (Cout, M) -> (1, Cout, H, W): pure reshape (channel-major == NCHW for N=1).
    return out_flat.reshape(N, Cout, H, W)


if __name__ == "__main__":
    key = jax.random.PRNGKey(0)
    k1, k2, k3, k4, k5 = jax.random.split(key, 5)

    # Shapes implied by the module: Conv2d(384, 2304, 1x1), inputs (1, 384, 7, 7).
    N, Cin, H, W = 1, 384, 7, 7
    Cout = 2304
    M = H * W

    x618 = jax.random.normal(k1, (N, Cin, H, W), dtype=jnp.float32)
    x603 = jax.random.normal(k2, (N, Cin, H, W), dtype=jnp.float32)

    # Conv2d(384, 2304, kernel_size=1, bias=False) weight, squeezed to (Cout, Cin)
    weight = jax.random.normal(k3, (Cout, Cin), dtype=jnp.float32) * 0.02
    # BatchNorm2d(2304, eps=0.001, affine=True) parameters
    gamma = 1.0 + 0.1 * jax.random.normal(k4, (Cout,), dtype=jnp.float32)
    beta = 0.1 * jax.random.normal(k5, (Cout,), dtype=jnp.float32)

    fn = jax.jit(fused_add_conv1x1_bn)
    out = fn(x618, x603, weight, gamma, beta)
    jax.block_until_ready(out)
    assert out.shape == (N, Cout, H, W)

    # --- Strict check: pure-JAX reference using the SAME bf16 operands -------
    a_bf = x618.reshape(Cin, M).astype(jnp.bfloat16)
    b_bf = x603.reshape(Cin, M).astype(jnp.bfloat16)
    y = jnp.dot(weight.astype(jnp.bfloat16), a_bf + b_bf,
                preferred_element_type=jnp.float32)
    mean = jnp.mean(y, axis=1, keepdims=True)
    var = jnp.mean((y - mean) ** 2, axis=1, keepdims=True)
    ref_bf16 = ((y - mean) * jax.lax.rsqrt(var + 1e-3)
                * gamma[:, None] + beta[:, None]).reshape(N, Cout, H, W)
    assert jnp.allclose(out, ref_bf16, atol=2e-3, rtol=2e-3), \
        float(jnp.max(jnp.abs(out - ref_bf16)))

    # --- Loose check: full-f32 reference of the original module forward ------
    x = x618 + x603
    y32 = jnp.einsum("oc,nchw->nohw", weight, x)
    mean32 = jnp.mean(y32, axis=(0, 2, 3), keepdims=True)
    var32 = jnp.mean((y32 - mean32) ** 2, axis=(0, 2, 3), keepdims=True)
    ref_f32 = (y32 - mean32) * jax.lax.rsqrt(var32 + 1e-3) \
        * gamma.reshape(1, -1, 1, 1) + beta.reshape(1, -1, 1, 1)
    assert jnp.allclose(out, ref_f32, atol=5e-2, rtol=5e-2), \
        float(jnp.max(jnp.abs(out - ref_f32)))

    print("KERNEL_OK")
</pallas_src>

<mosaic_0001>
module attributes {stable_mosaic.version = 11 : i64} {
  func.func @fused_add_conv1x1_bn_kernel(%arg0: i32, %arg1: memref<384x49xbf16, #tpu.memory_space<vmem>>, %arg2: memref<384x49xbf16, #tpu.memory_space<vmem>>, %arg3: memref<1152x384xbf16, #tpu.memory_space<vmem>>, %arg4: memref<1152x2xf32, #tpu.memory_space<vmem>>, %arg5: memref<1152x49xf32, #tpu.memory_space<vmem>>) attributes {dimension_semantics = [#tpu.dimension_semantics<parallel>], iteration_bounds = array<i64: 2>, scalar_prefetch = 0 : i64, scratch_operands = 0 : i64, tpu.core_type = #tpu.core_type<tc>, window_params = [{pipeline_mode = #tpu.pipeline_mode<synchronous>, transform_indices = @transform_0, window_bounds = array<i64: 384, 49>}, {pipeline_mode = #tpu.pipeline_mode<synchronous>, transform_indices = @transform_1, window_bounds = array<i64: 384, 49>}, {transform_indices = @transform_2, window_bounds = array<i64: 1152, 384>}, {transform_indices = @transform_3, window_bounds = array<i64: 1152, 2>}, {transform_indices = @transform_4, window_bounds = array<i64: 1152, 49>}]} {
    %c0 = arith.constant 0 : index
    %c0_0 = arith.constant 0 : index
    %0 = vector.load %arg1[%c0, %c0_0] : memref<384x49xbf16, #tpu.memory_space<vmem>>, vector<384x49xbf16>
    %c0_1 = arith.constant 0 : index
    %c0_2 = arith.constant 0 : index
    %1 = vector.load %arg2[%c0_1, %c0_2] : memref<384x49xbf16, #tpu.memory_space<vmem>>, vector<384x49xbf16>
    %2 = arith.addf %0, %1 : vector<384x49xbf16>
    %c0_3 = arith.constant 0 : index
    %c0_4 = arith.constant 0 : index
    %3 = vector.load %arg3[%c0_3, %c0_4] : memref<1152x384xbf16, #tpu.memory_space<vmem>>, vector<1152x384xbf16>
    %cst = arith.constant dense<0.000000e+00> : vector<1152x49xf32>
    %4 = tpu.matmul %3, %2, %cst {dimension_numbers = #tpu.dot_dimension_numbers<[1], [0], [0], [1], [0, 0, 1, 1], [], []>} : vector<1152x384xbf16>, vector<384x49xbf16>, vector<1152x49xf32> -> vector<1152x49xf32>
    %cst_5 = arith.constant dense<0.000000e+00> : vector<1152xf32>
    %5 = vector.multi_reduction <add>, %4, %cst_5 [1] : vector<1152x49xf32> to vector<1152xf32>
    %6 = vector.shape_cast %5 : vector<1152xf32> to vector<1152x1xf32>
    %cst_6 = arith.constant 0.0204081628 : f32
    %7 = vector.broadcast %cst_6 : f32 to vector<1152x1xf32>
    %8 = arith.mulf %6, %7 : vector<1152x1xf32>
    %9 = vector.broadcast %8 : vector<1152x1xf32> to vector<1152x49xf32>
    %10 = arith.subf %4, %9 : vector<1152x49xf32>
    %11 = arith.mulf %10, %10 : vector<1152x49xf32>
    %cst_7 = arith.constant dense<0.000000e+00> : vector<1152xf32>
    %12 = vector.multi_reduction <add>, %11, %cst_7 [1] : vector<1152x49xf32> to vector<1152xf32>
    %13 = vector.shape_cast %12 : vector<1152xf32> to vector<1152x1xf32>
    %cst_8 = arith.constant 0.0204081628 : f32
    %14 = vector.broadcast %cst_8 : f32 to vector<1152x1xf32>
    %15 = arith.mulf %13, %14 : vector<1152x1xf32>
    %c0_9 = arith.constant 0 : index
    %c0_10 = arith.constant 0 : index
    %16 = vector.load %arg4[%c0_9, %c0_10] : memref<1152x2xf32, #tpu.memory_space<vmem>>, vector<1152x1xf32>
    %c0_11 = arith.constant 0 : index
    %c1 = arith.constant 1 : index
    %17 = vector.load %arg4[%c0_11, %c1] : memref<1152x2xf32, #tpu.memory_space<vmem>>, vector<1152x1xf32>
    %cst_12 = arith.constant 1.000000e-03 : f32
    %18 = vector.broadcast %cst_12 : f32 to vector<1152x1xf32>
    %19 = arith.addf %15, %18 : vector<1152x1xf32>
    %20 = math.rsqrt %19 : vector<1152x1xf32>
    %21 = arith.mulf %20, %16 : vector<1152x1xf32>
    %22 = vector.broadcast %21 : vector<1152x1xf32> to vector<1152x49xf32>
    %23 = arith.mulf %10, %22 : vector<1152x49xf32>
    %24 = vector.broadcast %17 : vector<1152x1xf32> to vector<1152x49xf32>
    %25 = arith.addf %23, %24 : vector<1152x49xf32>
    %c0_13 = arith.constant 0 : index
    %c0_14 = arith.constant 0 : index
    %26 = vector.load %arg5[%c0_13, %c0_14] : memref<1152x49xf32, #tpu.memory_space<vmem>>, vector<1152x49xf32>
    tpu.vector_store %arg5[%c0_13, %c0_14], %25 {strides = array<i32>} : memref<1152x49xf32, #tpu.memory_space<vmem>>, vector<1152x49xf32>,
    return
  }
  func.func @transform_0(%arg0: i32) -> (i32, i32) {
    %c0_i32 = arith.constant 0 : i32
    %c0_i32_0 = arith.constant 0 : i32
    %c0_i32_1 = arith.constant 0 : i32
    return %c0_i32, %c0_i32_0 : i32, i32
  }
  func.func @transform_1(%arg0: i32) -> (i32, i32) {
    %c0_i32 = arith.constant 0 : i32
    %c0_i32_0 = arith.constant 0 : i32
    %c0_i32_1 = arith.constant 0 : i32
    return %c0_i32, %c0_i32_0 : i32, i32
  }
  func.func @transform_2(%arg0: i32) -> (i32, i32) {
    %c0_i32 = arith.constant 0 : i32
    %c0_i32_0 = arith.constant 0 : i32
    return %arg0, %c0_i32 : i32, i32
  }
  func.func @transform_3(%arg0: i32) -> (i32, i32) {
    %c0_i32 = arith.constant 0 : i32
    %c0_i32_0 = arith.constant 0 : i32
    return %arg0, %c0_i32 : i32, i32
  }
  func.func @transform_4(%arg0: i32) -> (i32, i32) {
    %c0_i32 = arith.constant 0 : i32
    %c0_i32_0 = arith.constant 0 : i32
    return %arg0, %c0_i32 : i32, i32
  }
}

</mosaic_0001>

<llo_original>
// kernel: fused_add_conv1x1_bn.1
$region0: #{fused_add_conv1x1_bn.1}
  #allocation0 [shape = 'u32[]', space=smem, size = 0x4, offset = 0x4, fixed_abs, tag = 'smem constant byte address 0x4 - core index']
  #allocation1 [shape = 'u32[72,128]{1,0:T(1,128)}', space=vmem, size = 0x9000, scoped, tag = 'internal scratch']
  %s0 = inlined_call_operand.vmem [shape: bf16[384,49], index: 0, kind: input, shape index: {}]
  %s1 = inlined_call_operand.vmem [shape: bf16[384,49], index: 1, kind: input, shape index: {}]
  %s2 = inlined_call_operand.vmem [shape: bf16[2304,384], index: 2, kind: input, shape index: {}]
  %s3 = inlined_call_operand.vmem [shape: f32[2304,2], index: 3, kind: input, shape index: {}]
  %s4 = inlined_call_operand.vmem [shape: f32[2304,49], index: 4, kind: output, shape index: {}]
  %s5 = sld [smem:[#allocation0]]
  $region49: #{fused_add_conv1x1_bn.1} parent=0
    _
  %s7 = ssub.s32 1, %s5
  %s8 = scalar_select 0, %s7, %s5
  loop: start=0, step=1, limit=4
  $region2: #{fused_add_conv1x1_bn.1} parent=0 // loop_pre_header
    _
  $region3: #{fused_add_conv1x1_bn.1} parent=0 // loop_header
    %s10 = sphi 0, %s14
    %p11 = scmp.ge.s32.totalorder %s10, 4
    %s18 = sphi 0, %s18
    %s20 = sphi 0, %s18
    %s21 = sphi 0, %s20
    %s35 = sphi 0, %s21
    %s39 = sphi 0, %s39
    %s41 = sphi 0, %s39
    %s42 = sphi 0, %s41
    %s56 = sphi 0, %s42
    %s62 = sphi 0, %s64
    %s65 = sphi 0, %s62
    %s66 = sphi 0, %s65
    %s82 = sphi 0, %s66
    %s88 = sphi 0, %s90
    %s91 = sphi 0, %s88
    %s92 = sphi 0, %s91
    %s108 = sphi 0, %s92
    %s114 = sphi 0, %s116
    %s117 = sphi 0, %s114
    %s118 = sphi 0, %s117
    %s134 = sphi 0, %s118
  $region4: #{fused_add_conv1x1_bn.1} parent=0 // loop_header_branch
    %13 = sbr.rel (%p11) target = $region8
  $region5: #{fused_add_conv1x1_bn.1} parent=0 // loop_body
    %s15 = ssub.s32 %s10, 1
    %s16 = ssub.s32 %s10, 2
    %s17 = sadd.s32 %s10, 1
    %s19 = sadd.s32 %s18, 1
    %p22 = scmp.eq.s32.totalorder %s10, 1
    %p23 = scmp.ne.s32.totalorder %s18, %s20
    %p24 = scmp.eq.s32.totalorder %s10, 0
    %p25 = por %p23, %p24
    %p26 = scmp.ne.s32.totalorder %s18, %s20
    %p27 = scmp.eq.s32.totalorder %s15, 1
    %p28 = por %p26, %p27
    %p29 = scmp.ne.s32.totalorder %s20, %s21
    %p30 = scmp.eq.s32.totalorder %s15, 0
    %p31 = por %p29, %p30
    %p32 = scmp.ne.s32.totalorder %s20, %s21
    %p33 = scmp.eq.s32.totalorder %s16, 1
    %p34 = por %p32, %p33
    %p36 = scmp.ne.s32.totalorder %s21, %s35
    %p37 = scmp.eq.s32.totalorder %s16, 0
    %p38 = por %p36, %p37
    %s40 = sadd.s32 %s39, 1
    %p43 = scmp.eq.s32.totalorder %s10, 1
    %p44 = scmp.ne.s32.totalorder %s39, %s41
    %p45 = scmp.eq.s32.totalorder %s10, 0
    %p46 = por %p44, %p45
    %p47 = scmp.ne.s32.totalorder %s39, %s41
    %p48 = scmp.eq.s32.totalorder %s15, 1
    %p49 = por %p47, %p48
    %p50 = scmp.ne.s32.totalorder %s41, %s42
    %p51 = scmp.eq.s32.totalorder %s15, 0
    %p52 = por %p50, %p51
    %p53 = scmp.ne.s32.totalorder %s41, %s42
    %p54 = scmp.eq.s32.totalorder %s16, 1
    %p55 = por %p53, %p54
    %p57 = scmp.ne.s32.totalorder %s42, %s56
    %p58 = scmp.eq.s32.totalorder %s16, 0
    %p59 = por %p57, %p58
    %s60 = ssub.s32 %s10, %s17
    %p61 = scmp.eq.s32.totalorder %s60, 0
    %s63 = sadd.s32 %s62, 1
    %s64 = scalar_select %p61, %s62, %s63
    %p67 = pneg %p61
    %p68 = scmp.eq.s32.totalorder %s10, 1
    %p69 = por %p67, %p68
    %p70 = scmp.ne.s32.totalorder %s62, %s65
    %p71 = scmp.eq.s32.totalorder %s10, 0
    %p72 = por %p70, %p71
    %p73 = scmp.ne.s32.totalorder %s62, %s65
    %p74 = scmp.eq.s32.totalorder %s15, 1
    %p75 = por %p73, %p74
    %p76 = scmp.ne.s32.totalorder %s65, %s66
    %p77 = scmp.eq.s32.totalorder %s15, 0
    %p78 = por %p76, %p77
    %p79 = scmp.ne.s32.totalorder %s65, %s66
    %p80 = scmp.eq.s32.totalorder %s16, 1
    %p81 = por %p79, %p80
    %p83 = scmp.ne.s32.totalorder %s66, %s82
    %p84 = scmp.eq.s32.totalorder %s16, 0
    %p85 = por %p83, %p84
    %s86 = ssub.s32 %s10, %s17
    %p87 = scmp.eq.s32.totalorder %s86, 0
    %s89 = sadd.s32 %s88, 1
    %s90 = scalar_select %p87, %s88, %s89
    %p93 = pneg %p87
    %p94 = scmp.eq.s32.totalorder %s10, 1
    %p95 = por %p93, %p94
    %p96 = scmp.ne.s32.totalorder %s88, %s91
    %p97 = scmp.eq.s32.totalorder %s10, 0
    %p98 = por %p96, %p97
    %p99 = scmp.ne.s32.totalorder %s88, %s91
    %p100 = scmp.eq.s32.totalorder %s15, 1
    %p101 = por %p99, %p100
    %p102 = scmp.ne.s32.totalorder %s91, %s92
    %p103 = scmp.eq.s32.totalorder %s15, 0
    %p104 = por %p102, %p103
    %p105 = scmp.ne.s32.totalorder %s91, %s92
    %p106 = scmp.eq.s32.totalorder %s16, 1
    %p107 = por %p105, %p106
    %p109 = scmp.ne.s32.totalorder %s92, %s108
    %p110 = scmp.eq.s32.totalorder %s16, 0
    %p111 = por %p109, %p110
    %s112 = ssub.s32 %s10, %s17
    %p113 = scmp.eq.s32.totalorder %s112, 0
    %s115 = sadd.s32 %s114, 1
    %s116 = scalar_select %p113, %s114, %s115
    %p119 = pneg %p113
    %p120 = scmp.eq.s32.totalorder %s10, 1
    %p121 = por %p119, %p120
    %p122 = scmp.ne.s32.totalorder %s114, %s117
    %p123 = scmp.eq.s32.totalorder %s10, 0
    %p124 = por %p122, %p123
    %p125 = scmp.ne.s32.totalorder %s114, %s117
    %p126 = scmp.eq.s32.totalorder %s15, 1
    %p127 = por %p125, %p126
    %p128 = scmp.ne.s32.totalorder %s117, %s118
    %p129 = scmp.eq.s32.totalorder %s15, 0
    %p130 = por %p128, %p129
    %p131 = scmp.ne.s32.totalorder %s117, %s118
    %p132 = scmp.eq.s32.totalorder %s16, 1
    %p133 = por %p131, %p132
    %p135 = scmp.ne.s32.totalorder %s118, %s134
    %p136 = scmp.eq.s32.totalorder %s16, 0
    %p137 = por %p135, %p136
    %p138 = scmp.le.s32.totalorder 1, %s10
    %p139 = scmp.lt.s32.totalorder %s10, 3
    %p140 = pnand %p138, %p139
    %p141 = pneg %p140
    // Predicated region
    $region9: #{fused_add_conv1x1_bn.1} parent=5 // pred_check
      _
    $region10: #{fused_add_conv1x1_bn.1} parent=5 // pred_check_branch
      %143 = sbr.rel (%p140) target = $region12
    $region11: #{fused_add_conv1x1_bn.1} parent=5 // pred_region
      %s144 = ssub.s32 %s10, 1
      // Predicated region
      $region13: #{fused_add_conv1x1_bn.1} parent=11 // pred_check
        %p145 = pneg %p31
      $region14: #{fused_add_conv1x1_bn.1} parent=11 // pred_check_branch
        %147 = sbr.rel (%p145) target = $region16
      $region15: #{fused_add_conv1x1_bn.1} parent=11 // pred_region
        _
      $region16: #{fused_add_conv1x1_bn.1} parent=11 // pred_fallthru
        _
      // Predicated region
      $region17: #{fused_add_conv1x1_bn.1} parent=11 // pred_check
        %p148 = pneg %p52
      $region18: #{fused_add_conv1x1_bn.1} parent=11 // pred_check_branch
        %150 = sbr.rel (%p148) target = $region20
      $region19: #{fused_add_conv1x1_bn.1} parent=11 // pred_region
        _
      $region20: #{fused_add_conv1x1_bn.1} parent=11 // pred_fallthru
        _
    $region12: #{fused_add_conv1x1_bn.1} parent=5 // pred_fallthru
      _
    %p151 = scmp.lt.s32.totalorder %s10, 2
    // Predicated region
    $region21: #{fused_add_conv1x1_bn.1} parent=5 // pred_check
      %p152 = pneg %p151
    $region22: #{fused_add_conv1x1_bn.1} parent=5 // pred_check_branch
      %154 = sbr.rel (%p152) target = $region24
    $region23: #{fused_add_conv1x1_bn.1} parent=5 // pred_region
      // Predicated region
      $region25: #{fused_add_conv1x1_bn.1} parent=23 // pred_check
        %p155 = pneg %p72
      $region26: #{fused_add_conv1x1_bn.1} parent=23 // pred_check_branch
        %157 = sbr.rel (%p155) target = $region28
      $region27: #{fused_add_conv1x1_bn.1} parent=23 // pred_region
        %s158 = smul.u32 144, %s10
        %p159 = scmp.lt.s32.totalorder %s158, 287
        %s160 = scalar_select %p159, %s158, 287
        %s161 = smul.addr %s160, 3
        %s162 = smul.addr %s161, 4
        %s163 = scalar_lea.vmem %s2, %s162
        %s164 = smul.u32 144, %s10
      $region28: #{fused_add_conv1x1_bn.1} parent=23 // pred_fallthru
        _
      // Predicated region
      $region29: #{fused_add_conv1x1_bn.1} parent=23 // pred_check
        %p165 = pneg %p98
      $region30: #{fused_add_conv1x1_bn.1} parent=23 // pred_check_branch
        %167 = sbr.rel (%p165) target = $region32
      $region31: #{fused_add_conv1x1_bn.1} parent=23 // pred_region
        %s168 = smul.u32 144, %s10
        %p169 = scmp.lt.s32.totalorder %s168, 287
        %s170 = scalar_select %p169, %s168, 287
        %s171 = smul.addr %s170, 8
        %s172 = scalar_lea.vmem %s3, %s171
        %s173 = smul.u32 144, %s10
      $region32: #{fused_add_conv1x1_bn.1} parent=23 // pred_fallthru
        _
    $region24: #{fused_add_conv1x1_bn.1} parent=5 // pred_fallthru
      _
    %p174 = scmp.le.s32.totalorder 1, %s10
    %p175 = scmp.lt.s32.totalorder %s10, 3
    %p176 = pnand %p174, %p175
    %p177 = pneg %p176
    // Predicated region
    $region33: #{fused_add_conv1x1_bn.1} parent=5 // pred_check
      _
    $region34: #{fused_add_conv1x1_bn.1} parent=5 // pred_check_branch
      %179 = sbr.rel (%p176) target = $region36
    $region35: #{fused_add_conv1x1_bn.1} parent=5 // pred_region
      %s180 = ssub.s32 %s10, 1
      %p181 = pneg %p31
      %p182 = pneg %p28
      %p183 = pneg %p52
      %p184 = pneg %p49
      %s185 = smul.u32 144, %s15
      %p186 = scmp.lt.s32.totalorder %s185, 287
      %s187 = scalar_select %p186, %s185, 287
      %s188 = smul.addr %s187, 3
      %s189 = smul.addr %s188, 4
      %s190 = scalar_lea.vmem %s2, %s189
      %p191 = pneg %p78
      %p192 = pneg %p75
      %s193 = smul.u32 144, %s15
      %p194 = scmp.lt.s32.totalorder %s193, 287
      %s195 = scalar_select %p194, %s193, 287
      %s196 = smul.addr %s195, 8
      %s197 = scalar_lea.vmem %s3, %s196
      %p198 = pneg %p104
      %p199 = pneg %p101
      %p200 = pneg %p130
      %p201 = pneg %p127
      %s202 = smul.u32 144, %s15
      %p203 = scmp.lt.s32.totalorder %s202, 287
      %s204 = scalar_select %p203, %s202, 287
      %s205 = smul.addr %s204, 8
      %s206 = scalar_lea.vmem %s4, %s205
      %s207 = smul.u32 144, %s15
      %p208 = scmp.lt.s32.totalorder %s207, 287
      %s209 = scalar_select %p208, %s207, 287
      %s210 = smul.addr %s209, 3
      %s211 = smul.addr %s210, 4
      %s212 = scalar_lea.vmem %s2, %s211
      %s213 = smul.u32 144, %s15
      %s214 = smul.u32 144, %s15
      %p215 = scmp.lt.s32.totalorder %s214, 287
      %s216 = scalar_select %p215, %s214, 287
      %s217 = smul.addr %s216, 8
      %s218 = scalar_lea.vmem %s3, %s217
      %s219 = smul.u32 144, %s15
      %s220 = smul.u32 144, %s15
      %p221 = scmp.lt.s32.totalorder %s220, 287
      %s222 = scalar_select %p221, %s220, 287
      %s223 = smul.addr %s222, 8
      %s224 = scalar_lea.vmem %s4, %s223
      %s225 = smul.u32 144, %s15
      %v226 = vld [vmem:[%s0] sm:$0xf]
      %v227 = vld [vmem:[%s0 + $0x4] sm:$0xf]
      %v228 = vld [vmem:[%s0 + $0x8] sm:$0xf]
      %v229 = vld [vmem:[%s0 + $0xc] sm:$0xf]
      %v230 = vld [vmem:[%s0 + $0x10] sm:$0xf]
      %v231 = vld [vmem:[%s0 + $0x14] sm:$0xf]
      %v232 = vld [vmem:[%s0 + $0x18] sm:$0xf]
      %v233 = vld [vmem:[%s0 + $0x1c] sm:$0xf]
      %v234 = vld [vmem:[%s0 + $0x20] sm:$0xf]
      %v235 = vld [vmem:[%s0 + $0x24] sm:$0xf]
      %v236 = vld [vmem:[%s0 + $0x28] sm:$0xf]
      %v237 = vld [vmem:[%s0 + $0x2c] sm:$0xf]
      %v238 = vld [vmem:[%s0 + $0x30] sm:$0xf]
      %v239 = vld [vmem:[%s0 + $0x34] sm:$0xf]
      %v240 = vld [vmem:[%s0 + $0x38] sm:$0xf]
      %v241 = vld [vmem:[%s0 + $0x3c] sm:$0xf]
      %v242 = vld [vmem:[%s0 + $0x40] sm:$0xf]
      %v243 = vld [vmem:[%s0 + $0x44] sm:$0xf]
      %v244 = vld [vmem:[%s0 + $0x48] sm:$0xf]
      %v245 = vld [vmem:[%s0 + $0x4c] sm:$0xf]
      %v246 = vld [vmem:[%s0 + $0x50] sm:$0xf]
      %v247 = vld [vmem:[%s0 + $0x54] sm:$0xf]
      %v248 = vld [vmem:[%s0 + $0x58] sm:$0xf]
      %v249 = vld [vmem:[%s0 + $0x5c] sm:$0xf]
      %v250 = vld [vmem:[%s0 + $0x60] sm:$0xf]
      %v251 = vld [vmem:[%s0 + $0x64] sm:$0xf]
      %v252 = vld [vmem:[%s0 + $0x68] sm:$0xf]
      %v253 = vld [vmem:[%s0 + $0x6c] sm:$0xf]
      %v254 = vld [vmem:[%s0 + $0x70] sm:$0xf]
      %v255 = vld [vmem:[%s0 + $0x74] sm:$0xf]
      %v256 = vld [vmem:[%s0 + $0x78] sm:$0xf]
      %v257 = vld [vmem:[%s0 + $0x7c] sm:$0xf]
      %v258 = vld [vmem:[%s0 + $0x80] sm:$0xf]
      %v259 = vld [vmem:[%s0 + $0x84] sm:$0xf]
      %v260 = vld [vmem:[%s0 + $0x88] sm:$0xf]
      %v261 = vld [vmem:[%s0 + $0x8c] sm:$0xf]
      %v262 = vld [vmem:[%s0 + $0x90] sm:$0xf]
      %v263 = vld [vmem:[%s0 + $0x94] sm:$0xf]
      %v264 = vld [vmem:[%s0 + $0x98] sm:$0xf]
      %v265 = vld [vmem:[%s0 + $0x9c] sm:$0xf]
      %v266 = vld [vmem:[%s0 + $0xa0] sm:$0xf]
      %v267 = vld [vmem:[%s0 + $0xa4] sm:$0xf]
      %v268 = vld [vmem:[%s0 + $0xa8] sm:$0xf]
      %v269 = vld [vmem:[%s0 + $0xac] sm:$0xf]
      %v270 = vld [vmem:[%s0 + $0xb0] sm:$0xf]
      %v271 = vld [vmem:[%s0 + $0xb4] sm:$0xf]
      %v272 = vld [vmem:[%s0 + $0xb8] sm:$0xf]
      %v273 = vld [vmem:[%s0 + $0xbc] sm:$0xf]
      %v274 = vld [vmem:[%s1] sm:$0xf]
      %v275 = vld [vmem:[%s1 + $0x4] sm:$0xf]
      %v276 = vld [vmem:[%s1 + $0x8] sm:$0xf]
      %v277 = vld [vmem:[%s1 + $0xc] sm:$0xf]
      %v278 = vld [vmem:[%s1 + $0x10] sm:$0xf]
      %v279 = vld [vmem:[%s1 + $0x14] sm:$0xf]
      %v280 = vld [vmem:[%s1 + $0x18] sm:$0xf]
      %v281 = vld [vmem:[%s1 + $0x1c] sm:$0xf]
      %v282 = vld [vmem:[%s1 + $0x20] sm:$0xf]
      %v283 = vld [vmem:[%s1 + $0x24] sm:$0xf]
      %v284 = vld [vmem:[%s1 + $0x28] sm:$0xf]
      %v285 = vld [vmem:[%s1 + $0x2c] sm:$0xf]
      %v286 = vld [vmem:[%s1 + $0x30] sm:$0xf]
      %v287 = vld [vmem:[%s1 + $0x34] sm:$0xf]
      %v288 = vld [vmem:[%s1 + $0x38] sm:$0xf]
      %v289 = vld [vmem:[%s1 + $0x3c] sm:$0xf]
      %v290 = vld [vmem:[%s1 + $0x40] sm:$0xf]
      %v291 = vld [vmem:[%s1 + $0x44] sm:$0xf]
      %v292 = vld [vmem:[%s1 + $0x48] sm:$0xf]
      %v293 = vld [vmem:[%s1 + $0x4c] sm:$0xf]
      %v294 = vld [vmem:[%s1 + $0x50] sm:$0xf]
      %v295 = vld [vmem:[%s1 + $0x54] sm:$0xf]
      %v296 = vld [vmem:[%s1 + $0x58] sm:$0xf]
      %v297 = vld [vmem:[%s1 + $0x5c] sm:$0xf]
      %v298 = vld [vmem:[%s1 + $0x60] sm:$0xf]
      %v299 = vld [vmem:[%s1 + $0x64] sm:$0xf]
      %v300 = vld [vmem:[%s1 + $0x68] sm:$0xf]
      %v301 = vld [vmem:[%s1 + $0x6c] sm:$0xf]
      %v302 = vld [vmem:[%s1 + $0x70] sm:$0xf]
      %v303 = vld [vmem:[%s1 + $0x74] sm:$0xf]
      %v304 = vld [vmem:[%s1 + $0x78] sm:$0xf]
      %v305 = vld [vmem:[%s1 + $0x7c] sm:$0xf]
      %v306 = vld [vmem:[%s1 + $0x80] sm:$0xf]
      %v307 = vld [vmem:[%s1 + $0x84] sm:$0xf]
      %v308 = vld [vmem:[%s1 + $0x88] sm:$0xf]
      %v309 = vld [vmem:[%s1 + $0x8c] sm:$0xf]
      %v310 = vld [vmem:[%s1 + $0x90] sm:$0xf]
      %v311 = vld [vmem:[%s1 + $0x94] sm:$0xf]
      %v312 = vld [vmem:[%s1 + $0x98] sm:$0xf]
      %v313 = vld [vmem:[%s1 + $0x9c] sm:$0xf]
      %v314 = vld [vmem:[%s1 + $0xa0] sm:$0xf]
      %v315 = vld [vmem:[%s1 + $0xa4] sm:$0xf]
      %v316 = vld [vmem:[%s1 + $0xa8] sm:$0xf]
      %v317 = vld [vmem:[%s1 + $0xac] sm:$0xf]
      %v318 = vld [vmem:[%s1 + $0xb0] sm:$0xf]
      %v319 = vld [vmem:[%s1 + $0xb4] sm:$0xf]
      %v320 = vld [vmem:[%s1 + $0xb8] sm:$0xf]
      %v321 = vld [vmem:[%s1 + $0xbc] sm:$0xf]
      %v322 = vunpack.c.l.bf16 %v226
      %v323 = vunpack.c.l.bf16 %v227
      %v324 = vunpack.c.l.bf16 %v228
      %v325 = vunpack.c.l.bf16 %v229
      %v326 = vunpack.c.l.bf16 %v230
      %v327 = vunpack.c.l.bf16 %v231
      %v328 = vunpack.c.l.bf16 %v232
      %v329 = vunpack.c.l.bf16 %v233
      %v330 = vunpack.c.l.bf16 %v234
      %v331 = vunpack.c.l.bf16 %v235
      %v332 = vunpack.c.l.bf16 %v236
      %v333 = vunpack.c.l.bf16 %v237
      %v334 = vunpack.c.l.bf16 %v238
      %v335 = vunpack.c.l.bf16 %v239
      %v336 = vunpack.c.l.bf16 %v240
      %v337 = vunpack.c.l.bf16 %v241
      %v338 = vunpack.c.l.bf16 %v242
      %v339 = vunpack.c.l.bf16 %v243
      %v340 = vunpack.c.l.bf16 %v244
      %v341 = vunpack.c.l.bf16 %v245
      %v342 = vunpack.c.l.bf16 %v246
      %v343 = vunpack.c.l.bf16 %v247
      %v344 = vunpack.c.l.bf16 %v248
      %v345 = vunpack.c.l.bf16 %v249
      %v346 = vunpack.c.l.bf16 %v250
      %v347 = vunpack.c.l.bf16 %v251
      %v348 = vunpack.c.l.bf16 %v252
      %v349 = vunpack.c.l.bf16 %v253
      %v350 = vunpack.c.l.bf16 %v254
      %v351 = vunpack.c.l.bf16 %v255
      %v352 = vunpack.c.l.bf16 %v256
      %v353 = vunpack.c.l.bf16 %v257
      %v354 = vunpack.c.l.bf16 %v258
      %v355 = vunpack.c.l.bf16 %v259
      %v356 = vunpack.c.l.bf16 %v260
      %v357 = vunpack.c.l.bf16 %v261
      %v358 = vunpack.c.l.bf16 %v262
      %v359 = vunpack.c.l.bf16 %v263
      %v360 = vunpack.c.l.bf16 %v264
      %v361 = vunpack.c.l.bf16 %v265
      %v362 = vunpack.c.l.bf16 %v266
      %v363 = vunpack.c.l.bf16 %v267
      %v364 = vunpack.c.l.bf16 %v268
      %v365 = vunpack.c.l.bf16 %v269
      %v366 = vunpack.c.l.bf16 %v270
      %v367 = vunpack.c.l.bf16 %v271
      %v368 = vunpack.c.l.bf16 %v272
      %v369 = vunpack.c.l.bf16 %v273
      %v370 = vunpack.c.l.bf16 %v274
      %v371 = vunpack.c.l.bf16 %v275
      %v372 = vunpack.c.l.bf16 %v276
      %v373 = vunpack.c.l.bf16 %v277
      %v374 = vunpack.c.l.bf16 %v278
      %v375 = vunpack.c.l.bf16 %v279
      %v376 = vunpack.c.l.bf16 %v280
      %v377 = vunpack.c.l.bf16 %v281
      %v378 = vunpack.c.l.bf16 %v282
      %v379 = vunpack.c.l.bf16 %v283
      %v380 = vunpack.c.l.bf16 %v284
      %v381 = vunpack.c.l.bf16 %v285
      %v382 = vunpack.c.l.bf16 %v286
      %v383 = vunpack.c.l.bf16 %v287
      %v384 = vunpack.c.l.bf16 %v288
      %v385 = vunpack.c.l.bf16 %v289
      %v386 = vunpack.c.l.bf16 %v290
      %v387 = vunpack.c.l.bf16 %v291
      %v388 = vunpack.c.l.bf16 %v292
      %v389 = vunpack.c.l.bf16 %v293
      %v390 = vunpack.c.l.bf16 %v294
      %v391 = vunpack.c.l.bf16 %v295
      %v392 = vunpack.c.l.bf16 %v296
      %v393 = vunpack.c.l.bf16 %v297
      %v394 = vunpack.c.l.bf16 %v298
      %v395 = vunpack.c.l.bf16 %v299
      %v396 = vunpack.c.l.bf16 %v300
      %v397 = vunpack.c.l.bf16 %v301
      %v398 = vunpack.c.l.bf16 %v302
      %v399 = vunpack.c.l.bf16 %v303
      %v400 = vunpack.c.l.bf16 %v304
      %v401 = vunpack.c.l.bf16 %v305
      %v402 = vunpack.c.l.bf16 %v306
      %v403 = vunpack.c.l.bf16 %v307
      %v404 = vunpack.c.l.bf16 %v308
      %v405 = vunpack.c.l.bf16 %v309
      %v406 = vunpack.c.l.bf16 %v310
      %v407 = vunpack.c.l.bf16 %v311
      %v408 = vunpack.c.l.bf16 %v312
      %v409 = vunpack.c.l.bf16 %v313
      %v410 = vunpack.c.l.bf16 %v314
      %v411 = vunpack.c.l.bf16 %v315
      %v412 = vunpack.c.l.bf16 %v316
      %v413 = vunpack.c.l.bf16 %v317
      %v414 = vunpack.c.l.bf16 %v318
      %v415 = vunpack.c.l.bf16 %v319
      %v416 = vunpack.c.l.bf16 %v320
      %v417 = vunpack.c.l.bf16 %v321
      %v418 = vadd.f32 %v322, %v370
      %v419 = vadd.f32 %v323, %v371
      %v420 = vadd.f32 %v324, %v372
      %v421 = vadd.f32 %v325, %v373
      %v422 = vadd.f32 %v326, %v374
      %v423 = vadd.f32 %v327, %v375
      %v424 = vadd.f32 %v328, %v376
      %v425 = vadd.f32 %v329, %v377
      %v426 = vadd.f32 %v330, %v378
      %v427 = vadd.f32 %v331, %v379
      %v428 = vadd.f32 %v332, %v380
      %v429 = vadd.f32 %v333, %v381
      %v430 = vadd.f32 %v334, %v382
      %v431 = vadd.f32 %v335, %v383
      %v432 = vadd.f32 %v336, %v384
      %v433 = vadd.f32 %v337, %v385
      %v434 = vadd.f32 %v338, %v386
      %v435 = vadd.f32 %v339, %v387
      %v436 = vadd.f32 %v340, %v388
      %v437 = vadd.f32 %v341, %v389
      %v438 = vadd.f32 %v342, %v390
      %v439 = vadd.f32 %v343, %v391
      %v440 = vadd.f32 %v344, %v392
      %v441 = vadd.f32 %v345, %v393
      %v442 = vadd.f32 %v346, %v394
      %v443 = vadd.f32 %v347, %v395
      %v444 = vadd.f32 %v348, %v396
      %v445 = vadd.f32 %v349, %v397
      %v446 = vadd.f32 %v350, %v398
      %v447 = vadd.f32 %v351, %v399
      %v448 = vadd.f32 %v352, %v400
      %v449 = vadd.f32 %v353, %v401
      %v450 = vadd.f32 %v354, %v402
      %v451 = vadd.f32 %v355, %v403
      %v452 = vadd.f32 %v356, %v404
      %v453 = vadd.f32 %v357, %v405
      %v454 = vadd.f32 %v358, %v406
      %v455 = vadd.f32 %v359, %v407
      %v456 = vadd.f32 %v360, %v408
      %v457 = vadd.f32 %v361, %v409
      %v458 = vadd.f32 %v362, %v410
      %v459 = vadd.f32 %v363, %v411
      %v460 = vadd.f32 %v364, %v412
      %v461 = vadd.f32 %v365, %v413
      %v462 = vadd.f32 %v366, %v414
      %v463 = vadd.f32 %v367, %v415
      %v464 = vadd.f32 %v368, %v416
      %v465 = vadd.f32 %v369, %v417
      %v466 = vpack.c.bf16 %v419, %v418
      %v467 = vpack.c.bf16 %v421, %v420
      %v468 = vpack.c.bf16 %v423, %v422
      %v469 = vpack.c.bf16 %v425, %v424
      %v470 = vpack.c.bf16 %v427, %v426
      %v471 = vpack.c.bf16 %v429, %v428
      %v472 = vpack.c.bf16 %v431, %v430
      %v473 = vpack.c.bf16 %v433, %v432
      %v474 = vpack.c.bf16 %v435, %v434
      %v475 = vpack.c.bf16 %v437, %v436
      %v476 = vpack.c.bf16 %v439, %v438
      %v477 = vpack.c.bf16 %v441, %v440
      %v478 = vpack.c.bf16 %v443, %v442
      %v479 = vpack.c.bf16 %v445, %v444
      %v480 = vpack.c.bf16 %v447, %v446
      %v481 = vpack.c.bf16 %v449, %v448
      %v482 = vpack.c.bf16 %v451, %v450
      %v483 = vpack.c.bf16 %v453, %v452
      %v484 = vpack.c.bf16 %v455, %v454
      %v485 = vpack.c.bf16 %v457, %v456
      %v486 = vpack.c.bf16 %v459, %v458
      %v487 = vpack.c.bf16 %v461, %v460
      %v488 = vpack.c.bf16 %v463, %v462
      %v489 = vpack.c.bf16 %v465, %v464
      %v490 = vld [vmem:[%s212] sm:$0xff]
      %v491 = vld [vmem:[%s212 + $0x8] sm:$0xf]
      %v492 = vld [vmem:[%s212 + $0xc] sm:$0xff]
      %v493 = vld [vmem:[%s212 + $0x14] sm:$0xf]
      %v494 = vld [vmem:[%s212 + $0x18] sm:$0xff]
      %v495 = vld [vmem:[%s212 + $0x20] sm:$0xf]
      %v496 = vld [vmem:[%s212 + $0x24] sm:$0xff]
      %v497 = vld [vmem:[%s212 + $0x2c] sm:$0xf]
      %v498 = vld [vmem:[%s212 + $0x30] sm:$0xff]
      %v499 = vld [vmem:[%s212 + $0x38] sm:$0xf]
      %v500 = vld [vmem:[%s212 + $0x3c] sm:$0xff]
      %v501 = vld [vmem:[%s212 + $0x44] sm:$0xf]
      %v502 = vld [vmem:[%s212 + $0x48] sm:$0xff]
      %v503 = vld [vmem:[%s212 + $0x50] sm:$0xf]
      %v504 = vld [vmem:[%s212 + $0x54] sm:$0xff]
      %v505 = vld [vmem:[%s212 + $0x5c] sm:$0xf]
      %v506 = vld [vmem:[%s212 + $0x60] sm:$0xff]
      %v507 = vld [vmem:[%s212 + $0x68] sm:$0xf]
      %v508 = vld [vmem:[%s212 + $0x6c] sm:$0xff]
      %v509 = vld [vmem:[%s212 + $0x74] sm:$0xf]
      %v510 = vld [vmem:[%s212 + $0x78] sm:$0xff]
      %v511 = vld [vmem:[%s212 + $0x80] sm:$0xf]
      %v512 = vld [vmem:[%s212 + $0x84] sm:$0xff]
      %v513 = vld [vmem:[%s212 + $0x8c] sm:$0xf]
      %v514 = vld [vmem:[%s212 + $0x90] sm:$0xff]
      %v515 = vld [vmem:[%s212 + $0x98] sm:$0xf]
      %v516 = vld [vmem:[%s212 + $0x9c] sm:$0xff]
      %v517 = vld [vmem:[%s212 + $0xa4] sm:$0xf]
      %v518 = vld [vmem:[%s212 + $0xa8] sm:$0xff]
      %v519 = vld [vmem:[%s212 + $0xb0] sm:$0xf]
      %v520 = vld [vmem:[%s212 + $0xb4] sm:$0xff]
      %v521 = vld [vmem:[%s212 + $0xbc] sm:$0xf]
      %v522 = vld [vmem:[%s212 + $0xc0] sm:$0xff]
      %v523 = vld [vmem:[%s212 + $0xc8] sm:$0xf]
      %v524 = vld [vmem:[%s212 + $0xcc] sm:$0xff]
      %v525 = vld [vmem:[%s212 + $0xd4] sm:$0xf]
      %v526 = vld [vmem:[%s212 + $0xd8] sm:$0xff]
      %v527 = vld [vmem:[%s212 + $0xe0] sm:$0xf]
      %v528 = vld [vmem:[%s212 + $0xe4] sm:$0xff]
      %v529 = vld [vmem:[%s212 + $0xec] sm:$0xf]
      %v530 = vld [vmem:[%s212 + $0xf0] sm:$0xff]
      %v531 = vld [vmem:[%s212 + $0xf8] sm:$0xf]
      %v532 = vld [vmem:[%s212 + $0xfc] sm:$0xff]
      %v533 = vld [vmem:[%s212 + $0x104] sm:$0xf]
      %v534 = vld [vmem:[%s212 + $0x108] sm:$0xff]
      %v535 = vld [vmem:[%s212 + $0x110] sm:$0xf]
      %v536 = vld [vmem:[%s212 + $0x114] sm:$0xff]
      %v537 = vld [vmem:[%s212 + $0x11c] sm:$0xf]
      %v538 = vld [vmem:[%s212 + $0x120] sm:$0xff]
      %v539 = vld [vmem:[%s212 + $0x128] sm:$0xf]
      %v540 = vld [vmem:[%s212 + $0x12c] sm:$0xff]
      %v541 = vld [vmem:[%s212 + $0x134] sm:$0xf]
      %v542 = vld [vmem:[%s212 + $0x138] sm:$0xff]
      %v543 = vld [vmem:[%s212 + $0x140] sm:$0xf]
      %v544 = vld [vmem:[%s212 + $0x144] sm:$0xff]
      %v545 = vld [vmem:[%s212 + $0x14c] sm:$0xf]
      %v546 = vld [vmem:[%s212 + $0x150] sm:$0xff]
      %v547 = vld [vmem:[%s212 + $0x158] sm:$0xf]
      %v548 = vld [vmem:[%s212 + $0x15c] sm:$0xff]
      %v549 = vld [vmem:[%s212 + $0x164] sm:$0xf]
      %v550 = vld [vmem:[%s212 + $0x168] sm:$0xff]
      %v551 = vld [vmem:[%s212 + $0x170] sm:$0xf]
      %v552 = vld [vmem:[%s212 + $0x174] sm:$0xff]
      %v553 = vld [vmem:[%s212 + $0x17c] sm:$0xf]
      %v554 = vld [vmem:[%s212 + $0x180] sm:$0xff]
      %v555 = vld [vmem:[%s212 + $0x188] sm:$0xf]
      %v556 = vld [vmem:[%s212 + $0x18c] sm:$0xff]
      %v557 = vld [vmem:[%s212 + $0x194] sm:$0xf]
      %v558 = vld [vmem:[%s212 + $0x198] sm:$0xff]
      %v559 = vld [vmem:[%s212 + $0x1a0] sm:$0xf]
      %v560 = vld [vmem:[%s212 + $0x1a4] sm:$0xff]
      %v561 = vld [vmem:[%s212 + $0x1ac] sm:$0xf]
      %v562 = vld [vmem:[%s212 + $0x1b0] sm:$0xff]
      %v563 = vld [vmem:[%s212 + $0x1b8] sm:$0xf]
      %v564 = vld [vmem:[%s212 + $0x1bc] sm:$0xff]
      %v565 = vld [vmem:[%s212 + $0x1c4] sm:$0xf]
      %v566 = vld [vmem:[%s212 + $0x1c8] sm:$0xff]
      %v567 = vld [vmem:[%s212 + $0x1d0] sm:$0xf]
      %v568 = vld [vmem:[%s212 + $0x1d4] sm:$0xff]
      %v569 = vld [vmem:[%s212 + $0x1dc] sm:$0xf]
      %v570 = vld [vmem:[%s212 + $0x1e0] sm:$0xff]
      %v571 = vld [vmem:[%s212 + $0x1e8] sm:$0xf]
      %v572 = vld [vmem:[%s212 + $0x1ec] sm:$0xff]
      %v573 = vld [vmem:[%s212 + $0x1f4] sm:$0xf]
      %v574 = vld [vmem:[%s212 + $0x1f8] sm:$0xff]
      %v575 = vld [vmem:[%s212 + $0x200] sm:$0xf]
      %v576 = vld [vmem:[%s212 + $0x204] sm:$0xff]
      %v577 = vld [vmem:[%s212 + $0x20c] sm:$0xf]
      %v578 = vld [vmem:[%s212 + $0x210] sm:$0xff]
      %v579 = vld [vmem:[%s212 + $0x218] sm:$0xf]
      %v580 = vld [vmem:[%s212 + $0x21c] sm:$0xff]
      %v581 = vld [vmem:[%s212 + $0x224] sm:$0xf]
      %v582 = vld [vmem:[%s212 + $0x228] sm:$0xff]
      %v583 = vld [vmem:[%s212 + $0x230] sm:$0xf]
      %v584 = vld [vmem:[%s212 + $0x234] sm:$0xff]
      %v585 = vld [vmem:[%s212 + $0x23c] sm:$0xf]
      %v586 = vld [vmem:[%s212 + $0x240] sm:$0xff]
      %v587 = vld [vmem:[%s212 + $0x248] sm:$0xf]
      %v588 = vld [vmem:[%s212 + $0x24c] sm:$0xff]
      %v589 = vld [vmem:[%s212 + $0x254] sm:$0xf]
      %v590 = vld [vmem:[%s212 + $0x258] sm:$0xff]
      %v591 = vld [vmem:[%s212 + $0x260] sm:$0xf]
      %v592 = vld [vmem:[%s212 + $0x264] sm:$0xff]
      %v593 = vld [vmem:[%s212 + $0x26c] sm:$0xf]
      %v594 = vld [vmem:[%s212 + $0x270] sm:$0xff]
      %v595 = vld [vmem:[%s212 + $0x278] sm:$0xf]
      %v596 = vld [vmem:[%s212 + $0x27c] sm:$0xff]
      %v597 = vld [vmem:[%s212 + $0x284] sm:$0xf]
      %v598 = vld [vmem:[%s212 + $0x288] sm:$0xff]
      %v599 = vld [vmem:[%s212 + $0x290] sm:$0xf]
      %v600 = vld [vmem:[%s212 + $0x294] sm:$0xff]
      %v601 = vld [vmem:[%s212 + $0x29c] sm:$0xf]
      %v602 = vld [vmem:[%s212 + $0x2a0] sm:$0xff]
      %v603 = vld [vmem:[%s212 + $0x2a8] sm:$0xf]
      %v604 = vld [vmem:[%s212 + $0x2ac] sm:$0xff]
      %v605 = vld [vmem:[%s212 + $0x2b4] sm:$0xf]
      %v606 = vld [vmem:[%s212 + $0x2b8] sm:$0xff]
      %v607 = vld [vmem:[%s212 + $0x2c0] sm:$0xf]
      %v608 = vld [vmem:[%s212 + $0x2c4] sm:$0xff]
      %v609 = vld [vmem:[%s212 + $0x2cc] sm:$0xf]
      %v610 = vld [vmem:[%s212 + $0x2d0] sm:$0xff]
      %v611 = vld [vmem:[%s212 + $0x2d8] sm:$0xf]
      %v612 = vld [vmem:[%s212 + $0x2dc] sm:$0xff]
      %v613 = vld [vmem:[%s212 + $0x2e4] sm:$0xf]
      %v614 = vld [vmem:[%s212 + $0x2e8] sm:$0xff]
      %v615 = vld [vmem:[%s212 + $0x2f0] sm:$0xf]
      %v616 = vld [vmem:[%s212 + $0x2f4] sm:$0xff]
      %v617 = vld [vmem:[%s212 + $0x2fc] sm:$0xf]
      %v618 = vld [vmem:[%s212 + $0x300] sm:$0xff]
      %v619 = vld [vmem:[%s212 + $0x308] sm:$0xf]
      %v620 = vld [vmem:[%s212 + $0x30c] sm:$0xff]
      %v621 = vld [vmem:[%s212 + $0x314] sm:$0xf]
      %v622 = vld [vmem:[%s212 + $0x318] sm:$0xff]
      %v623 = vld [vmem:[%s212 + $0x320] sm:$0xf]
      %v624 = vld [vmem:[%s212 + $0x324] sm:$0xff]
      %v625 = vld [vmem:[%s212 + $0x32c] sm:$0xf]
      %v626 = vld [vmem:[%s212 + $0x330] sm:$0xff]
      %v627 = vld [vmem:[%s212 + $0x338] sm:$0xf]
      %v628 = vld [vmem:[%s212 + $0x33c] sm:$0xff]
      %v629 = vld [vmem:[%s212 + $0x344] sm:$0xf]
      %v630 = vld [vmem:[%s212 + $0x348] sm:$0xff]
      %v631 = vld [vmem:[%s212 + $0x350] sm:$0xf]
      %v632 = vld [vmem:[%s212 + $0x354] sm:$0xff]
      %v633 = vld [vmem:[%s212 + $0x35c] sm:$0xf]
      %v634 = vld [vmem:[%s212 + $0x360] sm:$0xff]
      %v635 = vld [vmem:[%s212 + $0x368] sm:$0xf]
      %v636 = vld [vmem:[%s212 + $0x36c] sm:$0xff]
      %v637 = vld [vmem:[%s212 + $0x374] sm:$0xf]
      %v638 = vld [vmem:[%s212 + $0x378] sm:$0xff]
      %v639 = vld [vmem:[%s212 + $0x380] sm:$0xf]
      %v640 = vld [vmem:[%s212 + $0x384] sm:$0xff]
      %v641 = vld [vmem:[%s212 + $0x38c] sm:$0xf]
      %v642 = vld [vmem:[%s212 + $0x390] sm:$0xff]
      %v643 = vld [vmem:[%s212 + $0x398] sm:$0xf]
      %v644 = vld [vmem:[%s212 + $0x39c] sm:$0xff]
      %v645 = vld [vmem:[%s212 + $0x3a4] sm:$0xf]
      %v646 = vld [vmem:[%s212 + $0x3a8] sm:$0xff]
      %v647 = vld [vmem:[%s212 + $0x3b0] sm:$0xf]
      %v648 = vld [vmem:[%s212 + $0x3b4] sm:$0xff]
      %v649 = vld [vmem:[%s212 + $0x3bc] sm:$0xf]
      %v650 = vld [vmem:[%s212 + $0x3c0] sm:$0xff]
      %v651 = vld [vmem:[%s212 + $0x3c8] sm:$0xf]
      %v652 = vld [vmem:[%s212 + $0x3cc] sm:$0xff]
      %v653 = vld [vmem:[%s212 + $0x3d4] sm:$0xf]
      %v654 = vld [vmem:[%s212 + $0x3d8] sm:$0xff]
      %v655 = vld [vmem:[%s212 + $0x3e0] sm:$0xf]
      %v656 = vld [vmem:[%s212 + $0x3e4] sm:$0xff]
      %v657 = vld [vmem:[%s212 + $0x3ec] sm:$0xf]
      %v658 = vld [vmem:[%s212 + $0x3f0] sm:$0xff]
      %v659 = vld [vmem:[%s212 + $0x3f8] sm:$0xf]
      %v660 = vld [vmem:[%s212 + $0x3fc] sm:$0xff]
      %v661 = vld [vmem:[%s212 + $0x404] sm:$0xf]
      %v662 = vld [vmem:[%s212 + $0x408] sm:$0xff]
      %v663 = vld [vmem:[%s212 + $0x410] sm:$0xf]
      %v664 = vld [vmem:[%s212 + $0x414] sm:$0xff]
      %v665 = vld [vmem:[%s212 + $0x41c] sm:$0xf]
      %v666 = vld [vmem:[%s212 + $0x420] sm:$0xff]
      %v667 = vld [vmem:[%s212 + $0x428] sm:$0xf]
      %v668 = vld [vmem:[%s212 + $0x42c] sm:$0xff]
      %v669 = vld [vmem:[%s212 + $0x434] sm:$0xf]
      %v670 = vld [vmem:[%s212 + $0x438] sm:$0xff]
      %v671 = vld [vmem:[%s212 + $0x440] sm:$0xf]
      %v672 = vld [vmem:[%s212 + $0x444] sm:$0xff]
      %v673 = vld [vmem:[%s212 + $0x44c] sm:$0xf]
      %v674 = vld [vmem:[%s212 + $0x450] sm:$0xff]
      %v675 = vld [vmem:[%s212 + $0x458] sm:$0xf]
      %v676 = vld [vmem:[%s212 + $0x45c] sm:$0xff]
      %v677 = vld [vmem:[%s212 + $0x464] sm:$0xf]
      %v678 = vld [vmem:[%s212 + $0x468] sm:$0xff]
      %v679 = vld [vmem:[%s212 + $0x470] sm:$0xf]
      %v680 = vld [vmem:[%s212 + $0x474] sm:$0xff]
      %v681 = vld [vmem:[%s212 + $0x47c] sm:$0xf]
      %v682 = vld [vmem:[%s212 + $0x480] sm:$0xff]
      %v683 = vld [vmem:[%s212 + $0x488] sm:$0xf]
      %v684 = vld [vmem:[%s212 + $0x48c] sm:$0xff]
      %v685 = vld [vmem:[%s212 + $0x494] sm:$0xf]
      %v686 = vld [vmem:[%s212 + $0x498] sm:$0xff]
      %v687 = vld [vmem:[%s212 + $0x4a0] sm:$0xf]
      %v688 = vld [vmem:[%s212 + $0x4a4] sm:$0xff]
      %v689 = vld [vmem:[%s212 + $0x4ac] sm:$0xf]
      %v690 = vld [vmem:[%s212 + $0x4b0] sm:$0xff]
      %v691 = vld [vmem:[%s212 + $0x4b8] sm:$0xf]
      %v692 = vld [vmem:[%s212 + $0x4bc] sm:$0xff]
      %v693 = vld [vmem:[%s212 + $0x4c4] sm:$0xf]
      %v694 = vld [vmem:[%s212 + $0x4c8] sm:$0xff]
      %v695 = vld [vmem:[%s212 + $0x4d0] sm:$0xf]
      %v696 = vld [vmem:[%s212 + $0x4d4] sm:$0xff]
      %v697 = vld [vmem:[%s212 + $0x4dc] sm:$0xf]
      %v698 = vld [vmem:[%s212 + $0x4e0] sm:$0xff]
      %v699 = vld [vmem:[%s212 + $0x4e8] sm:$0xf]
      %v700 = vld [vmem:[%s212 + $0x4ec] sm:$0xff]
      %v701 = vld [vmem:[%s212 + $0x4f4] sm:$0xf]
      %v702 = vld [vmem:[%s212 + $0x4f8] sm:$0xff]
      %v703 = vld [vmem:[%s212 + $0x500] sm:$0xf]
      %v704 = vld [vmem:[%s212 + $0x504] sm:$0xff]
      %v705 = vld [vmem:[%s212 + $0x50c] sm:$0xf]
      %v706 = vld [vmem:[%s212 + $0x510] sm:$0xff]
      %v707 = vld [vmem:[%s212 + $0x518] sm:$0xf]
      %v708 = vld [vmem:[%s212 + $0x51c] sm:$0xff]
      %v709 = vld [vmem:[%s212 + $0x524] sm:$0xf]
      %v710 = vld [vmem:[%s212 + $0x528] sm:$0xff]
      %v711 = vld [vmem:[%s212 + $0x530] sm:$0xf]
      %v712 = vld [vmem:[%s212 + $0x534] sm:$0xff]
      %v713 = vld [vmem:[%s212 + $0x53c] sm:$0xf]
      %v714 = vld [vmem:[%s212 + $0x540] sm:$0xff]
      %v715 = vld [vmem:[%s212 + $0x548] sm:$0xf]
      %v716 = vld [vmem:[%s212 + $0x54c] sm:$0xff]
      %v717 = vld [vmem:[%s212 + $0x554] sm:$0xf]
      %v718 = vld [vmem:[%s212 + $0x558] sm:$0xff]
      %v719 = vld [vmem:[%s212 + $0x560] sm:$0xf]
      %v720 = vld [vmem:[%s212 + $0x564] sm:$0xff]
      %v721 = vld [vmem:[%s212 + $0x56c] sm:$0xf]
      %v722 = vld [vmem:[%s212 + $0x570] sm:$0xff]
      %v723 = vld [vmem:[%s212 + $0x578] sm:$0xf]
      %v724 = vld [vmem:[%s212 + $0x57c] sm:$0xff]
      %v725 = vld [vmem:[%s212 + $0x584] sm:$0xf]
      %v726 = vld [vmem:[%s212 + $0x588] sm:$0xff]
      %v727 = vld [vmem:[%s212 + $0x590] sm:$0xf]
      %v728 = vld [vmem:[%s212 + $0x594] sm:$0xff]
      %v729 = vld [vmem:[%s212 + $0x59c] sm:$0xf]
      %v730 = vld [vmem:[%s212 + $0x5a0] sm:$0xff]
      %v731 = vld [vmem:[%s212 + $0x5a8] sm:$0xf]
      %v732 = vld [vmem:[%s212 + $0x5ac] sm:$0xff]
      %v733 = vld [vmem:[%s212 + $0x5b4] sm:$0xf]
      %v734 = vld [vmem:[%s212 + $0x5b8] sm:$0xff]
      %v735 = vld [vmem:[%s212 + $0x5c0] sm:$0xf]
      %v736 = vld [vmem:[%s212 + $0x5c4] sm:$0xff]
      %v737 = vld [vmem:[%s212 + $0x5cc] sm:$0xf]
      %v738 = vld [vmem:[%s212 + $0x5d0] sm:$0xff]
      %v739 = vld [vmem:[%s212 + $0x5d8] sm:$0xf]
      %v740 = vld [vmem:[%s212 + $0x5dc] sm:$0xff]
      %v741 = vld [vmem:[%s212 + $0x5e4] sm:$0xf]
      %v742 = vld [vmem:[%s212 + $0x5e8] sm:$0xff]
      %v743 = vld [vmem:[%s212 + $0x5f0] sm:$0xf]
      %v744 = vld [vmem:[%s212 + $0x5f4] sm:$0xff]
      %v745 = vld [vmem:[%s212 + $0x5fc] sm:$0xf]
      %v746 = vld [vmem:[%s212 + $0x600] sm:$0xff]
      %v747 = vld [vmem:[%s212 + $0x608] sm:$0xf]
      %v748 = vld [vmem:[%s212 + $0x60c] sm:$0xff]
      %v749 = vld [vmem:[%s212 + $0x614] sm:$0xf]
      %v750 = vld [vmem:[%s212 + $0x618] sm:$0xff]
      %v751 = vld [vmem:[%s212 + $0x620] sm:$0xf]
      %v752 = vld [vmem:[%s212 + $0x624] sm:$0xff]
      %v753 = vld [vmem:[%s212 + $0x62c] sm:$0xf]
      %v754 = vld [vmem:[%s212 + $0x630] sm:$0xff]
      %v755 = vld [vmem:[%s212 + $0x638] sm:$0xf]
      %v756 = vld [vmem:[%s212 + $0x63c] sm:$0xff]
      %v757 = vld [vmem:[%s212 + $0x644] sm:$0xf]
      %v758 = vld [vmem:[%s212 + $0x648] sm:$0xff]
      %v759 = vld [vmem:[%s212 + $0x650] sm:$0xf]
      %v760 = vld [vmem:[%s212 + $0x654] sm:$0xff]
      %v761 = vld [vmem:[%s212 + $0x65c] sm:$0xf]
      %v762 = vld [vmem:[%s212 + $0x660] sm:$0xff]
      %v763 = vld [vmem:[%s212 + $0x668] sm:$0xf]
      %v764 = vld [vmem:[%s212 + $0x66c] sm:$0xff]
      %v765 = vld [vmem:[%s212 + $0x674] sm:$0xf]
      %v766 = vld [vmem:[%s212 + $0x678] sm:$0xff]
      %v767 = vld [vmem:[%s212 + $0x680] sm:$0xf]
      %v768 = vld [vmem:[%s212 + $0x684] sm:$0xff]
      %v769 = vld [vmem:[%s212 + $0x68c] sm:$0xf]
      %v770 = vld [vmem:[%s212 + $0x690] sm:$0xff]
      %v771 = vld [vmem:[%s212 + $0x698] sm:$0xf]
      %v772 = vld [vmem:[%s212 + $0x69c] sm:$0xff]
      %v773 = vld [vmem:[%s212 + $0x6a4] sm:$0xf]
      %v774 = vld [vmem:[%s212 + $0x6a8] sm:$0xff]
      %v775 = vld [vmem:[%s212 + $0x6b0] sm:$0xf]
      %v776 = vld [vmem:[%s212 + $0x6b4] sm:$0xff]
      %v777 = vld [vmem:[%s212 + $0x6bc] sm:$0xf]
      %v1066 = vunpack.c.l.b16 %v490
      %v1067 = vunpack.c.h.b16 %v490
      %v1068 = vunpack.c.l.b16 %v491
      %v1069 = vunpack.c.l.b16 %v492
      %v1070 = vunpack.c.h.b16 %v492
      %v1071 = vunpack.c.l.b16 %v493
      %v1072 = vunpack.c.l.b16 %v494
      %v1073 = vunpack.c.h.b16 %v494
      %v1074 = vunpack.c.l.b16 %v495
      %v1075 = vunpack.c.l.b16 %v496
      %v1076 = vunpack.c.h.b16 %v496
      %v1077 = vunpack.c.l.b16 %v497
      %v1078 = vunpack.c.l.b16 %v498
      %v1079 = vunpack.c.h.b16 %v498
      %v1080 = vunpack.c.l.b16 %v499
      %v1081 = vunpack.c.l.b16 %v500
      %v1082 = vunpack.c.h.b16 %v500
      %v1083 = vunpack.c.l.b16 %v501
      %v1084 = vunpack.c.l.b16 %v502
      %v1085 = vunpack.c.h.b16 %v502
      %v1086 = vunpack.c.l.b16 %v503
      %v1087 = vunpack.c.l.b16 %v504
      %v1088 = vunpack.c.h.b16 %v504
      %v1089 = vunpack.c.l.b16 %v505
      %v1090 = vunpack.c.l.b16 %v506
      %v1091 = vunpack.c.h.b16 %v506
      %v1092 = vunpack.c.l.b16 %v507
      %v1093 = vunpack.c.l.b16 %v508
      %v1094 = vunpack.c.h.b16 %v508
      %v1095 = vunpack.c.l.b16 %v509
      %v1096 = vunpack.c.l.b16 %v510
      %v1097 = vunpack.c.h.b16 %v510
      %v1098 = vunpack.c.l.b16 %v511
      %v1099 = vunpack.c.l.b16 %v512
      %v1100 = vunpack.c.h.b16 %v512
      %v1101 = vunpack.c.l.b16 %v513
      %v1102 = vunpack.c.l.b16 %v514
      %v1103 = vunpack.c.h.b16 %v514
      %v1104 = vunpack.c.l.b16 %v515
      %v1105 = vunpack.c.l.b16 %v516
      %v1106 = vunpack.c.h.b16 %v516
      %v1107 = vunpack.c.l.b16 %v517
      %v1108 = vunpack.c.l.b16 %v518
      %v1109 = vunpack.c.h.b16 %v518
      %v1110 = vunpack.c.l.b16 %v519
      %v1111 = vunpack.c.l.b16 %v520
      %v1112 = vunpack.c.h.b16 %v520
      %v1113 = vunpack.c.l.b16 %v521
      %v1114 = vunpack.c.l.b16 %v522
      %v1115 = vunpack.c.h.b16 %v522
      %v1116 = vunpack.c.l.b16 %v523
      %v1117 = vunpack.c.l.b16 %v524
      %v1118 = vunpack.c.h.b16 %v524
      %v1119 = vunpack.c.l.b16 %v525
      %v1120 = vunpack.c.l.b16 %v526
      %v1121 = vunpack.c.h.b16 %v526
      %v1122 = vunpack.c.l.b16 %v527
      %v1123 = vunpack.c.l.b16 %v528
      %v1124 = vunpack.c.h.b16 %v528
      %v1125 = vunpack.c.l.b16 %v529
      %v1126 = vunpack.c.l.b16 %v530
      %v1127 = vunpack.c.h.b16 %v530
      %v1128 = vunpack.c.l.b16 %v531
      %v1129 = vunpack.c.l.b16 %v532
      %v1130 = vunpack.c.h.b16 %v532
      %v1131 = vunpack.c.l.b16 %v533
      %v1132 = vunpack.c.l.b16 %v534
      %v1133 = vunpack.c.h.b16 %v534
      %v1134 = vunpack.c.l.b16 %v535
      %v1135 = vunpack.c.l.b16 %v536
      %v1136 = vunpack.c.h.b16 %v536
      %v1137 = vunpack.c.l.b16 %v537
      %v1138 = vunpack.c.l.b16 %v538
      %v1139 = vunpack.c.h.b16 %v538
      %v1140 = vunpack.c.l.b16 %v539
      %v1141 = vunpack.c.l.b16 %v540
      %v1142 = vunpack.c.h.b16 %v540
      %v1143 = vunpack.c.l.b16 %v541
      %v1144 = vunpack.c.l.b16 %v542
      %v1145 = vunpack.c.h.b16 %v542
      %v1146 = vunpack.c.l.b16 %v543
      %v1147 = vunpack.c.l.b16 %v544
      %v1148 = vunpack.c.h.b16 %v544
      %v1149 = vunpack.c.l.b16 %v545
      %v1150 = vunpack.c.l.b16 %v546
      %v1151 = vunpack.c.h.b16 %v546
      %v1152 = vunpack.c.l.b16 %v547
      %v1153 = vunpack.c.l.b16 %v548
      %v1154 = vunpack.c.h.b16 %v548
      %v1155 = vunpack.c.l.b16 %v549
      %v1156 = vunpack.c.l.b16 %v550
      %v1157 = vunpack.c.h.b16 %v550
      %v1158 = vunpack.c.l.b16 %v551
      %v1159 = vunpack.c.l.b16 %v552
      %v1160 = vunpack.c.h.b16 %v552
      %v1161 = vunpack.c.l.b16 %v553
      %v1162 = vunpack.c.l.b16 %v554
      %v1163 = vunpack.c.h.b16 %v554
      %v1164 = vunpack.c.l.b16 %v555
      %v1165 = vunpack.c.l.b16 %v556
      %v1166 = vunpack.c.h.b16 %v556
      %v1167 = vunpack.c.l.b16 %v557
      %v1168 = vunpack.c.l.b16 %v558
      %v1169 = vunpack.c.h.b16 %v558
      %v1170 = vunpack.c.l.b16 %v559
      %v1171 = vunpack.c.l.b16 %v560
      %v1172 = vunpack.c.h.b16 %v560
      %v1173 = vunpack.c.l.b16 %v561
      %v1174 = vunpack.c.l.b16 %v562
      %v1175 = vunpack.c.h.b16 %v562
      %v1176 = vunpack.c.l.b16 %v563
      %v1177 = vunpack.c.l.b16 %v564
      %v1178 = vunpack.c.h.b16 %v564
      %v1179 = vunpack.c.l.b16 %v565
      %v1180 = vunpack.c.l.b16 %v566
      %v1181 = vunpack.c.h.b16 %v566
      %v1182 = vunpack.c.l.b16 %v567
      %v1183 = vunpack.c.l.b16 %v568
      %v1184 = vunpack.c.h.b16 %v568
      %v1185 = vunpack.c.l.b16 %v569
      %v1186 = vunpack.c.l.b16 %v570
      %v1187 = vunpack.c.h.b16 %v570
      %v1188 = vunpack.c.l.b16 %v571
      %v1189 = vunpack.c.l.b16 %v572
      %v1190 = vunpack.c.h.b16 %v572
      %v1191 = vunpack.c.l.b16 %v573
      %v1192 = vunpack.c.l.b16 %v574
      %v1193 = vunpack.c.h.b16 %v574
      %v1194 = vunpack.c.l.b16 %v575
      %v1195 = vunpack.c.l.b16 %v576
      %v1196 = vunpack.c.h.b16 %v576
      %v1197 = vunpack.c.l.b16 %v577
      %v1198 = vunpack.c.l.b16 %v578
      %v1199 = vunpack.c.h.b16 %v578
      %v1200 = vunpack.c.l.b16 %v579
      %v1201 = vunpack.c.l.b16 %v580
      %v1202 = vunpack.c.h.b16 %v580
      %v1203 = vunpack.c.l.b16 %v581
      %v1204 = vunpack.c.l.b16 %v582
      %v1205 = vunpack.c.h.b16 %v582
      %v1206 = vunpack.c.l.b16 %v583
      %v1207 = vunpack.c.l.b16 %v584
      %v1208 = vunpack.c.h.b16 %v584
      %v1209 = vunpack.c.l.b16 %v585
      %v1210 = vunpack.c.l.b16 %v586
      %v1211 = vunpack.c.h.b16 %v586
      %v1212 = vunpack.c.l.b16 %v587
      %v1213 = vunpack.c.l.b16 %v588
      %v1214 = vunpack.c.h.b16 %v588
      %v1215 = vunpack.c.l.b16 %v589
      %v1216 = vunpack.c.l.b16 %v590
      %v1217 = vunpack.c.h.b16 %v590
      %v1218 = vunpack.c.l.b16 %v591
      %v1219 = vunpack.c.l.b16 %v592
      %v1220 = vunpack.c.h.b16 %v592
      %v1221 = vunpack.c.l.b16 %v593
      %v1222 = vunpack.c.l.b16 %v594
      %v1223 = vunpack.c.h.b16 %v594
      %v1224 = vunpack.c.l.b16 %v595
      %v1225 = vunpack.c.l.b16 %v596
      %v1226 = vunpack.c.h.b16 %v596
      %v1227 = vunpack.c.l.b16 %v597
      %v1228 = vunpack.c.l.b16 %v598
      %v1229 = vunpack.c.h.b16 %v598
      %v1230 = vunpack.c.l.b16 %v599
      %v1231 = vunpack.c.l.b16 %v600
      %v1232 = vunpack.c.h.b16 %v600
      %v1233 = vunpack.c.l.b16 %v601
      %v1234 = vunpack.c.l.b16 %v602
      %v1235 = vunpack.c.h.b16 %v602
      %v1236 = vunpack.c.l.b16 %v603
      %v1237 = vunpack.c.l.b16 %v604
      %v1238 = vunpack.c.h.b16 %v604
      %v1239 = vunpack.c.l.b16 %v605
      %v1240 = vunpack.c.l.b16 %v606
      %v1241 = vunpack.c.h.b16 %v606
      %v1242 = vunpack.c.l.b16 %v607
      %v1243 = vunpack.c.l.b16 %v608
      %v1244 = vunpack.c.h.b16 %v608
      %v1245 = vunpack.c.l.b16 %v609
      %v1246 = vunpack.c.l.b16 %v610
      %v1247 = vunpack.c.h.b16 %v610
      %v1248 = vunpack.c.l.b16 %v611
      %v1249 = vunpack.c.l.b16 %v612
      %v1250 = vunpack.c.h.b16 %v612
      %v1251 = vunpack.c.l.b16 %v613
      %v1252 = vunpack.c.l.b16 %v614
      %v1253 = vunpack.c.h.b16 %v614
      %v1254 = vunpack.c.l.b16 %v615
      %v1255 = vunpack.c.l.b16 %v616
      %v1256 = vunpack.c.h.b16 %v616
      %v1257 = vunpack.c.l.b16 %v617
      %v1258 = vunpack.c.l.b16 %v618
      %v1259 = vunpack.c.h.b16 %v618
      %v1260 = vunpack.c.l.b16 %v619
      %v1261 = vunpack.c.l.b16 %v620
      %v1262 = vunpack.c.h.b16 %v620
      %v1263 = vunpack.c.l.b16 %v621
      %v1264 = vunpack.c.l.b16 %v622
      %v1265 = vunpack.c.h.b16 %v622
      %v1266 = vunpack.c.l.b16 %v623
      %v1267 = vunpack.c.l.b16 %v624
      %v1268 = vunpack.c.h.b16 %v624
      %v1269 = vunpack.c.l.b16 %v625
      %v1270 = vunpack.c.l.b16 %v626
      %v1271 = vunpack.c.h.b16 %v626
      %v1272 = vunpack.c.l.b16 %v627
      %v1273 = vunpack.c.l.b16 %v628
      %v1274 = vunpack.c.h.b16 %v628
      %v1275 = vunpack.c.l.b16 %v629
      %v1276 = vunpack.c.l.b16 %v630
      %v1277 = vunpack.c.h.b16 %v630
      %v1278 = vunpack.c.l.b16 %v631
      %v1279 = vunpack.c.l.b16 %v632
      %v1280 = vunpack.c.h.b16 %v632
      %v1281 = vunpack.c.l.b16 %v633
      %v1282 = vunpack.c.l.b16 %v634
      %v1283 = vunpack.c.h.b16 %v634
      %v1284 = vunpack.c.l.b16 %v635
      %v1285 = vunpack.c.l.b16 %v636
      %v1286 = vunpack.c.h.b16 %v636
      %v1287 = vunpack.c.l.b16 %v637
      %v1288 = vunpack.c.l.b16 %v638
      %v1289 = vunpack.c.h.b16 %v638
      %v1290 = vunpack.c.l.b16 %v639
      %v1291 = vunpack.c.l.b16 %v640
      %v1292 = vunpack.c.h.b16 %v640
      %v1293 = vunpack.c.l.b16 %v641
      %v1294 = vunpack.c.l.b16 %v642
      %v1295 = vunpack.c.h.b16 %v642
      %v1296 = vunpack.c.l.b16 %v643
      %v1297 = vunpack.c.l.b16 %v644
      %v1298 = vunpack.c.h.b16 %v644
      %v1299 = vunpack.c.l.b16 %v645
      %v1300 = vunpack.c.l.b16 %v646
      %v1301 = vunpack.c.h.b16 %v646
      %v1302 = vunpack.c.l.b16 %v647
      %v1303 = vunpack.c.l.b16 %v648
      %v1304 = vunpack.c.h.b16 %v648
      %v1305 = vunpack.c.l.b16 %v649
      %v1306 = vunpack.c.l.b16 %v650
      %v1307 = vunpack.c.h.b16 %v650
      %v1308 = vunpack.c.l.b16 %v651
      %v1309 = vunpack.c.l.b16 %v652
      %v1310 = vunpack.c.h.b16 %v652
      %v1311 = vunpack.c.l.b16 %v653
      %v1312 = vunpack.c.l.b16 %v654
      %v1313 = vunpack.c.h.b16 %v654
      %v1314 = vunpack.c.l.b16 %v655
      %v1315 = vunpack.c.l.b16 %v656
      %v1316 = vunpack.c.h.b16 %v656
      %v1317 = vunpack.c.l.b16 %v657
      %v1318 = vunpack.c.l.b16 %v658
      %v1319 = vunpack.c.h.b16 %v658
      %v1320 = vunpack.c.l.b16 %v659
      %v1321 = vunpack.c.l.b16 %v660
      %v1322 = vunpack.c.h.b16 %v660
      %v1323 = vunpack.c.l.b16 %v661
      %v1324 = vunpack.c.l.b16 %v662
      %v1325 = vunpack.c.h.b16 %v662
      %v1326 = vunpack.c.l.b16 %v663
      %v1327 = vunpack.c.l.b16 %v664
      %v1328 = vunpack.c.h.b16 %v664
      %v1329 = vunpack.c.l.b16 %v665
      %v1330 = vunpack.c.l.b16 %v666
      %v1331 = vunpack.c.h.b16 %v666
      %v1332 = vunpack.c.l.b16 %v667
      %v1333 = vunpack.c.l.b16 %v668
      %v1334 = vunpack.c.h.b16 %v668
      %v1335 = vunpack.c.l.b16 %v669
      %v1336 = vunpack.c.l.b16 %v670
      %v1337 = vunpack.c.h.b16 %v670
      %v1338 = vunpack.c.l.b16 %v671
      %v1339 = vunpack.c.l.b16 %v672
      %v1340 = vunpack.c.h.b16 %v672
      %v1341 = vunpack.c.l.b16 %v673
      %v1342 = vunpack.c.l.b16 %v674
      %v1343 = vunpack.c.h.b16 %v674
      %v1344 = vunpack.c.l.b16 %v675
      %v1345 = vunpack.c.l.b16 %v676
      %v1346 = vunpack.c.h.b16 %v676
      %v1347 = vunpack.c.l.b16 %v677
      %v1348 = vunpack.c.l.b16 %v678
      %v1349 = vunpack.c.h.b16 %v678
      %v1350 = vunpack.c.l.b16 %v679
      %v1351 = vunpack.c.l.b16 %v680
      %v1352 = vunpack.c.h.b16 %v680
      %v1353 = vunpack.c.l.b16 %v681
      %v1354 = vunpack.c.l.b16 %v682
      %v1355 = vunpack.c.h.b16 %v682
      %v1356 = vunpack.c.l.b16 %v683
      %v1357 = vunpack.c.l.b16 %v684
      %v1358 = vunpack.c.h.b16 %v684
      %v1359 = vunpack.c.l.b16 %v685
      %v1360 = vunpack.c.l.b16 %v686
      %v1361 = vunpack.c.h.b16 %v686
      %v1362 = vunpack.c.l.b16 %v687
      %v1363 = vunpack.c.l.b16 %v688
      %v1364 = vunpack.c.h.b16 %v688
      %v1365 = vunpack.c.l.b16 %v689
      %v1366 = vunpack.c.l.b16 %v690
      %v1367 = vunpack.c.h.b16 %v690
      %v1368 = vunpack.c.l.b16 %v691
      %v1369 = vunpack.c.l.b16 %v692
      %v1370 = vunpack.c.h.b16 %v692
      %v1371 = vunpack.c.l.b16 %v693
      %v1372 = vunpack.c.l.b16 %v694
      %v1373 = vunpack.c.h.b16 %v694
      %v1374 = vunpack.c.l.b16 %v695
      %v1375 = vunpack.c.l.b16 %v696
      %v1376 = vunpack.c.h.b16 %v696
      %v1377 = vunpack.c.l.b16 %v697
      %v1378 = vunpack.c.l.b16 %v698
      %v1379 = vunpack.c.h.b16 %v698
      %v1380 = vunpack.c.l.b16 %v699
      %v1381 = vunpack.c.l.b16 %v700
      %v1382 = vunpack.c.h.b16 %v700
      %v1383 = vunpack.c.l.b16 %v701
      %v1384 = vunpack.c.l.b16 %v702
      %v1385 = vunpack.c.h.b16 %v702
      %v1386 = vunpack.c.l.b16 %v703
      %v1387 = vunpack.c.l.b16 %v704
      %v1388 = vunpack.c.h.b16 %v704
      %v1389 = vunpack.c.l.b16 %v705
      %v1390 = vunpack.c.l.b16 %v706
      %v1391 = vunpack.c.h.b16 %v706
      %v1392 = vunpack.c.l.b16 %v707
      %v1393 = vunpack.c.l.b16 %v708
      %v1394 = vunpack.c.h.b16 %v708
      %v1395 = vunpack.c.l.b16 %v709
      %v1396 = vunpack.c.l.b16 %v710
      %v1397 = vunpack.c.h.b16 %v710
      %v1398 = vunpack.c.l.b16 %v711
      %v1399 = vunpack.c.l.b16 %v712
      %v1400 = vunpack.c.h.b16 %v712
      %v1401 = vunpack.c.l.b16 %v713
      %v1402 = vunpack.c.l.b16 %v714
      %v1403 = vunpack.c.h.b16 %v714
      %v1404 = vunpack.c.l.b16 %v715
      %v1405 = vunpack.c.l.b16 %v716
      %v1406 = vunpack.c.h.b16 %v716
      %v1407 = vunpack.c.l.b16 %v717
      %v1408 = vunpack.c.l.b16 %v718
      %v1409 = vunpack.c.h.b16 %v718
      %v1410 = vunpack.c.l.b16 %v719
      %v1411 = vunpack.c.l.b16 %v720
      %v1412 = vunpack.c.h.b16 %v720
      %v1413 = vunpack.c.l.b16 %v721
      %v1414 = vunpack.c.l.b16 %v722
      %v1415 = vunpack.c.h.b16 %v722
      %v1416 = vunpack.c.l.b16 %v723
      %v1417 = vunpack.c.l.b16 %v724
      %v1418 = vunpack.c.h.b16 %v724
      %v1419 = vunpack.c.l.b16 %v725
      %v1420 = vunpack.c.l.b16 %v726
      %v1421 = vunpack.c.h.b16 %v726
      %v1422 = vunpack.c.l.b16 %v727
      %v1423 = vunpack.c.l.b16 %v728
      %v1424 = vunpack.c.h.b16 %v728
      %v1425 = vunpack.c.l.b16 %v729
      %v1426 = vunpack.c.l.b16 %v730
      %v1427 = vunpack.c.h.b16 %v730
      %v1428 = vunpack.c.l.b16 %v731
      %v1429 = vunpack.c.l.b16 %v732
      %v1430 = vunpack.c.h.b16 %v732
      %v1431 = vunpack.c.l.b16 %v733
      %v1432 = vunpack.c.l.b16 %v734
      %v1433 = vunpack.c.h.b16 %v734
      %v1434 = vunpack.c.l.b16 %v735
      %v1435 = vunpack.c.l.b16 %v736
      %v1436 = vunpack.c.h.b16 %v736
      %v1437 = vunpack.c.l.b16 %v737
      %v1438 = vunpack.c.l.b16 %v738
      %v1439 = vunpack.c.h.b16 %v738
      %v1440 = vunpack.c.l.b16 %v739
      %v1441 = vunpack.c.l.b16 %v740
      %v1442 = vunpack.c.h.b16 %v740
      %v1443 = vunpack.c.l.b16 %v741
      %v1444 = vunpack.c.l.b16 %v742
      %v1445 = vunpack.c.h.b16 %v742
      %v1446 = vunpack.c.l.b16 %v743
      %v1447 = vunpack.c.l.b16 %v744
      %v1448 = vunpack.c.h.b16 %v744
      %v1449 = vunpack.c.l.b16 %v745
      %v1450 = vunpack.c.l.b16 %v746
      %v1451 = vunpack.c.h.b16 %v746
      %v1452 = vunpack.c.l.b16 %v747
      %v1453 = vunpack.c.l.b16 %v748
      %v1454 = vunpack.c.h.b16 %v748
      %v1455 = vunpack.c.l.b16 %v749
      %v1456 = vunpack.c.l.b16 %v750
      %v1457 = vunpack.c.h.b16 %v750
      %v1458 = vunpack.c.l.b16 %v751
      %v1459 = vunpack.c.l.b16 %v752
      %v1460 = vunpack.c.h.b16 %v752
      %v1461 = vunpack.c.l.b16 %v753
      %v1462 = vunpack.c.l.b16 %v754
      %v1463 = vunpack.c.h.b16 %v754
      %v1464 = vunpack.c.l.b16 %v755
      %v1465 = vunpack.c.l.b16 %v756
      %v1466 = vunpack.c.h.b16 %v756
      %v1467 = vunpack.c.l.b16 %v757
      %v1468 = vunpack.c.l.b16 %v758
      %v1469 = vunpack.c.h.b16 %v758
      %v1470 = vunpack.c.l.b16 %v759
      %v1471 = vunpack.c.l.b16 %v760
      %v1472 = vunpack.c.h.b16 %v760
      %v1473 = vunpack.c.l.b16 %v761
      %v1474 = vunpack.c.l.b16 %v762
      %v1475 = vunpack.c.h.b16 %v762
      %v1476 = vunpack.c.l.b16 %v763
      %v1477 = vunpack.c.l.b16 %v764
      %v1478 = vunpack.c.h.b16 %v764
      %v1479 = vunpack.c.l.b16 %v765
      %v1480 = vunpack.c.l.b16 %v766
      %v1481 = vunpack.c.h.b16 %v766
      %v1482 = vunpack.c.l.b16 %v767
      %v1483 = vunpack.c.l.b16 %v768
      %v1484 = vunpack.c.h.b16 %v768
      %v1485 = vunpack.c.l.b16 %v769
      %v1486 = vunpack.c.l.b16 %v770
      %v1487 = vunpack.c.h.b16 %v770
      %v1488 = vunpack.c.l.b16 %v771
      %v1489 = vunpack.c.l.b16 %v772
      %v1490 = vunpack.c.h.b16 %v772
      %v1491 = vunpack.c.l.b16 %v773
      %v1492 = vunpack.c.l.b16 %v774
      %v1493 = vunpack.c.h.b16 %v774
      %v1494 = vunpack.c.l.b16 %v775
      %v1495 = vunpack.c.l.b16 %v776
      %v1496 = vunpack.c.h.b16 %v776
      %v1497 = vunpack.c.l.b16 %v777
      %v1498 = vpack.c.b16 %v1069, %v1066
      %v1499 = vpack.c.b16 %v1070, %v1067
      %v1500 = vpack.c.b16 %v1071, %v1068
      %v1501 = vpack.c.b16 %v1075, %v1072
      %v1502 = vpack.c.b16 %v1076, %v1073
      %v1503 = vpack.c.b16 %v1077, %v1074
      %v1504 = vpack.c.b16 %v1081, %v1078
      %v1505 = vpack.c.b16 %v1082, %v1079
      %v1506 = vpack.c.b16 %v1083, %v1080
      %v1507 = vpack.c.b16 %v1087, %v1084
      %v1508 = vpack.c.b16 %v1088, %v1085
      %v1509 = vpack.c.b16 %v1089, %v1086
      %v1510 = vpack.c.b16 %v1093, %v1090
      %v1511 = vpack.c.b16 %v1094, %v1091
      %v1512 = vpack.c.b16 %v1095, %v1092
      %v1513 = vpack.c.b16 %v1099, %v1096
      %v1514 = vpack.c.b16 %v1100, %v1097
      %v1515 = vpack.c.b16 %v1101, %v1098
      %v1516 = vpack.c.b16 %v1105, %v1102
      %v1517 = vpack.c.b16 %v1106, %v1103
      %v1518 = vpack.c.b16 %v1107, %v1104
      %v1519 = vpack.c.b16 %v1111, %v1108
      %v1520 = vpack.c.b16 %v1112, %v1109
      %v1521 = vpack.c.b16 %v1113, %v1110
      %v1522 = vpack.c.b16 %v1117, %v1114
      %v1523 = vpack.c.b16 %v1118, %v1115
      %v1524 = vpack.c.b16 %v1119, %v1116
      %v1525 = vpack.c.b16 %v1123, %v1120
      %v1526 = vpack.c.b16 %v1124, %v1121
      %v1527 = vpack.c.b16 %v1125, %v1122
      %v1528 = vpack.c.b16 %v1129, %v1126
      %v1529 = vpack.c.b16 %v1130, %v1127
      %v1530 = vpack.c.b16 %v1131, %v1128
      %v1531 = vpack.c.b16 %v1135, %v1132
      %v1532 = vpack.c.b16 %v1136, %v1133
      %v1533 = vpack.c.b16 %v1137, %v1134
      %v1534 = vpack.c.b16 %v1141, %v1138
      %v1535 = vpack.c.b16 %v1142, %v1139
      %v1536 = vpack.c.b16 %v1143, %v1140
      %v1537 = vpack.c.b16 %v1147, %v1144
      %v1538 = vpack.c.b16 %v1148, %v1145
      %v1539 = vpack.c.b16 %v1149, %v1146
      %v1540 = vpack.c.b16 %v1153, %v1150
      %v1541 = vpack.c.b16 %v1154, %v1151
      %v1542 = vpack.c.b16 %v1155, %v1152
      %v1543 = vpack.c.b16 %v1159, %v1156
      %v1544 = vpack.c.b16 %v1160, %v1157
      %v1545 = vpack.c.b16 %v1161, %v1158
      %v1546 = vpack.c.b16 %v1165, %v1162
      %v1547 = vpack.c.b16 %v1166, %v1163
      %v1548 = vpack.c.b16 %v1167, %v1164
      %v1549 = vpack.c.b16 %v1171, %v1168
      %v1550 = vpack.c.b16 %v1172, %v1169
      %v1551 = vpack.c.b16 %v1173, %v1170
      %v1552 = vpack.c.b16 %v1177, %v1174
      %v1553 = vpack.c.b16 %v1178, %v1175
      %v1554 = vpack.c.b16 %v1179, %v1176
      %v1555 = vpack.c.b16 %v1183, %v1180
      %v1556 = vpack.c.b16 %v1184, %v1181
      %v1557 = vpack.c.b16 %v1185, %v1182
      %v1558 = vpack.c.b16 %v1189, %v1186
      %v1559 = vpack.c.b16 %v1190, %v1187
      %v1560 = vpack.c.b16 %v1191, %v1188
      %v1561 = vpack.c.b16 %v1195, %v1192
      %v1562 = vpack.c.b16 %v1196, %v1193
      %v1563 = vpack.c.b16 %v1197, %v1194
      %v1564 = vpack.c.b16 %v1201, %v1198
      %v1565 = vpack.c.b16 %v1202, %v1199
      %v1566 = vpack.c.b16 %v1203, %v1200
      %v1567 = vpack.c.b16 %v1207, %v1204
      %v1568 = vpack.c.b16 %v1208, %v1205
      %v1569 = vpack.c.b16 %v1209, %v1206
      %v1570 = vpack.c.b16 %v1213, %v1210
      %v1571 = vpack.c.b16 %v1214, %v1211
      %v1572 = vpack.c.b16 %v1215, %v1212
      %v1573 = vpack.c.b16 %v1219, %v1216
      %v1574 = vpack.c.b16 %v1220, %v1217
      %v1575 = vpack.c.b16 %v1221, %v1218
      %v1576 = vpack.c.b16 %v1225, %v1222
      %v1577 = vpack.c.b16 %v1226, %v1223
      %v1578 = vpack.c.b16 %v1227, %v1224
      %v1579 = vpack.c.b16 %v1231, %v1228
      %v1580 = vpack.c.b16 %v1232, %v1229
      %v1581 = vpack.c.b16 %v1233, %v1230
      %v1582 = vpack.c.b16 %v1237, %v1234
      %v1583 = vpack.c.b16 %v1238, %v1235
      %v1584 = vpack.c.b16 %v1239, %v1236
      %v1585 = vpack.c.b16 %v1243, %v1240
      %v1586 = vpack.c.b16 %v1244, %v1241
      %v1587 = vpack.c.b16 %v1245, %v1242
      %v1588 = vpack.c.b16 %v1249, %v1246
      %v1589 = vpack.c.b16 %v1250, %v1247
      %v1590 = vpack.c.b16 %v1251, %v1248
      %v1591 = vpack.c.b16 %v1255, %v1252
      %v1592 = vpack.c.b16 %v1256, %v1253
      %v1593 = vpack.c.b16 %v1257, %v1254
      %v1594 = vpack.c.b16 %v1261, %v1258
      %v1595 = vpack.c.b16 %v1262, %v1259
      %v1596 = vpack.c.b16 %v1263, %v1260
      %v1597 = vpack.c.b16 %v1267, %v1264
      %v1598 = vpack.c.b16 %v1268, %v1265
      %v1599 = vpack.c.b16 %v1269, %v1266
      %v1600 = vpack.c.b16 %v1273, %v1270
      %v1601 = vpack.c.b16 %v1274, %v1271
      %v1602 = vpack.c.b16 %v1275, %v1272
      %v1603 = vpack.c.b16 %v1279, %v1276
      %v1604 = vpack.c.b16 %v1280, %v1277
      %v1605 = vpack.c.b16 %v1281, %v1278
      %v1606 = vpack.c.b16 %v1285, %v1282
      %v1607 = vpack.c.b16 %v1286, %v1283
      %v1608 = vpack.c.b16 %v1287, %v1284
      %v1609 = vpack.c.b16 %v1291, %v1288
      %v1610 = vpack.c.b16 %v1292, %v1289
      %v1611 = vpack.c.b16 %v1293, %v1290
      %v1612 = vpack.c.b16 %v1297, %v1294
      %v1613 = vpack.c.b16 %v1298, %v1295
      %v1614 = vpack.c.b16 %v1299, %v1296
      %v1615 = vpack.c.b16 %v1303, %v1300
      %v1616 = vpack.c.b16 %v1304, %v1301
      %v1617 = vpack.c.b16 %v1305, %v1302
      %v1618 = vpack.c.b16 %v1309, %v1306
      %v1619 = vpack.c.b16 %v1310, %v1307
      %v1620 = vpack.c.b16 %v1311, %v1308
      %v1621 = vpack.c.b16 %v1315, %v1312
      %v1622 = vpack.c.b16 %v1316, %v1313
      %v1623 = vpack.c.b16 %v1317, %v1314
      %v1624 = vpack.c.b16 %v1321, %v1318
      %v1625 = vpack.c.b16 %v1322, %v1319
      %v1626 = vpack.c.b16 %v1323, %v1320
      %v1627 = vpack.c.b16 %v1327, %v1324
      %v1628 = vpack.c.b16 %v1328, %v1325
      %v1629 = vpack.c.b16 %v1329, %v1326
      %v1630 = vpack.c.b16 %v1333, %v1330
      %v1631 = vpack.c.b16 %v1334, %v1331
      %v1632 = vpack.c.b16 %v1335, %v1332
      %v1633 = vpack.c.b16 %v1339, %v1336
      %v1634 = vpack.c.b16 %v1340, %v1337
      %v1635 = vpack.c.b16 %v1341, %v1338
      %v1636 = vpack.c.b16 %v1345, %v1342
      %v1637 = vpack.c.b16 %v1346, %v1343
      %v1638 = vpack.c.b16 %v1347, %v1344
      %v1639 = vpack.c.b16 %v1351, %v1348
      %v1640 = vpack.c.b16 %v1352, %v1349
      %v1641 = vpack.c.b16 %v1353, %v1350
      %v1642 = vpack.c.b16 %v1357, %v1354
      %v1643 = vpack.c.b16 %v1358, %v1355
      %v1644 = vpack.c.b16 %v1359, %v1356
      %v1645 = vpack.c.b16 %v1363, %v1360
      %v1646 = vpack.c.b16 %v1364, %v1361
      %v1647 = vpack.c.b16 %v1365, %v1362
      %v1648 = vpack.c.b16 %v1369, %v1366
      %v1649 = vpack.c.b16 %v1370, %v1367
      %v1650 = vpack.c.b16 %v1371, %v1368
      %v1651 = vpack.c.b16 %v1375, %v1372
      %v1652 = vpack.c.b16 %v1376, %v1373
      %v1653 = vpack.c.b16 %v1377, %v1374
      %v1654 = vpack.c.b16 %v1381, %v1378
      %v1655 = vpack.c.b16 %v1382, %v1379
      %v1656 = vpack.c.b16 %v1383, %v1380
      %v1657 = vpack.c.b16 %v1387, %v1384
      %v1658 = vpack.c.b16 %v1388, %v1385
      %v1659 = vpack.c.b16 %v1389, %v1386
      %v1660 = vpack.c.b16 %v1393, %v1390
      %v1661 = vpack.c.b16 %v1394, %v1391
      %v1662 = vpack.c.b16 %v1395, %v1392
      %v1663 = vpack.c.b16 %v1399, %v1396
      %v1664 = vpack.c.b16 %v1400, %v1397
      %v1665 = vpack.c.b16 %v1401, %v1398
      %v1666 = vpack.c.b16 %v1405, %v1402
      %v1667 = vpack.c.b16 %v1406, %v1403
      %v1668 = vpack.c.b16 %v1407, %v1404
      %v1669 = vpack.c.b16 %v1411, %v1408
      %v1670 = vpack.c.b16 %v1412, %v1409
      %v1671 = vpack.c.b16 %v1413, %v1410
      %v1672 = vpack.c.b16 %v1417, %v1414
      %v1673 = vpack.c.b16 %v1418, %v1415
      %v1674 = vpack.c.b16 %v1419, %v1416
      %v1675 = vpack.c.b16 %v1423, %v1420
      %v1676 = vpack.c.b16 %v1424, %v1421
      %v1677 = vpack.c.b16 %v1425, %v1422
      %v1678 = vpack.c.b16 %v1429, %v1426
      %v1679 = vpack.c.b16 %v1430, %v1427
      %v1680 = vpack.c.b16 %v1431, %v1428
      %v1681 = vpack.c.b16 %v1435, %v1432
      %v1682 = vpack.c.b16 %v1436, %v1433
      %v1683 = vpack.c.b16 %v1437, %v1434
      %v1684 = vpack.c.b16 %v1441, %v1438
      %v1685 = vpack.c.b16 %v1442, %v1439
      %v1686 = vpack.c.b16 %v1443, %v1440
      %v1687 = vpack.c.b16 %v1447, %v1444
      %v1688 = vpack.c.b16 %v1448, %v1445
      %v1689 = vpack.c.b16 %v1449, %v1446
      %v1690 = vpack.c.b16 %v1453, %v1450
      %v1691 = vpack.c.b16 %v1454, %v1451
      %v1692 = vpack.c.b16 %v1455, %v1452
      %v1693 = vpack.c.b16 %v1459, %v1456
      %v1694 = vpack.c.b16 %v1460, %v1457
      %v1695 = vpack.c.b16 %v1461, %v1458
      %v1696 = vpack.c.b16 %v1465, %v1462
      %v1697 = vpack.c.b16 %v1466, %v1463
      %v1698 = vpack.c.b16 %v1467, %v1464
      %v1699 = vpack.c.b16 %v1471, %v1468
      %v1700 = vpack.c.b16 %v1472, %v1469
      %v1701 = vpack.c.b16 %v1473, %v1470
      %v1702 = vpack.c.b16 %v1477, %v1474
      %v1703 = vpack.c.b16 %v1478, %v1475
      %v1704 = vpack.c.b16 %v1479, %v1476
      %v1705 = vpack.c.b16 %v1483, %v1480
      %v1706 = vpack.c.b16 %v1484, %v1481
      %v1707 = vpack.c.b16 %v1485, %v1482
      %v1708 = vpack.c.b16 %v1489, %v1486
      %v1709 = vpack.c.b16 %v1490, %v1487
      %v1710 = vpack.c.b16 %v1491, %v1488
      %v1711 = vpack.c.b16 %v1495, %v1492
      %v1712 = vpack.c.b16 %v1496, %v1493
      %v1713 = vpack.c.b16 %v1497, %v1494
      %1930 = vmatpush.bf16.msra.mxu0 %v473
      %1931 = vmatpush.bf16.msra.mxu0 %v472
      %1932 = vmatpush.bf16.msra.mxu0 %v471
      %1933 = vmatpush.bf16.msra.mxu0 %v470
      %1934 = vmatpush.bf16.msra.mxu0 %v469
      %1935 = vmatpush.bf16.msra.mxu0 %v468
      %1936 = vmatpush.bf16.msra.mxu0 %v467
      %1937 = vmatpush.bf16.msra.mxu0 %v466
      %1938 = vmatmul.bf16.gmra.mxu0 %v1498
      %v1939 = vpop.f32.mrf.mxu0
      %v1940 = vadd.f32 0.0, %v1939
      %v1941 = vpop.f32.mrf.mxu0
      %v1942 = vadd.f32 0.0, %v1941
      %1943 = vmatmul.bf16.gmra.mxu0 %v1501
      %v1944 = vpop.f32.mrf.mxu0
      %v1945 = vadd.f32 0.0, %v1944
      %v1946 = vpop.f32.mrf.mxu0
      %v1947 = vadd.f32 0.0, %v1946
      %1948 = vmatmul.bf16.gmra.mxu0 %v1504
      %v1949 = vpop.f32.mrf.mxu0
      %v1950 = vadd.f32 0.0, %v1949
      %v1951 = vpop.f32.mrf.mxu0
      %v1952 = vadd.f32 0.0, %v1951
      %1953 = vmatmul.bf16.gmra.mxu0 %v1507
      %v1954 = vpop.f32.mrf.mxu0
      %v1955 = vadd.f32 0.0, %v1954
      %v1956 = vpop.f32.mrf.mxu0
      %v1957 = vadd.f32 0.0, %v1956
      %1958 = vmatmul.bf16.gmra.mxu0 %v1510
      %v1959 = vpop.f32.mrf.mxu0
      %v1960 = vadd.f32 0.0, %v1959
      %v1961 = vpop.f32.mrf.mxu0
      %v1962 = vadd.f32 0.0, %v1961
      %1963 = vmatmul.bf16.gmra.mxu0 %v1513
      %v1964 = vpop.f32.mrf.mxu0
      %v1965 = vadd.f32 0.0, %v1964
      %v1966 = vpop.f32.mrf.mxu0
      %v1967 = vadd.f32 0.0, %v1966
      %1968 = vmatmul.bf16.gmra.mxu0 %v1516
      %v1969 = vpop.f32.mrf.mxu0
      %v1970 = vadd.f32 0.0, %v1969
      %v1971 = vpop.f32.mrf.mxu0
      %v1972 = vadd.f32 0.0, %v1971
      %1973 = vmatmul.bf16.gmra.mxu0 %v1519
      %v1974 = vpop.f32.mrf.mxu0
      %v1975 = vadd.f32 0.0, %v1974
      %v1976 = vpop.f32.mrf.mxu0
      %v1977 = vadd.f32 0.0, %v1976
      %1978 = vmatmul.bf16.gmra.mxu0 %v1522
      %v1979 = vpop.f32.mrf.mxu0
      %v1980 = vadd.f32 0.0, %v1979
      %v1981 = vpop.f32.mrf.mxu0
      %v1982 = vadd.f32 0.0, %v1981
      %1983 = vmatmul.bf16.gmra.mxu0 %v1525
      %v1984 = vpop.f32.mrf.mxu0
      %v1985 = vadd.f32 0.0, %v1984
      %v1986 = vpop.f32.mrf.mxu0
      %v1987 = vadd.f32 0.0, %v1986
      %1988 = vmatmul.bf16.gmra.mxu0 %v1528
      %v1989 = vpop.f32.mrf.mxu0
      %v1990 = vadd.f32 0.0, %v1989
      %v1991 = vpop.f32.mrf.mxu0
      %v1992 = vadd.f32 0.0, %v1991
      %1993 = vmatmul.bf16.gmra.mxu0 %v1531
      %v1994 = vpop.f32.mrf.mxu0
      %v1995 = vadd.f32 0.0, %v1994
      %v1996 = vpop.f32.mrf.mxu0
      %v1997 = vadd.f32 0.0, %v1996
      %1998 = vmatmul.bf16.gmra.mxu0 %v1534
      %v1999 = vpop.f32.mrf.mxu0
      %v2000 = vadd.f32 0.0, %v1999
      %v2001 = vpop.f32.mrf.mxu0
      %v2002 = vadd.f32 0.0, %v2001
      %2003 = vmatmul.bf16.gmra.mxu0 %v1537
      %v2004 = vpop.f32.mrf.mxu0
      %v2005 = vadd.f32 0.0, %v2004
      %v2006 = vpop.f32.mrf.mxu0
      %v2007 = vadd.f32 0.0, %v2006
      %2008 = vmatmul.bf16.gmra.mxu0 %v1540
      %v2009 = vpop.f32.mrf.mxu0
      %v2010 = vadd.f32 0.0, %v2009
      %v2011 = vpop.f32.mrf.mxu0
      %v2012 = vadd.f32 0.0, %v2011
      %2013 = vmatmul.bf16.gmra.mxu0 %v1543
      %v2014 = vpop.f32.mrf.mxu0
      %v2015 = vadd.f32 0.0, %v2014
      %v2016 = vpop.f32.mrf.mxu0
      %v2017 = vadd.f32 0.0, %v2016
      %2018 = vmatmul.bf16.gmra.mxu0 %v1546
      %v2019 = vpop.f32.mrf.mxu0
      %v2020 = vadd.f32 0.0, %v2019
      %v2021 = vpop.f32.mrf.mxu0
      %v2022 = vadd.f32 0.0, %v2021
      %2023 = vmatmul.bf16.gmra.mxu0 %v1549
      %v2024 = vpop.f32.mrf.mxu0
      %v2025 = vadd.f32 0.0, %v2024
      %v2026 = vpop.f32.mrf.mxu0
      %v2027 = vadd.f32 0.0, %v2026
      %2028 = vmatmul.bf16.gmra.mxu0 %v1552
      %v2029 = vpop.f32.mrf.mxu0
      %v2030 = vadd.f32 0.0, %v2029
      %v2031 = vpop.f32.mrf.mxu0
      %v2032 = vadd.f32 0.0, %v2031
      %2033 = vmatmul.bf16.gmra.mxu0 %v1555
      %v2034 = vpop.f32.mrf.mxu0
      %v2035 = vadd.f32 0.0, %v2034
      %v2036 = vpop.f32.mrf.mxu0
      %v2037 = vadd.f32 0.0, %v2036
      %2038 = vmatmul.bf16.gmra.mxu0 %v1558
      %v2039 = vpop.f32.mrf.mxu0
      %v2040 = vadd.f32 0.0, %v2039
      %v2041 = vpop.f32.mrf.mxu0
      %v2042 = vadd.f32 0.0, %v2041
      %2043 = vmatmul.bf16.gmra.mxu0 %v1561
      %v2044 = vpop.f32.mrf.mxu0
      %v2045 = vadd.f32 0.0, %v2044
      %v2046 = vpop.f32.mrf.mxu0
      %v2047 = vadd.f32 0.0, %v2046
      %2048 = vmatmul.bf16.gmra.mxu0 %v1564
      %v2049 = vpop.f32.mrf.mxu0
      %v2050 = vadd.f32 0.0, %v2049
      %v2051 = vpop.f32.mrf.mxu0
      %v2052 = vadd.f32 0.0, %v2051
      %2053 = vmatmul.bf16.gmra.mxu0 %v1567
      %v2054 = vpop.f32.mrf.mxu0
      %v2055 = vadd.f32 0.0, %v2054
      %v2056 = vpop.f32.mrf.mxu0
      %v2057 = vadd.f32 0.0, %v2056
      %2058 = vmatmul.bf16.gmra.mxu0 %v1570
      %v2059 = vpop.f32.mrf.mxu0
      %v2060 = vadd.f32 0.0, %v2059
      %v2061 = vpop.f32.mrf.mxu0
      %v2062 = vadd.f32 0.0, %v2061
      %2063 = vmatmul.bf16.gmra.mxu0 %v1573
      %v2064 = vpop.f32.mrf.mxu0
      %v2065 = vadd.f32 0.0, %v2064
      %v2066 = vpop.f32.mrf.mxu0
      %v2067 = vadd.f32 0.0, %v2066
      %2068 = vmatmul.bf16.gmra.mxu0 %v1576
      %v2069 = vpop.f32.mrf.mxu0
      %v2070 = vadd.f32 0.0, %v2069
      %v2071 = vpop.f32.mrf.mxu0
      %v2072 = vadd.f32 0.0, %v2071
      %2073 = vmatmul.bf16.gmra.mxu0 %v1579
      %v2074 = vpop.f32.mrf.mxu0
      %v2075 = vadd.f32 0.0, %v2074
      %v2076 = vpop.f32.mrf.mxu0
      %v2077 = vadd.f32 0.0, %v2076
      %2078 = vmatmul.bf16.gmra.mxu0 %v1582
      %v2079 = vpop.f32.mrf.mxu0
      %v2080 = vadd.f32 0.0, %v2079
      %v2081 = vpop.f32.mrf.mxu0
      %v2082 = vadd.f32 0.0, %v2081
      %2083 = vmatmul.bf16.gmra.mxu0 %v1585
      %v2084 = vpop.f32.mrf.mxu0
      %v2085 = vadd.f32 0.0, %v2084
      %v2086 = vpop.f32.mrf.mxu0
      %v2087 = vadd.f32 0.0, %v2086
      %2088 = vmatmul.bf16.gmra.mxu0 %v1588
      %v2089 = vpop.f32.mrf.mxu0
      %v2090 = vadd.f32 0.0, %v2089
      %v2091 = vpop.f32.mrf.mxu0
      %v2092 = vadd.f32 0.0, %v2091
      %2093 = vmatmul.bf16.gmra.mxu0 %v1591
      %v2094 = vpop.f32.mrf.mxu0
      %v2095 = vadd.f32 0.0, %v2094
      %v2096 = vpop.f32.mrf.mxu0
      %v2097 = vadd.f32 0.0, %v2096
      %2098 = vmatmul.bf16.gmra.mxu0 %v1594
      %v2099 = vpop.f32.mrf.mxu0
      %v2100 = vadd.f32 0.0, %v2099
      %v2101 = vpop.f32.mrf.mxu0
      %v2102 = vadd.f32 0.0, %v2101
      %2103 = vmatmul.bf16.gmra.mxu0 %v1597
      %v2104 = vpop.f32.mrf.mxu0
      %v2105 = vadd.f32 0.0, %v2104
      %v2106 = vpop.f32.mrf.mxu0
      %v2107 = vadd.f32 0.0, %v2106
      %2108 = vmatmul.bf16.gmra.mxu0 %v1600
      %v2109 = vpop.f32.mrf.mxu0
      %v2110 = vadd.f32 0.0, %v2109
      %v2111 = vpop.f32.mrf.mxu0
      %v2112 = vadd.f32 0.0, %v2111
      %2113 = vmatmul.bf16.gmra.mxu0 %v1603
      %v2114 = vpop.f32.mrf.mxu0
      %v2115 = vadd.f32 0.0, %v2114
      %v2116 = vpop.f32.mrf.mxu0
      %v2117 = vadd.f32 0.0, %v2116
      %2118 = vmatmul.bf16.gmra.mxu0 %v1606
      %v2119 = vpop.f32.mrf.mxu0
      %v2120 = vadd.f32 0.0, %v2119
      %v2121 = vpop.f32.mrf.mxu0
      %v2122 = vadd.f32 0.0, %v2121
      %2123 = vmatmul.bf16.gmra.mxu0 %v1609
      %v2124 = vpop.f32.mrf.mxu0
      %v2125 = vadd.f32 0.0, %v2124
      %v2126 = vpop.f32.mrf.mxu0
      %v2127 = vadd.f32 0.0, %v2126
      %2128 = vmatmul.bf16.gmra.mxu0 %v1612
      %v2129 = vpop.f32.mrf.mxu0
      %v2130 = vadd.f32 0.0, %v2129
      %v2131 = vpop.f32.mrf.mxu0
      %v2132 = vadd.f32 0.0, %v2131
      %2133 = vmatmul.bf16.gmra.mxu0 %v1615
      %v2134 = vpop.f32.mrf.mxu0
      %v2135 = vadd.f32 0.0, %v2134
      %v2136 = vpop.f32.mrf.mxu0
      %v2137 = vadd.f32 0.0, %v2136
      %2138 = vmatmul.bf16.gmra.mxu0 %v1618
      %v2139 = vpop.f32.mrf.mxu0
      %v2140 = vadd.f32 0.0, %v2139
      %v2141 = vpop.f32.mrf.mxu0
      %v2142 = vadd.f32 0.0, %v2141
      %2143 = vmatmul.bf16.gmra.mxu0 %v1621
      %v2144 = vpop.f32.mrf.mxu0
      %v2145 = vadd.f32 0.0, %v2144
      %v2146 = vpop.f32.mrf.mxu0
      %v2147 = vadd.f32 0.0, %v2146
      %2148 = vmatmul.bf16.gmra.mxu0 %v1624
      %v2149 = vpop.f32.mrf.mxu0
      %v2150 = vadd.f32 0.0, %v2149
      %v2151 = vpop.f32.mrf.mxu0
      %v2152 = vadd.f32 0.0, %v2151
      %2153 = vmatmul.bf16.gmra.mxu0 %v1627
      %v2154 = vpop.f32.mrf.mxu0
      %v2155 = vadd.f32 0.0, %v2154
      %v2156 = vpop.f32.mrf.mxu0
      %v2157 = vadd.f32 0.0, %v2156
      %2158 = vmatmul.bf16.gmra.mxu0 %v1630
      %v2159 = vpop.f32.mrf.mxu0
      %v2160 = vadd.f32 0.0, %v2159
      %v2161 = vpop.f32.mrf.mxu0
      %v2162 = vadd.f32 0.0, %v2161
      %2163 = vmatmul.bf16.gmra.mxu0 %v1633
      %v2164 = vpop.f32.mrf.mxu0
      %v2165 = vadd.f32 0.0, %v2164
      %v2166 = vpop.f32.mrf.mxu0
      %v2167 = vadd.f32 0.0, %v2166
      %2168 = vmatmul.bf16.gmra.mxu0 %v1636
      %v2169 = vpop.f32.mrf.mxu0
      %v2170 = vadd.f32 0.0, %v2169
      %v2171 = vpop.f32.mrf.mxu0
      %v2172 = vadd.f32 0.0, %v2171
      %2173 = vmatmul.bf16.gmra.mxu0 %v1639
      %v2174 = vpop.f32.mrf.mxu0
      %v2175 = vadd.f32 0.0, %v2174
      %v2176 = vpop.f32.mrf.mxu0
      %v2177 = vadd.f32 0.0, %v2176
      %2178 = vmatmul.bf16.gmra.mxu0 %v1642
      %v2179 = vpop.f32.mrf.mxu0
      %v2180 = vadd.f32 0.0, %v2179
      %v2181 = vpop.f32.mrf.mxu0
      %v2182 = vadd.f32 0.0, %v2181
      %2183 = vmatmul.bf16.gmra.mxu0 %v1645
      %v2184 = vpop.f32.mrf.mxu0
      %v2185 = vadd.f32 0.0, %v2184
      %v2186 = vpop.f32.mrf.mxu0
      %v2187 = vadd.f32 0.0, %v2186
      %2188 = vmatmul.bf16.gmra.mxu0 %v1648
      %v2189 = vpop.f32.mrf.mxu0
      %v2190 = vadd.f32 0.0, %v2189
      %v2191 = vpop.f32.mrf.mxu0
      %v2192 = vadd.f32 0.0, %v2191
      %2193 = vmatmul.bf16.gmra.mxu0 %v1651
      %v2194 = vpop.f32.mrf.mxu0
      %v2195 = vadd.f32 0.0, %v2194
      %v2196 = vpop.f32.mrf.mxu0
      %v2197 = vadd.f32 0.0, %v2196
      %2198 = vmatmul.bf16.gmra.mxu0 %v1654
      %v2199 = vpop.f32.mrf.mxu0
      %v2200 = vadd.f32 0.0, %v2199
      %v2201 = vpop.f32.mrf.mxu0
      %v2202 = vadd.f32 0.0, %v2201
      %2203 = vmatmul.bf16.gmra.mxu0 %v1657
      %v2204 = vpop.f32.mrf.mxu0
      %v2205 = vadd.f32 0.0, %v2204
      %v2206 = vpop.f32.mrf.mxu0
      %v2207 = vadd.f32 0.0, %v2206
      %2208 = vmatmul.bf16.gmra.mxu0 %v1660
      %v2209 = vpop.f32.mrf.mxu0
      %v2210 = vadd.f32 0.0, %v2209
      %v2211 = vpop.f32.mrf.mxu0
      %v2212 = vadd.f32 0.0, %v2211
      %2213 = vmatmul.bf16.gmra.mxu0 %v1663
      %v2214 = vpop.f32.mrf.mxu0
      %v2215 = vadd.f32 0.0, %v2214
      %v2216 = vpop.f32.mrf.mxu0
      %v2217 = vadd.f32 0.0, %v2216
      %2218 = vmatmul.bf16.gmra.mxu0 %v1666
      %v2219 = vpop.f32.mrf.mxu0
      %v2220 = vadd.f32 0.0, %v2219
      %v2221 = vpop.f32.mrf.mxu0
      %v2222 = vadd.f32 0.0, %v2221
      %2223 = vmatmul.bf16.gmra.mxu0 %v1669
      %v2224 = vpop.f32.mrf.mxu0
      %v2225 = vadd.f32 0.0, %v2224
      %v2226 = vpop.f32.mrf.mxu0
      %v2227 = vadd.f32 0.0, %v2226
      %2228 = vmatmul.bf16.gmra.mxu0 %v1672
      %v2229 = vpop.f32.mrf.mxu0
      %v2230 = vadd.f32 0.0, %v2229
      %v2231 = vpop.f32.mrf.mxu0
      %v2232 = vadd.f32 0.0, %v2231
      %2233 = vmatmul.bf16.gmra.mxu0 %v1675
      %v2234 = vpop.f32.mrf.mxu0
      %v2235 = vadd.f32 0.0, %v2234
      %v2236 = vpop.f32.mrf.mxu0
      %v2237 = vadd.f32 0.0, %v2236
      %2238 = vmatmul.bf16.gmra.mxu0 %v1678
      %v2239 = vpop.f32.mrf.mxu0
      %v2240 = vadd.f32 0.0, %v2239
      %v2241 = vpop.f32.mrf.mxu0
      %v2242 = vadd.f32 0.0, %v2241
      %2243 = vmatmul.bf16.gmra.mxu0 %v1681
      %v2244 = vpop.f32.mrf.mxu0
      %v2245 = vadd.f32 0.0, %v2244
      %v2246 = vpop.f32.mrf.mxu0
      %v2247 = vadd.f32 0.0, %v2246
      %2248 = vmatmul.bf16.gmra.mxu0 %v1684
      %v2249 = vpop.f32.mrf.mxu0
      %v2250 = vadd.f32 0.0, %v2249
      %v2251 = vpop.f32.mrf.mxu0
      %v2252 = vadd.f32 0.0, %v2251
      %2253 = vmatmul.bf16.gmra.mxu0 %v1687
      %v2254 = vpop.f32.mrf.mxu0
      %v2255 = vadd.f32 0.0, %v2254
      %v2256 = vpop.f32.mrf.mxu0
      %v2257 = vadd.f32 0.0, %v2256
      %2258 = vmatmul.bf16.gmra.mxu0 %v1690
      %v2259 = vpop.f32.mrf.mxu0
      %v2260 = vadd.f32 0.0, %v2259
      %v2261 = vpop.f32.mrf.mxu0
      %v2262 = vadd.f32 0.0, %v2261
      %2263 = vmatmul.bf16.gmra.mxu0 %v1693
      %v2264 = vpop.f32.mrf.mxu0
      %v2265 = vadd.f32 0.0, %v2264
      %v2266 = vpop.f32.mrf.mxu0
      %v2267 = vadd.f32 0.0, %v2266
      %2268 = vmatmul.bf16.gmra.mxu0 %v1696
      %v2269 = vpop.f32.mrf.mxu0
      %v2270 = vadd.f32 0.0, %v2269
      %v2271 = vpop.f32.mrf.mxu0
      %v2272 = vadd.f32 0.0, %v2271
      %2273 = vmatmul.bf16.gmra.mxu0 %v1699
      %v2274 = vpop.f32.mrf.mxu0
      %v2275 = vadd.f32 0.0, %v2274
      %v2276 = vpop.f32.mrf.mxu0
      %v2277 = vadd.f32 0.0, %v2276
      %2278 = vmatmul.bf16.gmra.mxu0 %v1702
      %v2279 = vpop.f32.mrf.mxu0
      %v2280 = vadd.f32 0.0, %v2279
      %v2281 = vpop.f32.mrf.mxu0
      %v2282 = vadd.f32 0.0, %v2281
      %2283 = vmatmul.bf16.gmra.mxu0 %v1705
      %v2284 = vpop.f32.mrf.mxu0
      %v2285 = vadd.f32 0.0, %v2284
      %v2286 = vpop.f32.mrf.mxu0
      %v2287 = vadd.f32 0.0, %v2286
      %2288 = vmatmul.bf16.gmra.mxu0 %v1708
      %v2289 = vpop.f32.mrf.mxu0
      %v2290 = vadd.f32 0.0, %v2289
      %v2291 = vpop.f32.mrf.mxu0
      %v2292 = vadd.f32 0.0, %v2291
      %2293 = vmatmul.bf16.gmra.mxu0 %v1711
      %v2294 = vpop.f32.mrf.mxu0
      %v2295 = vadd.f32 0.0, %v2294
      %v2296 = vpop.f32.mrf.mxu0
      %v2297 = vadd.f32 0.0, %v2296
      %2298 = vdwg.mxu0
      %2299 = vmatpush.bf16.msra.mxu0 %v481
      %2300 = vmatpush.bf16.msra.mxu0 %v480
      %2301 = vmatpush.bf16.msra.mxu0 %v479
      %2302 = vmatpush.bf16.msra.mxu0 %v478
      %2303 = vmatpush.bf16.msra.mxu0 %v477
      %2304 = vmatpush.bf16.msra.mxu0 %v476
      %2305 = vmatpush.bf16.msra.mxu0 %v475
      %2306 = vmatpush.bf16.msra.mxu0 %v474
      %2307 = vmatmul.bf16.gmra.mxu0 %v1499
      %v2308 = vpop.f32.mrf.mxu0
      %v2309 = vadd.f32 %v1940, %v2308
      %v2310 = vpop.f32.mrf.mxu0
      %v2311 = vadd.f32 %v1942, %v2310
      %2312 = vmatmul.bf16.gmra.mxu0 %v1502
      %v2313 = vpop.f32.mrf.mxu0
      %v2314 = vadd.f32 %v1945, %v2313
      %v2315 = vpop.f32.mrf.mxu0
      %v2316 = vadd.f32 %v1947, %v2315
      %2317 = vmatmul.bf16.gmra.mxu0 %v1505
      %v2318 = vpop.f32.mrf.mxu0
      %v2319 = vadd.f32 %v1950, %v2318
      %v2320 = vpop.f32.mrf.mxu0
      %v2321 = vadd.f32 %v1952, %v2320
      %2322 = vmatmul.bf16.gmra.mxu0 %v1508
      %v2323 = vpop.f32.mrf.mxu0
      %v2324 = vadd.f32 %v1955, %v2323
      %v2325 = vpop.f32.mrf.mxu0
      %v2326 = vadd.f32 %v1957, %v2325
      %2327 = vmatmul.bf16.gmra.mxu0 %v1511
      %v2328 = vpop.f32.mrf.mxu0
      %v2329 = vadd.f32 %v1960, %v2328
      %v2330 = vpop.f32.mrf.mxu0
      %v2331 = vadd.f32 %v1962, %v2330
      %2332 = vmatmul.bf16.gmra.mxu0 %v1514
      %v2333 = vpop.f32.mrf.mxu0
      %v2334 = vadd.f32 %v1965, %v2333
      %v2335 = vpop.f32.mrf.mxu0
      %v2336 = vadd.f32 %v1967, %v2335
      %2337 = vmatmul.bf16.gmra.mxu0 %v1517
      %v2338 = vpop.f32.mrf.mxu0
      %v2339 = vadd.f32 %v1970, %v2338
      %v2340 = vpop.f32.mrf.mxu0
      %v2341 = vadd.f32 %v1972, %v2340
      %2342 = vmatmul.bf16.gmra.mxu0 %v1520
      %v2343 = vpop.f32.mrf.mxu0
      %v2344 = vadd.f32 %v1975, %v2343
      %v2345 = vpop.f32.mrf.mxu0
      %v2346 = vadd.f32 %v1977, %v2345
      %2347 = vmatmul.bf16.gmra.mxu0 %v1523
      %v2348 = vpop.f32.mrf.mxu0
      %v2349 = vadd.f32 %v1980, %v2348
      %v2350 = vpop.f32.mrf.mxu0
      %v2351 = vadd.f32 %v1982, %v2350
      %2352 = vmatmul.bf16.gmra.mxu0 %v1526
      %v2353 = vpop.f32.mrf.mxu0
      %v2354 = vadd.f32 %v1985, %v2353
      %v2355 = vpop.f32.mrf.mxu0
      %v2356 = vadd.f32 %v1987, %v2355
      %2357 = vmatmul.bf16.gmra.mxu0 %v1529
      %v2358 = vpop.f32.mrf.mxu0
      %v2359 = vadd.f32 %v1990, %v2358
      %v2360 = vpop.f32.mrf.mxu0
      %v2361 = vadd.f32 %v1992, %v2360
      %2362 = vmatmul.bf16.gmra.mxu0 %v1532
      %v2363 = vpop.f32.mrf.mxu0
      %v2364 = vadd.f32 %v1995, %v2363
      %v2365 = vpop.f32.mrf.mxu0
      %v2366 = vadd.f32 %v1997, %v2365
      %2367 = vmatmul.bf16.gmra.mxu0 %v1535
      %v2368 = vpop.f32.mrf.mxu0
      %v2369 = vadd.f32 %v2000, %v2368
      %v2370 = vpop.f32.mrf.mxu0
      %v2371 = vadd.f32 %v2002, %v2370
      %2372 = vmatmul.bf16.gmra.mxu0 %v1538
      %v2373 = vpop.f32.mrf.mxu0
      %v2374 = vadd.f32 %v2005, %v2373
      %v2375 = vpop.f32.mrf.mxu0
      %v2376 = vadd.f32 %v2007, %v2375
      %2377 = vmatmul.bf16.gmra.mxu0 %v1541
      %v2378 = vpop.f32.mrf.mxu0
      %v2379 = vadd.f32 %v2010, %v2378
      %v2380 = vpop.f32.mrf.mxu0
      %v2381 = vadd.f32 %v2012, %v2380
      %2382 = vmatmul.bf16.gmra.mxu0 %v1544
      %v2383 = vpop.f32.mrf.mxu0
      %v2384 = vadd.f32 %v2015, %v2383
      %v2385 = vpop.f32.mrf.mxu0
      %v2386 = vadd.f32 %v2017, %v2385
      %2387 = vmatmul.bf16.gmra.mxu0 %v1547
      %v2388 = vpop.f32.mrf.mxu0
      %v2389 = vadd.f32 %v2020, %v2388
      %v2390 = vpop.f32.mrf.mxu0
      %v2391 = vadd.f32 %v2022, %v2390
      %2392 = vmatmul.bf16.gmra.mxu0 %v1550
      %v2393 = vpop.f32.mrf.mxu0
      %v2394 = vadd.f32 %v2025, %v2393
      %v2395 = vpop.f32.mrf.mxu0
      %v2396 = vadd.f32 %v2027, %v2395
      %2397 = vmatmul.bf16.gmra.mxu0 %v1553
      %v2398 = vpop.f32.mrf.mxu0
      %v2399 = vadd.f32 %v2030, %v2398
      %v2400 = vpop.f32.mrf.mxu0
      %v2401 = vadd.f32 %v2032, %v2400
      %2402 = vmatmul.bf16.gmra.mxu0 %v1556
      %v2403 = vpop.f32.mrf.mxu0
      %v2404 = vadd.f32 %v2035, %v2403
      %v2405 = vpop.f32.mrf.mxu0
      %v2406 = vadd.f32 %v2037, %v2405
      %2407 = vmatmul.bf16.gmra.mxu0 %v1559
      %v2408 = vpop.f32.mrf.mxu0
      %v2409 = vadd.f32 %v2040, %v2408
      %v2410 = vpop.f32.mrf.mxu0
      %v2411 = vadd.f32 %v2042, %v2410
      %2412 = vmatmul.bf16.gmra.mxu0 %v1562
      %v2413 = vpop.f32.mrf.mxu0
      %v2414 = vadd.f32 %v2045, %v2413
      %v2415 = vpop.f32.mrf.mxu0
      %v2416 = vadd.f32 %v2047, %v2415
      %2417 = vmatmul.bf16.gmra.mxu0 %v1565
      %v2418 = vpop.f32.mrf.mxu0
      %v2419 = vadd.f32 %v2050, %v2418
      %v2420 = vpop.f32.mrf.mxu0
      %v2421 = vadd.f32 %v2052, %v2420
      %2422 = vmatmul.bf16.gmra.mxu0 %v1568
      %v2423 = vpop.f32.mrf.mxu0
      %v2424 = vadd.f32 %v2055, %v2423
      %v2425 = vpop.f32.mrf.mxu0
      %v2426 = vadd.f32 %v2057, %v2425
      %2427 = vmatmul.bf16.gmra.mxu0 %v1571
      %v2428 = vpop.f32.mrf.mxu0
      %v2429 = vadd.f32 %v2060, %v2428
      %v2430 = vpop.f32.mrf.mxu0
      %v2431 = vadd.f32 %v2062, %v2430
      %2432 = vmatmul.bf16.gmra.mxu0 %v1574
      %v2433 = vpop.f32.mrf.mxu0
      %v2434 = vadd.f32 %v2065, %v2433
      %v2435 = vpop.f32.mrf.mxu0
      %v2436 = vadd.f32 %v2067, %v2435
      %2437 = vmatmul.bf16.gmra.mxu0 %v1577
      %v2438 = vpop.f32.mrf.mxu0
      %v2439 = vadd.f32 %v2070, %v2438
      %v2440 = vpop.f32.mrf.mxu0
      %v2441 = vadd.f32 %v2072, %v2440
      %2442 = vmatmul.bf16.gmra.mxu0 %v1580
      %v2443 = vpop.f32.mrf.mxu0
      %v2444 = vadd.f32 %v2075, %v2443
      %v2445 = vpop.f32.mrf.mxu0
      %v2446 = vadd.f32 %v2077, %v2445
      %2447 = vmatmul.bf16.gmra.mxu0 %v1583
      %v2448 = vpop.f32.mrf.mxu0
      %v2449 = vadd.f32 %v2080, %v2448
      %v2450 = vpop.f32.mrf.mxu0
      %v2451 = vadd.f32 %v2082, %v2450
      %2452 = vmatmul.bf16.gmra.mxu0 %v1586
      %v2453 = vpop.f32.mrf.mxu0
      %v2454 = vadd.f32 %v2085, %v2453
      %v2455 = vpop.f32.mrf.mxu0
      %v2456 = vadd.f32 %v2087, %v2455
      %2457 = vmatmul.bf16.gmra.mxu0 %v1589
      %v2458 = vpop.f32.mrf.mxu0
      %v2459 = vadd.f32 %v2090, %v2458
      %v2460 = vpop.f32.mrf.mxu0
      %v2461 = vadd.f32 %v2092, %v2460
      %2462 = vmatmul.bf16.gmra.mxu0 %v1592
      %v2463 = vpop.f32.mrf.mxu0
      %v2464 = vadd.f32 %v2095, %v2463
      %v2465 = vpop.f32.mrf.mxu0
      %v2466 = vadd.f32 %v2097, %v2465
      %2467 = vmatmul.bf16.gmra.mxu0 %v1595
      %v2468 = vpop.f32.mrf.mxu0
      %v2469 = vadd.f32 %v2100, %v2468
      %v2470 = vpop.f32.mrf.mxu0
      %v2471 = vadd.f32 %v2102, %v2470
      %2472 = vmatmul.bf16.gmra.mxu0 %v1598
      %v2473 = vpop.f32.mrf.mxu0
      %v2474 = vadd.f32 %v2105, %v2473
      %v2475 = vpop.f32.mrf.mxu0
      %v2476 = vadd.f32 %v2107, %v2475
      %2477 = vmatmul.bf16.gmra.mxu0 %v1601
      %v2478 = vpop.f32.mrf.mxu0
      %v2479 = vadd.f32 %v2110, %v2478
      %v2480 = vpop.f32.mrf.mxu0
      %v2481 = vadd.f32 %v2112, %v2480
      %2482 = vmatmul.bf16.gmra.mxu0 %v1604
      %v2483 = vpop.f32.mrf.mxu0
      %v2484 = vadd.f32 %v2115, %v2483
      %v2485 = vpop.f32.mrf.mxu0
      %v2486 = vadd.f32 %v2117, %v2485
      %2487 = vmatmul.bf16.gmra.mxu0 %v1607
      %v2488 = vpop.f32.mrf.mxu0
      %v2489 = vadd.f32 %v2120, %v2488
      %v2490 = vpop.f32.mrf.mxu0
      %v2491 = vadd.f32 %v2122, %v2490
      %2492 = vmatmul.bf16.gmra.mxu0 %v1610
      %v2493 = vpop.f32.mrf.mxu0
      %v2494 = vadd.f32 %v2125, %v2493
      %v2495 = vpop.f32.mrf.mxu0
      %v2496 = vadd.f32 %v2127, %v2495
      %2497 = vmatmul.bf16.gmra.mxu0 %v1613
      %v2498 = vpop.f32.mrf.mxu0
      %v2499 = vadd.f32 %v2130, %v2498
      %v2500 = vpop.f32.mrf.mxu0
      %v2501 = vadd.f32 %v2132, %v2500
      %2502 = vmatmul.bf16.gmra.mxu0 %v1616
      %v2503 = vpop.f32.mrf.mxu0
      %v2504 = vadd.f32 %v2135, %v2503
      %v2505 = vpop.f32.mrf.mxu0
      %v2506 = vadd.f32 %v2137, %v2505
      %2507 = vmatmul.bf16.gmra.mxu0 %v1619
      %v2508 = vpop.f32.mrf.mxu0
      %v2509 = vadd.f32 %v2140, %v2508
      %v2510 = vpop.f32.mrf.mxu0
      %v2511 = vadd.f32 %v2142, %v2510
      %2512 = vmatmul.bf16.gmra.mxu0 %v1622
      %v2513 = vpop.f32.mrf.mxu0
      %v2514 = vadd.f32 %v2145, %v2513
      %v2515 = vpop.f32.mrf.mxu0
      %v2516 = vadd.f32 %v2147, %v2515
      %2517 = vmatmul.bf16.gmra.mxu0 %v1625
      %v2518 = vpop.f32.mrf.mxu0
      %v2519 = vadd.f32 %v2150, %v2518
      %v2520 = vpop.f32.mrf.mxu0
      %v2521 = vadd.f32 %v2152, %v2520
      %2522 = vmatmul.bf16.gmra.mxu0 %v1628
      %v2523 = vpop.f32.mrf.mxu0
      %v2524 = vadd.f32 %v2155, %v2523
      %v2525 = vpop.f32.mrf.mxu0
      %v2526 = vadd.f32 %v2157, %v2525
      %2527 = vmatmul.bf16.gmra.mxu0 %v1631
      %v2528 = vpop.f32.mrf.mxu0
      %v2529 = vadd.f32 %v2160, %v2528
      %v2530 = vpop.f32.mrf.mxu0
      %v2531 = vadd.f32 %v2162, %v2530
      %2532 = vmatmul.bf16.gmra.mxu0 %v1634
      %v2533 = vpop.f32.mrf.mxu0
      %v2534 = vadd.f32 %v2165, %v2533
      %v2535 = vpop.f32.mrf.mxu0
      %v2536 = vadd.f32 %v2167, %v2535
      %2537 = vmatmul.bf16.gmra.mxu0 %v1637
      %v2538 = vpop.f32.mrf.mxu0
      %v2539 = vadd.f32 %v2170, %v2538
      %v2540 = vpop.f32.mrf.mxu0
      %v2541 = vadd.f32 %v2172, %v2540
      %2542 = vmatmul.bf16.gmra.mxu0 %v1640
      %v2543 = vpop.f32.mrf.mxu0
      %v2544 = vadd.f32 %v2175, %v2543
      %v2545 = vpop.f32.mrf.mxu0
      %v2546 = vadd.f32 %v2177, %v2545
      %2547 = vmatmul.bf16.gmra.mxu0 %v1643
      %v2548 = vpop.f32.mrf.mxu0
      %v2549 = vadd.f32 %v2180, %v2548
      %v2550 = vpop.f32.mrf.mxu0
      %v2551 = vadd.f32 %v2182, %v2550
      %2552 = vmatmul.bf16.gmra.mxu0 %v1646
      %v2553 = vpop.f32.mrf.mxu0
      %v2554 = vadd.f32 %v2185, %v2553
      %v2555 = vpop.f32.mrf.mxu0
      %v2556 = vadd.f32 %v2187, %v2555
      %2557 = vmatmul.bf16.gmra.mxu0 %v1649
      %v2558 = vpop.f32.mrf.mxu0
      %v2559 = vadd.f32 %v2190, %v2558
      %v2560 = vpop.f32.mrf.mxu0
      %v2561 = vadd.f32 %v2192, %v2560
      %2562 = vmatmul.bf16.gmra.mxu0 %v1652
      %v2563 = vpop.f32.mrf.mxu0
      %v2564 = vadd.f32 %v2195, %v2563
      %v2565 = vpop.f32.mrf.mxu0
      %v2566 = vadd.f32 %v2197, %v2565
      %2567 = vmatmul.bf16.gmra.mxu0 %v1655
      %v2568 = vpop.f32.mrf.mxu0
      %v2569 = vadd.f32 %v2200, %v2568
      %v2570 = vpop.f32.mrf.mxu0
      %v2571 = vadd.f32 %v2202, %v2570
      %2572 = vmatmul.bf16.gmra.mxu0 %v1658
      %v2573 = vpop.f32.mrf.mxu0
      %v2574 = vadd.f32 %v2205, %v2573
      %v2575 = vpop.f32.mrf.mxu0
      %v2576 = vadd.f32 %v2207, %v2575
      %2577 = vmatmul.bf16.gmra.mxu0 %v1661
      %v2578 = vpop.f32.mrf.mxu0
      %v2579 = vadd.f32 %v2210, %v2578
      %v2580 = vpop.f32.mrf.mxu0
      %v2581 = vadd.f32 %v2212, %v2580
      %2582 = vmatmul.bf16.gmra.mxu0 %v1664
      %v2583 = vpop.f32.mrf.mxu0
      %v2584 = vadd.f32 %v2215, %v2583
      %v2585 = vpop.f32.mrf.mxu0
      %v2586 = vadd.f32 %v2217, %v2585
      %2587 = vmatmul.bf16.gmra.mxu0 %v1667
      %v2588 = vpop.f32.mrf.mxu0
      %v2589 = vadd.f32 %v2220, %v2588
      %v2590 = vpop.f32.mrf.mxu0
      %v2591 = vadd.f32 %v2222, %v2590
      %2592 = vmatmul.bf16.gmra.mxu0 %v1670
      %v2593 = vpop.f32.mrf.mxu0
      %v2594 = vadd.f32 %v2225, %v2593
      %v2595 = vpop.f32.mrf.mxu0
      %v2596 = vadd.f32 %v2227, %v2595
      %2597 = vmatmul.bf16.gmra.mxu0 %v1673
      %v2598 = vpop.f32.mrf.mxu0
      %v2599 = vadd.f32 %v2230, %v2598
      %v2600 = vpop.f32.mrf.mxu0
      %v2601 = vadd.f32 %v2232, %v2600
      %2602 = vmatmul.bf16.gmra.mxu0 %v1676
      %v2603 = vpop.f32.mrf.mxu0
      %v2604 = vadd.f32 %v2235, %v2603
      %v2605 = vpop.f32.mrf.mxu0
      %v2606 = vadd.f32 %v2237, %v2605
      %2607 = vmatmul.bf16.gmra.mxu0 %v1679
      %v2608 = vpop.f32.mrf.mxu0
      %v2609 = vadd.f32 %v2240, %v2608
      %v2610 = vpop.f32.mrf.mxu0
      %v2611 = vadd.f32 %v2242, %v2610
      %2612 = vmatmul.bf16.gmra.mxu0 %v1682
      %v2613 = vpop.f32.mrf.mxu0
      %v2614 = vadd.f32 %v2245, %v2613
      %v2615 = vpop.f32.mrf.mxu0
      %v2616 = vadd.f32 %v2247, %v2615
      %2617 = vmatmul.bf16.gmra.mxu0 %v1685
      %v2618 = vpop.f32.mrf.mxu0
      %v2619 = vadd.f32 %v2250, %v2618
      %v2620 = vpop.f32.mrf.mxu0
      %v2621 = vadd.f32 %v2252, %v2620
      %2622 = vmatmul.bf16.gmra.mxu0 %v1688
      %v2623 = vpop.f32.mrf.mxu0
      %v2624 = vadd.f32 %v2255, %v2623
      %v2625 = vpop.f32.mrf.mxu0
      %v2626 = vadd.f32 %v2257, %v2625
      %2627 = vmatmul.bf16.gmra.mxu0 %v1691
      %v2628 = vpop.f32.mrf.mxu0
      %v2629 = vadd.f32 %v2260, %v2628
      %v2630 = vpop.f32.mrf.mxu0
      %v2631 = vadd.f32 %v2262, %v2630
      %2632 = vmatmul.bf16.gmra.mxu0 %v1694
      %v2633 = vpop.f32.mrf.mxu0
      %v2634 = vadd.f32 %v2265, %v2633
      %v2635 = vpop.f32.mrf.mxu0
      %v2636 = vadd.f32 %v2267, %v2635
      %2637 = vmatmul.bf16.gmra.mxu0 %v1697
      %v2638 = vpop.f32.mrf.mxu0
      %v2639 = vadd.f32 %v2270, %v2638
      %v2640 = vpop.f32.mrf.mxu0
      %v2641 = vadd.f32 %v2272, %v2640
      %2642 = vmatmul.bf16.gmra.mxu0 %v1700
      %v2643 = vpop.f32.mrf.mxu0
      %v2644 = vadd.f32 %v2275, %v2643
      %v2645 = vpop.f32.mrf.mxu0
      %v2646 = vadd.f32 %v2277, %v2645
      %2647 = vmatmul.bf16.gmra.mxu0 %v1703
      %v2648 = vpop.f32.mrf.mxu0
      %v2649 = vadd.f32 %v2280, %v2648
      %v2650 = vpop.f32.mrf.mxu0
      %v2651 = vadd.f32 %v2282, %v2650
      %2652 = vmatmul.bf16.gmra.mxu0 %v1706
      %v2653 = vpop.f32.mrf.mxu0
      %v2654 = vadd.f32 %v2285, %v2653
      %v2655 = vpop.f32.mrf.mxu0
      %v2656 = vadd.f32 %v2287, %v2655
      %2657 = vmatmul.bf16.gmra.mxu0 %v1709
      %v2658 = vpop.f32.mrf.mxu0
      %v2659 = vadd.f32 %v2290, %v2658
      %v2660 = vpop.f32.mrf.mxu0
      %v2661 = vadd.f32 %v2292, %v2660
      %2662 = vmatmul.bf16.gmra.mxu0 %v1712
      %v2663 = vpop.f32.mrf.mxu0
      %v2664 = vadd.f32 %v2295, %v2663
      %v2665 = vpop.f32.mrf.mxu0
      %v2666 = vadd.f32 %v2297, %v2665
      %2667 = vdwg.mxu0
      %2668 = vmatpush.bf16.msra.mxu0 %v489
      %2669 = vmatpush.bf16.msra.mxu0 %v488
      %2670 = vmatpush.bf16.msra.mxu0 %v487
      %2671 = vmatpush.bf16.msra.mxu0 %v486
      %2672 = vmatpush.bf16.msra.mxu0 %v485
      %2673 = vmatpush.bf16.msra.mxu0 %v484
      %2674 = vmatpush.bf16.msra.mxu0 %v483
      %2675 = vmatpush.bf16.msra.mxu0 %v482
      %2676 = vmatmul.bf16.gmra.mxu0 %v1500
      %v2677 = vpop.f32.mrf.mxu0
      %v2678 = vadd.f32 %v2309, %v2677
      %v2679 = vpop.f32.mrf.mxu0
      %v2680 = vadd.f32 %v2311, %v2679
      %2681 = vmatmul.bf16.gmra.mxu0 %v1503
      %v2682 = vpop.f32.mrf.mxu0
      %v2683 = vadd.f32 %v2314, %v2682
      %v2684 = vpop.f32.mrf.mxu0
      %v2685 = vadd.f32 %v2316, %v2684
      %2686 = vmatmul.bf16.gmra.mxu0 %v1506
      %v2687 = vpop.f32.mrf.mxu0
      %v2688 = vadd.f32 %v2319, %v2687
      %v2689 = vpop.f32.mrf.mxu0
      %v2690 = vadd.f32 %v2321, %v2689
      %2691 = vmatmul.bf16.gmra.mxu0 %v1509
      %v2692 = vpop.f32.mrf.mxu0
      %v2693 = vadd.f32 %v2324, %v2692
      %v2694 = vpop.f32.mrf.mxu0
      %v2695 = vadd.f32 %v2326, %v2694
      %2696 = vmatmul.bf16.gmra.mxu0 %v1512
      %v2697 = vpop.f32.mrf.mxu0
      %v2698 = vadd.f32 %v2329, %v2697
      %v2699 = vpop.f32.mrf.mxu0
      %v2700 = vadd.f32 %v2331, %v2699
      %2701 = vmatmul.bf16.gmra.mxu0 %v1515
      %v2702 = vpop.f32.mrf.mxu0
      %v2703 = vadd.f32 %v2334, %v2702
      %v2704 = vpop.f32.mrf.mxu0
      %v2705 = vadd.f32 %v2336, %v2704
      %2706 = vmatmul.bf16.gmra.mxu0 %v1518
      %v2707 = vpop.f32.mrf.mxu0
      %v2708 = vadd.f32 %v2339, %v2707
      %v2709 = vpop.f32.mrf.mxu0
      %v2710 = vadd.f32 %v2341, %v2709
      %2711 = vmatmul.bf16.gmra.mxu0 %v1521
      %v2712 = vpop.f32.mrf.mxu0
      %v2713 = vadd.f32 %v2344, %v2712
      %v2714 = vpop.f32.mrf.mxu0
      %v2715 = vadd.f32 %v2346, %v2714
      %2716 = vmatmul.bf16.gmra.mxu0 %v1524
      %v2717 = vpop.f32.mrf.mxu0
      %v2718 = vadd.f32 %v2349, %v2717
      %v2719 = vpop.f32.mrf.mxu0
      %v2720 = vadd.f32 %v2351, %v2719
      %2721 = vmatmul.bf16.gmra.mxu0 %v1527
      %v2722 = vpop.f32.mrf.mxu0
      %v2723 = vadd.f32 %v2354, %v2722
      %v2724 = vpop.f32.mrf.mxu0
      %v2725 = vadd.f32 %v2356, %v2724
      %2726 = vmatmul.bf16.gmra.mxu0 %v1530
      %v2727 = vpop.f32.mrf.mxu0
      %v2728 = vadd.f32 %v2359, %v2727
      %v2729 = vpop.f32.mrf.mxu0
      %v2730 = vadd.f32 %v2361, %v2729
      %2731 = vmatmul.bf16.gmra.mxu0 %v1533
      %v2732 = vpop.f32.mrf.mxu0
      %v2733 = vadd.f32 %v2364, %v2732
      %v2734 = vpop.f32.mrf.mxu0
      %v2735 = vadd.f32 %v2366, %v2734
      %2736 = vmatmul.bf16.gmra.mxu0 %v1536
      %v2737 = vpop.f32.mrf.mxu0
      %v2738 = vadd.f32 %v2369, %v2737
      %v2739 = vpop.f32.mrf.mxu0
      %v2740 = vadd.f32 %v2371, %v2739
      %2741 = vmatmul.bf16.gmra.mxu0 %v1539
      %v2742 = vpop.f32.mrf.mxu0
      %v2743 = vadd.f32 %v2374, %v2742
      %v2744 = vpop.f32.mrf.mxu0
      %v2745 = vadd.f32 %v2376, %v2744
      %2746 = vmatmul.bf16.gmra.mxu0 %v1542
      %v2747 = vpop.f32.mrf.mxu0
      %v2748 = vadd.f32 %v2379, %v2747
      %v2749 = vpop.f32.mrf.mxu0
      %v2750 = vadd.f32 %v2381, %v2749
      %2751 = vmatmul.bf16.gmra.mxu0 %v1545
      %v2752 = vpop.f32.mrf.mxu0
      %v2753 = vadd.f32 %v2384, %v2752
      %v2754 = vpop.f32.mrf.mxu0
      %v2755 = vadd.f32 %v2386, %v2754
      %2756 = vmatmul.bf16.gmra.mxu0 %v1548
      %v2757 = vpop.f32.mrf.mxu0
      %v2758 = vadd.f32 %v2389, %v2757
      %v2759 = vpop.f32.mrf.mxu0
      %v2760 = vadd.f32 %v2391, %v2759
      %2761 = vmatmul.bf16.gmra.mxu0 %v1551
      %v2762 = vpop.f32.mrf.mxu0
      %v2763 = vadd.f32 %v2394, %v2762
      %v2764 = vpop.f32.mrf.mxu0
      %v2765 = vadd.f32 %v2396, %v2764
      %2766 = vmatmul.bf16.gmra.mxu0 %v1554
      %v2767 = vpop.f32.mrf.mxu0
      %v2768 = vadd.f32 %v2399, %v2767
      %v2769 = vpop.f32.mrf.mxu0
      %v2770 = vadd.f32 %v2401, %v2769
      %2771 = vmatmul.bf16.gmra.mxu0 %v1557
      %v2772 = vpop.f32.mrf.mxu0
      %v2773 = vadd.f32 %v2404, %v2772
      %v2774 = vpop.f32.mrf.mxu0
      %v2775 = vadd.f32 %v2406, %v2774
      %2776 = vmatmul.bf16.gmra.mxu0 %v1560
      %v2777 = vpop.f32.mrf.mxu0
      %v2778 = vadd.f32 %v2409, %v2777
      %v2779 = vpop.f32.mrf.mxu0
      %v2780 = vadd.f32 %v2411, %v2779
      %2781 = vmatmul.bf16.gmra.mxu0 %v1563
      %v2782 = vpop.f32.mrf.mxu0
      %v2783 = vadd.f32 %v2414, %v2782
      %v2784 = vpop.f32.mrf.mxu0
      %v2785 = vadd.f32 %v2416, %v2784
      %2786 = vmatmul.bf16.gmra.mxu0 %v1566
      %v2787 = vpop.f32.mrf.mxu0
      %v2788 = vadd.f32 %v2419, %v2787
      %v2789 = vpop.f32.mrf.mxu0
      %v2790 = vadd.f32 %v2421, %v2789
      %2791 = vmatmul.bf16.gmra.mxu0 %v1569
      %v2792 = vpop.f32.mrf.mxu0
      %v2793 = vadd.f32 %v2424, %v2792
      %v2794 = vpop.f32.mrf.mxu0
      %v2795 = vadd.f32 %v2426, %v2794
      %2796 = vmatmul.bf16.gmra.mxu0 %v1572
      %v2797 = vpop.f32.mrf.mxu0
      %v2798 = vadd.f32 %v2429, %v2797
      %v2799 = vpop.f32.mrf.mxu0
      %v2800 = vadd.f32 %v2431, %v2799
      %2801 = vmatmul.bf16.gmra.mxu0 %v1575
      %v2802 = vpop.f32.mrf.mxu0
      %v2803 = vadd.f32 %v2434, %v2802
      %v2804 = vpop.f32.mrf.mxu0
      %v2805 = vadd.f32 %v2436, %v2804
      %2806 = vmatmul.bf16.gmra.mxu0 %v1578
      %v2807 = vpop.f32.mrf.mxu0
      %v2808 = vadd.f32 %v2439, %v2807
      %v2809 = vpop.f32.mrf.mxu0
      %v2810 = vadd.f32 %v2441, %v2809
      %2811 = vmatmul.bf16.gmra.mxu0 %v1581
      %v2812 = vpop.f32.mrf.mxu0
      %v2813 = vadd.f32 %v2444, %v2812
      %v2814 = vpop.f32.mrf.mxu0
      %v2815 = vadd.f32 %v2446, %v2814
      %2816 = vmatmul.bf16.gmra.mxu0 %v1584
      %v2817 = vpop.f32.mrf.mxu0
      %v2818 = vadd.f32 %v2449, %v2817
      %v2819 = vpop.f32.mrf.mxu0
      %v2820 = vadd.f32 %v2451, %v2819
      %2821 = vmatmul.bf16.gmra.mxu0 %v1587
      %v2822 = vpop.f32.mrf.mxu0
      %v2823 = vadd.f32 %v2454, %v2822
      %v2824 = vpop.f32.mrf.mxu0
      %v2825 = vadd.f32 %v2456, %v2824
      %2826 = vmatmul.bf16.gmra.mxu0 %v1590
      %v2827 = vpop.f32.mrf.mxu0
      %v2828 = vadd.f32 %v2459, %v2827
      %v2829 = vpop.f32.mrf.mxu0
      %v2830 = vadd.f32 %v2461, %v2829
      %2831 = vmatmul.bf16.gmra.mxu0 %v1593
      %v2832 = vpop.f32.mrf.mxu0
      %v2833 = vadd.f32 %v2464, %v2832
      %v2834 = vpop.f32.mrf.mxu0
      %v2835 = vadd.f32 %v2466, %v2834
      %2836 = vmatmul.bf16.gmra.mxu0 %v1596
      %v2837 = vpop.f32.mrf.mxu0
      %v2838 = vadd.f32 %v2469, %v2837
      %v2839 = vpop.f32.mrf.mxu0
      %v2840 = vadd.f32 %v2471, %v2839
      %2841 = vmatmul.bf16.gmra.mxu0 %v1599
      %v2842 = vpop.f32.mrf.mxu0
      %v2843 = vadd.f32 %v2474, %v2842
      %v2844 = vpop.f32.mrf.mxu0
      %v2845 = vadd.f32 %v2476, %v2844
      %2846 = vmatmul.bf16.gmra.mxu0 %v1602
      %v2847 = vpop.f32.mrf.mxu0
      %v2848 = vadd.f32 %v2479, %v2847
      %v2849 = vpop.f32.mrf.mxu0
      %v2850 = vadd.f32 %v2481, %v2849
      %2851 = vmatmul.bf16.gmra.mxu0 %v1605
      %v2852 = vpop.f32.mrf.mxu0
      %v2853 = vadd.f32 %v2484, %v2852
      %v2854 = vpop.f32.mrf.mxu0
      %v2855 = vadd.f32 %v2486, %v2854
      %2856 = vmatmul.bf16.gmra.mxu0 %v1608
      %v2857 = vpop.f32.mrf.mxu0
      %v2858 = vadd.f32 %v2489, %v2857
      %v2859 = vpop.f32.mrf.mxu0
      %v2860 = vadd.f32 %v2491, %v2859
      %2861 = vmatmul.bf16.gmra.mxu0 %v1611
      %v2862 = vpop.f32.mrf.mxu0
      %v2863 = vadd.f32 %v2494, %v2862
      %v2864 = vpop.f32.mrf.mxu0
      %v2865 = vadd.f32 %v2496, %v2864
      %2866 = vmatmul.bf16.gmra.mxu0 %v1614
      %v2867 = vpop.f32.mrf.mxu0
      %v2868 = vadd.f32 %v2499, %v2867
      %v2869 = vpop.f32.mrf.mxu0
      %v2870 = vadd.f32 %v2501, %v2869
      %2871 = vmatmul.bf16.gmra.mxu0 %v1617
      %v2872 = vpop.f32.mrf.mxu0
      %v2873 = vadd.f32 %v2504, %v2872
      %v2874 = vpop.f32.mrf.mxu0
      %v2875 = vadd.f32 %v2506, %v2874
      %2876 = vmatmul.bf16.gmra.mxu0 %v1620
      %v2877 = vpop.f32.mrf.mxu0
      %v2878 = vadd.f32 %v2509, %v2877
      %v2879 = vpop.f32.mrf.mxu0
      %v2880 = vadd.f32 %v2511, %v2879
      %2881 = vmatmul.bf16.gmra.mxu0 %v1623
      %v2882 = vpop.f32.mrf.mxu0
      %v2883 = vadd.f32 %v2514, %v2882
      %v2884 = vpop.f32.mrf.mxu0
      %v2885 = vadd.f32 %v2516, %v2884
      %2886 = vmatmul.bf16.gmra.mxu0 %v1626
      %v2887 = vpop.f32.mrf.mxu0
      %v2888 = vadd.f32 %v2519, %v2887
      %v2889 = vpop.f32.mrf.mxu0
      %v2890 = vadd.f32 %v2521, %v2889
      %2891 = vmatmul.bf16.gmra.mxu0 %v1629
      %v2892 = vpop.f32.mrf.mxu0
      %v2893 = vadd.f32 %v2524, %v2892
      %v2894 = vpop.f32.mrf.mxu0
      %v2895 = vadd.f32 %v2526, %v2894
      %2896 = vmatmul.bf16.gmra.mxu0 %v1632
      %v2897 = vpop.f32.mrf.mxu0
      %v2898 = vadd.f32 %v2529, %v2897
      %v2899 = vpop.f32.mrf.mxu0
      %v2900 = vadd.f32 %v2531, %v2899
      %2901 = vmatmul.bf16.gmra.mxu0 %v1635
      %v2902 = vpop.f32.mrf.mxu0
      %v2903 = vadd.f32 %v2534, %v2902
      %v2904 = vpop.f32.mrf.mxu0
      %v2905 = vadd.f32 %v2536, %v2904
      %2906 = vmatmul.bf16.gmra.mxu0 %v1638
      %v2907 = vpop.f32.mrf.mxu0
      %v2908 = vadd.f32 %v2539, %v2907
      %v2909 = vpop.f32.mrf.mxu0
      %v2910 = vadd.f32 %v2541, %v2909
      %2911 = vmatmul.bf16.gmra.mxu0 %v1641
      %v2912 = vpop.f32.mrf.mxu0
      %v2913 = vadd.f32 %v2544, %v2912
      %v2914 = vpop.f32.mrf.mxu0
      %v2915 = vadd.f32 %v2546, %v2914
      %2916 = vmatmul.bf16.gmra.mxu0 %v1644
      %v2917 = vpop.f32.mrf.mxu0
      %v2918 = vadd.f32 %v2549, %v2917
      %v2919 = vpop.f32.mrf.mxu0
      %v2920 = vadd.f32 %v2551, %v2919
      %2921 = vmatmul.bf16.gmra.mxu0 %v1647
      %v2922 = vpop.f32.mrf.mxu0
      %v2923 = vadd.f32 %v2554, %v2922
      %v2924 = vpop.f32.mrf.mxu0
      %v2925 = vadd.f32 %v2556, %v2924
      %2926 = vmatmul.bf16.gmra.mxu0 %v1650
      %v2927 = vpop.f32.mrf.mxu0
      %v2928 = vadd.f32 %v2559, %v2927
      %v2929 = vpop.f32.mrf.mxu0
      %v2930 = vadd.f32 %v2561, %v2929
      %2931 = vmatmul.bf16.gmra.mxu0 %v1653
      %v2932 = vpop.f32.mrf.mxu0
      %v2933 = vadd.f32 %v2564, %v2932
      %v2934 = vpop.f32.mrf.mxu0
      %v2935 = vadd.f32 %v2566, %v2934
      %2936 = vmatmul.bf16.gmra.mxu0 %v1656
      %v2937 = vpop.f32.mrf.mxu0
      %v2938 = vadd.f32 %v2569, %v2937
      %v2939 = vpop.f32.mrf.mxu0
      %v2940 = vadd.f32 %v2571, %v2939
      %2941 = vmatmul.bf16.gmra.mxu0 %v1659
      %v2942 = vpop.f32.mrf.mxu0
      %v2943 = vadd.f32 %v2574, %v2942
      %v2944 = vpop.f32.mrf.mxu0
      %v2945 = vadd.f32 %v2576, %v2944
      %2946 = vmatmul.bf16.gmra.mxu0 %v1662
      %v2947 = vpop.f32.mrf.mxu0
      %v2948 = vadd.f32 %v2579, %v2947
      %v2949 = vpop.f32.mrf.mxu0
      %v2950 = vadd.f32 %v2581, %v2949
      %2951 = vmatmul.bf16.gmra.mxu0 %v1665
      %v2952 = vpop.f32.mrf.mxu0
      %v2953 = vadd.f32 %v2584, %v2952
      %v2954 = vpop.f32.mrf.mxu0
      %v2955 = vadd.f32 %v2586, %v2954
      %2956 = vmatmul.bf16.gmra.mxu0 %v1668
      %v2957 = vpop.f32.mrf.mxu0
      %v2958 = vadd.f32 %v2589, %v2957
      %v2959 = vpop.f32.mrf.mxu0
      %v2960 = vadd.f32 %v2591, %v2959
      %2961 = vmatmul.bf16.gmra.mxu0 %v1671
      %v2962 = vpop.f32.mrf.mxu0
      %v2963 = vadd.f32 %v2594, %v2962
      %v2964 = vpop.f32.mrf.mxu0
      %v2965 = vadd.f32 %v2596, %v2964
      %2966 = vmatmul.bf16.gmra.mxu0 %v1674
      %v2967 = vpop.f32.mrf.mxu0
      %v2968 = vadd.f32 %v2599, %v2967
      %v2969 = vpop.f32.mrf.mxu0
      %v2970 = vadd.f32 %v2601, %v2969
      %2971 = vmatmul.bf16.gmra.mxu0 %v1677
      %v2972 = vpop.f32.mrf.mxu0
      %v2973 = vadd.f32 %v2604, %v2972
      %v2974 = vpop.f32.mrf.mxu0
      %v2975 = vadd.f32 %v2606, %v2974
      %2976 = vmatmul.bf16.gmra.mxu0 %v1680
      %v2977 = vpop.f32.mrf.mxu0
      %v2978 = vadd.f32 %v2609, %v2977
      %v2979 = vpop.f32.mrf.mxu0
      %v2980 = vadd.f32 %v2611, %v2979
      %2981 = vmatmul.bf16.gmra.mxu0 %v1683
      %v2982 = vpop.f32.mrf.mxu0
      %v2983 = vadd.f32 %v2614, %v2982
      %v2984 = vpop.f32.mrf.mxu0
      %v2985 = vadd.f32 %v2616, %v2984
      %2986 = vmatmul.bf16.gmra.mxu0 %v1686
      %v2987 = vpop.f32.mrf.mxu0
      %v2988 = vadd.f32 %v2619, %v2987
      %v2989 = vpop.f32.mrf.mxu0
      %v2990 = vadd.f32 %v2621, %v2989
      %2991 = vmatmul.bf16.gmra.mxu0 %v1689
      %v2992 = vpop.f32.mrf.mxu0
      %v2993 = vadd.f32 %v2624, %v2992
      %v2994 = vpop.f32.mrf.mxu0
      %v2995 = vadd.f32 %v2626, %v2994
      %2996 = vmatmul.bf16.gmra.mxu0 %v1692
      %v2997 = vpop.f32.mrf.mxu0
      %v2998 = vadd.f32 %v2629, %v2997
      %v2999 = vpop.f32.mrf.mxu0
      %v3000 = vadd.f32 %v2631, %v2999
      %3001 = vmatmul.bf16.gmra.mxu0 %v1695
      %v3002 = vpop.f32.mrf.mxu0
      %v3003 = vadd.f32 %v2634, %v3002
      %v3004 = vpop.f32.mrf.mxu0
      %v3005 = vadd.f32 %v2636, %v3004
      %3006 = vmatmul.bf16.gmra.mxu0 %v1698
      %v3007 = vpop.f32.mrf.mxu0
      %v3008 = vadd.f32 %v2639, %v3007
      %v3009 = vpop.f32.mrf.mxu0
      %v3010 = vadd.f32 %v2641, %v3009
      %3011 = vmatmul.bf16.gmra.mxu0 %v1701
      %v3012 = vpop.f32.mrf.mxu0
      %v3013 = vadd.f32 %v2644, %v3012
      %v3014 = vpop.f32.mrf.mxu0
      %v3015 = vadd.f32 %v2646, %v3014
      %3016 = vmatmul.bf16.gmra.mxu0 %v1704
      %v3017 = vpop.f32.mrf.mxu0
      %v3018 = vadd.f32 %v2649, %v3017
      %v3019 = vpop.f32.mrf.mxu0
      %v3020 = vadd.f32 %v2651, %v3019
      %3021 = vmatmul.bf16.gmra.mxu0 %v1707
      %v3022 = vpop.f32.mrf.mxu0
      %v3023 = vadd.f32 %v2654, %v3022
      %v3024 = vpop.f32.mrf.mxu0
      %v3025 = vadd.f32 %v2656, %v3024
      %3026 = vmatmul.bf16.gmra.mxu0 %v1710
      %v3027 = vpop.f32.mrf.mxu0
      %v3028 = vadd.f32 %v2659, %v3027
      %v3029 = vpop.f32.mrf.mxu0
      %v3030 = vadd.f32 %v2661, %v3029
      %3031 = vmatmul.bf16.gmra.mxu0 %v1713
      %v3032 = vpop.f32.mrf.mxu0
      %v3033 = vadd.f32 %v2664, %v3032
      %v3034 = vpop.f32.mrf.mxu0
      %v3035 = vadd.f32 %v2666, %v3034
      %3036 = vdwg.mxu0
      %vm3037 = vcmask 400384
      %v3038 = vsel %vm3037, %v2678, 0.0
      %3039 = vadd.xlane.f32.xlu0 %v3038
      %v3040 = vpop.xlane.xlu0 %3039
      %v3041 = vsel %vm3037, %v2680, 0.0
      %3042 = vadd.xlane.f32.xlu0 %v3041
      %v3043 = vpop.xlane.xlu0 %3042
      %v3044 = vsel %vm3037, %v2683, 0.0
      %3045 = vadd.xlane.f32.xlu0 %v3044
      %v3046 = vpop.xlane.xlu0 %3045
      %v3047 = vsel %vm3037, %v2685, 0.0
      %3048 = vadd.xlane.f32.xlu0 %v3047
      %v3049 = vpop.xlane.xlu0 %3048
      %v3050 = vsel %vm3037, %v2688, 0.0
      %3051 = vadd.xlane.f32.xlu0 %v3050
      %v3052 = vpop.xlane.xlu0 %3051
      %v3053 = vsel %vm3037, %v2690, 0.0
      %3054 = vadd.xlane.f32.xlu0 %v3053
      %v3055 = vpop.xlane.xlu0 %3054
      %v3056 = vsel %vm3037, %v2693, 0.0
      %3057 = vadd.xlane.f32.xlu0 %v3056
      %v3058 = vpop.xlane.xlu0 %3057
      %v3059 = vsel %vm3037, %v2695, 0.0
      %3060 = vadd.xlane.f32.xlu0 %v3059
      %v3061 = vpop.xlane.xlu0 %3060
      %v3062 = vsel %vm3037, %v2698, 0.0
      %3063 = vadd.xlane.f32.xlu0 %v3062
      %v3064 = vpop.xlane.xlu0 %3063
      %v3065 = vsel %vm3037, %v2700, 0.0
      %3066 = vadd.xlane.f32.xlu0 %v3065
      %v3067 = vpop.xlane.xlu0 %3066
      %v3068 = vsel %vm3037, %v2703, 0.0
      %3069 = vadd.xlane.f32.xlu0 %v3068
      %v3070 = vpop.xlane.xlu0 %3069
      %v3071 = vsel %vm3037, %v2705, 0.0
      %3072 = vadd.xlane.f32.xlu0 %v3071
      %v3073 = vpop.xlane.xlu0 %3072
      %v3074 = vsel %vm3037, %v2708, 0.0
      %3075 = vadd.xlane.f32.xlu0 %v3074
      %v3076 = vpop.xlane.xlu0 %3075
      %v3077 = vsel %vm3037, %v2710, 0.0
      %3078 = vadd.xlane.f32.xlu0 %v3077
      %v3079 = vpop.xlane.xlu0 %3078
      %v3080 = vsel %vm3037, %v2713, 0.0
      %3081 = vadd.xlane.f32.xlu0 %v3080
      %v3082 = vpop.xlane.xlu0 %3081
      %v3083 = vsel %vm3037, %v2715, 0.0
      %3084 = vadd.xlane.f32.xlu0 %v3083
      %v3085 = vpop.xlane.xlu0 %3084
      %v3086 = vsel %vm3037, %v2718, 0.0
      %3087 = vadd.xlane.f32.xlu0 %v3086
      %v3088 = vpop.xlane.xlu0 %3087
      %v3089 = vsel %vm3037, %v2720, 0.0
      %3090 = vadd.xlane.f32.xlu0 %v3089
      %v3091 = vpop.xlane.xlu0 %3090
      %v3092 = vsel %vm3037, %v2723, 0.0
      %3093 = vadd.xlane.f32.xlu0 %v3092
      %v3094 = vpop.xlane.xlu0 %3093
      %v3095 = vsel %vm3037, %v2725, 0.0
      %3096 = vadd.xlane.f32.xlu0 %v3095
      %v3097 = vpop.xlane.xlu0 %3096
      %v3098 = vsel %vm3037, %v2728, 0.0
      %3099 = vadd.xlane.f32.xlu0 %v3098
      %v3100 = vpop.xlane.xlu0 %3099
      %v3101 = vsel %vm3037, %v2730, 0.0
      %3102 = vadd.xlane.f32.xlu0 %v3101
      %v3103 = vpop.xlane.xlu0 %3102
      %v3104 = vsel %vm3037, %v2733, 0.0
      %3105 = vadd.xlane.f32.xlu0 %v3104
      %v3106 = vpop.xlane.xlu0 %3105
      %v3107 = vsel %vm3037, %v2735, 0.0
      %3108 = vadd.xlane.f32.xlu0 %v3107
      %v3109 = vpop.xlane.xlu0 %3108
      %v3110 = vsel %vm3037, %v2738, 0.0
      %3111 = vadd.xlane.f32.xlu0 %v3110
      %v3112 = vpop.xlane.xlu0 %3111
      %v3113 = vsel %vm3037, %v2740, 0.0
      %3114 = vadd.xlane.f32.xlu0 %v3113
      %v3115 = vpop.xlane.xlu0 %3114
      %v3116 = vsel %vm3037, %v2743, 0.0
      %3117 = vadd.xlane.f32.xlu0 %v3116
      %v3118 = vpop.xlane.xlu0 %3117
      %v3119 = vsel %vm3037, %v2745, 0.0
      %3120 = vadd.xlane.f32.xlu0 %v3119
      %v3121 = vpop.xlane.xlu0 %3120
      %v3122 = vsel %vm3037, %v2748, 0.0
      %3123 = vadd.xlane.f32.xlu0 %v3122
      %v3124 = vpop.xlane.xlu0 %3123
      %v3125 = vsel %vm3037, %v2750, 0.0
      %3126 = vadd.xlane.f32.xlu0 %v3125
      %v3127 = vpop.xlane.xlu0 %3126
      %v3128 = vsel %vm3037, %v2753, 0.0
      %3129 = vadd.xlane.f32.xlu0 %v3128
      %v3130 = vpop.xlane.xlu0 %3129
      %v3131 = vsel %vm3037, %v2755, 0.0
      %3132 = vadd.xlane.f32.xlu0 %v3131
      %v3133 = vpop.xlane.xlu0 %3132
      %v3134 = vsel %vm3037, %v2758, 0.0
      %3135 = vadd.xlane.f32.xlu0 %v3134
      %v3136 = vpop.xlane.xlu0 %3135
      %v3137 = vsel %vm3037, %v2760, 0.0
      %3138 = vadd.xlane.f32.xlu0 %v3137
      %v3139 = vpop.xlane.xlu0 %3138
      %v3140 = vsel %vm3037, %v2763, 0.0
      %3141 = vadd.xlane.f32.xlu0 %v3140
      %v3142 = vpop.xlane.xlu0 %3141
      %v3143 = vsel %vm3037, %v2765, 0.0
      %3144 = vadd.xlane.f32.xlu0 %v3143
      %v3145 = vpop.xlane.xlu0 %3144
      %v3146 = vsel %vm3037, %v2768, 0.0
      %3147 = vadd.xlane.f32.xlu0 %v3146
      %v3148 = vpop.xlane.xlu0 %3147
      %v3149 = vsel %vm3037, %v2770, 0.0
      %3150 = vadd.xlane.f32.xlu0 %v3149
      %v3151 = vpop.xlane.xlu0 %3150
      %v3152 = vsel %vm3037, %v2773, 0.0
      %3153 = vadd.xlane.f32.xlu0 %v3152
      %v3154 = vpop.xlane.xlu0 %3153
      %v3155 = vsel %vm3037, %v2775, 0.0
      %3156 = vadd.xlane.f32.xlu0 %v3155
      %v3157 = vpop.xlane.xlu0 %3156
      %v3158 = vsel %vm3037, %v2778, 0.0
      %3159 = vadd.xlane.f32.xlu0 %v3158
      %v3160 = vpop.xlane.xlu0 %3159
      %v3161 = vsel %vm3037, %v2780, 0.0
      %3162 = vadd.xlane.f32.xlu0 %v3161
      %v3163 = vpop.xlane.xlu0 %3162
      %v3164 = vsel %vm3037, %v2783, 0.0
      %3165 = vadd.xlane.f32.xlu0 %v3164
      %v3166 = vpop.xlane.xlu0 %3165
      %v3167 = vsel %vm3037, %v2785, 0.0
      %3168 = vadd.xlane.f32.xlu0 %v3167
      %v3169 = vpop.xlane.xlu0 %3168
      %v3170 = vsel %vm3037, %v2788, 0.0
      %3171 = vadd.xlane.f32.xlu0 %v3170
      %v3172 = vpop.xlane.xlu0 %3171
      %v3173 = vsel %vm3037, %v2790, 0.0
      %3174 = vadd.xlane.f32.xlu0 %v3173
      %v3175 = vpop.xlane.xlu0 %3174
      %v3176 = vsel %vm3037, %v2793, 0.0
      %3177 = vadd.xlane.f32.xlu0 %v3176
      %v3178 = vpop.xlane.xlu0 %3177
      %v3179 = vsel %vm3037, %v2795, 0.0
      %3180 = vadd.xlane.f32.xlu0 %v3179
      %v3181 = vpop.xlane.xlu0 %3180
      %v3182 = vsel %vm3037, %v2798, 0.0
      %3183 = vadd.xlane.f32.xlu0 %v3182
      %v3184 = vpop.xlane.xlu0 %3183
      %v3185 = vsel %vm3037, %v2800, 0.0
      %3186 = vadd.xlane.f32.xlu0 %v3185
      %v3187 = vpop.xlane.xlu0 %3186
      %v3188 = vsel %vm3037, %v2803, 0.0
      %3189 = vadd.xlane.f32.xlu0 %v3188
      %v3190 = vpop.xlane.xlu0 %3189
      %v3191 = vsel %vm3037, %v2805, 0.0
      %3192 = vadd.xlane.f32.xlu0 %v3191
      %v3193 = vpop.xlane.xlu0 %3192
      %v3194 = vsel %vm3037, %v2808, 0.0
      %3195 = vadd.xlane.f32.xlu0 %v3194
      %v3196 = vpop.xlane.xlu0 %3195
      %v3197 = vsel %vm3037, %v2810, 0.0
      %3198 = vadd.xlane.f32.xlu0 %v3197
      %v3199 = vpop.xlane.xlu0 %3198
      %v3200 = vsel %vm3037, %v2813, 0.0
      %3201 = vadd.xlane.f32.xlu0 %v3200
      %v3202 = vpop.xlane.xlu0 %3201
      %v3203 = vsel %vm3037, %v2815, 0.0
      %3204 = vadd.xlane.f32.xlu0 %v3203
      %v3205 = vpop.xlane.xlu0 %3204
      %v3206 = vsel %vm3037, %v2818, 0.0
      %3207 = vadd.xlane.f32.xlu0 %v3206
      %v3208 = vpop.xlane.xlu0 %3207
      %v3209 = vsel %vm3037, %v2820, 0.0
      %3210 = vadd.xlane.f32.xlu0 %v3209
      %v3211 = vpop.xlane.xlu0 %3210
      %v3212 = vsel %vm3037, %v2823, 0.0
      %3213 = vadd.xlane.f32.xlu0 %v3212
      %v3214 = vpop.xlane.xlu0 %3213
      %v3215 = vsel %vm3037, %v2825, 0.0
      %3216 = vadd.xlane.f32.xlu0 %v3215
      %v3217 = vpop.xlane.xlu0 %3216
      %v3218 = vsel %vm3037, %v2828, 0.0
      %3219 = vadd.xlane.f32.xlu0 %v3218
      %v3220 = vpop.xlane.xlu0 %3219
      %v3221 = vsel %vm3037, %v2830, 0.0
      %3222 = vadd.xlane.f32.xlu0 %v3221
      %v3223 = vpop.xlane.xlu0 %3222
      %v3224 = vsel %vm3037, %v2833, 0.0
      %3225 = vadd.xlane.f32.xlu0 %v3224
      %v3226 = vpop.xlane.xlu0 %3225
      %v3227 = vsel %vm3037, %v2835, 0.0
      %3228 = vadd.xlane.f32.xlu0 %v3227
      %v3229 = vpop.xlane.xlu0 %3228
      %v3230 = vsel %vm3037, %v2838, 0.0
      %3231 = vadd.xlane.f32.xlu0 %v3230
      %v3232 = vpop.xlane.xlu0 %3231
      %v3233 = vsel %vm3037, %v2840, 0.0
      %3234 = vadd.xlane.f32.xlu0 %v3233
      %v3235 = vpop.xlane.xlu0 %3234
      %v3236 = vsel %vm3037, %v2843, 0.0
      %3237 = vadd.xlane.f32.xlu0 %v3236
      %v3238 = vpop.xlane.xlu0 %3237
      %v3239 = vsel %vm3037, %v2845, 0.0
      %3240 = vadd.xlane.f32.xlu0 %v3239
      %v3241 = vpop.xlane.xlu0 %3240
      %v3242 = vsel %vm3037, %v2848, 0.0
      %3243 = vadd.xlane.f32.xlu0 %v3242
      %v3244 = vpop.xlane.xlu0 %3243
      %v3245 = vsel %vm3037, %v2850, 0.0
      %3246 = vadd.xlane.f32.xlu0 %v3245
      %v3247 = vpop.xlane.xlu0 %3246
      %v3248 = vsel %vm3037, %v2853, 0.0
      %3249 = vadd.xlane.f32.xlu0 %v3248
      %v3250 = vpop.xlane.xlu0 %3249
      %v3251 = vsel %vm3037, %v2855, 0.0
      %3252 = vadd.xlane.f32.xlu0 %v3251
      %v3253 = vpop.xlane.xlu0 %3252
      %v3254 = vsel %vm3037, %v2858, 0.0
      %3255 = vadd.xlane.f32.xlu0 %v3254
      %v3256 = vpop.xlane.xlu0 %3255
      %v3257 = vsel %vm3037, %v2860, 0.0
      %3258 = vadd.xlane.f32.xlu0 %v3257
      %v3259 = vpop.xlane.xlu0 %3258
      %v3260 = vsel %vm3037, %v2863, 0.0
      %3261 = vadd.xlane.f32.xlu0 %v3260
      %v3262 = vpop.xlane.xlu0 %3261
      %v3263 = vsel %vm3037, %v2865, 0.0
      %3264 = vadd.xlane.f32.xlu0 %v3263
      %v3265 = vpop.xlane.xlu0 %3264
      %v3266 = vsel %vm3037, %v2868, 0.0
      %3267 = vadd.xlane.f32.xlu0 %v3266
      %v3268 = vpop.xlane.xlu0 %3267
      %v3269 = vsel %vm3037, %v2870, 0.0
      %3270 = vadd.xlane.f32.xlu0 %v3269
      %v3271 = vpop.xlane.xlu0 %3270
      %v3272 = vsel %vm3037, %v2873, 0.0
      %3273 = vadd.xlane.f32.xlu0 %v3272
      %v3274 = vpop.xlane.xlu0 %3273
      %v3275 = vsel %vm3037, %v2875, 0.0
      %3276 = vadd.xlane.f32.xlu0 %v3275
      %v3277 = vpop.xlane.xlu0 %3276
      %v3278 = vsel %vm3037, %v2878, 0.0
      %3279 = vadd.xlane.f32.xlu0 %v3278
      %v3280 = vpop.xlane.xlu0 %3279
      %v3281 = vsel %vm3037, %v2880, 0.0
      %3282 = vadd.xlane.f32.xlu0 %v3281
      %v3283 = vpop.xlane.xlu0 %3282
      %v3284 = vsel %vm3037, %v2883, 0.0
      %3285 = vadd.xlane.f32.xlu0 %v3284
      %v3286 = vpop.xlane.xlu0 %3285
      %v3287 = vsel %vm3037, %v2885, 0.0
      %3288 = vadd.xlane.f32.xlu0 %v3287
      %v3289 = vpop.xlane.xlu0 %3288
      %v3290 = vsel %vm3037, %v2888, 0.0
      %3291 = vadd.xlane.f32.xlu0 %v3290
      %v3292 = vpop.xlane.xlu0 %3291
      %v3293 = vsel %vm3037, %v2890, 0.0
      %3294 = vadd.xlane.f32.xlu0 %v3293
      %v3295 = vpop.xlane.xlu0 %3294
      %v3296 = vsel %vm3037, %v2893, 0.0
      %3297 = vadd.xlane.f32.xlu0 %v3296
      %v3298 = vpop.xlane.xlu0 %3297
      %v3299 = vsel %vm3037, %v2895, 0.0
      %3300 = vadd.xlane.f32.xlu0 %v3299
      %v3301 = vpop.xlane.xlu0 %3300
      %v3302 = vsel %vm3037, %v2898, 0.0
      %3303 = vadd.xlane.f32.xlu0 %v3302
      %v3304 = vpop.xlane.xlu0 %3303
      %v3305 = vsel %vm3037, %v2900, 0.0
      %3306 = vadd.xlane.f32.xlu0 %v3305
      %v3307 = vpop.xlane.xlu0 %3306
      %v3308 = vsel %vm3037, %v2903, 0.0
      %3309 = vadd.xlane.f32.xlu0 %v3308
      %v3310 = vpop.xlane.xlu0 %3309
      %v3311 = vsel %vm3037, %v2905, 0.0
      %3312 = vadd.xlane.f32.xlu0 %v3311
      %v3313 = vpop.xlane.xlu0 %3312
      %v3314 = vsel %vm3037, %v2908, 0.0
      %3315 = vadd.xlane.f32.xlu0 %v3314
      %v3316 = vpop.xlane.xlu0 %3315
      %v3317 = vsel %vm3037, %v2910, 0.0
      %3318 = vadd.xlane.f32.xlu0 %v3317
      %v3319 = vpop.xlane.xlu0 %3318
      %v3320 = vsel %vm3037, %v2913, 0.0
      %3321 = vadd.xlane.f32.xlu0 %v3320
      %v3322 = vpop.xlane.xlu0 %3321
      %v3323 = vsel %vm3037, %v2915, 0.0
      %3324 = vadd.xlane.f32.xlu0 %v3323
      %v3325 = vpop.xlane.xlu0 %3324
      %v3326 = vsel %vm3037, %v2918, 0.0
      %3327 = vadd.xlane.f32.xlu0 %v3326
      %v3328 = vpop.xlane.xlu0 %3327
      %v3329 = vsel %vm3037, %v2920, 0.0
      %3330 = vadd.xlane.f32.xlu0 %v3329
      %v3331 = vpop.xlane.xlu0 %3330
      %v3332 = vsel %vm3037, %v2923, 0.0
      %3333 = vadd.xlane.f32.xlu0 %v3332
      %v3334 = vpop.xlane.xlu0 %3333
      %v3335 = vsel %vm3037, %v2925, 0.0
      %3336 = vadd.xlane.f32.xlu0 %v3335
      %v3337 = vpop.xlane.xlu0 %3336
      %v3338 = vsel %vm3037, %v2928, 0.0
      %3339 = vadd.xlane.f32.xlu0 %v3338
      %v3340 = vpop.xlane.xlu0 %3339
      %v3341 = vsel %vm3037, %v2930, 0.0
      %3342 = vadd.xlane.f32.xlu0 %v3341
      %v3343 = vpop.xlane.xlu0 %3342
      %v3344 = vsel %vm3037, %v2933, 0.0
      %3345 = vadd.xlane.f32.xlu0 %v3344
      %v3346 = vpop.xlane.xlu0 %3345
      %v3347 = vsel %vm3037, %v2935, 0.0
      %3348 = vadd.xlane.f32.xlu0 %v3347
      %v3349 = vpop.xlane.xlu0 %3348
      %v3350 = vsel %vm3037, %v2938, 0.0
      %3351 = vadd.xlane.f32.xlu0 %v3350
      %v3352 = vpop.xlane.xlu0 %3351
      %v3353 = vsel %vm3037, %v2940, 0.0
      %3354 = vadd.xlane.f32.xlu0 %v3353
      %v3355 = vpop.xlane.xlu0 %3354
      %v3356 = vsel %vm3037, %v2943, 0.0
      %3357 = vadd.xlane.f32.xlu0 %v3356
      %v3358 = vpop.xlane.xlu0 %3357
      %v3359 = vsel %vm3037, %v2945, 0.0
      %3360 = vadd.xlane.f32.xlu0 %v3359
      %v3361 = vpop.xlane.xlu0 %3360
      %v3362 = vsel %vm3037, %v2948, 0.0
      %3363 = vadd.xlane.f32.xlu0 %v3362
      %v3364 = vpop.xlane.xlu0 %3363
      %v3365 = vsel %vm3037, %v2950, 0.0
      %3366 = vadd.xlane.f32.xlu0 %v3365
      %v3367 = vpop.xlane.xlu0 %3366
      %v3368 = vsel %vm3037, %v2953, 0.0
      %3369 = vadd.xlane.f32.xlu0 %v3368
      %v3370 = vpop.xlane.xlu0 %3369
      %v3371 = vsel %vm3037, %v2955, 0.0
      %3372 = vadd.xlane.f32.xlu0 %v3371
      %v3373 = vpop.xlane.xlu0 %3372
      %v3374 = vsel %vm3037, %v2958, 0.0
      %3375 = vadd.xlane.f32.xlu0 %v3374
      %v3376 = vpop.xlane.xlu0 %3375
      %v3377 = vsel %vm3037, %v2960, 0.0
      %3378 = vadd.xlane.f32.xlu0 %v3377
      %v3379 = vpop.xlane.xlu0 %3378
      %v3380 = vsel %vm3037, %v2963, 0.0
      %3381 = vadd.xlane.f32.xlu0 %v3380
      %v3382 = vpop.xlane.xlu0 %3381
      %v3383 = vsel %vm3037, %v2965, 0.0
      %3384 = vadd.xlane.f32.xlu0 %v3383
      %v3385 = vpop.xlane.xlu0 %3384
      %v3386 = vsel %vm3037, %v2968, 0.0
      %3387 = vadd.xlane.f32.xlu0 %v3386
      %v3388 = vpop.xlane.xlu0 %3387
      %v3389 = vsel %vm3037, %v2970, 0.0
      %3390 = vadd.xlane.f32.xlu0 %v3389
      %v3391 = vpop.xlane.xlu0 %3390
      %v3392 = vsel %vm3037, %v2973, 0.0
      %3393 = vadd.xlane.f32.xlu0 %v3392
      %v3394 = vpop.xlane.xlu0 %3393
      %v3395 = vsel %vm3037, %v2975, 0.0
      %3396 = vadd.xlane.f32.xlu0 %v3395
      %v3397 = vpop.xlane.xlu0 %3396
      %v3398 = vsel %vm3037, %v2978, 0.0
      %3399 = vadd.xlane.f32.xlu0 %v3398
      %v3400 = vpop.xlane.xlu0 %3399
      %v3401 = vsel %vm3037, %v2980, 0.0
      %3402 = vadd.xlane.f32.xlu0 %v3401
      %v3403 = vpop.xlane.xlu0 %3402
      %v3404 = vsel %vm3037, %v2983, 0.0
      %3405 = vadd.xlane.f32.xlu0 %v3404
      %v3406 = vpop.xlane.xlu0 %3405
      %v3407 = vsel %vm3037, %v2985, 0.0
      %3408 = vadd.xlane.f32.xlu0 %v3407
      %v3409 = vpop.xlane.xlu0 %3408
      %v3410 = vsel %vm3037, %v2988, 0.0
      %3411 = vadd.xlane.f32.xlu0 %v3410
      %v3412 = vpop.xlane.xlu0 %3411
      %v3413 = vsel %vm3037, %v2990, 0.0
      %3414 = vadd.xlane.f32.xlu0 %v3413
      %v3415 = vpop.xlane.xlu0 %3414
      %v3416 = vsel %vm3037, %v2993, 0.0
      %3417 = vadd.xlane.f32.xlu0 %v3416
      %v3418 = vpop.xlane.xlu0 %3417
      %v3419 = vsel %vm3037, %v2995, 0.0
      %3420 = vadd.xlane.f32.xlu0 %v3419
      %v3421 = vpop.xlane.xlu0 %3420
      %v3422 = vsel %vm3037, %v2998, 0.0
      %3423 = vadd.xlane.f32.xlu0 %v3422
      %v3424 = vpop.xlane.xlu0 %3423
      %v3425 = vsel %vm3037, %v3000, 0.0
      %3426 = vadd.xlane.f32.xlu0 %v3425
      %v3427 = vpop.xlane.xlu0 %3426
      %v3428 = vsel %vm3037, %v3003, 0.0
      %3429 = vadd.xlane.f32.xlu0 %v3428
      %v3430 = vpop.xlane.xlu0 %3429
      %v3431 = vsel %vm3037, %v3005, 0.0
      %3432 = vadd.xlane.f32.xlu0 %v3431
      %v3433 = vpop.xlane.xlu0 %3432
      %v3434 = vsel %vm3037, %v3008, 0.0
      %3435 = vadd.xlane.f32.xlu0 %v3434
      %v3436 = vpop.xlane.xlu0 %3435
      %v3437 = vsel %vm3037, %v3010, 0.0
      %3438 = vadd.xlane.f32.xlu0 %v3437
      %v3439 = vpop.xlane.xlu0 %3438
      %v3440 = vsel %vm3037, %v3013, 0.0
      %3441 = vadd.xlane.f32.xlu0 %v3440
      %v3442 = vpop.xlane.xlu0 %3441
      %v3443 = vsel %vm3037, %v3015, 0.0
      %3444 = vadd.xlane.f32.xlu0 %v3443
      %v3445 = vpop.xlane.xlu0 %3444
      %v3446 = vsel %vm3037, %v3018, 0.0
      %3447 = vadd.xlane.f32.xlu0 %v3446
      %v3448 = vpop.xlane.xlu0 %3447
      %v3449 = vsel %vm3037, %v3020, 0.0
      %3450 = vadd.xlane.f32.xlu0 %v3449
      %v3451 = vpop.xlane.xlu0 %3450
      %v3452 = vsel %vm3037, %v3023, 0.0
      %3453 = vadd.xlane.f32.xlu0 %v3452
      %v3454 = vpop.xlane.xlu0 %3453
      %v3455 = vsel %vm3037, %v3025, 0.0
      %3456 = vadd.xlane.f32.xlu0 %v3455
      %v3457 = vpop.xlane.xlu0 %3456
      %v3458 = vsel %vm3037, %v3028, 0.0
      %3459 = vadd.xlane.f32.xlu0 %v3458
      %v3460 = vpop.xlane.xlu0 %3459
      %v3461 = vsel %vm3037, %v3030, 0.0
      %3462 = vadd.xlane.f32.xlu0 %v3461
      %v3463 = vpop.xlane.xlu0 %3462
      %v3464 = vsel %vm3037, %v3033, 0.0
      %3465 = vadd.xlane.f32.xlu0 %v3464
      %v3466 = vpop.xlane.xlu0 %3465
      %v3467 = vsel %vm3037, %v3035, 0.0
      %3468 = vadd.xlane.f32.xlu0 %v3467
      %v3469 = vpop.xlane.xlu0 %3468
      %v3470 = vmul.f32 %v3040, 0.020408163
      %v3471 = vmul.f32 %v3043, 0.020408163
      %v3472 = vmul.f32 %v3046, 0.020408163
      %v3473 = vmul.f32 %v3049, 0.020408163
      %v3474 = vmul.f32 %v3052, 0.020408163
      %v3475 = vmul.f32 %v3055, 0.020408163
      %v3476 = vmul.f32 %v3058, 0.020408163
      %v3477 = vmul.f32 %v3061, 0.020408163
      %v3478 = vmul.f32 %v3064, 0.020408163
      %v3479 = vmul.f32 %v3067, 0.020408163
      %v3480 = vmul.f32 %v3070, 0.020408163
      %v3481 = vmul.f32 %v3073, 0.020408163
      %v3482 = vmul.f32 %v3076, 0.020408163
      %v3483 = vmul.f32 %v3079, 0.020408163
      %v3484 = vmul.f32 %v3082, 0.020408163
      %v3485 = vmul.f32 %v3085, 0.020408163
      %v3486 = vmul.f32 %v3088, 0.020408163
      %v3487 = vmul.f32 %v3091, 0.020408163
      %v3488 = vmul.f32 %v3094, 0.020408163
      %v3489 = vmul.f32 %v3097, 0.020408163
      %v3490 = vmul.f32 %v3100, 0.020408163
      %v3491 = vmul.f32 %v3103, 0.020408163
      %v3492 = vmul.f32 %v3106, 0.020408163
      %v3493 = vmul.f32 %v3109, 0.020408163
      %v3494 = vmul.f32 %v3112, 0.020408163
      %v3495 = vmul.f32 %v3115, 0.020408163
      %v3496 = vmul.f32 %v3118, 0.020408163
      %v3497 = vmul.f32 %v3121, 0.020408163
      %v3498 = vmul.f32 %v3124, 0.020408163
      %v3499 = vmul.f32 %v3127, 0.020408163
      %v3500 = vmul.f32 %v3130, 0.020408163
      %v3501 = vmul.f32 %v3133, 0.020408163
      %v3502 = vmul.f32 %v3136, 0.020408163
      %v3503 = vmul.f32 %v3139, 0.020408163
      %v3504 = vmul.f32 %v3142, 0.020408163
      %v3505 = vmul.f32 %v3145, 0.020408163
      %v3506 = vmul.f32 %v3148, 0.020408163
      %v3507 = vmul.f32 %v3151, 0.020408163
      %v3508 = vmul.f32 %v3154, 0.020408163
      %v3509 = vmul.f32 %v3157, 0.020408163
      %v3510 = vmul.f32 %v3160, 0.020408163
      %v3511 = vmul.f32 %v3163, 0.020408163
      %v3512 = vmul.f32 %v3166, 0.020408163
      %v3513 = vmul.f32 %v3169, 0.020408163
      %v3514 = vmul.f32 %v3172, 0.020408163
      %v3515 = vmul.f32 %v3175, 0.020408163
      %v3516 = vmul.f32 %v3178, 0.020408163
      %v3517 = vmul.f32 %v3181, 0.020408163
      %v3518 = vmul.f32 %v3184, 0.020408163
      %v3519 = vmul.f32 %v3187, 0.020408163
      %v3520 = vmul.f32 %v3190, 0.020408163
      %v3521 = vmul.f32 %v3193, 0.020408163
      %v3522 = vmul.f32 %v3196, 0.020408163
      %v3523 = vmul.f32 %v3199, 0.020408163
      %v3524 = vmul.f32 %v3202, 0.020408163
      %v3525 = vmul.f32 %v3205, 0.020408163
      %v3526 = vmul.f32 %v3208, 0.020408163
      %v3527 = vmul.f32 %v3211, 0.020408163
      %v3528 = vmul.f32 %v3214, 0.020408163
      %v3529 = vmul.f32 %v3217, 0.020408163
      %v3530 = vmul.f32 %v3220, 0.020408163
      %v3531 = vmul.f32 %v3223, 0.020408163
      %v3532 = vmul.f32 %v3226, 0.020408163
      %v3533 = vmul.f32 %v3229, 0.020408163
      %v3534 = vmul.f32 %v3232, 0.020408163
      %v3535 = vmul.f32 %v3235, 0.020408163
      %v3536 = vmul.f32 %v3238, 0.020408163
      %v3537 = vmul.f32 %v3241, 0.020408163
      %v3538 = vmul.f32 %v3244, 0.020408163
      %v3539 = vmul.f32 %v3247, 0.020408163
      %v3540 = vmul.f32 %v3250, 0.020408163
      %v3541 = vmul.f32 %v3253, 0.020408163
      %v3542 = vmul.f32 %v3256, 0.020408163
      %v3543 = vmul.f32 %v3259, 0.020408163
      %v3544 = vmul.f32 %v3262, 0.020408163
      %v3545 = vmul.f32 %v3265, 0.020408163
      %v3546 = vmul.f32 %v3268, 0.020408163
      %v3547 = vmul.f32 %v3271, 0.020408163
      %v3548 = vmul.f32 %v3274, 0.020408163
      %v3549 = vmul.f32 %v3277, 0.020408163
      %v3550 = vmul.f32 %v3280, 0.020408163
      %v3551 = vmul.f32 %v3283, 0.020408163
      %v3552 = vmul.f32 %v3286, 0.020408163
      %v3553 = vmul.f32 %v3289, 0.020408163
      %v3554 = vmul.f32 %v3292, 0.020408163
      %v3555 = vmul.f32 %v3295, 0.020408163
      %v3556 = vmul.f32 %v3298, 0.020408163
      %v3557 = vmul.f32 %v3301, 0.020408163
      %v3558 = vmul.f32 %v3304, 0.020408163
      %v3559 = vmul.f32 %v3307, 0.020408163
      %v3560 = vmul.f32 %v3310, 0.020408163
      %v3561 = vmul.f32 %v3313, 0.020408163
      %v3562 = vmul.f32 %v3316, 0.020408163
      %v3563 = vmul.f32 %v3319, 0.020408163
      %v3564 = vmul.f32 %v3322, 0.020408163
      %v3565 = vmul.f32 %v3325, 0.020408163
      %v3566 = vmul.f32 %v3328, 0.020408163
      %v3567 = vmul.f32 %v3331, 0.020408163
      %v3568 = vmul.f32 %v3334, 0.020408163
      %v3569 = vmul.f32 %v3337, 0.020408163
      %v3570 = vmul.f32 %v3340, 0.020408163
      %v3571 = vmul.f32 %v3343, 0.020408163
      %v3572 = vmul.f32 %v3346, 0.020408163
      %v3573 = vmul.f32 %v3349, 0.020408163
      %v3574 = vmul.f32 %v3352, 0.020408163
      %v3575 = vmul.f32 %v3355, 0.020408163
      %v3576 = vmul.f32 %v3358, 0.020408163
      %v3577 = vmul.f32 %v3361, 0.020408163
      %v3578 = vmul.f32 %v3364, 0.020408163
      %v3579 = vmul.f32 %v3367, 0.020408163
      %v3580 = vmul.f32 %v3370, 0.020408163
      %v3581 = vmul.f32 %v3373, 0.020408163
      %v3582 = vmul.f32 %v3376, 0.020408163
      %v3583 = vmul.f32 %v3379, 0.020408163
      %v3584 = vmul.f32 %v3382, 0.020408163
      %v3585 = vmul.f32 %v3385, 0.020408163
      %v3586 = vmul.f32 %v3388, 0.020408163
      %v3587 = vmul.f32 %v3391, 0.020408163
      %v3588 = vmul.f32 %v3394, 0.020408163
      %v3589 = vmul.f32 %v3397, 0.020408163
      %v3590 = vmul.f32 %v3400, 0.020408163
      %v3591 = vmul.f32 %v3403, 0.020408163
      %v3592 = vmul.f32 %v3406, 0.020408163
      %v3593 = vmul.f32 %v3409, 0.020408163
      %v3594 = vmul.f32 %v3412, 0.020408163
      %v3595 = vmul.f32 %v3415, 0.020408163
      %v3596 = vmul.f32 %v3418, 0.020408163
      %v3597 = vmul.f32 %v3421, 0.020408163
      %v3598 = vmul.f32 %v3424, 0.020408163
      %v3599 = vmul.f32 %v3427, 0.020408163
      %v3600 = vmul.f32 %v3430, 0.020408163
      %v3601 = vmul.f32 %v3433, 0.020408163
      %v3602 = vmul.f32 %v3436, 0.020408163
      %v3603 = vmul.f32 %v3439, 0.020408163
      %v3604 = vmul.f32 %v3442, 0.020408163
      %v3605 = vmul.f32 %v3445, 0.020408163
      %v3606 = vmul.f32 %v3448, 0.020408163
      %v3607 = vmul.f32 %v3451, 0.020408163
      %v3608 = vmul.f32 %v3454, 0.020408163
      %v3609 = vmul.f32 %v3457, 0.020408163
      %v3610 = vmul.f32 %v3460, 0.020408163
      %v3611 = vmul.f32 %v3463, 0.020408163
      %v3612 = vmul.f32 %v3466, 0.020408163
      %v3613 = vmul.f32 %v3469, 0.020408163
      %v3614 = vsub.f32 %v2678, %v3470
      %v3615 = vsub.f32 %v2680, %v3471
      %v3616 = vsub.f32 %v2683, %v3472
      %v3617 = vsub.f32 %v2685, %v3473
      %v3618 = vsub.f32 %v2688, %v3474
      %v3619 = vsub.f32 %v2690, %v3475
      %v3620 = vsub.f32 %v2693, %v3476
      %v3621 = vsub.f32 %v2695, %v3477
      %v3622 = vsub.f32 %v2698, %v3478
      %v3623 = vsub.f32 %v2700, %v3479
      %v3624 = vsub.f32 %v2703, %v3480
      %v3625 = vsub.f32 %v2705, %v3481
      %v3626 = vsub.f32 %v2708, %v3482
      %v3627 = vsub.f32 %v2710, %v3483
      %v3628 = vsub.f32 %v2713, %v3484
      %v3629 = vsub.f32 %v2715, %v3485
      %v3630 = vsub.f32 %v2718, %v3486
      %v3631 = vsub.f32 %v2720, %v3487
      %v3632 = vsub.f32 %v2723, %v3488
      %v3633 = vsub.f32 %v2725, %v3489
      %v3634 = vsub.f32 %v2728, %v3490
      %v3635 = vsub.f32 %v2730, %v3491
      %v3636 = vsub.f32 %v2733, %v3492
      %v3637 = vsub.f32 %v2735, %v3493
      %v3638 = vsub.f32 %v2738, %v3494
      %v3639 = vsub.f32 %v2740, %v3495
      %v3640 = vsub.f32 %v2743, %v3496
      %v3641 = vsub.f32 %v2745, %v3497
      %v3642 = vsub.f32 %v2748, %v3498
      %v3643 = vsub.f32 %v2750, %v3499
      %v3644 = vsub.f32 %v2753, %v3500
      %v3645 = vsub.f32 %v2755, %v3501
      %v3646 = vsub.f32 %v2758, %v3502
      %v3647 = vsub.f32 %v2760, %v3503
      %v3648 = vsub.f32 %v2763, %v3504
      %v3649 = vsub.f32 %v2765, %v3505
      %v3650 = vsub.f32 %v2768, %v3506
      %v3651 = vsub.f32 %v2770, %v3507
      %v3652 = vsub.f32 %v2773, %v3508
      %v3653 = vsub.f32 %v2775, %v3509
      %v3654 = vsub.f32 %v2778, %v3510
      %v3655 = vsub.f32 %v2780, %v3511
      %v3656 = vsub.f32 %v2783, %v3512
      %v3657 = vsub.f32 %v2785, %v3513
      %v3658 = vsub.f32 %v2788, %v3514
      %v3659 = vsub.f32 %v2790, %v3515
      %v3660 = vsub.f32 %v2793, %v3516
      %v3661 = vsub.f32 %v2795, %v3517
      %v3662 = vsub.f32 %v2798, %v3518
      %v3663 = vsub.f32 %v2800, %v3519
      %v3664 = vsub.f32 %v2803, %v3520
      %v3665 = vsub.f32 %v2805, %v3521
      %v3666 = vsub.f32 %v2808, %v3522
      %v3667 = vsub.f32 %v2810, %v3523
      %v3668 = vsub.f32 %v2813, %v3524
      %v3669 = vsub.f32 %v2815, %v3525
      %v3670 = vsub.f32 %v2818, %v3526
      %v3671 = vsub.f32 %v2820, %v3527
      %v3672 = vsub.f32 %v2823, %v3528
      %v3673 = vsub.f32 %v2825, %v3529
      %v3674 = vsub.f32 %v2828, %v3530
      %v3675 = vsub.f32 %v2830, %v3531
      %v3676 = vsub.f32 %v2833, %v3532
      %v3677 = vsub.f32 %v2835, %v3533
      %v3678 = vsub.f32 %v2838, %v3534
      %v3679 = vsub.f32 %v2840, %v3535
      %v3680 = vsub.f32 %v2843, %v3536
      %v3681 = vsub.f32 %v2845, %v3537
      %v3682 = vsub.f32 %v2848, %v3538
      %v3683 = vsub.f32 %v2850, %v3539
      %v3684 = vsub.f32 %v2853, %v3540
      %v3685 = vsub.f32 %v2855, %v3541
      %v3686 = vsub.f32 %v2858, %v3542
      %v3687 = vsub.f32 %v2860, %v3543
      %v3688 = vsub.f32 %v2863, %v3544
      %v3689 = vsub.f32 %v2865, %v3545
      %v3690 = vsub.f32 %v2868, %v3546
      %v3691 = vsub.f32 %v2870, %v3547
      %v3692 = vsub.f32 %v2873, %v3548
      %v3693 = vsub.f32 %v2875, %v3549
      %v3694 = vsub.f32 %v2878, %v3550
      %v3695 = vsub.f32 %v2880, %v3551
      %v3696 = vsub.f32 %v2883, %v3552
      %v3697 = vsub.f32 %v2885, %v3553
      %v3698 = vsub.f32 %v2888, %v3554
      %v3699 = vsub.f32 %v2890, %v3555
      %v3700 = vsub.f32 %v2893, %v3556
      %v3701 = vsub.f32 %v2895, %v3557
      %v3702 = vsub.f32 %v2898, %v3558
      %v3703 = vsub.f32 %v2900, %v3559
      %v3704 = vsub.f32 %v2903, %v3560
      %v3705 = vsub.f32 %v2905, %v3561
      %v3706 = vsub.f32 %v2908, %v3562
      %v3707 = vsub.f32 %v2910, %v3563
      %v3708 = vsub.f32 %v2913, %v3564
      %v3709 = vsub.f32 %v2915, %v3565
      %v3710 = vsub.f32 %v2918, %v3566
      %v3711 = vsub.f32 %v2920, %v3567
      %v3712 = vsub.f32 %v2923, %v3568
      %v3713 = vsub.f32 %v2925, %v3569
      %v3714 = vsub.f32 %v2928, %v3570
      %v3715 = vsub.f32 %v2930, %v3571
      %v3716 = vsub.f32 %v2933, %v3572
      %v3717 = vsub.f32 %v2935, %v3573
      %v3718 = vsub.f32 %v2938, %v3574
      %v3719 = vsub.f32 %v2940, %v3575
      %v3720 = vsub.f32 %v2943, %v3576
      %v3721 = vsub.f32 %v2945, %v3577
      %v3722 = vsub.f32 %v2948, %v3578
      %v3723 = vsub.f32 %v2950, %v3579
      %v3724 = vsub.f32 %v2953, %v3580
      %v3725 = vsub.f32 %v2955, %v3581
      %v3726 = vsub.f32 %v2958, %v3582
      %v3727 = vsub.f32 %v2960, %v3583
      %v3728 = vsub.f32 %v2963, %v3584
      %v3729 = vsub.f32 %v2965, %v3585
      %v3730 = vsub.f32 %v2968, %v3586
      %v3731 = vsub.f32 %v2970, %v3587
      %v3732 = vsub.f32 %v2973, %v3588
      %v3733 = vsub.f32 %v2975, %v3589
      %v3734 = vsub.f32 %v2978, %v3590
      %v3735 = vsub.f32 %v2980, %v3591
      %v3736 = vsub.f32 %v2983, %v3592
      %v3737 = vsub.f32 %v2985, %v3593
      %v3738 = vsub.f32 %v2988, %v3594
      %v3739 = vsub.f32 %v2990, %v3595
      %v3740 = vsub.f32 %v2993, %v3596
      %v3741 = vsub.f32 %v2995, %v3597
      %v3742 = vsub.f32 %v2998, %v3598
      %v3743 = vsub.f32 %v3000, %v3599
      %v3744 = vsub.f32 %v3003, %v3600
      %v3745 = vsub.f32 %v3005, %v3601
      %v3746 = vsub.f32 %v3008, %v3602
      %v3747 = vsub.f32 %v3010, %v3603
      %v3748 = vsub.f32 %v3013, %v3604
      %v3749 = vsub.f32 %v3015, %v3605
      %v3750 = vsub.f32 %v3018, %v3606
      %v3751 = vsub.f32 %v3020, %v3607
      %v3752 = vsub.f32 %v3023, %v3608
      %v3753 = vsub.f32 %v3025, %v3609
      %v3754 = vsub.f32 %v3028, %v3610
      %v3755 = vsub.f32 %v3030, %v3611
      %v3756 = vsub.f32 %v3033, %v3612
      %v3757 = vsub.f32 %v3035, %v3613
      %v3758 = vmul.f32 %v3614, %v3614
      %v3759 = vmul.f32 %v3615, %v3615
      %v3760 = vmul.f32 %v3616, %v3616
      %v3761 = vmul.f32 %v3617, %v3617
      %v3762 = vmul.f32 %v3618, %v3618
      %v3763 = vmul.f32 %v3619, %v3619
      %v3764 = vmul.f32 %v3620, %v3620
      %v3765 = vmul.f32 %v3621, %v3621
      %v3766 = vmul.f32 %v3622, %v3622
      %v3767 = vmul.f32 %v3623, %v3623
      %v3768 = vmul.f32 %v3624, %v3624
      %v3769 = vmul.f32 %v3625, %v3625
      %v3770 = vmul.f32 %v3626, %v3626
      %v3771 = vmul.f32 %v3627, %v3627
      %v3772 = vmul.f32 %v3628, %v3628
      %v3773 = vmul.f32 %v3629, %v3629
      %v3774 = vmul.f32 %v3630, %v3630
      %v3775 = vmul.f32 %v3631, %v3631
      %v3776 = vmul.f32 %v3632, %v3632
      %v3777 = vmul.f32 %v3633, %v3633
      %v3778 = vmul.f32 %v3634, %v3634
      %v3779 = vmul.f32 %v3635, %v3635
      %v3780 = vmul.f32 %v3636, %v3636
      %v3781 = vmul.f32 %v3637, %v3637
      %v3782 = vmul.f32 %v3638, %v3638
      %v3783 = vmul.f32 %v3639, %v3639
      %v3784 = vmul.f32 %v3640, %v3640
      %v3785 = vmul.f32 %v3641, %v3641
      %v3786 = vmul.f32 %v3642, %v3642
      %v3787 = vmul.f32 %v3643, %v3643
      %v3788 = vmul.f32 %v3644, %v3644
      %v3789 = vmul.f32 %v3645, %v3645
      %v3790 = vmul.f32 %v3646, %v3646
      %v3791 = vmul.f32 %v3647, %v3647
      %v3792 = vmul.f32 %v3648, %v3648
      %v3793 = vmul.f32 %v3649, %v3649
      %v3794 = vmul.f32 %v3650, %v3650
      %v3795 = vmul.f32 %v3651, %v3651
      %v3796 = vmul.f32 %v3652, %v3652
      %v3797 = vmul.f32 %v3653, %v3653
      %v3798 = vmul.f32 %v3654, %v3654
      %v3799 = vmul.f32 %v3655, %v3655
      %v3800 = vmul.f32 %v3656, %v3656
      %v3801 = vmul.f32 %v3657, %v3657
      %v3802 = vmul.f32 %v3658, %v3658
      %v3803 = vmul.f32 %v3659, %v3659
      %v3804 = vmul.f32 %v3660, %v3660
      %v3805 = vmul.f32 %v3661, %v3661
      %v3806 = vmul.f32 %v3662, %v3662
      %v3807 = vmul.f32 %v3663, %v3663
      %v3808 = vmul.f32 %v3664, %v3664
      %v3809 = vmul.f32 %v3665, %v3665
      %v3810 = vmul.f32 %v3666, %v3666
      %v3811 = vmul.f32 %v3667, %v3667
      %v3812 = vmul.f32 %v3668, %v3668
      %v3813 = vmul.f32 %v3669, %v3669
      %v3814 = vmul.f32 %v3670, %v3670
      %v3815 = vmul.f32 %v3671, %v3671
      %v3816 = vmul.f32 %v3672, %v3672
      %v3817 = vmul.f32 %v3673, %v3673
      %v3818 = vmul.f32 %v3674, %v3674
      %v3819 = vmul.f32 %v3675, %v3675
      %v3820 = vmul.f32 %v3676, %v3676
      %v3821 = vmul.f32 %v3677, %v3677
      %v3822 = vmul.f32 %v3678, %v3678
      %v3823 = vmul.f32 %v3679, %v3679
      %v3824 = vmul.f32 %v3680, %v3680
      %v3825 = vmul.f32 %v3681, %v3681
      %v3826 = vmul.f32 %v3682, %v3682
      %v3827 = vmul.f32 %v3683, %v3683
      %v3828 = vmul.f32 %v3684, %v3684
      %v3829 = vmul.f32 %v3685, %v3685
      %v3830 = vmul.f32 %v3686, %v3686
      %v3831 = vmul.f32 %v3687, %v3687
      %v3832 = vmul.f32 %v3688, %v3688
      %v3833 = vmul.f32 %v3689, %v3689
      %v3834 = vmul.f32 %v3690, %v3690
      %v3835 = vmul.f32 %v3691, %v3691
      %v3836 = vmul.f32 %v3692, %v3692
      %v3837 = vmul.f32 %v3693, %v3693
      %v3838 = vmul.f32 %v3694, %v3694
      %v3839 = vmul.f32 %v3695, %v3695
      %v3840 = vmul.f32 %v3696, %v3696
      %v3841 = vmul.f32 %v3697, %v3697
      %v3842 = vmul.f32 %v3698, %v3698
      %v3843 = vmul.f32 %v3699, %v3699
      %v3844 = vmul.f32 %v3700, %v3700
      %v3845 = vmul.f32 %v3701, %v3701
      %v3846 = vmul.f32 %v3702, %v3702
      %v3847 = vmul.f32 %v3703, %v3703
      %v3848 = vmul.f32 %v3704, %v3704
      %v3849 = vmul.f32 %v3705, %v3705
      %v3850 = vmul.f32 %v3706, %v3706
      %v3851 = vmul.f32 %v3707, %v3707
      %v3852 = vmul.f32 %v3708, %v3708
      %v3853 = vmul.f32 %v3709, %v3709
      %v3854 = vmul.f32 %v3710, %v3710
      %v3855 = vmul.f32 %v3711, %v3711
      %v3856 = vmul.f32 %v3712, %v3712
      %v3857 = vmul.f32 %v3713, %v3713
      %v3858 = vmul.f32 %v3714, %v3714
      %v3859 = vmul.f32 %v3715, %v3715
      %v3860 = vmul.f32 %v3716, %v3716
      %v3861 = vmul.f32 %v3717, %v3717
      %v3862 = vmul.f32 %v3718, %v3718
      %v3863 = vmul.f32 %v3719, %v3719
      %v3864 = vmul.f32 %v3720, %v3720
      %v3865 = vmul.f32 %v3721, %v3721
      %v3866 = vmul.f32 %v3722, %v3722
      %v3867 = vmul.f32 %v3723, %v3723
      %v3868 = vmul.f32 %v3724, %v3724
      %v3869 = vmul.f32 %v3725, %v3725
      %v3870 = vmul.f32 %v3726, %v3726
      %v3871 = vmul.f32 %v3727, %v3727
      %v3872 = vmul.f32 %v3728, %v3728
      %v3873 = vmul.f32 %v3729, %v3729
      %v3874 = vmul.f32 %v3730, %v3730
      %v3875 = vmul.f32 %v3731, %v3731
      %v3876 = vmul.f32 %v3732, %v3732
      %v3877 = vmul.f32 %v3733, %v3733
      %v3878 = vmul.f32 %v3734, %v3734
      %v3879 = vmul.f32 %v3735, %v3735
      %v3880 = vmul.f32 %v3736, %v3736
      %v3881 = vmul.f32 %v3737, %v3737
      %v3882 = vmul.f32 %v3738, %v3738
      %v3883 = vmul.f32 %v3739, %v3739
      %v3884 = vmul.f32 %v3740, %v3740
      %v3885 = vmul.f32 %v3741, %v3741
      %v3886 = vmul.f32 %v3742, %v3742
      %v3887 = vmul.f32 %v3743, %v3743
      %v3888 = vmul.f32 %v3744, %v3744
      %v3889 = vmul.f32 %v3745, %v3745
      %v3890 = vmul.f32 %v3746, %v3746
      %v3891 = vmul.f32 %v3747, %v3747
      %v3892 = vmul.f32 %v3748, %v3748
      %v3893 = vmul.f32 %v3749, %v3749
      %v3894 = vmul.f32 %v3750, %v3750
      %v3895 = vmul.f32 %v3751, %v3751
      %v3896 = vmul.f32 %v3752, %v3752
      %v3897 = vmul.f32 %v3753, %v3753
      %v3898 = vmul.f32 %v3754, %v3754
      %v3899 = vmul.f32 %v3755, %v3755
      %v3900 = vmul.f32 %v3756, %v3756
      %v3901 = vmul.f32 %v3757, %v3757
      %v3902 = vsel %vm3037, %v3758, 0.0
      %3903 = vadd.xlane.f32.xlu0 %v3902
      %v3904 = vpop.xlane.xlu0 %3903
      %v3905 = vsel %vm3037, %v3759, 0.0
      %3906 = vadd.xlane.f32.xlu0 %v3905
      %v3907 = vpop.xlane.xlu0 %3906
      %v3908 = vsel %vm3037, %v3760, 0.0
      %3909 = vadd.xlane.f32.xlu0 %v3908
      %v3910 = vpop.xlane.xlu0 %3909
      %v3911 = vsel %vm3037, %v3761, 0.0
      %3912 = vadd.xlane.f32.xlu0 %v3911
      %v3913 = vpop.xlane.xlu0 %3912
      %v3914 = vsel %vm3037, %v3762, 0.0
      %3915 = vadd.xlane.f32.xlu0 %v3914
      %v3916 = vpop.xlane.xlu0 %3915
      %v3917 = vsel %vm3037, %v3763, 0.0
      %3918 = vadd.xlane.f32.xlu0 %v3917
      %v3919 = vpop.xlane.xlu0 %3918
      %v3920 = vsel %vm3037, %v3764, 0.0
      %3921 = vadd.xlane.f32.xlu0 %v3920
      %v3922 = vpop.xlane.xlu0 %3921
      %v3923 = vsel %vm3037, %v3765, 0.0
      %3924 = vadd.xlane.f32.xlu0 %v3923
      %v3925 = vpop.xlane.xlu0 %3924
      %v3926 = vsel %vm3037, %v3766, 0.0
      %3927 = vadd.xlane.f32.xlu0 %v3926
      %v3928 = vpop.xlane.xlu0 %3927
      %v3929 = vsel %vm3037, %v3767, 0.0
      %3930 = vadd.xlane.f32.xlu0 %v3929
      %v3931 = vpop.xlane.xlu0 %3930
      %v3932 = vsel %vm3037, %v3768, 0.0
      %3933 = vadd.xlane.f32.xlu0 %v3932
      %v3934 = vpop.xlane.xlu0 %3933
      %v3935 = vsel %vm3037, %v3769, 0.0
      %3936 = vadd.xlane.f32.xlu0 %v3935
      %v3937 = vpop.xlane.xlu0 %3936
      %v3938 = vsel %vm3037, %v3770, 0.0
      %3939 = vadd.xlane.f32.xlu0 %v3938
      %v3940 = vpop.xlane.xlu0 %3939
      %v3941 = vsel %vm3037, %v3771, 0.0
      %3942 = vadd.xlane.f32.xlu0 %v3941
      %v3943 = vpop.xlane.xlu0 %3942
      %v3944 = vsel %vm3037, %v3772, 0.0
      %3945 = vadd.xlane.f32.xlu0 %v3944
      %v3946 = vpop.xlane.xlu0 %3945
      %v3947 = vsel %vm3037, %v3773, 0.0
      %3948 = vadd.xlane.f32.xlu0 %v3947
      %v3949 = vpop.xlane.xlu0 %3948
      %v3950 = vsel %vm3037, %v3774, 0.0
      %3951 = vadd.xlane.f32.xlu0 %v3950
      %v3952 = vpop.xlane.xlu0 %3951
      %v3953 = vsel %vm3037, %v3775, 0.0
      %3954 = vadd.xlane.f32.xlu0 %v3953
      %v3955 = vpop.xlane.xlu0 %3954
      %v3956 = vsel %vm3037, %v3776, 0.0
      %3957 = vadd.xlane.f32.xlu0 %v3956
      %v3958 = vpop.xlane.xlu0 %3957
      %v3959 = vsel %vm3037, %v3777, 0.0
      %3960 = vadd.xlane.f32.xlu0 %v3959
      %v3961 = vpop.xlane.xlu0 %3960
      %v3962 = vsel %vm3037, %v3778, 0.0
      %3963 = vadd.xlane.f32.xlu0 %v3962
      %v3964 = vpop.xlane.xlu0 %3963
      %v3965 = vsel %vm3037, %v3779, 0.0
      %3966 = vadd.xlane.f32.xlu0 %v3965
      %v3967 = vpop.xlane.xlu0 %3966
      %v3968 = vsel %vm3037, %v3780, 0.0
      %3969 = vadd.xlane.f32.xlu0 %v3968
      %v3970 = vpop.xlane.xlu0 %3969
      %v3971 = vsel %vm3037, %v3781, 0.0
      %3972 = vadd.xlane.f32.xlu0 %v3971
      %v3973 = vpop.xlane.xlu0 %3972
      %v3974 = vsel %vm3037, %v3782, 0.0
      %3975 = vadd.xlane.f32.xlu0 %v3974
      %v3976 = vpop.xlane.xlu0 %3975
      %v3977 = vsel %vm3037, %v3783, 0.0
      %3978 = vadd.xlane.f32.xlu0 %v3977
      %v3979 = vpop.xlane.xlu0 %3978
      %v3980 = vsel %vm3037, %v3784, 0.0
      %3981 = vadd.xlane.f32.xlu0 %v3980
      %v3982 = vpop.xlane.xlu0 %3981
      %v3983 = vsel %vm3037, %v3785, 0.0
      %3984 = vadd.xlane.f32.xlu0 %v3983
      %v3985 = vpop.xlane.xlu0 %3984
      %v3986 = vsel %vm3037, %v3786, 0.0
      %3987 = vadd.xlane.f32.xlu0 %v3986
      %v3988 = vpop.xlane.xlu0 %3987
      %v3989 = vsel %vm3037, %v3787, 0.0
      %3990 = vadd.xlane.f32.xlu0 %v3989
      %v3991 = vpop.xlane.xlu0 %3990
      %v3992 = vsel %vm3037, %v3788, 0.0
      %3993 = vadd.xlane.f32.xlu0 %v3992
      %v3994 = vpop.xlane.xlu0 %3993
      %v3995 = vsel %vm3037, %v3789, 0.0
      %3996 = vadd.xlane.f32.xlu0 %v3995
      %v3997 = vpop.xlane.xlu0 %3996
      %v3998 = vsel %vm3037, %v3790, 0.0
      %3999 = vadd.xlane.f32.xlu0 %v3998
      %v4000 = vpop.xlane.xlu0 %3999
      %v4001 = vsel %vm3037, %v3791, 0.0
      %4002 = vadd.xlane.f32.xlu0 %v4001
      %v4003 = vpop.xlane.xlu0 %4002
      %v4004 = vsel %vm3037, %v3792, 0.0
      %4005 = vadd.xlane.f32.xlu0 %v4004
      %v4006 = vpop.xlane.xlu0 %4005
      %v4007 = vsel %vm3037, %v3793, 0.0
      %4008 = vadd.xlane.f32.xlu0 %v4007
      %v4009 = vpop.xlane.xlu0 %4008
      %v4010 = vsel %vm3037, %v3794, 0.0
      %4011 = vadd.xlane.f32.xlu0 %v4010
      %v4012 = vpop.xlane.xlu0 %4011
      %v4013 = vsel %vm3037, %v3795, 0.0
      %4014 = vadd.xlane.f32.xlu0 %v4013
      %v4015 = vpop.xlane.xlu0 %4014
      %v4016 = vsel %vm3037, %v3796, 0.0
      %4017 = vadd.xlane.f32.xlu0 %v4016
      %v4018 = vpop.xlane.xlu0 %4017
      %v4019 = vsel %vm3037, %v3797, 0.0
      %4020 = vadd.xlane.f32.xlu0 %v4019
      %v4021 = vpop.xlane.xlu0 %4020
      %v4022 = vsel %vm3037, %v3798, 0.0
      %4023 = vadd.xlane.f32.xlu0 %v4022
      %v4024 = vpop.xlane.xlu0 %4023
      %v4025 = vsel %vm3037, %v3799, 0.0
      %4026 = vadd.xlane.f32.xlu0 %v4025
      %v4027 = vpop.xlane.xlu0 %4026
      %v4028 = vsel %vm3037, %v3800, 0.0
      %4029 = vadd.xlane.f32.xlu0 %v4028
      %v4030 = vpop.xlane.xlu0 %4029
      %v4031 = vsel %vm3037, %v3801, 0.0
      %4032 = vadd.xlane.f32.xlu0 %v4031
      %v4033 = vpop.xlane.xlu0 %4032
      %v4034 = vsel %vm3037, %v3802, 0.0
      %4035 = vadd.xlane.f32.xlu0 %v4034
      %v4036 = vpop.xlane.xlu0 %4035
      %v4037 = vsel %vm3037, %v3803, 0.0
      %4038 = vadd.xlane.f32.xlu0 %v4037
      %v4039 = vpop.xlane.xlu0 %4038
      %v4040 = vsel %vm3037, %v3804, 0.0
      %4041 = vadd.xlane.f32.xlu0 %v4040
      %v4042 = vpop.xlane.xlu0 %4041
      %v4043 = vsel %vm3037, %v3805, 0.0
      %4044 = vadd.xlane.f32.xlu0 %v4043
      %v4045 = vpop.xlane.xlu0 %4044
      %v4046 = vsel %vm3037, %v3806, 0.0
      %4047 = vadd.xlane.f32.xlu0 %v4046
      %v4048 = vpop.xlane.xlu0 %4047
      %v4049 = vsel %vm3037, %v3807, 0.0
      %4050 = vadd.xlane.f32.xlu0 %v4049
      %v4051 = vpop.xlane.xlu0 %4050
      %v4052 = vsel %vm3037, %v3808, 0.0
      %4053 = vadd.xlane.f32.xlu0 %v4052
      %v4054 = vpop.xlane.xlu0 %4053
      %v4055 = vsel %vm3037, %v3809, 0.0
      %4056 = vadd.xlane.f32.xlu0 %v4055
      %v4057 = vpop.xlane.xlu0 %4056
      %v4058 = vsel %vm3037, %v3810, 0.0
      %4059 = vadd.xlane.f32.xlu0 %v4058
      %v4060 = vpop.xlane.xlu0 %4059
      %v4061 = vsel %vm3037, %v3811, 0.0
      %4062 = vadd.xlane.f32.xlu0 %v4061
      %v4063 = vpop.xlane.xlu0 %4062
      %v4064 = vsel %vm3037, %v3812, 0.0
      %4065 = vadd.xlane.f32.xlu0 %v4064
      %v4066 = vpop.xlane.xlu0 %4065
      %v4067 = vsel %vm3037, %v3813, 0.0
      %4068 = vadd.xlane.f32.xlu0 %v4067
      %v4069 = vpop.xlane.xlu0 %4068
      %v4070 = vsel %vm3037, %v3814, 0.0
      %4071 = vadd.xlane.f32.xlu0 %v4070
      %v4072 = vpop.xlane.xlu0 %4071
      %v4073 = vsel %vm3037, %v3815, 0.0
      %4074 = vadd.xlane.f32.xlu0 %v4073
      %v4075 = vpop.xlane.xlu0 %4074
      %v4076 = vsel %vm3037, %v3816, 0.0
      %4077 = vadd.xlane.f32.xlu0 %v4076
      %v4078 = vpop.xlane.xlu0 %4077
      %v4079 = vsel %vm3037, %v3817, 0.0
      %4080 = vadd.xlane.f32.xlu0 %v4079
      %v4081 = vpop.xlane.xlu0 %4080
      %v4082 = vsel %vm3037, %v3818, 0.0
      %4083 = vadd.xlane.f32.xlu0 %v4082
      %v4084 = vpop.xlane.xlu0 %4083
      %v4085 = vsel %vm3037, %v3819, 0.0
      %4086 = vadd.xlane.f32.xlu0 %v4085
      %v4087 = vpop.xlane.xlu0 %4086
      %v4088 = vsel %vm3037, %v3820, 0.0
      %4089 = vadd.xlane.f32.xlu0 %v4088
      %v4090 = vpop.xlane.xlu0 %4089
      %v4091 = vsel %vm3037, %v3821, 0.0
      %4092 = vadd.xlane.f32.xlu0 %v4091
      %v4093 = vpop.xlane.xlu0 %4092
      %v4094 = vsel %vm3037, %v3822, 0.0
      %4095 = vadd.xlane.f32.xlu0 %v4094
      %v4096 = vpop.xlane.xlu0 %4095
      %v4097 = vsel %vm3037, %v3823, 0.0
      %4098 = vadd.xlane.f32.xlu0 %v4097
      %v4099 = vpop.xlane.xlu0 %4098
      %v4100 = vsel %vm3037, %v3824, 0.0
      %4101 = vadd.xlane.f32.xlu0 %v4100
      %v4102 = vpop.xlane.xlu0 %4101
      %v4103 = vsel %vm3037, %v3825, 0.0
      %4104 = vadd.xlane.f32.xlu0 %v4103
      %v4105 = vpop.xlane.xlu0 %4104
      %v4106 = vsel %vm3037, %v3826, 0.0
      %4107 = vadd.xlane.f32.xlu0 %v4106
      %v4108 = vpop.xlane.xlu0 %4107
      %v4109 = vsel %vm3037, %v3827, 0.0
      %4110 = vadd.xlane.f32.xlu0 %v4109
      %v4111 = vpop.xlane.xlu0 %4110
      %v4112 = vsel %vm3037, %v3828, 0.0
      %4113 = vadd.xlane.f32.xlu0 %v4112
      %v4114 = vpop.xlane.xlu0 %4113
      %v4115 = vsel %vm3037, %v3829, 0.0
      %4116 = vadd.xlane.f32.xlu0 %v4115
      %v4117 = vpop.xlane.xlu0 %4116
      %v4118 = vsel %vm3037, %v3830, 0.0
      %4119 = vadd.xlane.f32.xlu0 %v4118
      %v4120 = vpop.xlane.xlu0 %4119
      %v4121 = vsel %vm3037, %v3831, 0.0
      %4122 = vadd.xlane.f32.xlu0 %v4121
      %v4123 = vpop.xlane.xlu0 %4122
      %v4124 = vsel %vm3037, %v3832, 0.0
      %4125 = vadd.xlane.f32.xlu0 %v4124
      %v4126 = vpop.xlane.xlu0 %4125
      %v4127 = vsel %vm3037, %v3833, 0.0
      %4128 = vadd.xlane.f32.xlu0 %v4127
      %v4129 = vpop.xlane.xlu0 %4128
      %v4130 = vsel %vm3037, %v3834, 0.0
      %4131 = vadd.xlane.f32.xlu0 %v4130
      %v4132 = vpop.xlane.xlu0 %4131
      %v4133 = vsel %vm3037, %v3835, 0.0
      %4134 = vadd.xlane.f32.xlu0 %v4133
      %v4135 = vpop.xlane.xlu0 %4134
      %v4136 = vsel %vm3037, %v3836, 0.0
      %4137 = vadd.xlane.f32.xlu0 %v4136
      %v4138 = vpop.xlane.xlu0 %4137
      %v4139 = vsel %vm3037, %v3837, 0.0
      %4140 = vadd.xlane.f32.xlu0 %v4139
      %v4141 = vpop.xlane.xlu0 %4140
      %v4142 = vsel %vm3037, %v3838, 0.0
      %4143 = vadd.xlane.f32.xlu0 %v4142
      %v4144 = vpop.xlane.xlu0 %4143
      %v4145 = vsel %vm3037, %v3839, 0.0
      %4146 = vadd.xlane.f32.xlu0 %v4145
      %v4147 = vpop.xlane.xlu0 %4146
      %v4148 = vsel %vm3037, %v3840, 0.0
      %4149 = vadd.xlane.f32.xlu0 %v4148
      %v4150 = vpop.xlane.xlu0 %4149
      %v4151 = vsel %vm3037, %v3841, 0.0
      %4152 = vadd.xlane.f32.xlu0 %v4151
      %v4153 = vpop.xlane.xlu0 %4152
      %v4154 = vsel %vm3037, %v3842, 0.0
      %4155 = vadd.xlane.f32.xlu0 %v4154
      %v4156 = vpop.xlane.xlu0 %4155
      %v4157 = vsel %vm3037, %v3843, 0.0
      %4158 = vadd.xlane.f32.xlu0 %v4157
      %v4159 = vpop.xlane.xlu0 %4158
      %v4160 = vsel %vm3037, %v3844, 0.0
      %4161 = vadd.xlane.f32.xlu0 %v4160
      %v4162 = vpop.xlane.xlu0 %4161
      %v4163 = vsel %vm3037, %v3845, 0.0
      %4164 = vadd.xlane.f32.xlu0 %v4163
      %v4165 = vpop.xlane.xlu0 %4164
      %v4166 = vsel %vm3037, %v3846, 0.0
      %4167 = vadd.xlane.f32.xlu0 %v4166
      %v4168 = vpop.xlane.xlu0 %4167
      %v4169 = vsel %vm3037, %v3847, 0.0
      %4170 = vadd.xlane.f32.xlu0 %v4169
      %v4171 = vpop.xlane.xlu0 %4170
      %v4172 = vsel %vm3037, %v3848, 0.0
      %4173 = vadd.xlane.f32.xlu0 %v4172
      %v4174 = vpop.xlane.xlu0 %4173
      %v4175 = vsel %vm3037, %v3849, 0.0
      %4176 = vadd.xlane.f32.xlu0 %v4175
      %v4177 = vpop.xlane.xlu0 %4176
      %v4178 = vsel %vm3037, %v3850, 0.0
      %4179 = vadd.xlane.f32.xlu0 %v4178
      %v4180 = vpop.xlane.xlu0 %4179
      %v4181 = vsel %vm3037, %v3851, 0.0
      %4182 = vadd.xlane.f32.xlu0 %v4181
      %v4183 = vpop.xlane.xlu0 %4182
      %v4184 = vsel %vm3037, %v3852, 0.0
      %4185 = vadd.xlane.f32.xlu0 %v4184
      %v4186 = vpop.xlane.xlu0 %4185
      %v4187 = vsel %vm3037, %v3853, 0.0
      %4188 = vadd.xlane.f32.xlu0 %v4187
      %v4189 = vpop.xlane.xlu0 %4188
      %v4190 = vsel %vm3037, %v3854, 0.0
      %4191 = vadd.xlane.f32.xlu0 %v4190
      %v4192 = vpop.xlane.xlu0 %4191
      %v4193 = vsel %vm3037, %v3855, 0.0
      %4194 = vadd.xlane.f32.xlu0 %v4193
      %v4195 = vpop.xlane.xlu0 %4194
      %v4196 = vsel %vm3037, %v3856, 0.0
      %4197 = vadd.xlane.f32.xlu0 %v4196
      %v4198 = vpop.xlane.xlu0 %4197
      %v4199 = vsel %vm3037, %v3857, 0.0
      %4200 = vadd.xlane.f32.xlu0 %v4199
      %v4201 = vpop.xlane.xlu0 %4200
      %v4202 = vsel %vm3037, %v3858, 0.0
      %4203 = vadd.xlane.f32.xlu0 %v4202
      %v4204 = vpop.xlane.xlu0 %4203
      %v4205 = vsel %vm3037, %v3859, 0.0
      %4206 = vadd.xlane.f32.xlu0 %v4205
      %v4207 = vpop.xlane.xlu0 %4206
      %v4208 = vsel %vm3037, %v3860, 0.0
      %4209 = vadd.xlane.f32.xlu0 %v4208
      %v4210 = vpop.xlane.xlu0 %4209
      %v4211 = vsel %vm3037, %v3861, 0.0
      %4212 = vadd.xlane.f32.xlu0 %v4211
      %v4213 = vpop.xlane.xlu0 %4212
      %v4214 = vsel %vm3037, %v3862, 0.0
      %4215 = vadd.xlane.f32.xlu0 %v4214
      %v4216 = vpop.xlane.xlu0 %4215
      %v4217 = vsel %vm3037, %v3863, 0.0
      %4218 = vadd.xlane.f32.xlu0 %v4217
      %v4219 = vpop.xlane.xlu0 %4218
      %v4220 = vsel %vm3037, %v3864, 0.0
      %4221 = vadd.xlane.f32.xlu0 %v4220
      %v4222 = vpop.xlane.xlu0 %4221
      %v4223 = vsel %vm3037, %v3865, 0.0
      %4224 = vadd.xlane.f32.xlu0 %v4223
      %v4225 = vpop.xlane.xlu0 %4224
      %v4226 = vsel %vm3037, %v3866, 0.0
      %4227 = vadd.xlane.f32.xlu0 %v4226
      %v4228 = vpop.xlane.xlu0 %4227
      %v4229 = vsel %vm3037, %v3867, 0.0
      %4230 = vadd.xlane.f32.xlu0 %v4229
      %v4231 = vpop.xlane.xlu0 %4230
      %v4232 = vsel %vm3037, %v3868, 0.0
      %4233 = vadd.xlane.f32.xlu0 %v4232
      %v4234 = vpop.xlane.xlu0 %4233
      %v4235 = vsel %vm3037, %v3869, 0.0
      %4236 = vadd.xlane.f32.xlu0 %v4235
      %v4237 = vpop.xlane.xlu0 %4236
      %v4238 = vsel %vm3037, %v3870, 0.0
      %4239 = vadd.xlane.f32.xlu0 %v4238
      %v4240 = vpop.xlane.xlu0 %4239
      %v4241 = vsel %vm3037, %v3871, 0.0
      %4242 = vadd.xlane.f32.xlu0 %v4241
      %v4243 = vpop.xlane.xlu0 %4242
      %v4244 = vsel %vm3037, %v3872, 0.0
      %4245 = vadd.xlane.f32.xlu0 %v4244
      %v4246 = vpop.xlane.xlu0 %4245
      %v4247 = vsel %vm3037, %v3873, 0.0
      %4248 = vadd.xlane.f32.xlu0 %v4247
      %v4249 = vpop.xlane.xlu0 %4248
      %v4250 = vsel %vm3037, %v3874, 0.0
      %4251 = vadd.xlane.f32.xlu0 %v4250
      %v4252 = vpop.xlane.xlu0 %4251
      %v4253 = vsel %vm3037, %v3875, 0.0
      %4254 = vadd.xlane.f32.xlu0 %v4253
      %v4255 = vpop.xlane.xlu0 %4254
      %v4256 = vsel %vm3037, %v3876, 0.0
      %4257 = vadd.xlane.f32.xlu0 %v4256
      %v4258 = vpop.xlane.xlu0 %4257
      %v4259 = vsel %vm3037, %v3877, 0.0
      %4260 = vadd.xlane.f32.xlu0 %v4259
      %v4261 = vpop.xlane.xlu0 %4260
      %v4262 = vsel %vm3037, %v3878, 0.0
      %4263 = vadd.xlane.f32.xlu0 %v4262
      %v4264 = vpop.xlane.xlu0 %4263
      %v4265 = vsel %vm3037, %v3879, 0.0
      %4266 = vadd.xlane.f32.xlu0 %v4265
      %v4267 = vpop.xlane.xlu0 %4266
      %v4268 = vsel %vm3037, %v3880, 0.0
      %4269 = vadd.xlane.f32.xlu0 %v4268
      %v4270 = vpop.xlane.xlu0 %4269
      %v4271 = vsel %vm3037, %v3881, 0.0
      %4272 = vadd.xlane.f32.xlu0 %v4271
      %v4273 = vpop.xlane.xlu0 %4272
      %v4274 = vsel %vm3037, %v3882, 0.0
      %4275 = vadd.xlane.f32.xlu0 %v4274
      %v4276 = vpop.xlane.xlu0 %4275
      %v4277 = vsel %vm3037, %v3883, 0.0
      %4278 = vadd.xlane.f32.xlu0 %v4277
      %v4279 = vpop.xlane.xlu0 %4278
      %v4280 = vsel %vm3037, %v3884, 0.0
      %4281 = vadd.xlane.f32.xlu0 %v4280
      %v4282 = vpop.xlane.xlu0 %4281
      %v4283 = vsel %vm3037, %v3885, 0.0
      %4284 = vadd.xlane.f32.xlu0 %v4283
      %v4285 = vpop.xlane.xlu0 %4284
      %v4286 = vsel %vm3037, %v3886, 0.0
      %4287 = vadd.xlane.f32.xlu0 %v4286
      %v4288 = vpop.xlane.xlu0 %4287
      %v4289 = vsel %vm3037, %v3887, 0.0
      %4290 = vadd.xlane.f32.xlu0 %v4289
      %v4291 = vpop.xlane.xlu0 %4290
      %v4292 = vsel %vm3037, %v3888, 0.0
      %4293 = vadd.xlane.f32.xlu0 %v4292
      %v4294 = vpop.xlane.xlu0 %4293
      %v4295 = vsel %vm3037, %v3889, 0.0
      %4296 = vadd.xlane.f32.xlu0 %v4295
      %v4297 = vpop.xlane.xlu0 %4296
      %v4298 = vsel %vm3037, %v3890, 0.0
      %4299 = vadd.xlane.f32.xlu0 %v4298
      %v4300 = vpop.xlane.xlu0 %4299
      %v4301 = vsel %vm3037, %v3891, 0.0
      %4302 = vadd.xlane.f32.xlu0 %v4301
      %v4303 = vpop.xlane.xlu0 %4302
      %v4304 = vsel %vm3037, %v3892, 0.0
      %4305 = vadd.xlane.f32.xlu0 %v4304
      %v4306 = vpop.xlane.xlu0 %4305
      %v4307 = vsel %vm3037, %v3893, 0.0
      %4308 = vadd.xlane.f32.xlu0 %v4307
      %v4309 = vpop.xlane.xlu0 %4308
      %v4310 = vsel %vm3037, %v3894, 0.0
      %4311 = vadd.xlane.f32.xlu0 %v4310
      %v4312 = vpop.xlane.xlu0 %4311
      %v4313 = vsel %vm3037, %v3895, 0.0
      %4314 = vadd.xlane.f32.xlu0 %v4313
      %v4315 = vpop.xlane.xlu0 %4314
      %v4316 = vsel %vm3037, %v3896, 0.0
      %4317 = vadd.xlane.f32.xlu0 %v4316
      %v4318 = vpop.xlane.xlu0 %4317
      %v4319 = vsel %vm3037, %v3897, 0.0
      %4320 = vadd.xlane.f32.xlu0 %v4319
      %v4321 = vpop.xlane.xlu0 %4320
      %v4322 = vsel %vm3037, %v3898, 0.0
      %4323 = vadd.xlane.f32.xlu0 %v4322
      %v4324 = vpop.xlane.xlu0 %4323
      %v4325 = vsel %vm3037, %v3899, 0.0
      %4326 = vadd.xlane.f32.xlu0 %v4325
      %v4327 = vpop.xlane.xlu0 %4326
      %v4328 = vsel %vm3037, %v3900, 0.0
      %4329 = vadd.xlane.f32.xlu0 %v4328
      %v4330 = vpop.xlane.xlu0 %4329
      %v4331 = vsel %vm3037, %v3901, 0.0
      %4332 = vadd.xlane.f32.xlu0 %v4331
      %v4333 = vpop.xlane.xlu0 %4332
      %v4334 = vmul.f32 %v3904, 0.020408163
      %v4335 = vmul.f32 %v3907, 0.020408163
      %v4336 = vmul.f32 %v3910, 0.020408163
      %v4337 = vmul.f32 %v3913, 0.020408163
      %v4338 = vmul.f32 %v3916, 0.020408163
      %v4339 = vmul.f32 %v3919, 0.020408163
      %v4340 = vmul.f32 %v3922, 0.020408163
      %v4341 = vmul.f32 %v3925, 0.020408163
      %v4342 = vmul.f32 %v3928, 0.020408163
      %v4343 = vmul.f32 %v3931, 0.020408163
      %v4344 = vmul.f32 %v3934, 0.020408163
      %v4345 = vmul.f32 %v3937, 0.020408163
      %v4346 = vmul.f32 %v3940, 0.020408163
      %v4347 = vmul.f32 %v3943, 0.020408163
      %v4348 = vmul.f32 %v3946, 0.020408163
      %v4349 = vmul.f32 %v3949, 0.020408163
      %v4350 = vmul.f32 %v3952, 0.020408163
      %v4351 = vmul.f32 %v3955, 0.020408163
      %v4352 = vmul.f32 %v3958, 0.020408163
      %v4353 = vmul.f32 %v3961, 0.020408163
      %v4354 = vmul.f32 %v3964, 0.020408163
      %v4355 = vmul.f32 %v3967, 0.020408163
      %v4356 = vmul.f32 %v3970, 0.020408163
      %v4357 = vmul.f32 %v3973, 0.020408163
      %v4358 = vmul.f32 %v3976, 0.020408163
      %v4359 = vmul.f32 %v3979, 0.020408163
      %v4360 = vmul.f32 %v3982, 0.020408163
      %v4361 = vmul.f32 %v3985, 0.020408163
      %v4362 = vmul.f32 %v3988, 0.020408163
      %v4363 = vmul.f32 %v3991, 0.020408163
      %v4364 = vmul.f32 %v3994, 0.020408163
      %v4365 = vmul.f32 %v3997, 0.020408163
      %v4366 = vmul.f32 %v4000, 0.020408163
      %v4367 = vmul.f32 %v4003, 0.020408163
      %v4368 = vmul.f32 %v4006, 0.020408163
      %v4369 = vmul.f32 %v4009, 0.020408163
      %v4370 = vmul.f32 %v4012, 0.020408163
      %v4371 = vmul.f32 %v4015, 0.020408163
      %v4372 = vmul.f32 %v4018, 0.020408163
      %v4373 = vmul.f32 %v4021, 0.020408163
      %v4374 = vmul.f32 %v4024, 0.020408163
      %v4375 = vmul.f32 %v4027, 0.020408163
      %v4376 = vmul.f32 %v4030, 0.020408163
      %v4377 = vmul.f32 %v4033, 0.020408163
      %v4378 = vmul.f32 %v4036, 0.020408163
      %v4379 = vmul.f32 %v4039, 0.020408163
      %v4380 = vmul.f32 %v4042, 0.020408163
      %v4381 = vmul.f32 %v4045, 0.020408163
      %v4382 = vmul.f32 %v4048, 0.020408163
      %v4383 = vmul.f32 %v4051, 0.020408163
      %v4384 = vmul.f32 %v4054, 0.020408163
      %v4385 = vmul.f32 %v4057, 0.020408163
      %v4386 = vmul.f32 %v4060, 0.020408163
      %v4387 = vmul.f32 %v4063, 0.020408163
      %v4388 = vmul.f32 %v4066, 0.020408163
      %v4389 = vmul.f32 %v4069, 0.020408163
      %v4390 = vmul.f32 %v4072, 0.020408163
      %v4391 = vmul.f32 %v4075, 0.020408163
      %v4392 = vmul.f32 %v4078, 0.020408163
      %v4393 = vmul.f32 %v4081, 0.020408163
      %v4394 = vmul.f32 %v4084, 0.020408163
      %v4395 = vmul.f32 %v4087, 0.020408163
      %v4396 = vmul.f32 %v4090, 0.020408163
      %v4397 = vmul.f32 %v4093, 0.020408163
      %v4398 = vmul.f32 %v4096, 0.020408163
      %v4399 = vmul.f32 %v4099, 0.020408163
      %v4400 = vmul.f32 %v4102, 0.020408163
      %v4401 = vmul.f32 %v4105, 0.020408163
      %v4402 = vmul.f32 %v4108, 0.020408163
      %v4403 = vmul.f32 %v4111, 0.020408163
      %v4404 = vmul.f32 %v4114, 0.020408163
      %v4405 = vmul.f32 %v4117, 0.020408163
      %v4406 = vmul.f32 %v4120, 0.020408163
      %v4407 = vmul.f32 %v4123, 0.020408163
      %v4408 = vmul.f32 %v4126, 0.020408163
      %v4409 = vmul.f32 %v4129, 0.020408163
      %v4410 = vmul.f32 %v4132, 0.020408163
      %v4411 = vmul.f32 %v4135, 0.020408163
      %v4412 = vmul.f32 %v4138, 0.020408163
      %v4413 = vmul.f32 %v4141, 0.020408163
      %v4414 = vmul.f32 %v4144, 0.020408163
      %v4415 = vmul.f32 %v4147, 0.020408163
      %v4416 = vmul.f32 %v4150, 0.020408163
      %v4417 = vmul.f32 %v4153, 0.020408163
      %v4418 = vmul.f32 %v4156, 0.020408163
      %v4419 = vmul.f32 %v4159, 0.020408163
      %v4420 = vmul.f32 %v4162, 0.020408163
      %v4421 = vmul.f32 %v4165, 0.020408163
      %v4422 = vmul.f32 %v4168, 0.020408163
      %v4423 = vmul.f32 %v4171, 0.020408163
      %v4424 = vmul.f32 %v4174, 0.020408163
      %v4425 = vmul.f32 %v4177, 0.020408163
      %v4426 = vmul.f32 %v4180, 0.020408163
      %v4427 = vmul.f32 %v4183, 0.020408163
      %v4428 = vmul.f32 %v4186, 0.020408163
      %v4429 = vmul.f32 %v4189, 0.020408163
      %v4430 = vmul.f32 %v4192, 0.020408163
      %v4431 = vmul.f32 %v4195, 0.020408163
      %v4432 = vmul.f32 %v4198, 0.020408163
      %v4433 = vmul.f32 %v4201, 0.020408163
      %v4434 = vmul.f32 %v4204, 0.020408163
      %v4435 = vmul.f32 %v4207, 0.020408163
      %v4436 = vmul.f32 %v4210, 0.020408163
      %v4437 = vmul.f32 %v4213, 0.020408163
      %v4438 = vmul.f32 %v4216, 0.020408163
      %v4439 = vmul.f32 %v4219, 0.020408163
      %v4440 = vmul.f32 %v4222, 0.020408163
      %v4441 = vmul.f32 %v4225, 0.020408163
      %v4442 = vmul.f32 %v4228, 0.020408163
      %v4443 = vmul.f32 %v4231, 0.020408163
      %v4444 = vmul.f32 %v4234, 0.020408163
      %v4445 = vmul.f32 %v4237, 0.020408163
      %v4446 = vmul.f32 %v4240, 0.020408163
      %v4447 = vmul.f32 %v4243, 0.020408163
      %v4448 = vmul.f32 %v4246, 0.020408163
      %v4449 = vmul.f32 %v4249, 0.020408163
      %v4450 = vmul.f32 %v4252, 0.020408163
      %v4451 = vmul.f32 %v4255, 0.020408163
      %v4452 = vmul.f32 %v4258, 0.020408163
      %v4453 = vmul.f32 %v4261, 0.020408163
      %v4454 = vmul.f32 %v4264, 0.020408163
      %v4455 = vmul.f32 %v4267, 0.020408163
      %v4456 = vmul.f32 %v4270, 0.020408163
      %v4457 = vmul.f32 %v4273, 0.020408163
      %v4458 = vmul.f32 %v4276, 0.020408163
      %v4459 = vmul.f32 %v4279, 0.020408163
      %v4460 = vmul.f32 %v4282, 0.020408163
      %v4461 = vmul.f32 %v4285, 0.020408163
      %v4462 = vmul.f32 %v4288, 0.020408163
      %v4463 = vmul.f32 %v4291, 0.020408163
      %v4464 = vmul.f32 %v4294, 0.020408163
      %v4465 = vmul.f32 %v4297, 0.020408163
      %v4466 = vmul.f32 %v4300, 0.020408163
      %v4467 = vmul.f32 %v4303, 0.020408163
      %v4468 = vmul.f32 %v4306, 0.020408163
      %v4469 = vmul.f32 %v4309, 0.020408163
      %v4470 = vmul.f32 %v4312, 0.020408163
      %v4471 = vmul.f32 %v4315, 0.020408163
      %v4472 = vmul.f32 %v4318, 0.020408163
      %v4473 = vmul.f32 %v4321, 0.020408163
      %v4474 = vmul.f32 %v4324, 0.020408163
      %v4475 = vmul.f32 %v4327, 0.020408163
      %v4476 = vmul.f32 %v4330, 0.020408163
      %v4477 = vmul.f32 %v4333, 0.020408163
      %v4478 = vld [vmem:[%s218] sm:$0xff]
      %v4479 = vld [vmem:[%s218 + $0x8] sm:$0xff]
      %v4480 = vld [vmem:[%s218 + $0x10] sm:$0xff]
      %v4481 = vld [vmem:[%s218 + $0x18] sm:$0xff]
      %v4482 = vld [vmem:[%s218 + $0x20] sm:$0xff]
      %v4483 = vld [vmem:[%s218 + $0x28] sm:$0xff]
      %v4484 = vld [vmem:[%s218 + $0x30] sm:$0xff]
      %v4485 = vld [vmem:[%s218 + $0x38] sm:$0xff]
      %v4486 = vld [vmem:[%s218 + $0x40] sm:$0xff]
      %v4487 = vld [vmem:[%s218 + $0x48] sm:$0xff]
      %v4488 = vld [vmem:[%s218 + $0x50] sm:$0xff]
      %v4489 = vld [vmem:[%s218 + $0x58] sm:$0xff]
      %v4490 = vld [vmem:[%s218 + $0x60] sm:$0xff]
      %v4491 = vld [vmem:[%s218 + $0x68] sm:$0xff]
      %v4492 = vld [vmem:[%s218 + $0x70] sm:$0xff]
      %v4493 = vld [vmem:[%s218 + $0x78] sm:$0xff]
      %v4494 = vld [vmem:[%s218 + $0x80] sm:$0xff]
      %v4495 = vld [vmem:[%s218 + $0x88] sm:$0xff]
      %v4496 = vld [vmem:[%s218 + $0x90] sm:$0xff]
      %v4497 = vld [vmem:[%s218 + $0x98] sm:$0xff]
      %v4498 = vld [vmem:[%s218 + $0xa0] sm:$0xff]
      %v4499 = vld [vmem:[%s218 + $0xa8] sm:$0xff]
      %v4500 = vld [vmem:[%s218 + $0xb0] sm:$0xff]
      %v4501 = vld [vmem:[%s218 + $0xb8] sm:$0xff]
      %v4502 = vld [vmem:[%s218 + $0xc0] sm:$0xff]
      %v4503 = vld [vmem:[%s218 + $0xc8] sm:$0xff]
      %v4504 = vld [vmem:[%s218 + $0xd0] sm:$0xff]
      %v4505 = vld [vmem:[%s218 + $0xd8] sm:$0xff]
      %v4506 = vld [vmem:[%s218 + $0xe0] sm:$0xff]
      %v4507 = vld [vmem:[%s218 + $0xe8] sm:$0xff]
      %v4508 = vld [vmem:[%s218 + $0xf0] sm:$0xff]
      %v4509 = vld [vmem:[%s218 + $0xf8] sm:$0xff]
      %v4510 = vld [vmem:[%s218 + $0x100] sm:$0xff]
      %v4511 = vld [vmem:[%s218 + $0x108] sm:$0xff]
      %v4512 = vld [vmem:[%s218 + $0x110] sm:$0xff]
      %v4513 = vld [vmem:[%s218 + $0x118] sm:$0xff]
      %v4514 = vld [vmem:[%s218 + $0x120] sm:$0xff]
      %v4515 = vld [vmem:[%s218 + $0x128] sm:$0xff]
      %v4516 = vld [vmem:[%s218 + $0x130] sm:$0xff]
      %v4517 = vld [vmem:[%s218 + $0x138] sm:$0xff]
      %v4518 = vld [vmem:[%s218 + $0x140] sm:$0xff]
      %v4519 = vld [vmem:[%s218 + $0x148] sm:$0xff]
      %v4520 = vld [vmem:[%s218 + $0x150] sm:$0xff]
      %v4521 = vld [vmem:[%s218 + $0x158] sm:$0xff]
      %v4522 = vld [vmem:[%s218 + $0x160] sm:$0xff]
      %v4523 = vld [vmem:[%s218 + $0x168] sm:$0xff]
      %v4524 = vld [vmem:[%s218 + $0x170] sm:$0xff]
      %v4525 = vld [vmem:[%s218 + $0x178] sm:$0xff]
      %v4526 = vld [vmem:[%s218 + $0x180] sm:$0xff]
      %v4527 = vld [vmem:[%s218 + $0x188] sm:$0xff]
      %v4528 = vld [vmem:[%s218 + $0x190] sm:$0xff]
      %v4529 = vld [vmem:[%s218 + $0x198] sm:$0xff]
      %v4530 = vld [vmem:[%s218 + $0x1a0] sm:$0xff]
      %v4531 = vld [vmem:[%s218 + $0x1a8] sm:$0xff]
      %v4532 = vld [vmem:[%s218 + $0x1b0] sm:$0xff]
      %v4533 = vld [vmem:[%s218 + $0x1b8] sm:$0xff]
      %v4534 = vld [vmem:[%s218 + $0x1c0] sm:$0xff]
      %v4535 = vld [vmem:[%s218 + $0x1c8] sm:$0xff]
      %v4536 = vld [vmem:[%s218 + $0x1d0] sm:$0xff]
      %v4537 = vld [vmem:[%s218 + $0x1d8] sm:$0xff]
      %v4538 = vld [vmem:[%s218 + $0x1e0] sm:$0xff]
      %v4539 = vld [vmem:[%s218 + $0x1e8] sm:$0xff]
      %v4540 = vld [vmem:[%s218 + $0x1f0] sm:$0xff]
      %v4541 = vld [vmem:[%s218 + $0x1f8] sm:$0xff]
      %v4542 = vld [vmem:[%s218 + $0x200] sm:$0xff]
      %v4543 = vld [vmem:[%s218 + $0x208] sm:$0xff]
      %v4544 = vld [vmem:[%s218 + $0x210] sm:$0xff]
      %v4545 = vld [vmem:[%s218 + $0x218] sm:$0xff]
      %v4546 = vld [vmem:[%s218 + $0x220] sm:$0xff]
      %v4547 = vld [vmem:[%s218 + $0x228] sm:$0xff]
      %v4548 = vld [vmem:[%s218 + $0x230] sm:$0xff]
      %v4549 = vld [vmem:[%s218 + $0x238] sm:$0xff]
      %v4550 = vld [vmem:[%s218 + $0x240] sm:$0xff]
      %v4551 = vld [vmem:[%s218 + $0x248] sm:$0xff]
      %v4552 = vld [vmem:[%s218 + $0x250] sm:$0xff]
      %v4553 = vld [vmem:[%s218 + $0x258] sm:$0xff]
      %v4554 = vld [vmem:[%s218 + $0x260] sm:$0xff]
      %v4555 = vld [vmem:[%s218 + $0x268] sm:$0xff]
      %v4556 = vld [vmem:[%s218 + $0x270] sm:$0xff]
      %v4557 = vld [vmem:[%s218 + $0x278] sm:$0xff]
      %v4558 = vld [vmem:[%s218 + $0x280] sm:$0xff]
      %v4559 = vld [vmem:[%s218 + $0x288] sm:$0xff]
      %v4560 = vld [vmem:[%s218 + $0x290] sm:$0xff]
      %v4561 = vld [vmem:[%s218 + $0x298] sm:$0xff]
      %v4562 = vld [vmem:[%s218 + $0x2a0] sm:$0xff]
      %v4563 = vld [vmem:[%s218 + $0x2a8] sm:$0xff]
      %v4564 = vld [vmem:[%s218 + $0x2b0] sm:$0xff]
      %v4565 = vld [vmem:[%s218 + $0x2b8] sm:$0xff]
      %v4566 = vld [vmem:[%s218 + $0x2c0] sm:$0xff]
      %v4567 = vld [vmem:[%s218 + $0x2c8] sm:$0xff]
      %v4568 = vld [vmem:[%s218 + $0x2d0] sm:$0xff]
      %v4569 = vld [vmem:[%s218 + $0x2d8] sm:$0xff]
      %v4570 = vld [vmem:[%s218 + $0x2e0] sm:$0xff]
      %v4571 = vld [vmem:[%s218 + $0x2e8] sm:$0xff]
      %v4572 = vld [vmem:[%s218 + $0x2f0] sm:$0xff]
      %v4573 = vld [vmem:[%s218 + $0x2f8] sm:$0xff]
      %v4574 = vld [vmem:[%s218 + $0x300] sm:$0xff]
      %v4575 = vld [vmem:[%s218 + $0x308] sm:$0xff]
      %v4576 = vld [vmem:[%s218 + $0x310] sm:$0xff]
      %v4577 = vld [vmem:[%s218 + $0x318] sm:$0xff]
      %v4578 = vld [vmem:[%s218 + $0x320] sm:$0xff]
      %v4579 = vld [vmem:[%s218 + $0x328] sm:$0xff]
      %v4580 = vld [vmem:[%s218 + $0x330] sm:$0xff]
      %v4581 = vld [vmem:[%s218 + $0x338] sm:$0xff]
      %v4582 = vld [vmem:[%s218 + $0x340] sm:$0xff]
      %v4583 = vld [vmem:[%s218 + $0x348] sm:$0xff]
      %v4584 = vld [vmem:[%s218 + $0x350] sm:$0xff]
      %v4585 = vld [vmem:[%s218 + $0x358] sm:$0xff]
      %v4586 = vld [vmem:[%s218 + $0x360] sm:$0xff]
      %v4587 = vld [vmem:[%s218 + $0x368] sm:$0xff]
      %v4588 = vld [vmem:[%s218 + $0x370] sm:$0xff]
      %v4589 = vld [vmem:[%s218 + $0x378] sm:$0xff]
      %v4590 = vld [vmem:[%s218 + $0x380] sm:$0xff]
      %v4591 = vld [vmem:[%s218 + $0x388] sm:$0xff]
      %v4592 = vld [vmem:[%s218 + $0x390] sm:$0xff]
      %v4593 = vld [vmem:[%s218 + $0x398] sm:$0xff]
      %v4594 = vld [vmem:[%s218 + $0x3a0] sm:$0xff]
      %v4595 = vld [vmem:[%s218 + $0x3a8] sm:$0xff]
      %v4596 = vld [vmem:[%s218 + $0x3b0] sm:$0xff]
      %v4597 = vld [vmem:[%s218 + $0x3b8] sm:$0xff]
      %v4598 = vld [vmem:[%s218 + $0x3c0] sm:$0xff]
      %v4599 = vld [vmem:[%s218 + $0x3c8] sm:$0xff]
      %v4600 = vld [vmem:[%s218 + $0x3d0] sm:$0xff]
      %v4601 = vld [vmem:[%s218 + $0x3d8] sm:$0xff]
      %v4602 = vld [vmem:[%s218 + $0x3e0] sm:$0xff]
      %v4603 = vld [vmem:[%s218 + $0x3e8] sm:$0xff]
      %v4604 = vld [vmem:[%s218 + $0x3f0] sm:$0xff]
      %v4605 = vld [vmem:[%s218 + $0x3f8] sm:$0xff]
      %v4606 = vld [vmem:[%s218 + $0x400] sm:$0xff]
      %v4607 = vld [vmem:[%s218 + $0x408] sm:$0xff]
      %v4608 = vld [vmem:[%s218 + $0x410] sm:$0xff]
      %v4609 = vld [vmem:[%s218 + $0x418] sm:$0xff]
      %v4610 = vld [vmem:[%s218 + $0x420] sm:$0xff]
      %v4611 = vld [vmem:[%s218 + $0x428] sm:$0xff]
      %v4612 = vld [vmem:[%s218 + $0x430] sm:$0xff]
      %v4613 = vld [vmem:[%s218 + $0x438] sm:$0xff]
      %v4614 = vld [vmem:[%s218 + $0x440] sm:$0xff]
      %v4615 = vld [vmem:[%s218 + $0x448] sm:$0xff]
      %v4616 = vld [vmem:[%s218 + $0x450] sm:$0xff]
      %v4617 = vld [vmem:[%s218 + $0x458] sm:$0xff]
      %v4618 = vld [vmem:[%s218 + $0x460] sm:$0xff]
      %v4619 = vld [vmem:[%s218 + $0x468] sm:$0xff]
      %v4620 = vld [vmem:[%s218 + $0x470] sm:$0xff]
      %v4621 = vld [vmem:[%s218 + $0x478] sm:$0xff]
      %v4622 = vadd.f32 %v4334, 0.001
      %v4623 = vadd.f32 %v4335, 0.001
      %v4624 = vadd.f32 %v4336, 0.001
      %v4625 = vadd.f32 %v4337, 0.001
      %v4626 = vadd.f32 %v4338, 0.001
      %v4627 = vadd.f32 %v4339, 0.001
      %v4628 = vadd.f32 %v4340, 0.001
      %v4629 = vadd.f32 %v4341, 0.001
      %v4630 = vadd.f32 %v4342, 0.001
      %v4631 = vadd.f32 %v4343, 0.001
      %v4632 = vadd.f32 %v4344, 0.001
      %v4633 = vadd.f32 %v4345, 0.001
      %v4634 = vadd.f32 %v4346, 0.001
      %v4635 = vadd.f32 %v4347, 0.001
      %v4636 = vadd.f32 %v4348, 0.001
      %v4637 = vadd.f32 %v4349, 0.001
      %v4638 = vadd.f32 %v4350, 0.001
      %v4639 = vadd.f32 %v4351, 0.001
      %v4640 = vadd.f32 %v4352, 0.001
      %v4641 = vadd.f32 %v4353, 0.001
      %v4642 = vadd.f32 %v4354, 0.001
      %v4643 = vadd.f32 %v4355, 0.001
      %v4644 = vadd.f32 %v4356, 0.001
      %v4645 = vadd.f32 %v4357, 0.001
      %v4646 = vadd.f32 %v4358, 0.001
      %v4647 = vadd.f32 %v4359, 0.001
      %v4648 = vadd.f32 %v4360, 0.001
      %v4649 = vadd.f32 %v4361, 0.001
      %v4650 = vadd.f32 %v4362, 0.001
      %v4651 = vadd.f32 %v4363, 0.001
      %v4652 = vadd.f32 %v4364, 0.001
      %v4653 = vadd.f32 %v4365, 0.001
      %v4654 = vadd.f32 %v4366, 0.001
      %v4655 = vadd.f32 %v4367, 0.001
      %v4656 = vadd.f32 %v4368, 0.001
      %v4657 = vadd.f32 %v4369, 0.001
      %v4658 = vadd.f32 %v4370, 0.001
      %v4659 = vadd.f32 %v4371, 0.001
      %v4660 = vadd.f32 %v4372, 0.001
      %v4661 = vadd.f32 %v4373, 0.001
      %v4662 = vadd.f32 %v4374, 0.001
      %v4663 = vadd.f32 %v4375, 0.001
      %v4664 = vadd.f32 %v4376, 0.001
      %v4665 = vadd.f32 %v4377, 0.001
      %v4666 = vadd.f32 %v4378, 0.001
      %v4667 = vadd.f32 %v4379, 0.001
      %v4668 = vadd.f32 %v4380, 0.001
      %v4669 = vadd.f32 %v4381, 0.001
      %v4670 = vadd.f32 %v4382, 0.001
      %v4671 = vadd.f32 %v4383, 0.001
      %v4672 = vadd.f32 %v4384, 0.001
      %v4673 = vadd.f32 %v4385, 0.001
      %v4674 = vadd.f32 %v4386, 0.001
      %v4675 = vadd.f32 %v4387, 0.001
      %v4676 = vadd.f32 %v4388, 0.001
      %v4677 = vadd.f32 %v4389, 0.001
      %v4678 = vadd.f32 %v4390, 0.001
      %v4679 = vadd.f32 %v4391, 0.001
      %v4680 = vadd.f32 %v4392, 0.001
      %v4681 = vadd.f32 %v4393, 0.001
      %v4682 = vadd.f32 %v4394, 0.001
      %v4683 = vadd.f32 %v4395, 0.001
      %v4684 = vadd.f32 %v4396, 0.001
      %v4685 = vadd.f32 %v4397, 0.001
      %v4686 = vadd.f32 %v4398, 0.001
      %v4687 = vadd.f32 %v4399, 0.001
      %v4688 = vadd.f32 %v4400, 0.001
      %v4689 = vadd.f32 %v4401, 0.001
      %v4690 = vadd.f32 %v4402, 0.001
      %v4691 = vadd.f32 %v4403, 0.001
      %v4692 = vadd.f32 %v4404, 0.001
      %v4693 = vadd.f32 %v4405, 0.001
      %v4694 = vadd.f32 %v4406, 0.001
      %v4695 = vadd.f32 %v4407, 0.001
      %v4696 = vadd.f32 %v4408, 0.001
      %v4697 = vadd.f32 %v4409, 0.001
      %v4698 = vadd.f32 %v4410, 0.001
      %v4699 = vadd.f32 %v4411, 0.001
      %v4700 = vadd.f32 %v4412, 0.001
      %v4701 = vadd.f32 %v4413, 0.001
      %v4702 = vadd.f32 %v4414, 0.001
      %v4703 = vadd.f32 %v4415, 0.001
      %v4704 = vadd.f32 %v4416, 0.001
      %v4705 = vadd.f32 %v4417, 0.001
      %v4706 = vadd.f32 %v4418, 0.001
      %v4707 = vadd.f32 %v4419, 0.001
      %v4708 = vadd.f32 %v4420, 0.001
      %v4709 = vadd.f32 %v4421, 0.001
      %v4710 = vadd.f32 %v4422, 0.001
      %v4711 = vadd.f32 %v4423, 0.001
      %v4712 = vadd.f32 %v4424, 0.001
      %v4713 = vadd.f32 %v4425, 0.001
      %v4714 = vadd.f32 %v4426, 0.001
      %v4715 = vadd.f32 %v4427, 0.001
      %v4716 = vadd.f32 %v4428, 0.001
      %v4717 = vadd.f32 %v4429, 0.001
      %v4718 = vadd.f32 %v4430, 0.001
      %v4719 = vadd.f32 %v4431, 0.001
      %v4720 = vadd.f32 %v4432, 0.001
      %v4721 = vadd.f32 %v4433, 0.001
      %v4722 = vadd.f32 %v4434, 0.001
      %v4723 = vadd.f32 %v4435, 0.001
      %v4724 = vadd.f32 %v4436, 0.001
      %v4725 = vadd.f32 %v4437, 0.001
      %v4726 = vadd.f32 %v4438, 0.001
      %v4727 = vadd.f32 %v4439, 0.001
      %v4728 = vadd.f32 %v4440, 0.001
      %v4729 = vadd.f32 %v4441, 0.001
      %v4730 = vadd.f32 %v4442, 0.001
      %v4731 = vadd.f32 %v4443, 0.001
      %v4732 = vadd.f32 %v4444, 0.001
      %v4733 = vadd.f32 %v4445, 0.001
      %v4734 = vadd.f32 %v4446, 0.001
      %v4735 = vadd.f32 %v4447, 0.001
      %v4736 = vadd.f32 %v4448, 0.001
      %v4737 = vadd.f32 %v4449, 0.001
      %v4738 = vadd.f32 %v4450, 0.001
      %v4739 = vadd.f32 %v4451, 0.001
      %v4740 = vadd.f32 %v4452, 0.001
      %v4741 = vadd.f32 %v4453, 0.001
      %v4742 = vadd.f32 %v4454, 0.001
      %v4743 = vadd.f32 %v4455, 0.001
      %v4744 = vadd.f32 %v4456, 0.001
      %v4745 = vadd.f32 %v4457, 0.001
      %v4746 = vadd.f32 %v4458, 0.001
      %v4747 = vadd.f32 %v4459, 0.001
      %v4748 = vadd.f32 %v4460, 0.001
      %v4749 = vadd.f32 %v4461, 0.001
      %v4750 = vadd.f32 %v4462, 0.001
      %v4751 = vadd.f32 %v4463, 0.001
      %v4752 = vadd.f32 %v4464, 0.001
      %v4753 = vadd.f32 %v4465, 0.001
      %v4754 = vadd.f32 %v4466, 0.001
      %v4755 = vadd.f32 %v4467, 0.001
      %v4756 = vadd.f32 %v4468, 0.001
      %v4757 = vadd.f32 %v4469, 0.001
      %v4758 = vadd.f32 %v4470, 0.001
      %v4759 = vadd.f32 %v4471, 0.001
      %v4760 = vadd.f32 %v4472, 0.001
      %v4761 = vadd.f32 %v4473, 0.001
      %v4762 = vadd.f32 %v4474, 0.001
      %v4763 = vadd.f32 %v4475, 0.001
      %v4764 = vadd.f32 %v4476, 0.001
      %v4765 = vadd.f32 %v4477, 0.001
      %v4766 = vrsqrt.pop %v4622
      %v4767 = vmul.f32 %v4766, %v4622
      %v4768 = vmul.f32 %v4767, %v4766
      %v4769 = vmul.f32 0.5, %v4768
      %v4770 = vsub.f32 1.5, %v4769
      %v4771 = vmul.f32 %v4766, %v4770
      %vm4772 = vweird.f32 %v4622
      %vm4773 = vweird.f32 %v4766
      %vm4774 = vmor %vm4772, %vm4773
      %v4775 = vsel %vm4774, %v4766, %v4771
      %v4776 = vrsqrt.pop %v4623
      %v4777 = vmul.f32 %v4776, %v4623
      %v4778 = vmul.f32 %v4777, %v4776
      %v4779 = vmul.f32 0.5, %v4778
      %v4780 = vsub.f32 1.5, %v4779
      %v4781 = vmul.f32 %v4776, %v4780
      %vm4782 = vweird.f32 %v4623
      %vm4783 = vweird.f32 %v4776
      %vm4784 = vmor %vm4782, %vm4783
      %v4785 = vsel %vm4784, %v4776, %v4781
      %v4786 = vrsqrt.pop %v4624
      %v4787 = vmul.f32 %v4786, %v4624
      %v4788 = vmul.f32 %v4787, %v4786
      %v4789 = vmul.f32 0.5, %v4788
      %v4790 = vsub.f32 1.5, %v4789
      %v4791 = vmul.f32 %v4786, %v4790
      %vm4792 = vweird.f32 %v4624
      %vm4793 = vweird.f32 %v4786
      %vm4794 = vmor %vm4792, %vm4793
      %v4795 = vsel %vm4794, %v4786, %v4791
      %v4796 = vrsqrt.pop %v4625
      %v4797 = vmul.f32 %v4796, %v4625
      %v4798 = vmul.f32 %v4797, %v4796
      %v4799 = vmul.f32 0.5, %v4798
      %v4800 = vsub.f32 1.5, %v4799
      %v4801 = vmul.f32 %v4796, %v4800
      %vm4802 = vweird.f32 %v4625
      %vm4803 = vweird.f32 %v4796
      %vm4804 = vmor %vm4802, %vm4803
      %v4805 = vsel %vm4804, %v4796, %v4801
      %v4806 = vrsqrt.pop %v4626
      %v4807 = vmul.f32 %v4806, %v4626
      %v4808 = vmul.f32 %v4807, %v4806
      %v4809 = vmul.f32 0.5, %v4808
      %v4810 = vsub.f32 1.5, %v4809
      %v4811 = vmul.f32 %v4806, %v4810
      %vm4812 = vweird.f32 %v4626
      %vm4813 = vweird.f32 %v4806
      %vm4814 = vmor %vm4812, %vm4813
      %v4815 = vsel %vm4814, %v4806, %v4811
      %v4816 = vrsqrt.pop %v4627
      %v4817 = vmul.f32 %v4816, %v4627
      %v4818 = vmul.f32 %v4817, %v4816
      %v4819 = vmul.f32 0.5, %v4818
      %v4820 = vsub.f32 1.5, %v4819
      %v4821 = vmul.f32 %v4816, %v4820
      %vm4822 = vweird.f32 %v4627
      %vm4823 = vweird.f32 %v4816
      %vm4824 = vmor %vm4822, %vm4823
      %v4825 = vsel %vm4824, %v4816, %v4821
      %v4826 = vrsqrt.pop %v4628
      %v4827 = vmul.f32 %v4826, %v4628
      %v4828 = vmul.f32 %v4827, %v4826
      %v4829 = vmul.f32 0.5, %v4828
      %v4830 = vsub.f32 1.5, %v4829
      %v4831 = vmul.f32 %v4826, %v4830
      %vm4832 = vweird.f32 %v4628
      %vm4833 = vweird.f32 %v4826
      %vm4834 = vmor %vm4832, %vm4833
      %v4835 = vsel %vm4834, %v4826, %v4831
      %v4836 = vrsqrt.pop %v4629
      %v4837 = vmul.f32 %v4836, %v4629
      %v4838 = vmul.f32 %v4837, %v4836
      %v4839 = vmul.f32 0.5, %v4838
      %v4840 = vsub.f32 1.5, %v4839
      %v4841 = vmul.f32 %v4836, %v4840
      %vm4842 = vweird.f32 %v4629
      %vm4843 = vweird.f32 %v4836
      %vm4844 = vmor %vm4842, %vm4843
      %v4845 = vsel %vm4844, %v4836, %v4841
      %v4846 = vrsqrt.pop %v4630
      %v4847 = vmul.f32 %v4846, %v4630
      %v4848 = vmul.f32 %v4847, %v4846
      %v4849 = vmul.f32 0.5, %v4848
      %v4850 = vsub.f32 1.5, %v4849
      %v4851 = vmul.f32 %v4846, %v4850
      %vm4852 = vweird.f32 %v4630
      %vm4853 = vweird.f32 %v4846
      %vm4854 = vmor %vm4852, %vm4853
      %v4855 = vsel %vm4854, %v4846, %v4851
      %v4856 = vrsqrt.pop %v4631
      %v4857 = vmul.f32 %v4856, %v4631
      %v4858 = vmul.f32 %v4857, %v4856
      %v4859 = vmul.f32 0.5, %v4858
      %v4860 = vsub.f32 1.5, %v4859
      %v4861 = vmul.f32 %v4856, %v4860
      %vm4862 = vweird.f32 %v4631
      %vm4863 = vweird.f32 %v4856
      %vm4864 = vmor %vm4862, %vm4863
      %v4865 = vsel %vm4864, %v4856, %v4861
      %v4866 = vrsqrt.pop %v4632
      %v4867 = vmul.f32 %v4866, %v4632
      %v4868 = vmul.f32 %v4867, %v4866
      %v4869 = vmul.f32 0.5, %v4868
      %v4870 = vsub.f32 1.5, %v4869
      %v4871 = vmul.f32 %v4866, %v4870
      %vm4872 = vweird.f32 %v4632
      %vm4873 = vweird.f32 %v4866
      %vm4874 = vmor %vm4872, %vm4873
      %v4875 = vsel %vm4874, %v4866, %v4871
      %v4876 = vrsqrt.pop %v4633
      %v4877 = vmul.f32 %v4876, %v4633
      %v4878 = vmul.f32 %v4877, %v4876
      %v4879 = vmul.f32 0.5, %v4878
      %v4880 = vsub.f32 1.5, %v4879
      %v4881 = vmul.f32 %v4876, %v4880
      %vm4882 = vweird.f32 %v4633
      %vm4883 = vweird.f32 %v4876
      %vm4884 = vmor %vm4882, %vm4883
      %v4885 = vsel %vm4884, %v4876, %v4881
      %v4886 = vrsqrt.pop %v4634
      %v4887 = vmul.f32 %v4886, %v4634
      %v4888 = vmul.f32 %v4887, %v4886
      %v4889 = vmul.f32 0.5, %v4888
      %v4890 = vsub.f32 1.5, %v4889
      %v4891 = vmul.f32 %v4886, %v4890
      %vm4892 = vweird.f32 %v4634
      %vm4893 = vweird.f32 %v4886
      %vm4894 = vmor %vm4892, %vm4893
      %v4895 = vsel %vm4894, %v4886, %v4891
      %v4896 = vrsqrt.pop %v4635
      %v4897 = vmul.f32 %v4896, %v4635
      %v4898 = vmul.f32 %v4897, %v4896
      %v4899 = vmul.f32 0.5, %v4898
      %v4900 = vsub.f32 1.5, %v4899
      %v4901 = vmul.f32 %v4896, %v4900
      %vm4902 = vweird.f32 %v4635
      %vm4903 = vweird.f32 %v4896
      %vm4904 = vmor %vm4902, %vm4903
      %v4905 = vsel %vm4904, %v4896, %v4901
      %v4906 = vrsqrt.pop %v4636
      %v4907 = vmul.f32 %v4906, %v4636
      %v4908 = vmul.f32 %v4907, %v4906
      %v4909 = vmul.f32 0.5, %v4908
      %v4910 = vsub.f32 1.5, %v4909
      %v4911 = vmul.f32 %v4906, %v4910
      %vm4912 = vweird.f32 %v4636
      %vm4913 = vweird.f32 %v4906
      %vm4914 = vmor %vm4912, %vm4913
      %v4915 = vsel %vm4914, %v4906, %v4911
      %v4916 = vrsqrt.pop %v4637
      %v4917 = vmul.f32 %v4916, %v4637
      %v4918 = vmul.f32 %v4917, %v4916
      %v4919 = vmul.f32 0.5, %v4918
      %v4920 = vsub.f32 1.5, %v4919
      %v4921 = vmul.f32 %v4916, %v4920
      %vm4922 = vweird.f32 %v4637
      %vm4923 = vweird.f32 %v4916
      %vm4924 = vmor %vm4922, %vm4923
      %v4925 = vsel %vm4924, %v4916, %v4921
      %v4926 = vrsqrt.pop %v4638
      %v4927 = vmul.f32 %v4926, %v4638
      %v4928 = vmul.f32 %v4927, %v4926
      %v4929 = vmul.f32 0.5, %v4928
      %v4930 = vsub.f32 1.5, %v4929
      %v4931 = vmul.f32 %v4926, %v4930
      %vm4932 = vweird.f32 %v4638
      %vm4933 = vweird.f32 %v4926
      %vm4934 = vmor %vm4932, %vm4933
      %v4935 = vsel %vm4934, %v4926, %v4931
      %v4936 = vrsqrt.pop %v4639
      %v4937 = vmul.f32 %v4936, %v4639
      %v4938 = vmul.f32 %v4937, %v4936
      %v4939 = vmul.f32 0.5, %v4938
      %v4940 = vsub.f32 1.5, %v4939
      %v4941 = vmul.f32 %v4936, %v4940
      %vm4942 = vweird.f32 %v4639
      %vm4943 = vweird.f32 %v4936
      %vm4944 = vmor %vm4942, %vm4943
      %v4945 = vsel %vm4944, %v4936, %v4941
      %v4946 = vrsqrt.pop %v4640
      %v4947 = vmul.f32 %v4946, %v4640
      %v4948 = vmul.f32 %v4947, %v4946
      %v4949 = vmul.f32 0.5, %v4948
      %v4950 = vsub.f32 1.5, %v4949
      %v4951 = vmul.f32 %v4946, %v4950
      %vm4952 = vweird.f32 %v4640
      %vm4953 = vweird.f32 %v4946
      %vm4954 = vmor %vm4952, %vm4953
      %v4955 = vsel %vm4954, %v4946, %v4951
      %v4956 = vrsqrt.pop %v4641
      %v4957 = vmul.f32 %v4956, %v4641
      %v4958 = vmul.f32 %v4957, %v4956
      %v4959 = vmul.f32 0.5, %v4958
      %v4960 = vsub.f32 1.5, %v4959
      %v4961 = vmul.f32 %v4956, %v4960
      %vm4962 = vweird.f32 %v4641
      %vm4963 = vweird.f32 %v4956
      %vm4964 = vmor %vm4962, %vm4963
      %v4965 = vsel %vm4964, %v4956, %v4961
      %v4966 = vrsqrt.pop %v4642
      %v4967 = vmul.f32 %v4966, %v4642
      %v4968 = vmul.f32 %v4967, %v4966
      %v4969 = vmul.f32 0.5, %v4968
      %v4970 = vsub.f32 1.5, %v4969
      %v4971 = vmul.f32 %v4966, %v4970
      %vm4972 = vweird.f32 %v4642
      %vm4973 = vweird.f32 %v4966
      %vm4974 = vmor %vm4972, %vm4973
      %v4975 = vsel %vm4974, %v4966, %v4971
      %v4976 = vrsqrt.pop %v4643
      %v4977 = vmul.f32 %v4976, %v4643
      %v4978 = vmul.f32 %v4977, %v4976
      %v4979 = vmul.f32 0.5, %v4978
      %v4980 = vsub.f32 1.5, %v4979
      %v4981 = vmul.f32 %v4976, %v4980
      %vm4982 = vweird.f32 %v4643
      %vm4983 = vweird.f32 %v4976
      %vm4984 = vmor %vm4982, %vm4983
      %v4985 = vsel %vm4984, %v4976, %v4981
      %v4986 = vrsqrt.pop %v4644
      %v4987 = vmul.f32 %v4986, %v4644
      %v4988 = vmul.f32 %v4987, %v4986
      %v4989 = vmul.f32 0.5, %v4988
      %v4990 = vsub.f32 1.5, %v4989
      %v4991 = vmul.f32 %v4986, %v4990
      %vm4992 = vweird.f32 %v4644
      %vm4993 = vweird.f32 %v4986
      %vm4994 = vmor %vm4992, %vm4993
      %v4995 = vsel %vm4994, %v4986, %v4991
      %v4996 = vrsqrt.pop %v4645
      %v4997 = vmul.f32 %v4996, %v4645
      %v4998 = vmul.f32 %v4997, %v4996
      %v4999 = vmul.f32 0.5, %v4998
      %v5000 = vsub.f32 1.5, %v4999
      %v5001 = vmul.f32 %v4996, %v5000
      %vm5002 = vweird.f32 %v4645
      %vm5003 = vweird.f32 %v4996
      %vm5004 = vmor %vm5002, %vm5003
      %v5005 = vsel %vm5004, %v4996, %v5001
      %v5006 = vrsqrt.pop %v4646
      %v5007 = vmul.f32 %v5006, %v4646
      %v5008 = vmul.f32 %v5007, %v5006
      %v5009 = vmul.f32 0.5, %v5008
      %v5010 = vsub.f32 1.5, %v5009
      %v5011 = vmul.f32 %v5006, %v5010
      %vm5012 = vweird.f32 %v4646
      %vm5013 = vweird.f32 %v5006
      %vm5014 = vmor %vm5012, %vm5013
      %v5015 = vsel %vm5014, %v5006, %v5011
      %v5016 = vrsqrt.pop %v4647
      %v5017 = vmul.f32 %v5016, %v4647
      %v5018 = vmul.f32 %v5017, %v5016
      %v5019 = vmul.f32 0.5, %v5018
      %v5020 = vsub.f32 1.5, %v5019
      %v5021 = vmul.f32 %v5016, %v5020
      %vm5022 = vweird.f32 %v4647
      %vm5023 = vweird.f32 %v5016
      %vm5024 = vmor %vm5022, %vm5023
      %v5025 = vsel %vm5024, %v5016, %v5021
      %v5026 = vrsqrt.pop %v4648
      %v5027 = vmul.f32 %v5026, %v4648
      %v5028 = vmul.f32 %v5027, %v5026
      %v5029 = vmul.f32 0.5, %v5028
      %v5030 = vsub.f32 1.5, %v5029
      %v5031 = vmul.f32 %v5026, %v5030
      %vm5032 = vweird.f32 %v4648
      %vm5033 = vweird.f32 %v5026
      %vm5034 = vmor %vm5032, %vm5033
      %v5035 = vsel %vm5034, %v5026, %v5031
      %v5036 = vrsqrt.pop %v4649
      %v5037 = vmul.f32 %v5036, %v4649
      %v5038 = vmul.f32 %v5037, %v5036
      %v5039 = vmul.f32 0.5, %v5038
      %v5040 = vsub.f32 1.5, %v5039
      %v5041 = vmul.f32 %v5036, %v5040
      %vm5042 = vweird.f32 %v4649
      %vm5043 = vweird.f32 %v5036
      %vm5044 = vmor %vm5042, %vm5043
      %v5045 = vsel %vm5044, %v5036, %v5041
      %v5046 = vrsqrt.pop %v4650
      %v5047 = vmul.f32 %v5046, %v4650
      %v5048 = vmul.f32 %v5047, %v5046
      %v5049 = vmul.f32 0.5, %v5048
      %v5050 = vsub.f32 1.5, %v5049
      %v5051 = vmul.f32 %v5046, %v5050
      %vm5052 = vweird.f32 %v4650
      %vm5053 = vweird.f32 %v5046
      %vm5054 = vmor %vm5052, %vm5053
      %v5055 = vsel %vm5054, %v5046, %v5051
      %v5056 = vrsqrt.pop %v4651
      %v5057 = vmul.f32 %v5056, %v4651
      %v5058 = vmul.f32 %v5057, %v5056
      %v5059 = vmul.f32 0.5, %v5058
      %v5060 = vsub.f32 1.5, %v5059
      %v5061 = vmul.f32 %v5056, %v5060
      %vm5062 = vweird.f32 %v4651
      %vm5063 = vweird.f32 %v5056
      %vm5064 = vmor %vm5062, %vm5063
      %v5065 = vsel %vm5064, %v5056, %v5061
      %v5066 = vrsqrt.pop %v4652
      %v5067 = vmul.f32 %v5066, %v4652
      %v5068 = vmul.f32 %v5067, %v5066
      %v5069 = vmul.f32 0.5, %v5068
      %v5070 = vsub.f32 1.5, %v5069
      %v5071 = vmul.f32 %v5066, %v5070
      %vm5072 = vweird.f32 %v4652
      %vm5073 = vweird.f32 %v5066
      %vm5074 = vmor %vm5072, %vm5073
      %v5075 = vsel %vm5074, %v5066, %v5071
      %v5076 = vrsqrt.pop %v4653
      %v5077 = vmul.f32 %v5076, %v4653
      %v5078 = vmul.f32 %v5077, %v5076
      %v5079 = vmul.f32 0.5, %v5078
      %v5080 = vsub.f32 1.5, %v5079
      %v5081 = vmul.f32 %v5076, %v5080
      %vm5082 = vweird.f32 %v4653
      %vm5083 = vweird.f32 %v5076
      %vm5084 = vmor %vm5082, %vm5083
      %v5085 = vsel %vm5084, %v5076, %v5081
      %v5086 = vrsqrt.pop %v4654
      %v5087 = vmul.f32 %v5086, %v4654
      %v5088 = vmul.f32 %v5087, %v5086
      %v5089 = vmul.f32 0.5, %v5088
      %v5090 = vsub.f32 1.5, %v5089
      %v5091 = vmul.f32 %v5086, %v5090
      %vm5092 = vweird.f32 %v4654
      %vm5093 = vweird.f32 %v5086
      %vm5094 = vmor %vm5092, %vm5093
      %v5095 = vsel %vm5094, %v5086, %v5091
      %v5096 = vrsqrt.pop %v4655
      %v5097 = vmul.f32 %v5096, %v4655
      %v5098 = vmul.f32 %v5097, %v5096
      %v5099 = vmul.f32 0.5, %v5098
      %v5100 = vsub.f32 1.5, %v5099
      %v5101 = vmul.f32 %v5096, %v5100
      %vm5102 = vweird.f32 %v4655
      %vm5103 = vweird.f32 %v5096
      %vm5104 = vmor %vm5102, %vm5103
      %v5105 = vsel %vm5104, %v5096, %v5101
      %v5106 = vrsqrt.pop %v4656
      %v5107 = vmul.f32 %v5106, %v4656
      %v5108 = vmul.f32 %v5107, %v5106
      %v5109 = vmul.f32 0.5, %v5108
      %v5110 = vsub.f32 1.5, %v5109
      %v5111 = vmul.f32 %v5106, %v5110
      %vm5112 = vweird.f32 %v4656
      %vm5113 = vweird.f32 %v5106
      %vm5114 = vmor %vm5112, %vm5113
      %v5115 = vsel %vm5114, %v5106, %v5111
      %v5116 = vrsqrt.pop %v4657
      %v5117 = vmul.f32 %v5116, %v4657
      %v5118 = vmul.f32 %v5117, %v5116
      %v5119 = vmul.f32 0.5, %v5118
      %v5120 = vsub.f32 1.5, %v5119
      %v5121 = vmul.f32 %v5116, %v5120
      %vm5122 = vweird.f32 %v4657
      %vm5123 = vweird.f32 %v5116
      %vm5124 = vmor %vm5122, %vm5123
      %v5125 = vsel %vm5124, %v5116, %v5121
      %v5126 = vrsqrt.pop %v4658
      %v5127 = vmul.f32 %v5126, %v4658
      %v5128 = vmul.f32 %v5127, %v5126
      %v5129 = vmul.f32 0.5, %v5128
      %v5130 = vsub.f32 1.5, %v5129
      %v5131 = vmul.f32 %v5126, %v5130
      %vm5132 = vweird.f32 %v4658
      %vm5133 = vweird.f32 %v5126
      %vm5134 = vmor %vm5132, %vm5133
      %v5135 = vsel %vm5134, %v5126, %v5131
      %v5136 = vrsqrt.pop %v4659
      %v5137 = vmul.f32 %v5136, %v4659
      %v5138 = vmul.f32 %v5137, %v5136
      %v5139 = vmul.f32 0.5, %v5138
      %v5140 = vsub.f32 1.5, %v5139
      %v5141 = vmul.f32 %v5136, %v5140
      %vm5142 = vweird.f32 %v4659
      %vm5143 = vweird.f32 %v5136
      %vm5144 = vmor %vm5142, %vm5143
      %v5145 = vsel %vm5144, %v5136, %v5141
      %v5146 = vrsqrt.pop %v4660
      %v5147 = vmul.f32 %v5146, %v4660
      %v5148 = vmul.f32 %v5147, %v5146
      %v5149 = vmul.f32 0.5, %v5148
      %v5150 = vsub.f32 1.5, %v5149
      %v5151 = vmul.f32 %v5146, %v5150
      %vm5152 = vweird.f32 %v4660
      %vm5153 = vweird.f32 %v5146
      %vm5154 = vmor %vm5152, %vm5153
      %v5155 = vsel %vm5154, %v5146, %v5151
      %v5156 = vrsqrt.pop %v4661
      %v5157 = vmul.f32 %v5156, %v4661
      %v5158 = vmul.f32 %v5157, %v5156
      %v5159 = vmul.f32 0.5, %v5158
      %v5160 = vsub.f32 1.5, %v5159
      %v5161 = vmul.f32 %v5156, %v5160
      %vm5162 = vweird.f32 %v4661
      %vm5163 = vweird.f32 %v5156
      %vm5164 = vmor %vm5162, %vm5163
      %v5165 = vsel %vm5164, %v5156, %v5161
      %v5166 = vrsqrt.pop %v4662
      %v5167 = vmul.f32 %v5166, %v4662
      %v5168 = vmul.f32 %v5167, %v5166
      %v5169 = vmul.f32 0.5, %v5168
      %v5170 = vsub.f32 1.5, %v5169
      %v5171 = vmul.f32 %v5166, %v5170
      %vm5172 = vweird.f32 %v4662
      %vm5173 = vweird.f32 %v5166
      %vm5174 = vmor %vm5172, %vm5173
      %v5175 = vsel %vm5174, %v5166, %v5171
      %v5176 = vrsqrt.pop %v4663
      %v5177 = vmul.f32 %v5176, %v4663
      %v5178 = vmul.f32 %v5177, %v5176
      %v5179 = vmul.f32 0.5, %v5178
      %v5180 = vsub.f32 1.5, %v5179
      %v5181 = vmul.f32 %v5176, %v5180
      %vm5182 = vweird.f32 %v4663
      %vm5183 = vweird.f32 %v5176
      %vm5184 = vmor %vm5182, %vm5183
      %v5185 = vsel %vm5184, %v5176, %v5181
      %v5186 = vrsqrt.pop %v4664
      %v5187 = vmul.f32 %v5186, %v4664
      %v5188 = vmul.f32 %v5187, %v5186
      %v5189 = vmul.f32 0.5, %v5188
      %v5190 = vsub.f32 1.5, %v5189
      %v5191 = vmul.f32 %v5186, %v5190
      %vm5192 = vweird.f32 %v4664
      %vm5193 = vweird.f32 %v5186
      %vm5194 = vmor %vm5192, %vm5193
      %v5195 = vsel %vm5194, %v5186, %v5191
      %v5196 = vrsqrt.pop %v4665
      %v5197 = vmul.f32 %v5196, %v4665
      %v5198 = vmul.f32 %v5197, %v5196
      %v5199 = vmul.f32 0.5, %v5198
      %v5200 = vsub.f32 1.5, %v5199
      %v5201 = vmul.f32 %v5196, %v5200
      %vm5202 = vweird.f32 %v4665
      %vm5203 = vweird.f32 %v5196
      %vm5204 = vmor %vm5202, %vm5203
      %v5205 = vsel %vm5204, %v5196, %v5201
      %v5206 = vrsqrt.pop %v4666
      %v5207 = vmul.f32 %v5206, %v4666
      %v5208 = vmul.f32 %v5207, %v5206
      %v5209 = vmul.f32 0.5, %v5208
      %v5210 = vsub.f32 1.5, %v5209
      %v5211 = vmul.f32 %v5206, %v5210
      %vm5212 = vweird.f32 %v4666
      %vm5213 = vweird.f32 %v5206
      %vm5214 = vmor %vm5212, %vm5213
      %v5215 = vsel %vm5214, %v5206, %v5211
      %v5216 = vrsqrt.pop %v4667
      %v5217 = vmul.f32 %v5216, %v4667
      %v5218 = vmul.f32 %v5217, %v5216
      %v5219 = vmul.f32 0.5, %v5218
      %v5220 = vsub.f32 1.5, %v5219
      %v5221 = vmul.f32 %v5216, %v5220
      %vm5222 = vweird.f32 %v4667
      %vm5223 = vweird.f32 %v5216
      %vm5224 = vmor %vm5222, %vm5223
      %v5225 = vsel %vm5224, %v5216, %v5221
      %v5226 = vrsqrt.pop %v4668
      %v5227 = vmul.f32 %v5226, %v4668
      %v5228 = vmul.f32 %v5227, %v5226
      %v5229 = vmul.f32 0.5, %v5228
      %v5230 = vsub.f32 1.5, %v5229
      %v5231 = vmul.f32 %v5226, %v5230
      %vm5232 = vweird.f32 %v4668
      %vm5233 = vweird.f32 %v5226
      %vm5234 = vmor %vm5232, %vm5233
      %v5235 = vsel %vm5234, %v5226, %v5231
      %v5236 = vrsqrt.pop %v4669
      %v5237 = vmul.f32 %v5236, %v4669
      %v5238 = vmul.f32 %v5237, %v5236
      %v5239 = vmul.f32 0.5, %v5238
      %v5240 = vsub.f32 1.5, %v5239
      %v5241 = vmul.f32 %v5236, %v5240
      %vm5242 = vweird.f32 %v4669
      %vm5243 = vweird.f32 %v5236
      %vm5244 = vmor %vm5242, %vm5243
      %v5245 = vsel %vm5244, %v5236, %v5241
      %v5246 = vrsqrt.pop %v4670
      %v5247 = vmul.f32 %v5246, %v4670
      %v5248 = vmul.f32 %v5247, %v5246
      %v5249 = vmul.f32 0.5, %v5248
      %v5250 = vsub.f32 1.5, %v5249
      %v5251 = vmul.f32 %v5246, %v5250
      %vm5252 = vweird.f32 %v4670
      %vm5253 = vweird.f32 %v5246
      %vm5254 = vmor %vm5252, %vm5253
      %v5255 = vsel %vm5254, %v5246, %v5251
      %v5256 = vrsqrt.pop %v4671
      %v5257 = vmul.f32 %v5256, %v4671
      %v5258 = vmul.f32 %v5257, %v5256
      %v5259 = vmul.f32 0.5, %v5258
      %v5260 = vsub.f32 1.5, %v5259
      %v5261 = vmul.f32 %v5256, %v5260
      %vm5262 = vweird.f32 %v4671
      %vm5263 = vweird.f32 %v5256
      %vm5264 = vmor %vm5262, %vm5263
      %v5265 = vsel %vm5264, %v5256, %v5261
      %v5266 = vrsqrt.pop %v4672
      %v5267 = vmul.f32 %v5266, %v4672
      %v5268 = vmul.f32 %v5267, %v5266
      %v5269 = vmul.f32 0.5, %v5268
      %v5270 = vsub.f32 1.5, %v5269
      %v5271 = vmul.f32 %v5266, %v5270
      %vm5272 = vweird.f32 %v4672
      %vm5273 = vweird.f32 %v5266
      %vm5274 = vmor %vm5272, %vm5273
      %v5275 = vsel %vm5274, %v5266, %v5271
      %v5276 = vrsqrt.pop %v4673
      %v5277 = vmul.f32 %v5276, %v4673
      %v5278 = vmul.f32 %v5277, %v5276
      %v5279 = vmul.f32 0.5, %v5278
      %v5280 = vsub.f32 1.5, %v5279
      %v5281 = vmul.f32 %v5276, %v5280
      %vm5282 = vweird.f32 %v4673
      %vm5283 = vweird.f32 %v5276
      %vm5284 = vmor %vm5282, %vm5283
      %v5285 = vsel %vm5284, %v5276, %v5281
      %v5286 = vrsqrt.pop %v4674
      %v5287 = vmul.f32 %v5286, %v4674
      %v5288 = vmul.f32 %v5287, %v5286
      %v5289 = vmul.f32 0.5, %v5288
      %v5290 = vsub.f32 1.5, %v5289
      %v5291 = vmul.f32 %v5286, %v5290
      %vm5292 = vweird.f32 %v4674
      %vm5293 = vweird.f32 %v5286
      %vm5294 = vmor %vm5292, %vm5293
      %v5295 = vsel %vm5294, %v5286, %v5291
      %v5296 = vrsqrt.pop %v4675
      %v5297 = vmul.f32 %v5296, %v4675
      %v5298 = vmul.f32 %v5297, %v5296
      %v5299 = vmul.f32 0.5, %v5298
      %v5300 = vsub.f32 1.5, %v5299
      %v5301 = vmul.f32 %v5296, %v5300
      %vm5302 = vweird.f32 %v4675
      %vm5303 = vweird.f32 %v5296
      %vm5304 = vmor %vm5302, %vm5303
      %v5305 = vsel %vm5304, %v5296, %v5301
      %v5306 = vrsqrt.pop %v4676
      %v5307 = vmul.f32 %v5306, %v4676
      %v5308 = vmul.f32 %v5307, %v5306
      %v5309 = vmul.f32 0.5, %v5308
      %v5310 = vsub.f32 1.5, %v5309
      %v5311 = vmul.f32 %v5306, %v5310
      %vm5312 = vweird.f32 %v4676
      %vm5313 = vweird.f32 %v5306
      %vm5314 = vmor %vm5312, %vm5313
      %v5315 = vsel %vm5314, %v5306, %v5311
      %v5316 = vrsqrt.pop %v4677
      %v5317 = vmul.f32 %v5316, %v4677
      %v5318 = vmul.f32 %v5317, %v5316
      %v5319 = vmul.f32 0.5, %v5318
      %v5320 = vsub.f32 1.5, %v5319
      %v5321 = vmul.f32 %v5316, %v5320
      %vm5322 = vweird.f32 %v4677
      %vm5323 = vweird.f32 %v5316
      %vm5324 = vmor %vm5322, %vm5323
      %v5325 = vsel %vm5324, %v5316, %v5321
      %v5326 = vrsqrt.pop %v4678
      %v5327 = vmul.f32 %v5326, %v4678
      %v5328 = vmul.f32 %v5327, %v5326
      %v5329 = vmul.f32 0.5, %v5328
      %v5330 = vsub.f32 1.5, %v5329
      %v5331 = vmul.f32 %v5326, %v5330
      %vm5332 = vweird.f32 %v4678
      %vm5333 = vweird.f32 %v5326
      %vm5334 = vmor %vm5332, %vm5333
      %v5335 = vsel %vm5334, %v5326, %v5331
      %v5336 = vrsqrt.pop %v4679
      %v5337 = vmul.f32 %v5336, %v4679
      %v5338 = vmul.f32 %v5337, %v5336
      %v5339 = vmul.f32 0.5, %v5338
      %v5340 = vsub.f32 1.5, %v5339
      %v5341 = vmul.f32 %v5336, %v5340
      %vm5342 = vweird.f32 %v4679
      %vm5343 = vweird.f32 %v5336
      %vm5344 = vmor %vm5342, %vm5343
      %v5345 = vsel %vm5344, %v5336, %v5341
      %v5346 = vrsqrt.pop %v4680
      %v5347 = vmul.f32 %v5346, %v4680
      %v5348 = vmul.f32 %v5347, %v5346
      %v5349 = vmul.f32 0.5, %v5348
      %v5350 = vsub.f32 1.5, %v5349
      %v5351 = vmul.f32 %v5346, %v5350
      %vm5352 = vweird.f32 %v4680
      %vm5353 = vweird.f32 %v5346
      %vm5354 = vmor %vm5352, %vm5353
      %v5355 = vsel %vm5354, %v5346, %v5351
      %v5356 = vrsqrt.pop %v4681
      %v5357 = vmul.f32 %v5356, %v4681
      %v5358 = vmul.f32 %v5357, %v5356
      %v5359 = vmul.f32 0.5, %v5358
      %v5360 = vsub.f32 1.5, %v5359
      %v5361 = vmul.f32 %v5356, %v5360
      %vm5362 = vweird.f32 %v4681
      %vm5363 = vweird.f32 %v5356
      %vm5364 = vmor %vm5362, %vm5363
      %v5365 = vsel %vm5364, %v5356, %v5361
      %v5366 = vrsqrt.pop %v4682
      %v5367 = vmul.f32 %v5366, %v4682
      %v5368 = vmul.f32 %v5367, %v5366
      %v5369 = vmul.f32 0.5, %v5368
      %v5370 = vsub.f32 1.5, %v5369
      %v5371 = vmul.f32 %v5366, %v5370
      %vm5372 = vweird.f32 %v4682
      %vm5373 = vweird.f32 %v5366
      %vm5374 = vmor %vm5372, %vm5373
      %v5375 = vsel %vm5374, %v5366, %v5371
      %v5376 = vrsqrt.pop %v4683
      %v5377 = vmul.f32 %v5376, %v4683
      %v5378 = vmul.f32 %v5377, %v5376
      %v5379 = vmul.f32 0.5, %v5378
      %v5380 = vsub.f32 1.5, %v5379
      %v5381 = vmul.f32 %v5376, %v5380
      %vm5382 = vweird.f32 %v4683
      %vm5383 = vweird.f32 %v5376
      %vm5384 = vmor %vm5382, %vm5383
      %v5385 = vsel %vm5384, %v5376, %v5381
      %v5386 = vrsqrt.pop %v4684
      %v5387 = vmul.f32 %v5386, %v4684
      %v5388 = vmul.f32 %v5387, %v5386
      %v5389 = vmul.f32 0.5, %v5388
      %v5390 = vsub.f32 1.5, %v5389
      %v5391 = vmul.f32 %v5386, %v5390
      %vm5392 = vweird.f32 %v4684
      %vm5393 = vweird.f32 %v5386
      %vm5394 = vmor %vm5392, %vm5393
      %v5395 = vsel %vm5394, %v5386, %v5391
      %v5396 = vrsqrt.pop %v4685
      %v5397 = vmul.f32 %v5396, %v4685
      %v5398 = vmul.f32 %v5397, %v5396
      %v5399 = vmul.f32 0.5, %v5398
      %v5400 = vsub.f32 1.5, %v5399
      %v5401 = vmul.f32 %v5396, %v5400
      %vm5402 = vweird.f32 %v4685
      %vm5403 = vweird.f32 %v5396
      %vm5404 = vmor %vm5402, %vm5403
      %v5405 = vsel %vm5404, %v5396, %v5401
      %v5406 = vrsqrt.pop %v4686
      %v5407 = vmul.f32 %v5406, %v4686
      %v5408 = vmul.f32 %v5407, %v5406
      %v5409 = vmul.f32 0.5, %v5408
      %v5410 = vsub.f32 1.5, %v5409
      %v5411 = vmul.f32 %v5406, %v5410
      %vm5412 = vweird.f32 %v4686
      %vm5413 = vweird.f32 %v5406
      %vm5414 = vmor %vm5412, %vm5413
      %v5415 = vsel %vm5414, %v5406, %v5411
      %v5416 = vrsqrt.pop %v4687
      %v5417 = vmul.f32 %v5416, %v4687
      %v5418 = vmul.f32 %v5417, %v5416
      %v5419 = vmul.f32 0.5, %v5418
      %v5420 = vsub.f32 1.5, %v5419
      %v5421 = vmul.f32 %v5416, %v5420
      %vm5422 = vweird.f32 %v4687
      %vm5423 = vweird.f32 %v5416
      %vm5424 = vmor %vm5422, %vm5423
      %v5425 = vsel %vm5424, %v5416, %v5421
      %v5426 = vrsqrt.pop %v4688
      %v5427 = vmul.f32 %v5426, %v4688
      %v5428 = vmul.f32 %v5427, %v5426
      %v5429 = vmul.f32 0.5, %v5428
      %v5430 = vsub.f32 1.5, %v5429
      %v5431 = vmul.f32 %v5426, %v5430
      %vm5432 = vweird.f32 %v4688
      %vm5433 = vweird.f32 %v5426
      %vm5434 = vmor %vm5432, %vm5433
      %v5435 = vsel %vm5434, %v5426, %v5431
      %v5436 = vrsqrt.pop %v4689
      %v5437 = vmul.f32 %v5436, %v4689
      %v5438 = vmul.f32 %v5437, %v5436
      %v5439 = vmul.f32 0.5, %v5438
      %v5440 = vsub.f32 1.5, %v5439
      %v5441 = vmul.f32 %v5436, %v5440
      %vm5442 = vweird.f32 %v4689
      %vm5443 = vweird.f32 %v5436
      %vm5444 = vmor %vm5442, %vm5443
      %v5445 = vsel %vm5444, %v5436, %v5441
      %v5446 = vrsqrt.pop %v4690
      %v5447 = vmul.f32 %v5446, %v4690
      %v5448 = vmul.f32 %v5447, %v5446
      %v5449 = vmul.f32 0.5, %v5448
      %v5450 = vsub.f32 1.5, %v5449
      %v5451 = vmul.f32 %v5446, %v5450
      %vm5452 = vweird.f32 %v4690
      %vm5453 = vweird.f32 %v5446
      %vm5454 = vmor %vm5452, %vm5453
      %v5455 = vsel %vm5454, %v5446, %v5451
      %v5456 = vrsqrt.pop %v4691
      %v5457 = vmul.f32 %v5456, %v4691
      %v5458 = vmul.f32 %v5457, %v5456
      %v5459 = vmul.f32 0.5, %v5458
      %v5460 = vsub.f32 1.5, %v5459
      %v5461 = vmul.f32 %v5456, %v5460
      %vm5462 = vweird.f32 %v4691
      %vm5463 = vweird.f32 %v5456
      %vm5464 = vmor %vm5462, %vm5463
      %v5465 = vsel %vm5464, %v5456, %v5461
      %v5466 = vrsqrt.pop %v4692
      %v5467 = vmul.f32 %v5466, %v4692
      %v5468 = vmul.f32 %v5467, %v5466
      %v5469 = vmul.f32 0.5, %v5468
      %v5470 = vsub.f32 1.5, %v5469
      %v5471 = vmul.f32 %v5466, %v5470
      %vm5472 = vweird.f32 %v4692
      %vm5473 = vweird.f32 %v5466
      %vm5474 = vmor %vm5472, %vm5473
      %v5475 = vsel %vm5474, %v5466, %v5471
      %v5476 = vrsqrt.pop %v4693
      %v5477 = vmul.f32 %v5476, %v4693
      %v5478 = vmul.f32 %v5477, %v5476
      %v5479 = vmul.f32 0.5, %v5478
      %v5480 = vsub.f32 1.5, %v5479
      %v5481 = vmul.f32 %v5476, %v5480
      %vm5482 = vweird.f32 %v4693
      %vm5483 = vweird.f32 %v5476
      %vm5484 = vmor %vm5482, %vm5483
      %v5485 = vsel %vm5484, %v5476, %v5481
      %v5486 = vrsqrt.pop %v4694
      %v5487 = vmul.f32 %v5486, %v4694
      %v5488 = vmul.f32 %v5487, %v5486
      %v5489 = vmul.f32 0.5, %v5488
      %v5490 = vsub.f32 1.5, %v5489
      %v5491 = vmul.f32 %v5486, %v5490
      %vm5492 = vweird.f32 %v4694
      %vm5493 = vweird.f32 %v5486
      %vm5494 = vmor %vm5492, %vm5493
      %v5495 = vsel %vm5494, %v5486, %v5491
      %v5496 = vrsqrt.pop %v4695
      %v5497 = vmul.f32 %v5496, %v4695
      %v5498 = vmul.f32 %v5497, %v5496
      %v5499 = vmul.f32 0.5, %v5498
      %v5500 = vsub.f32 1.5, %v5499
      %v5501 = vmul.f32 %v5496, %v5500
      %vm5502 = vweird.f32 %v4695
      %vm5503 = vweird.f32 %v5496
      %vm5504 = vmor %vm5502, %vm5503
      %v5505 = vsel %vm5504, %v5496, %v5501
      %v5506 = vrsqrt.pop %v4696
      %v5507 = vmul.f32 %v5506, %v4696
      %v5508 = vmul.f32 %v5507, %v5506
      %v5509 = vmul.f32 0.5, %v5508
      %v5510 = vsub.f32 1.5, %v5509
      %v5511 = vmul.f32 %v5506, %v5510
      %vm5512 = vweird.f32 %v4696
      %vm5513 = vweird.f32 %v5506
      %vm5514 = vmor %vm5512, %vm5513
      %v5515 = vsel %vm5514, %v5506, %v5511
      %v5516 = vrsqrt.pop %v4697
      %v5517 = vmul.f32 %v5516, %v4697
      %v5518 = vmul.f32 %v5517, %v5516
      %v5519 = vmul.f32 0.5, %v5518
      %v5520 = vsub.f32 1.5, %v5519
      %v5521 = vmul.f32 %v5516, %v5520
      %vm5522 = vweird.f32 %v4697
      %vm5523 = vweird.f32 %v5516
      %vm5524 = vmor %vm5522, %vm5523
      %v5525 = vsel %vm5524, %v5516, %v5521
      %v5526 = vrsqrt.pop %v4698
      %v5527 = vmul.f32 %v5526, %v4698
      %v5528 = vmul.f32 %v5527, %v5526
      %v5529 = vmul.f32 0.5, %v5528
      %v5530 = vsub.f32 1.5, %v5529
      %v5531 = vmul.f32 %v5526, %v5530
      %vm5532 = vweird.f32 %v4698
      %vm5533 = vweird.f32 %v5526
      %vm5534 = vmor %vm5532, %vm5533
      %v5535 = vsel %vm5534, %v5526, %v5531
      %v5536 = vrsqrt.pop %v4699
      %v5537 = vmul.f32 %v5536, %v4699
      %v5538 = vmul.f32 %v5537, %v5536
      %v5539 = vmul.f32 0.5, %v5538
      %v5540 = vsub.f32 1.5, %v5539
      %v5541 = vmul.f32 %v5536, %v5540
      %vm5542 = vweird.f32 %v4699
      %vm5543 = vweird.f32 %v5536
      %vm5544 = vmor %vm5542, %vm5543
      %v5545 = vsel %vm5544, %v5536, %v5541
      %v5546 = vrsqrt.pop %v4700
      %v5547 = vmul.f32 %v5546, %v4700
      %v5548 = vmul.f32 %v5547, %v5546
      %v5549 = vmul.f32 0.5, %v5548
      %v5550 = vsub.f32 1.5, %v5549
      %v5551 = vmul.f32 %v5546, %v5550
      %vm5552 = vweird.f32 %v4700
      %vm5553 = vweird.f32 %v5546
      %vm5554 = vmor %vm5552, %vm5553
      %v5555 = vsel %vm5554, %v5546, %v5551
      %v5556 = vrsqrt.pop %v4701
      %v5557 = vmul.f32 %v5556, %v4701
      %v5558 = vmul.f32 %v5557, %v5556
      %v5559 = vmul.f32 0.5, %v5558
      %v5560 = vsub.f32 1.5, %v5559
      %v5561 = vmul.f32 %v5556, %v5560
      %vm5562 = vweird.f32 %v4701
      %vm5563 = vweird.f32 %v5556
      %vm5564 = vmor %vm5562, %vm5563
      %v5565 = vsel %vm5564, %v5556, %v5561
      %v5566 = vrsqrt.pop %v4702
      %v5567 = vmul.f32 %v5566, %v4702
      %v5568 = vmul.f32 %v5567, %v5566
      %v5569 = vmul.f32 0.5, %v5568
      %v5570 = vsub.f32 1.5, %v5569
      %v5571 = vmul.f32 %v5566, %v5570
      %vm5572 = vweird.f32 %v4702
      %vm5573 = vweird.f32 %v5566
      %vm5574 = vmor %vm5572, %vm5573
      %v5575 = vsel %vm5574, %v5566, %v5571
      %v5576 = vrsqrt.pop %v4703
      %v5577 = vmul.f32 %v5576, %v4703
      %v5578 = vmul.f32 %v5577, %v5576
      %v5579 = vmul.f32 0.5, %v5578
      %v5580 = vsub.f32 1.5, %v5579
      %v5581 = vmul.f32 %v5576, %v5580
      %vm5582 = vweird.f32 %v4703
      %vm5583 = vweird.f32 %v5576
      %vm5584 = vmor %vm5582, %vm5583
      %v5585 = vsel %vm5584, %v5576, %v5581
      %v5586 = vrsqrt.pop %v4704
      %v5587 = vmul.f32 %v5586, %v4704
      %v5588 = vmul.f32 %v5587, %v5586
      %v5589 = vmul.f32 0.5, %v5588
      %v5590 = vsub.f32 1.5, %v5589
      %v5591 = vmul.f32 %v5586, %v5590
      %vm5592 = vweird.f32 %v4704
      %vm5593 = vweird.f32 %v5586
      %vm5594 = vmor %vm5592, %vm5593
      %v5595 = vsel %vm5594, %v5586, %v5591
      %v5596 = vrsqrt.pop %v4705
      %v5597 = vmul.f32 %v5596, %v4705
      %v5598 = vmul.f32 %v5597, %v5596
      %v5599 = vmul.f32 0.5, %v5598
      %v5600 = vsub.f32 1.5, %v5599
      %v5601 = vmul.f32 %v5596, %v5600
      %vm5602 = vweird.f32 %v4705
      %vm5603 = vweird.f32 %v5596
      %vm5604 = vmor %vm5602, %vm5603
      %v5605 = vsel %vm5604, %v5596, %v5601
      %v5606 = vrsqrt.pop %v4706
      %v5607 = vmul.f32 %v5606, %v4706
      %v5608 = vmul.f32 %v5607, %v5606
      %v5609 = vmul.f32 0.5, %v5608
      %v5610 = vsub.f32 1.5, %v5609
      %v5611 = vmul.f32 %v5606, %v5610
      %vm5612 = vweird.f32 %v4706
      %vm5613 = vweird.f32 %v5606
      %vm5614 = vmor %vm5612, %vm5613
      %v5615 = vsel %vm5614, %v5606, %v5611
      %v5616 = vrsqrt.pop %v4707
      %v5617 = vmul.f32 %v5616, %v4707
      %v5618 = vmul.f32 %v5617, %v5616
      %v5619 = vmul.f32 0.5, %v5618
      %v5620 = vsub.f32 1.5, %v5619
      %v5621 = vmul.f32 %v5616, %v5620
      %vm5622 = vweird.f32 %v4707
      %vm5623 = vweird.f32 %v5616
      %vm5624 = vmor %vm5622, %vm5623
      %v5625 = vsel %vm5624, %v5616, %v5621
      %v5626 = vrsqrt.pop %v4708
      %v5627 = vmul.f32 %v5626, %v4708
      %v5628 = vmul.f32 %v5627, %v5626
      %v5629 = vmul.f32 0.5, %v5628
      %v5630 = vsub.f32 1.5, %v5629
      %v5631 = vmul.f32 %v5626, %v5630
      %vm5632 = vweird.f32 %v4708
      %vm5633 = vweird.f32 %v5626
      %vm5634 = vmor %vm5632, %vm5633
      %v5635 = vsel %vm5634, %v5626, %v5631
      %v5636 = vrsqrt.pop %v4709
      %v5637 = vmul.f32 %v5636, %v4709
      %v5638 = vmul.f32 %v5637, %v5636
      %v5639 = vmul.f32 0.5, %v5638
      %v5640 = vsub.f32 1.5, %v5639
      %v5641 = vmul.f32 %v5636, %v5640
      %vm5642 = vweird.f32 %v4709
      %vm5643 = vweird.f32 %v5636
      %vm5644 = vmor %vm5642, %vm5643
      %v5645 = vsel %vm5644, %v5636, %v5641
      %v5646 = vrsqrt.pop %v4710
      %v5647 = vmul.f32 %v5646, %v4710
      %v5648 = vmul.f32 %v5647, %v5646
      %v5649 = vmul.f32 0.5, %v5648
      %v5650 = vsub.f32 1.5, %v5649
      %v5651 = vmul.f32 %v5646, %v5650
      %vm5652 = vweird.f32 %v4710
      %vm5653 = vweird.f32 %v5646
      %vm5654 = vmor %vm5652, %vm5653
      %v5655 = vsel %vm5654, %v5646, %v5651
      %v5656 = vrsqrt.pop %v4711
      %v5657 = vmul.f32 %v5656, %v4711
      %v5658 = vmul.f32 %v5657, %v5656
      %v5659 = vmul.f32 0.5, %v5658
      %v5660 = vsub.f32 1.5, %v5659
      %v5661 = vmul.f32 %v5656, %v5660
      %vm5662 = vweird.f32 %v4711
      %vm5663 = vweird.f32 %v5656
      %vm5664 = vmor %vm5662, %vm5663
      %v5665 = vsel %vm5664, %v5656, %v5661
      %v5666 = vrsqrt.pop %v4712
      %v5667 = vmul.f32 %v5666, %v4712
      %v5668 = vmul.f32 %v5667, %v5666
      %v5669 = vmul.f32 0.5, %v5668
      %v5670 = vsub.f32 1.5, %v5669
      %v5671 = vmul.f32 %v5666, %v5670
      %vm5672 = vweird.f32 %v4712
      %vm5673 = vweird.f32 %v5666
      %vm5674 = vmor %vm5672, %vm5673
      %v5675 = vsel %vm5674, %v5666, %v5671
      %v5676 = vrsqrt.pop %v4713
      %v5677 = vmul.f32 %v5676, %v4713
      %v5678 = vmul.f32 %v5677, %v5676
      %v5679 = vmul.f32 0.5, %v5678
      %v5680 = vsub.f32 1.5, %v5679
      %v5681 = vmul.f32 %v5676, %v5680
      %vm5682 = vweird.f32 %v4713
      %vm5683 = vweird.f32 %v5676
      %vm5684 = vmor %vm5682, %vm5683
      %v5685 = vsel %vm5684, %v5676, %v5681
      %v5686 = vrsqrt.pop %v4714
      %v5687 = vmul.f32 %v5686, %v4714
      %v5688 = vmul.f32 %v5687, %v5686
      %v5689 = vmul.f32 0.5, %v5688
      %v5690 = vsub.f32 1.5, %v5689
      %v5691 = vmul.f32 %v5686, %v5690
      %vm5692 = vweird.f32 %v4714
      %vm5693 = vweird.f32 %v5686
      %vm5694 = vmor %vm5692, %vm5693
      %v5695 = vsel %vm5694, %v5686, %v5691
      %v5696 = vrsqrt.pop %v4715
      %v5697 = vmul.f32 %v5696, %v4715
      %v5698 = vmul.f32 %v5697, %v5696
      %v5699 = vmul.f32 0.5, %v5698
      %v5700 = vsub.f32 1.5, %v5699
      %v5701 = vmul.f32 %v5696, %v5700
      %vm5702 = vweird.f32 %v4715
      %vm5703 = vweird.f32 %v5696
      %vm5704 = vmor %vm5702, %vm5703
      %v5705 = vsel %vm5704, %v5696, %v5701
      %v5706 = vrsqrt.pop %v4716
      %v5707 = vmul.f32 %v5706, %v4716
      %v5708 = vmul.f32 %v5707, %v5706
      %v5709 = vmul.f32 0.5, %v5708
      %v5710 = vsub.f32 1.5, %v5709
      %v5711 = vmul.f32 %v5706, %v5710
      %vm5712 = vweird.f32 %v4716
      %vm5713 = vweird.f32 %v5706
      %vm5714 = vmor %vm5712, %vm5713
      %v5715 = vsel %vm5714, %v5706, %v5711
      %v5716 = vrsqrt.pop %v4717
      %v5717 = vmul.f32 %v5716, %v4717
      %v5718 = vmul.f32 %v5717, %v5716
      %v5719 = vmul.f32 0.5, %v5718
      %v5720 = vsub.f32 1.5, %v5719
      %v5721 = vmul.f32 %v5716, %v5720
      %vm5722 = vweird.f32 %v4717
      %vm5723 = vweird.f32 %v5716
      %vm5724 = vmor %vm5722, %vm5723
      %v5725 = vsel %vm5724, %v5716, %v5721
      %v5726 = vrsqrt.pop %v4718
      %v5727 = vmul.f32 %v5726, %v4718
      %v5728 = vmul.f32 %v5727, %v5726
      %v5729 = vmul.f32 0.5, %v5728
      %v5730 = vsub.f32 1.5, %v5729
      %v5731 = vmul.f32 %v5726, %v5730
      %vm5732 = vweird.f32 %v4718
      %vm5733 = vweird.f32 %v5726
      %vm5734 = vmor %vm5732, %vm5733
      %v5735 = vsel %vm5734, %v5726, %v5731
      %v5736 = vrsqrt.pop %v4719
      %v5737 = vmul.f32 %v5736, %v4719
      %v5738 = vmul.f32 %v5737, %v5736
      %v5739 = vmul.f32 0.5, %v5738
      %v5740 = vsub.f32 1.5, %v5739
      %v5741 = vmul.f32 %v5736, %v5740
      %vm5742 = vweird.f32 %v4719
      %vm5743 = vweird.f32 %v5736
      %vm5744 = vmor %vm5742, %vm5743
      %v5745 = vsel %vm5744, %v5736, %v5741
      %v5746 = vrsqrt.pop %v4720
      %v5747 = vmul.f32 %v5746, %v4720
      %v5748 = vmul.f32 %v5747, %v5746
      %v5749 = vmul.f32 0.5, %v5748
      %v5750 = vsub.f32 1.5, %v5749
      %v5751 = vmul.f32 %v5746, %v5750
      %vm5752 = vweird.f32 %v4720
      %vm5753 = vweird.f32 %v5746
      %vm5754 = vmor %vm5752, %vm5753
      %v5755 = vsel %vm5754, %v5746, %v5751
      %v5756 = vrsqrt.pop %v4721
      %v5757 = vmul.f32 %v5756, %v4721
      %v5758 = vmul.f32 %v5757, %v5756
      %v5759 = vmul.f32 0.5, %v5758
      %v5760 = vsub.f32 1.5, %v5759
      %v5761 = vmul.f32 %v5756, %v5760
      %vm5762 = vweird.f32 %v4721
      %vm5763 = vweird.f32 %v5756
      %vm5764 = vmor %vm5762, %vm5763
      %v5765 = vsel %vm5764, %v5756, %v5761
      %v5766 = vrsqrt.pop %v4722
      %v5767 = vmul.f32 %v5766, %v4722
      %v5768 = vmul.f32 %v5767, %v5766
      %v5769 = vmul.f32 0.5, %v5768
      %v5770 = vsub.f32 1.5, %v5769
      %v5771 = vmul.f32 %v5766, %v5770
      %vm5772 = vweird.f32 %v4722
      %vm5773 = vweird.f32 %v5766
      %vm5774 = vmor %vm5772, %vm5773
      %v5775 = vsel %vm5774, %v5766, %v5771
      %v5776 = vrsqrt.pop %v4723
      %v5777 = vmul.f32 %v5776, %v4723
      %v5778 = vmul.f32 %v5777, %v5776
      %v5779 = vmul.f32 0.5, %v5778
      %v5780 = vsub.f32 1.5, %v5779
      %v5781 = vmul.f32 %v5776, %v5780
      %vm5782 = vweird.f32 %v4723
      %vm5783 = vweird.f32 %v5776
      %vm5784 = vmor %vm5782, %vm5783
      %v5785 = vsel %vm5784, %v5776, %v5781
      %v5786 = vrsqrt.pop %v4724
      %v5787 = vmul.f32 %v5786, %v4724
      %v5788 = vmul.f32 %v5787, %v5786
      %v5789 = vmul.f32 0.5, %v5788
      %v5790 = vsub.f32 1.5, %v5789
      %v5791 = vmul.f32 %v5786, %v5790
      %vm5792 = vweird.f32 %v4724
      %vm5793 = vweird.f32 %v5786
      %vm5794 = vmor %vm5792, %vm5793
      %v5795 = vsel %vm5794, %v5786, %v5791
      %v5796 = vrsqrt.pop %v4725
      %v5797 = vmul.f32 %v5796, %v4725
      %v5798 = vmul.f32 %v5797, %v5796
      %v5799 = vmul.f32 0.5, %v5798
      %v5800 = vsub.f32 1.5, %v5799
      %v5801 = vmul.f32 %v5796, %v5800
      %vm5802 = vweird.f32 %v4725
      %vm5803 = vweird.f32 %v5796
      %vm5804 = vmor %vm5802, %vm5803
      %v5805 = vsel %vm5804, %v5796, %v5801
      %v5806 = vrsqrt.pop %v4726
      %v5807 = vmul.f32 %v5806, %v4726
      %v5808 = vmul.f32 %v5807, %v5806
      %v5809 = vmul.f32 0.5, %v5808
      %v5810 = vsub.f32 1.5, %v5809
      %v5811 = vmul.f32 %v5806, %v5810
      %vm5812 = vweird.f32 %v4726
      %vm5813 = vweird.f32 %v5806
      %vm5814 = vmor %vm5812, %vm5813
      %v5815 = vsel %vm5814, %v5806, %v5811
      %v5816 = vrsqrt.pop %v4727
      %v5817 = vmul.f32 %v5816, %v4727
      %v5818 = vmul.f32 %v5817, %v5816
      %v5819 = vmul.f32 0.5, %v5818
      %v5820 = vsub.f32 1.5, %v5819
      %v5821 = vmul.f32 %v5816, %v5820
      %vm5822 = vweird.f32 %v4727
      %vm5823 = vweird.f32 %v5816
      %vm5824 = vmor %vm5822, %vm5823
      %v5825 = vsel %vm5824, %v5816, %v5821
      %v5826 = vrsqrt.pop %v4728
      %v5827 = vmul.f32 %v5826, %v4728
      %v5828 = vmul.f32 %v5827, %v5826
      %v5829 = vmul.f32 0.5, %v5828
      %v5830 = vsub.f32 1.5, %v5829
      %v5831 = vmul.f32 %v5826, %v5830
      %vm5832 = vweird.f32 %v4728
      %vm5833 = vweird.f32 %v5826
      %vm5834 = vmor %vm5832, %vm5833
      %v5835 = vsel %vm5834, %v5826, %v5831
      %v5836 = vrsqrt.pop %v4729
      %v5837 = vmul.f32 %v5836, %v4729
      %v5838 = vmul.f32 %v5837, %v5836
      %v5839 = vmul.f32 0.5, %v5838
      %v5840 = vsub.f32 1.5, %v5839
      %v5841 = vmul.f32 %v5836, %v5840
      %vm5842 = vweird.f32 %v4729
      %vm5843 = vweird.f32 %v5836
      %vm5844 = vmor %vm5842, %vm5843
      %v5845 = vsel %vm5844, %v5836, %v5841
      %v5846 = vrsqrt.pop %v4730
      %v5847 = vmul.f32 %v5846, %v4730
      %v5848 = vmul.f32 %v5847, %v5846
      %v5849 = vmul.f32 0.5, %v5848
      %v5850 = vsub.f32 1.5, %v5849
      %v5851 = vmul.f32 %v5846, %v5850
      %vm5852 = vweird.f32 %v4730
      %vm5853 = vweird.f32 %v5846
      %vm5854 = vmor %vm5852, %vm5853
      %v5855 = vsel %vm5854, %v5846, %v5851
      %v5856 = vrsqrt.pop %v4731
      %v5857 = vmul.f32 %v5856, %v4731
      %v5858 = vmul.f32 %v5857, %v5856
      %v5859 = vmul.f32 0.5, %v5858
      %v5860 = vsub.f32 1.5, %v5859
      %v5861 = vmul.f32 %v5856, %v5860
      %vm5862 = vweird.f32 %v4731
      %vm5863 = vweird.f32 %v5856
      %vm5864 = vmor %vm5862, %vm5863
      %v5865 = vsel %vm5864, %v5856, %v5861
      %v5866 = vrsqrt.pop %v4732
      %v5867 = vmul.f32 %v5866, %v4732
      %v5868 = vmul.f32 %v5867, %v5866
      %v5869 = vmul.f32 0.5, %v5868
      %v5870 = vsub.f32 1.5, %v5869
      %v5871 = vmul.f32 %v5866, %v5870
      %vm5872 = vweird.f32 %v4732
      %vm5873 = vweird.f32 %v5866
      %vm5874 = vmor %vm5872, %vm5873
      %v5875 = vsel %vm5874, %v5866, %v5871
      %v5876 = vrsqrt.pop %v4733
      %v5877 = vmul.f32 %v5876, %v4733
      %v5878 = vmul.f32 %v5877, %v5876
      %v5879 = vmul.f32 0.5, %v5878
      %v5880 = vsub.f32 1.5, %v5879
      %v5881 = vmul.f32 %v5876, %v5880
      %vm5882 = vweird.f32 %v4733
      %vm5883 = vweird.f32 %v5876
      %vm5884 = vmor %vm5882, %vm5883
      %v5885 = vsel %vm5884, %v5876, %v5881
      %v5886 = vrsqrt.pop %v4734
      %v5887 = vmul.f32 %v5886, %v4734
      %v5888 = vmul.f32 %v5887, %v5886
      %v5889 = vmul.f32 0.5, %v5888
      %v5890 = vsub.f32 1.5, %v5889
      %v5891 = vmul.f32 %v5886, %v5890
      %vm5892 = vweird.f32 %v4734
      %vm5893 = vweird.f32 %v5886
      %vm5894 = vmor %vm5892, %vm5893
      %v5895 = vsel %vm5894, %v5886, %v5891
      %v5896 = vrsqrt.pop %v4735
      %v5897 = vmul.f32 %v5896, %v4735
      %v5898 = vmul.f32 %v5897, %v5896
      %v5899 = vmul.f32 0.5, %v5898
      %v5900 = vsub.f32 1.5, %v5899
      %v5901 = vmul.f32 %v5896, %v5900
      %vm5902 = vweird.f32 %v4735
      %vm5903 = vweird.f32 %v5896
      %vm5904 = vmor %vm5902, %vm5903
      %v5905 = vsel %vm5904, %v5896, %v5901
      %v5906 = vrsqrt.pop %v4736
      %v5907 = vmul.f32 %v5906, %v4736
      %v5908 = vmul.f32 %v5907, %v5906
      %v5909 = vmul.f32 0.5, %v5908
      %v5910 = vsub.f32 1.5, %v5909
      %v5911 = vmul.f32 %v5906, %v5910
      %vm5912 = vweird.f32 %v4736
      %vm5913 = vweird.f32 %v5906
      %vm5914 = vmor %vm5912, %vm5913
      %v5915 = vsel %vm5914, %v5906, %v5911
      %v5916 = vrsqrt.pop %v4737
      %v5917 = vmul.f32 %v5916, %v4737
      %v5918 = vmul.f32 %v5917, %v5916
      %v5919 = vmul.f32 0.5, %v5918
      %v5920 = vsub.f32 1.5, %v5919
      %v5921 = vmul.f32 %v5916, %v5920
      %vm5922 = vweird.f32 %v4737
      %vm5923 = vweird.f32 %v5916
      %vm5924 = vmor %vm5922, %vm5923
      %v5925 = vsel %vm5924, %v5916, %v5921
      %v5926 = vrsqrt.pop %v4738
      %v5927 = vmul.f32 %v5926, %v4738
      %v5928 = vmul.f32 %v5927, %v5926
      %v5929 = vmul.f32 0.5, %v5928
      %v5930 = vsub.f32 1.5, %v5929
      %v5931 = vmul.f32 %v5926, %v5930
      %vm5932 = vweird.f32 %v4738
      %vm5933 = vweird.f32 %v5926
      %vm5934 = vmor %vm5932, %vm5933
      %v5935 = vsel %vm5934, %v5926, %v5931
      %v5936 = vrsqrt.pop %v4739
      %v5937 = vmul.f32 %v5936, %v4739
      %v5938 = vmul.f32 %v5937, %v5936
      %v5939 = vmul.f32 0.5, %v5938
      %v5940 = vsub.f32 1.5, %v5939
      %v5941 = vmul.f32 %v5936, %v5940
      %vm5942 = vweird.f32 %v4739
      %vm5943 = vweird.f32 %v5936
      %vm5944 = vmor %vm5942, %vm5943
      %v5945 = vsel %vm5944, %v5936, %v5941
      %v5946 = vrsqrt.pop %v4740
      %v5947 = vmul.f32 %v5946, %v4740
      %v5948 = vmul.f32 %v5947, %v5946
      %v5949 = vmul.f32 0.5, %v5948
      %v5950 = vsub.f32 1.5, %v5949
      %v5951 = vmul.f32 %v5946, %v5950
      %vm5952 = vweird.f32 %v4740
      %vm5953 = vweird.f32 %v5946
      %vm5954 = vmor %vm5952, %vm5953
      %v5955 = vsel %vm5954, %v5946, %v5951
      %v5956 = vrsqrt.pop %v4741
      %v5957 = vmul.f32 %v5956, %v4741
      %v5958 = vmul.f32 %v5957, %v5956
      %v5959 = vmul.f32 0.5, %v5958
      %v5960 = vsub.f32 1.5, %v5959
      %v5961 = vmul.f32 %v5956, %v5960
      %vm5962 = vweird.f32 %v4741
      %vm5963 = vweird.f32 %v5956
      %vm5964 = vmor %vm5962, %vm5963
      %v5965 = vsel %vm5964, %v5956, %v5961
      %v5966 = vrsqrt.pop %v4742
      %v5967 = vmul.f32 %v5966, %v4742
      %v5968 = vmul.f32 %v5967, %v5966
      %v5969 = vmul.f32 0.5, %v5968
      %v5970 = vsub.f32 1.5, %v5969
      %v5971 = vmul.f32 %v5966, %v5970
      %vm5972 = vweird.f32 %v4742
      %vm5973 = vweird.f32 %v5966
      %vm5974 = vmor %vm5972, %vm5973
      %v5975 = vsel %vm5974, %v5966, %v5971
      %v5976 = vrsqrt.pop %v4743
      %v5977 = vmul.f32 %v5976, %v4743
      %v5978 = vmul.f32 %v5977, %v5976
      %v5979 = vmul.f32 0.5, %v5978
      %v5980 = vsub.f32 1.5, %v5979
      %v5981 = vmul.f32 %v5976, %v5980
      %vm5982 = vweird.f32 %v4743
      %vm5983 = vweird.f32 %v5976
      %vm5984 = vmor %vm5982, %vm5983
      %v5985 = vsel %vm5984, %v5976, %v5981
      %v5986 = vrsqrt.pop %v4744
      %v5987 = vmul.f32 %v5986, %v4744
      %v5988 = vmul.f32 %v5987, %v5986
      %v5989 = vmul.f32 0.5, %v5988
      %v5990 = vsub.f32 1.5, %v5989
      %v5991 = vmul.f32 %v5986, %v5990
      %vm5992 = vweird.f32 %v4744
      %vm5993 = vweird.f32 %v5986
      %vm5994 = vmor %vm5992, %vm5993
      %v5995 = vsel %vm5994, %v5986, %v5991
      %v5996 = vrsqrt.pop %v4745
      %v5997 = vmul.f32 %v5996, %v4745
      %v5998 = vmul.f32 %v5997, %v5996
      %v5999 = vmul.f32 0.5, %v5998
      %v6000 = vsub.f32 1.5, %v5999
      %v6001 = vmul.f32 %v5996, %v6000
      %vm6002 = vweird.f32 %v4745
      %vm6003 = vweird.f32 %v5996
      %vm6004 = vmor %vm6002, %vm6003
      %v6005 = vsel %vm6004, %v5996, %v6001
      %v6006 = vrsqrt.pop %v4746
      %v6007 = vmul.f32 %v6006, %v4746
      %v6008 = vmul.f32 %v6007, %v6006
      %v6009 = vmul.f32 0.5, %v6008
      %v6010 = vsub.f32 1.5, %v6009
      %v6011 = vmul.f32 %v6006, %v6010
      %vm6012 = vweird.f32 %v4746
      %vm6013 = vweird.f32 %v6006
      %vm6014 = vmor %vm6012, %vm6013
      %v6015 = vsel %vm6014, %v6006, %v6011
      %v6016 = vrsqrt.pop %v4747
      %v6017 = vmul.f32 %v6016, %v4747
      %v6018 = vmul.f32 %v6017, %v6016
      %v6019 = vmul.f32 0.5, %v6018
      %v6020 = vsub.f32 1.5, %v6019
      %v6021 = vmul.f32 %v6016, %v6020
      %vm6022 = vweird.f32 %v4747
      %vm6023 = vweird.f32 %v6016
      %vm6024 = vmor %vm6022, %vm6023
      %v6025 = vsel %vm6024, %v6016, %v6021
      %v6026 = vrsqrt.pop %v4748
      %v6027 = vmul.f32 %v6026, %v4748
      %v6028 = vmul.f32 %v6027, %v6026
      %v6029 = vmul.f32 0.5, %v6028
      %v6030 = vsub.f32 1.5, %v6029
      %v6031 = vmul.f32 %v6026, %v6030
      %vm6032 = vweird.f32 %v4748
      %vm6033 = vweird.f32 %v6026
      %vm6034 = vmor %vm6032, %vm6033
      %v6035 = vsel %vm6034, %v6026, %v6031
      %v6036 = vrsqrt.pop %v4749
      %v6037 = vmul.f32 %v6036, %v4749
      %v6038 = vmul.f32 %v6037, %v6036
      %v6039 = vmul.f32 0.5, %v6038
      %v6040 = vsub.f32 1.5, %v6039
      %v6041 = vmul.f32 %v6036, %v6040
      %vm6042 = vweird.f32 %v4749
      %vm6043 = vweird.f32 %v6036
      %vm6044 = vmor %vm6042, %vm6043
      %v6045 = vsel %vm6044, %v6036, %v6041
      %v6046 = vrsqrt.pop %v4750
      %v6047 = vmul.f32 %v6046, %v4750
      %v6048 = vmul.f32 %v6047, %v6046
      %v6049 = vmul.f32 0.5, %v6048
      %v6050 = vsub.f32 1.5, %v6049
      %v6051 = vmul.f32 %v6046, %v6050
      %vm6052 = vweird.f32 %v4750
      %vm6053 = vweird.f32 %v6046
      %vm6054 = vmor %vm6052, %vm6053
      %v6055 = vsel %vm6054, %v6046, %v6051
      %v6056 = vrsqrt.pop %v4751
      %v6057 = vmul.f32 %v6056, %v4751
      %v6058 = vmul.f32 %v6057, %v6056
      %v6059 = vmul.f32 0.5, %v6058
      %v6060 = vsub.f32 1.5, %v6059
      %v6061 = vmul.f32 %v6056, %v6060
      %vm6062 = vweird.f32 %v4751
      %vm6063 = vweird.f32 %v6056
      %vm6064 = vmor %vm6062, %vm6063
      %v6065 = vsel %vm6064, %v6056, %v6061
      %v6066 = vrsqrt.pop %v4752
      %v6067 = vmul.f32 %v6066, %v4752
      %v6068 = vmul.f32 %v6067, %v6066
      %v6069 = vmul.f32 0.5, %v6068
      %v6070 = vsub.f32 1.5, %v6069
      %v6071 = vmul.f32 %v6066, %v6070
      %vm6072 = vweird.f32 %v4752
      %vm6073 = vweird.f32 %v6066
      %vm6074 = vmor %vm6072, %vm6073
      %v6075 = vsel %vm6074, %v6066, %v6071
      %v6076 = vrsqrt.pop %v4753
      %v6077 = vmul.f32 %v6076, %v4753
      %v6078 = vmul.f32 %v6077, %v6076
      %v6079 = vmul.f32 0.5, %v6078
      %v6080 = vsub.f32 1.5, %v6079
      %v6081 = vmul.f32 %v6076, %v6080
      %vm6082 = vweird.f32 %v4753
      %vm6083 = vweird.f32 %v6076
      %vm6084 = vmor %vm6082, %vm6083
      %v6085 = vsel %vm6084, %v6076, %v6081
      %v6086 = vrsqrt.pop %v4754
      %v6087 = vmul.f32 %v6086, %v4754
      %v6088 = vmul.f32 %v6087, %v6086
      %v6089 = vmul.f32 0.5, %v6088
      %v6090 = vsub.f32 1.5, %v6089
      %v6091 = vmul.f32 %v6086, %v6090
      %vm6092 = vweird.f32 %v4754
      %vm6093 = vweird.f32 %v6086
      %vm6094 = vmor %vm6092, %vm6093
      %v6095 = vsel %vm6094, %v6086, %v6091
      %v6096 = vrsqrt.pop %v4755
      %v6097 = vmul.f32 %v6096, %v4755
      %v6098 = vmul.f32 %v6097, %v6096
      %v6099 = vmul.f32 0.5, %v6098
      %v6100 = vsub.f32 1.5, %v6099
      %v6101 = vmul.f32 %v6096, %v6100
      %vm6102 = vweird.f32 %v4755
      %vm6103 = vweird.f32 %v6096
      %vm6104 = vmor %vm6102, %vm6103
      %v6105 = vsel %vm6104, %v6096, %v6101
      %v6106 = vrsqrt.pop %v4756
      %v6107 = vmul.f32 %v6106, %v4756
      %v6108 = vmul.f32 %v6107, %v6106
      %v6109 = vmul.f32 0.5, %v6108
      %v6110 = vsub.f32 1.5, %v6109
      %v6111 = vmul.f32 %v6106, %v6110
      %vm6112 = vweird.f32 %v4756
      %vm6113 = vweird.f32 %v6106
      %vm6114 = vmor %vm6112, %vm6113
      %v6115 = vsel %vm6114, %v6106, %v6111
      %v6116 = vrsqrt.pop %v4757
      %v6117 = vmul.f32 %v6116, %v4757
      %v6118 = vmul.f32 %v6117, %v6116
      %v6119 = vmul.f32 0.5, %v6118
      %v6120 = vsub.f32 1.5, %v6119
      %v6121 = vmul.f32 %v6116, %v6120
      %vm6122 = vweird.f32 %v4757
      %vm6123 = vweird.f32 %v6116
      %vm6124 = vmor %vm6122, %vm6123
      %v6125 = vsel %vm6124, %v6116, %v6121
      %v6126 = vrsqrt.pop %v4758
      %v6127 = vmul.f32 %v6126, %v4758
      %v6128 = vmul.f32 %v6127, %v6126
      %v6129 = vmul.f32 0.5, %v6128
      %v6130 = vsub.f32 1.5, %v6129
      %v6131 = vmul.f32 %v6126, %v6130
      %vm6132 = vweird.f32 %v4758
      %vm6133 = vweird.f32 %v6126
      %vm6134 = vmor %vm6132, %vm6133
      %v6135 = vsel %vm6134, %v6126, %v6131
      %v6136 = vrsqrt.pop %v4759
      %v6137 = vmul.f32 %v6136, %v4759
      %v6138 = vmul.f32 %v6137, %v6136
      %v6139 = vmul.f32 0.5, %v6138
      %v6140 = vsub.f32 1.5, %v6139
      %v6141 = vmul.f32 %v6136, %v6140
      %vm6142 = vweird.f32 %v4759
      %vm6143 = vweird.f32 %v6136
      %vm6144 = vmor %vm6142, %vm6143
      %v6145 = vsel %vm6144, %v6136, %v6141
      %v6146 = vrsqrt.pop %v4760
      %v6147 = vmul.f32 %v6146, %v4760
      %v6148 = vmul.f32 %v6147, %v6146
      %v6149 = vmul.f32 0.5, %v6148
      %v6150 = vsub.f32 1.5, %v6149
      %v6151 = vmul.f32 %v6146, %v6150
      %vm6152 = vweird.f32 %v4760
      %vm6153 = vweird.f32 %v6146
      %vm6154 = vmor %vm6152, %vm6153
      %v6155 = vsel %vm6154, %v6146, %v6151
      %v6156 = vrsqrt.pop %v4761
      %v6157 = vmul.f32 %v6156, %v4761
      %v6158 = vmul.f32 %v6157, %v6156
      %v6159 = vmul.f32 0.5, %v6158
      %v6160 = vsub.f32 1.5, %v6159
      %v6161 = vmul.f32 %v6156, %v6160
      %vm6162 = vweird.f32 %v4761
      %vm6163 = vweird.f32 %v6156
      %vm6164 = vmor %vm6162, %vm6163
      %v6165 = vsel %vm6164, %v6156, %v6161
      %v6166 = vrsqrt.pop %v4762
      %v6167 = vmul.f32 %v6166, %v4762
      %v6168 = vmul.f32 %v6167, %v6166
      %v6169 = vmul.f32 0.5, %v6168
      %v6170 = vsub.f32 1.5, %v6169
      %v6171 = vmul.f32 %v6166, %v6170
      %vm6172 = vweird.f32 %v4762
      %vm6173 = vweird.f32 %v6166
      %vm6174 = vmor %vm6172, %vm6173
      %v6175 = vsel %vm6174, %v6166, %v6171
      %v6176 = vrsqrt.pop %v4763
      %v6177 = vmul.f32 %v6176, %v4763
      %v6178 = vmul.f32 %v6177, %v6176
      %v6179 = vmul.f32 0.5, %v6178
      %v6180 = vsub.f32 1.5, %v6179
      %v6181 = vmul.f32 %v6176, %v6180
      %vm6182 = vweird.f32 %v4763
      %vm6183 = vweird.f32 %v6176
      %vm6184 = vmor %vm6182, %vm6183
      %v6185 = vsel %vm6184, %v6176, %v6181
      %v6186 = vrsqrt.pop %v4764
      %v6187 = vmul.f32 %v6186, %v4764
      %v6188 = vmul.f32 %v6187, %v6186
      %v6189 = vmul.f32 0.5, %v6188
      %v6190 = vsub.f32 1.5, %v6189
      %v6191 = vmul.f32 %v6186, %v6190
      %vm6192 = vweird.f32 %v4764
      %vm6193 = vweird.f32 %v6186
      %vm6194 = vmor %vm6192, %vm6193
      %v6195 = vsel %vm6194, %v6186, %v6191
      %v6196 = vrsqrt.pop %v4765
      %v6197 = vmul.f32 %v6196, %v4765
      %v6198 = vmul.f32 %v6197, %v6196
      %v6199 = vmul.f32 0.5, %v6198
      %v6200 = vsub.f32 1.5, %v6199
      %v6201 = vmul.f32 %v6196, %v6200
      %vm6202 = vweird.f32 %v4765
      %vm6203 = vweird.f32 %v6196
      %vm6204 = vmor %vm6202, %vm6203
      %v6205 = vsel %vm6204, %v6196, %v6201
      %v6206 = vmul.f32 %v4775, %v4478
      %v6207 = vmul.f32 %v4785, %v4479
      %v6208 = vmul.f32 %v4795, %v4480
      %v6209 = vmul.f32 %v4805, %v4481
      %v6210 = vmul.f32 %v4815, %v4482
      %v6211 = vmul.f32 %v4825, %v4483
      %v6212 = vmul.f32 %v4835, %v4484
      %v6213 = vmul.f32 %v4845, %v4485
      %v6214 = vmul.f32 %v4855, %v4486
      %v6215 = vmul.f32 %v4865, %v4487
      %v6216 = vmul.f32 %v4875, %v4488
      %v6217 = vmul.f32 %v4885, %v4489
      %v6218 = vmul.f32 %v4895, %v4490
      %v6219 = vmul.f32 %v4905, %v4491
      %v6220 = vmul.f32 %v4915, %v4492
      %v6221 = vmul.f32 %v4925, %v4493
      %v6222 = vmul.f32 %v4935, %v4494
      %v6223 = vmul.f32 %v4945, %v4495
      %v6224 = vmul.f32 %v4955, %v4496
      %v6225 = vmul.f32 %v4965, %v4497
      %v6226 = vmul.f32 %v4975, %v4498
      %v6227 = vmul.f32 %v4985, %v4499
      %v6228 = vmul.f32 %v4995, %v4500
      %v6229 = vmul.f32 %v5005, %v4501
      %v6230 = vmul.f32 %v5015, %v4502
      %v6231 = vmul.f32 %v5025, %v4503
      %v6232 = vmul.f32 %v5035, %v4504
      %v6233 = vmul.f32 %v5045, %v4505
      %v6234 = vmul.f32 %v5055, %v4506
      %v6235 = vmul.f32 %v5065, %v4507
      %v6236 = vmul.f32 %v5075, %v4508
      %v6237 = vmul.f32 %v5085, %v4509
      %v6238 = vmul.f32 %v5095, %v4510
      %v6239 = vmul.f32 %v5105, %v4511
      %v6240 = vmul.f32 %v5115, %v4512
      %v6241 = vmul.f32 %v5125, %v4513
      %v6242 = vmul.f32 %v5135, %v4514
      %v6243 = vmul.f32 %v5145, %v4515
      %v6244 = vmul.f32 %v5155, %v4516
      %v6245 = vmul.f32 %v5165, %v4517
      %v6246 = vmul.f32 %v5175, %v4518
      %v6247 = vmul.f32 %v5185, %v4519
      %v6248 = vmul.f32 %v5195, %v4520
      %v6249 = vmul.f32 %v5205, %v4521
      %v6250 = vmul.f32 %v5215, %v4522
      %v6251 = vmul.f32 %v5225, %v4523
      %v6252 = vmul.f32 %v5235, %v4524
      %v6253 = vmul.f32 %v5245, %v4525
      %v6254 = vmul.f32 %v5255, %v4526
      %v6255 = vmul.f32 %v5265, %v4527
      %v6256 = vmul.f32 %v5275, %v4528
      %v6257 = vmul.f32 %v5285, %v4529
      %v6258 = vmul.f32 %v5295, %v4530
      %v6259 = vmul.f32 %v5305, %v4531
      %v6260 = vmul.f32 %v5315, %v4532
      %v6261 = vmul.f32 %v5325, %v4533
      %v6262 = vmul.f32 %v5335, %v4534
      %v6263 = vmul.f32 %v5345, %v4535
      %v6264 = vmul.f32 %v5355, %v4536
      %v6265 = vmul.f32 %v5365, %v4537
      %v6266 = vmul.f32 %v5375, %v4538
      %v6267 = vmul.f32 %v5385, %v4539
      %v6268 = vmul.f32 %v5395, %v4540
      %v6269 = vmul.f32 %v5405, %v4541
      %v6270 = vmul.f32 %v5415, %v4542
      %v6271 = vmul.f32 %v5425, %v4543
      %v6272 = vmul.f32 %v5435, %v4544
      %v6273 = vmul.f32 %v5445, %v4545
      %v6274 = vmul.f32 %v5455, %v4546
      %v6275 = vmul.f32 %v5465, %v4547
      %v6276 = vmul.f32 %v5475, %v4548
      %v6277 = vmul.f32 %v5485, %v4549
      %v6278 = vmul.f32 %v5495, %v4550
      %v6279 = vmul.f32 %v5505, %v4551
      %v6280 = vmul.f32 %v5515, %v4552
      %v6281 = vmul.f32 %v5525, %v4553
      %v6282 = vmul.f32 %v5535, %v4554
      %v6283 = vmul.f32 %v5545, %v4555
      %v6284 = vmul.f32 %v5555, %v4556
      %v6285 = vmul.f32 %v5565, %v4557
      %v6286 = vmul.f32 %v5575, %v4558
      %v6287 = vmul.f32 %v5585, %v4559
      %v6288 = vmul.f32 %v5595, %v4560
      %v6289 = vmul.f32 %v5605, %v4561
      %v6290 = vmul.f32 %v5615, %v4562
      %v6291 = vmul.f32 %v5625, %v4563
      %v6292 = vmul.f32 %v5635, %v4564
      %v6293 = vmul.f32 %v5645, %v4565
      %v6294 = vmul.f32 %v5655, %v4566
      %v6295 = vmul.f32 %v5665, %v4567
      %v6296 = vmul.f32 %v5675, %v4568
      %v6297 = vmul.f32 %v5685, %v4569
      %v6298 = vmul.f32 %v5695, %v4570
      %v6299 = vmul.f32 %v5705, %v4571
      %v6300 = vmul.f32 %v5715, %v4572
      %v6301 = vmul.f32 %v5725, %v4573
      %v6302 = vmul.f32 %v5735, %v4574
      %v6303 = vmul.f32 %v5745, %v4575
      %v6304 = vmul.f32 %v5755, %v4576
      %v6305 = vmul.f32 %v5765, %v4577
      %v6306 = vmul.f32 %v5775, %v4578
      %v6307 = vmul.f32 %v5785, %v4579
      %v6308 = vmul.f32 %v5795, %v4580
      %v6309 = vmul.f32 %v5805, %v4581
      %v6310 = vmul.f32 %v5815, %v4582
      %v6311 = vmul.f32 %v5825, %v4583
      %v6312 = vmul.f32 %v5835, %v4584
      %v6313 = vmul.f32 %v5845, %v4585
      %v6314 = vmul.f32 %v5855, %v4586
      %v6315 = vmul.f32 %v5865, %v4587
      %v6316 = vmul.f32 %v5875, %v4588
      %v6317 = vmul.f32 %v5885, %v4589
      %v6318 = vmul.f32 %v5895, %v4590
      %v6319 = vmul.f32 %v5905, %v4591
      %v6320 = vmul.f32 %v5915, %v4592
      %v6321 = vmul.f32 %v5925, %v4593
      %v6322 = vmul.f32 %v5935, %v4594
      %v6323 = vmul.f32 %v5945, %v4595
      %v6324 = vmul.f32 %v5955, %v4596
      %v6325 = vmul.f32 %v5965, %v4597
      %v6326 = vmul.f32 %v5975, %v4598
      %v6327 = vmul.f32 %v5985, %v4599
      %v6328 = vmul.f32 %v5995, %v4600
      %v6329 = vmul.f32 %v6005, %v4601
      %v6330 = vmul.f32 %v6015, %v4602
      %v6331 = vmul.f32 %v6025, %v4603
      %v6332 = vmul.f32 %v6035, %v4604
      %v6333 = vmul.f32 %v6045, %v4605
      %v6334 = vmul.f32 %v6055, %v4606
      %v6335 = vmul.f32 %v6065, %v4607
      %v6336 = vmul.f32 %v6075, %v4608
      %v6337 = vmul.f32 %v6085, %v4609
      %v6338 = vmul.f32 %v6095, %v4610
      %v6339 = vmul.f32 %v6105, %v4611
      %v6340 = vmul.f32 %v6115, %v4612
      %v6341 = vmul.f32 %v6125, %v4613
      %v6342 = vmul.f32 %v6135, %v4614
      %v6343 = vmul.f32 %v6145, %v4615
      %v6344 = vmul.f32 %v6155, %v4616
      %v6345 = vmul.f32 %v6165, %v4617
      %v6346 = vmul.f32 %v6175, %v4618
      %v6347 = vmul.f32 %v6185, %v4619
      %v6348 = vmul.f32 %v6195, %v4620
      %v6349 = vmul.f32 %v6205, %v4621
      %6351 = vset.pattern.permute.xlu0 0
      %6352 = vperm.xlu0 %6351, %v6206
      %v6353 = vpop.permute.xlu0 %6352
      %6356 = vset.pattern.permute.xlu0 0
      %6357 = vperm.xlu0 %6356, %v6207
      %v6358 = vpop.permute.xlu0 %6357
      %6361 = vset.pattern.permute.xlu0 0
      %6362 = vperm.xlu0 %6361, %v6208
      %v6363 = vpop.permute.xlu0 %6362
      %6366 = vset.pattern.permute.xlu0 0
      %6367 = vperm.xlu0 %6366, %v6209
      %v6368 = vpop.permute.xlu0 %6367
      %6371 = vset.pattern.permute.xlu0 0
      %6372 = vperm.xlu0 %6371, %v6210
      %v6373 = vpop.permute.xlu0 %6372
      %6376 = vset.pattern.permute.xlu0 0
      %6377 = vperm.xlu0 %6376, %v6211
      %v6378 = vpop.permute.xlu0 %6377
      %6381 = vset.pattern.permute.xlu0 0
      %6382 = vperm.xlu0 %6381, %v6212
      %v6383 = vpop.permute.xlu0 %6382
      %6386 = vset.pattern.permute.xlu0 0
      %6387 = vperm.xlu0 %6386, %v6213
      %v6388 = vpop.permute.xlu0 %6387
      %6391 = vset.pattern.permute.xlu0 0
      %6392 = vperm.xlu0 %6391, %v6214
      %v6393 = vpop.permute.xlu0 %6392
      %6396 = vset.pattern.permute.xlu0 0
      %6397 = vperm.xlu0 %6396, %v6215
      %v6398 = vpop.permute.xlu0 %6397
      %6401 = vset.pattern.permute.xlu0 0
      %6402 = vperm.xlu0 %6401, %v6216
      %v6403 = vpop.permute.xlu0 %6402
      %6406 = vset.pattern.permute.xlu0 0
      %6407 = vperm.xlu0 %6406, %v6217
      %v6408 = vpop.permute.xlu0 %6407
      %6411 = vset.pattern.permute.xlu0 0
      %6412 = vperm.xlu0 %6411, %v6218
      %v6413 = vpop.permute.xlu0 %6412
      %6416 = vset.pattern.permute.xlu0 0
      %6417 = vperm.xlu0 %6416, %v6219
      %v6418 = vpop.permute.xlu0 %6417
      %6421 = vset.pattern.permute.xlu0 0
      %6422 = vperm.xlu0 %6421, %v6220
      %v6423 = vpop.permute.xlu0 %6422
      %6426 = vset.pattern.permute.xlu0 0
      %6427 = vperm.xlu0 %6426, %v6221
      %v6428 = vpop.permute.xlu0 %6427
      %6431 = vset.pattern.permute.xlu0 0
      %6432 = vperm.xlu0 %6431, %v6222
      %v6433 = vpop.permute.xlu0 %6432
      %6436 = vset.pattern.permute.xlu0 0
      %6437 = vperm.xlu0 %6436, %v6223
      %v6438 = vpop.permute.xlu0 %6437
      %6441 = vset.pattern.permute.xlu0 0
      %6442 = vperm.xlu0 %6441, %v6224
      %v6443 = vpop.permute.xlu0 %6442
      %6446 = vset.pattern.permute.xlu0 0
      %6447 = vperm.xlu0 %6446, %v6225
      %v6448 = vpop.permute.xlu0 %6447
      %6451 = vset.pattern.permute.xlu0 0
      %6452 = vperm.xlu0 %6451, %v6226
      %v6453 = vpop.permute.xlu0 %6452
      %6456 = vset.pattern.permute.xlu0 0
      %6457 = vperm.xlu0 %6456, %v6227
      %v6458 = vpop.permute.xlu0 %6457
      %6461 = vset.pattern.permute.xlu0 0
      %6462 = vperm.xlu0 %6461, %v6228
      %v6463 = vpop.permute.xlu0 %6462
      %6466 = vset.pattern.permute.xlu0 0
      %6467 = vperm.xlu0 %6466, %v6229
      %v6468 = vpop.permute.xlu0 %6467
      %6471 = vset.pattern.permute.xlu0 0
      %6472 = vperm.xlu0 %6471, %v6230
      %v6473 = vpop.permute.xlu0 %6472
      %6476 = vset.pattern.permute.xlu0 0
      %6477 = vperm.xlu0 %6476, %v6231
      %v6478 = vpop.permute.xlu0 %6477
      %6481 = vset.pattern.permute.xlu0 0
      %6482 = vperm.xlu0 %6481, %v6232
      %v6483 = vpop.permute.xlu0 %6482
      %6486 = vset.pattern.permute.xlu0 0
      %6487 = vperm.xlu0 %6486, %v6233
      %v6488 = vpop.permute.xlu0 %6487
      %6491 = vset.pattern.permute.xlu0 0
      %6492 = vperm.xlu0 %6491, %v6234
      %v6493 = vpop.permute.xlu0 %6492
      %6496 = vset.pattern.permute.xlu0 0
      %6497 = vperm.xlu0 %6496, %v6235
      %v6498 = vpop.permute.xlu0 %6497
      %6501 = vset.pattern.permute.xlu0 0
      %6502 = vperm.xlu0 %6501, %v6236
      %v6503 = vpop.permute.xlu0 %6502
      %6506 = vset.pattern.permute.xlu0 0
      %6507 = vperm.xlu0 %6506, %v6237
      %v6508 = vpop.permute.xlu0 %6507
      %6511 = vset.pattern.permute.xlu0 0
      %6512 = vperm.xlu0 %6511, %v6238
      %v6513 = vpop.permute.xlu0 %6512
      %6516 = vset.pattern.permute.xlu0 0
      %6517 = vperm.xlu0 %6516, %v6239
      %v6518 = vpop.permute.xlu0 %6517
      %6521 = vset.pattern.permute.xlu0 0
      %6522 = vperm.xlu0 %6521, %v6240
      %v6523 = vpop.permute.xlu0 %6522
      %6526 = vset.pattern.permute.xlu0 0
      %6527 = vperm.xlu0 %6526, %v6241
      %v6528 = vpop.permute.xlu0 %6527
      %6531 = vset.pattern.permute.xlu0 0
      %6532 = vperm.xlu0 %6531, %v6242
      %v6533 = vpop.permute.xlu0 %6532
      %6536 = vset.pattern.permute.xlu0 0
      %6537 = vperm.xlu0 %6536, %v6243
      %v6538 = vpop.permute.xlu0 %6537
      %6541 = vset.pattern.permute.xlu0 0
      %6542 = vperm.xlu0 %6541, %v6244
      %v6543 = vpop.permute.xlu0 %6542
      %6546 = vset.pattern.permute.xlu0 0
      %6547 = vperm.xlu0 %6546, %v6245
      %v6548 = vpop.permute.xlu0 %6547
      %6551 = vset.pattern.permute.xlu0 0
      %6552 = vperm.xlu0 %6551, %v6246
      %v6553 = vpop.permute.xlu0 %6552
      %6556 = vset.pattern.permute.xlu0 0
      %6557 = vperm.xlu0 %6556, %v6247
      %v6558 = vpop.permute.xlu0 %6557
      %6561 = vset.pattern.permute.xlu0 0
      %6562 = vperm.xlu0 %6561, %v6248
      %v6563 = vpop.permute.xlu0 %6562
      %6566 = vset.pattern.permute.xlu0 0
      %6567 = vperm.xlu0 %6566, %v6249
      %v6568 = vpop.permute.xlu0 %6567
      %6571 = vset.pattern.permute.xlu0 0
      %6572 = vperm.xlu0 %6571, %v6250
      %v6573 = vpop.permute.xlu0 %6572
      %6576 = vset.pattern.permute.xlu0 0
      %6577 = vperm.xlu0 %6576, %v6251
      %v6578 = vpop.permute.xlu0 %6577
      %6581 = vset.pattern.permute.xlu0 0
      %6582 = vperm.xlu0 %6581, %v6252
      %v6583 = vpop.permute.xlu0 %6582
      %6586 = vset.pattern.permute.xlu0 0
      %6587 = vperm.xlu0 %6586, %v6253
      %v6588 = vpop.permute.xlu0 %6587
      %6591 = vset.pattern.permute.xlu0 0
      %6592 = vperm.xlu0 %6591, %v6254
      %v6593 = vpop.permute.xlu0 %6592
      %6596 = vset.pattern.permute.xlu0 0
      %6597 = vperm.xlu0 %6596, %v6255
      %v6598 = vpop.permute.xlu0 %6597
      %6601 = vset.pattern.permute.xlu0 0
      %6602 = vperm.xlu0 %6601, %v6256
      %v6603 = vpop.permute.xlu0 %6602
      %6606 = vset.pattern.permute.xlu0 0
      %6607 = vperm.xlu0 %6606, %v6257
      %v6608 = vpop.permute.xlu0 %6607
      %6611 = vset.pattern.permute.xlu0 0
      %6612 = vperm.xlu0 %6611, %v6258
      %v6613 = vpop.permute.xlu0 %6612
      %6616 = vset.pattern.permute.xlu0 0
      %6617 = vperm.xlu0 %6616, %v6259
      %v6618 = vpop.permute.xlu0 %6617
      %6621 = vset.pattern.permute.xlu0 0
      %6622 = vperm.xlu0 %6621, %v6260
      %v6623 = vpop.permute.xlu0 %6622
      %6626 = vset.pattern.permute.xlu0 0
      %6627 = vperm.xlu0 %6626, %v6261
      %v6628 = vpop.permute.xlu0 %6627
      %6631 = vset.pattern.permute.xlu0 0
      %6632 = vperm.xlu0 %6631, %v6262
      %v6633 = vpop.permute.xlu0 %6632
      %6636 = vset.pattern.permute.xlu0 0
      %6637 = vperm.xlu0 %6636, %v6263
      %v6638 = vpop.permute.xlu0 %6637
      %6641 = vset.pattern.permute.xlu0 0
      %6642 = vperm.xlu0 %6641, %v6264
      %v6643 = vpop.permute.xlu0 %6642
      %6646 = vset.pattern.permute.xlu0 0
      %6647 = vperm.xlu0 %6646, %v6265
      %v6648 = vpop.permute.xlu0 %6647
      %6651 = vset.pattern.permute.xlu0 0
      %6652 = vperm.xlu0 %6651, %v6266
      %v6653 = vpop.permute.xlu0 %6652
      %6656 = vset.pattern.permute.xlu0 0
      %6657 = vperm.xlu0 %6656, %v6267
      %v6658 = vpop.permute.xlu0 %6657
      %6661 = vset.pattern.permute.xlu0 0
      %6662 = vperm.xlu0 %6661, %v6268
      %v6663 = vpop.permute.xlu0 %6662
      %6666 = vset.pattern.permute.xlu0 0
      %6667 = vperm.xlu0 %6666, %v6269
      %v6668 = vpop.permute.xlu0 %6667
      %6671 = vset.pattern.permute.xlu0 0
      %6672 = vperm.xlu0 %6671, %v6270
      %v6673 = vpop.permute.xlu0 %6672
      %6676 = vset.pattern.permute.xlu0 0
      %6677 = vperm.xlu0 %6676, %v6271
      %v6678 = vpop.permute.xlu0 %6677
      %6681 = vset.pattern.permute.xlu0 0
      %6682 = vperm.xlu0 %6681, %v6272
      %v6683 = vpop.permute.xlu0 %6682
      %6686 = vset.pattern.permute.xlu0 0
      %6687 = vperm.xlu0 %6686, %v6273
      %v6688 = vpop.permute.xlu0 %6687
      %6691 = vset.pattern.permute.xlu0 0
      %6692 = vperm.xlu0 %6691, %v6274
      %v6693 = vpop.permute.xlu0 %6692
      %6696 = vset.pattern.permute.xlu0 0
      %6697 = vperm.xlu0 %6696, %v6275
      %v6698 = vpop.permute.xlu0 %6697
      %6701 = vset.pattern.permute.xlu0 0
      %6702 = vperm.xlu0 %6701, %v6276
      %v6703 = vpop.permute.xlu0 %6702
      %6706 = vset.pattern.permute.xlu0 0
      %6707 = vperm.xlu0 %6706, %v6277
      %v6708 = vpop.permute.xlu0 %6707
      %6711 = vset.pattern.permute.xlu0 0
      %6712 = vperm.xlu0 %6711, %v6278
      %v6713 = vpop.permute.xlu0 %6712
      %6716 = vset.pattern.permute.xlu0 0
      %6717 = vperm.xlu0 %6716, %v6279
      %v6718 = vpop.permute.xlu0 %6717
      %6721 = vset.pattern.permute.xlu0 0
      %6722 = vperm.xlu0 %6721, %v6280
      %v6723 = vpop.permute.xlu0 %6722
      %6726 = vset.pattern.permute.xlu0 0
      %6727 = vperm.xlu0 %6726, %v6281
      %v6728 = vpop.permute.xlu0 %6727
      %6731 = vset.pattern.permute.xlu0 0
      %6732 = vperm.xlu0 %6731, %v6282
      %v6733 = vpop.permute.xlu0 %6732
      %6736 = vset.pattern.permute.xlu0 0
      %6737 = vperm.xlu0 %6736, %v6283
      %v6738 = vpop.permute.xlu0 %6737
      %6741 = vset.pattern.permute.xlu0 0
      %6742 = vperm.xlu0 %6741, %v6284
      %v6743 = vpop.permute.xlu0 %6742
      %6746 = vset.pattern.permute.xlu0 0
      %6747 = vperm.xlu0 %6746, %v6285
      %v6748 = vpop.permute.xlu0 %6747
      %6751 = vset.pattern.permute.xlu0 0
      %6752 = vperm.xlu0 %6751, %v6286
      %v6753 = vpop.permute.xlu0 %6752
      %6756 = vset.pattern.permute.xlu0 0
      %6757 = vperm.xlu0 %6756, %v6287
      %v6758 = vpop.permute.xlu0 %6757
      %6761 = vset.pattern.permute.xlu0 0
      %6762 = vperm.xlu0 %6761, %v6288
      %v6763 = vpop.permute.xlu0 %6762
      %6766 = vset.pattern.permute.xlu0 0
      %6767 = vperm.xlu0 %6766, %v6289
      %v6768 = vpop.permute.xlu0 %6767
      %6771 = vset.pattern.permute.xlu0 0
      %6772 = vperm.xlu0 %6771, %v6290
      %v6773 = vpop.permute.xlu0 %6772
      %6776 = vset.pattern.permute.xlu0 0
      %6777 = vperm.xlu0 %6776, %v6291
      %v6778 = vpop.permute.xlu0 %6777
      %6781 = vset.pattern.permute.xlu0 0
      %6782 = vperm.xlu0 %6781, %v6292
      %v6783 = vpop.permute.xlu0 %6782
      %6786 = vset.pattern.permute.xlu0 0
      %6787 = vperm.xlu0 %6786, %v6293
      %v6788 = vpop.permute.xlu0 %6787
      %6791 = vset.pattern.permute.xlu0 0
      %6792 = vperm.xlu0 %6791, %v6294
      %v6793 = vpop.permute.xlu0 %6792
      %6796 = vset.pattern.permute.xlu0 0
      %6797 = vperm.xlu0 %6796, %v6295
      %v6798 = vpop.permute.xlu0 %6797
      %6801 = vset.pattern.permute.xlu0 0
      %6802 = vperm.xlu0 %6801, %v6296
      %v6803 = vpop.permute.xlu0 %6802
      %6806 = vset.pattern.permute.xlu0 0
      %6807 = vperm.xlu0 %6806, %v6297
      %v6808 = vpop.permute.xlu0 %6807
      %6811 = vset.pattern.permute.xlu0 0
      %6812 = vperm.xlu0 %6811, %v6298
      %v6813 = vpop.permute.xlu0 %6812
      %6816 = vset.pattern.permute.xlu0 0
      %6817 = vperm.xlu0 %6816, %v6299
      %v6818 = vpop.permute.xlu0 %6817
      %6821 = vset.pattern.permute.xlu0 0
      %6822 = vperm.xlu0 %6821, %v6300
      %v6823 = vpop.permute.xlu0 %6822
      %6826 = vset.pattern.permute.xlu0 0
      %6827 = vperm.xlu0 %6826, %v6301
      %v6828 = vpop.permute.xlu0 %6827
      %6831 = vset.pattern.permute.xlu0 0
      %6832 = vperm.xlu0 %6831, %v6302
      %v6833 = vpop.permute.xlu0 %6832
      %6836 = vset.pattern.permute.xlu0 0
      %6837 = vperm.xlu0 %6836, %v6303
      %v6838 = vpop.permute.xlu0 %6837
      %6841 = vset.pattern.permute.xlu0 0
      %6842 = vperm.xlu0 %6841, %v6304
      %v6843 = vpop.permute.xlu0 %6842
      %6846 = vset.pattern.permute.xlu0 0
      %6847 = vperm.xlu0 %6846, %v6305
      %v6848 = vpop.permute.xlu0 %6847
      %6851 = vset.pattern.permute.xlu0 0
      %6852 = vperm.xlu0 %6851, %v6306
      %v6853 = vpop.permute.xlu0 %6852
      %6856 = vset.pattern.permute.xlu0 0
      %6857 = vperm.xlu0 %6856, %v6307
      %v6858 = vpop.permute.xlu0 %6857
      %6861 = vset.pattern.permute.xlu0 0
      %6862 = vperm.xlu0 %6861, %v6308
      %v6863 = vpop.permute.xlu0 %6862
      %6866 = vset.pattern.permute.xlu0 0
      %6867 = vperm.xlu0 %6866, %v6309
      %v6868 = vpop.permute.xlu0 %6867
      %6871 = vset.pattern.permute.xlu0 0
      %6872 = vperm.xlu0 %6871, %v6310
      %v6873 = vpop.permute.xlu0 %6872
      %6876 = vset.pattern.permute.xlu0 0
      %6877 = vperm.xlu0 %6876, %v6311
      %v6878 = vpop.permute.xlu0 %6877
      %6881 = vset.pattern.permute.xlu0 0
      %6882 = vperm.xlu0 %6881, %v6312
      %v6883 = vpop.permute.xlu0 %6882
      %6886 = vset.pattern.permute.xlu0 0
      %6887 = vperm.xlu0 %6886, %v6313
      %v6888 = vpop.permute.xlu0 %6887
      %6891 = vset.pattern.permute.xlu0 0
      %6892 = vperm.xlu0 %6891, %v6314
      %v6893 = vpop.permute.xlu0 %6892
      %6896 = vset.pattern.permute.xlu0 0
      %6897 = vperm.xlu0 %6896, %v6315
      %v6898 = vpop.permute.xlu0 %6897
      %6901 = vset.pattern.permute.xlu0 0
      %6902 = vperm.xlu0 %6901, %v6316
      %v6903 = vpop.permute.xlu0 %6902
      %6906 = vset.pattern.permute.xlu0 0
      %6907 = vperm.xlu0 %6906, %v6317
      %v6908 = vpop.permute.xlu0 %6907
      %6911 = vset.pattern.permute.xlu0 0
      %6912 = vperm.xlu0 %6911, %v6318
      %v6913 = vpop.permute.xlu0 %6912
      %6916 = vset.pattern.permute.xlu0 0
      %6917 = vperm.xlu0 %6916, %v6319
      %v6918 = vpop.permute.xlu0 %6917
      %6921 = vset.pattern.permute.xlu0 0
      %6922 = vperm.xlu0 %6921, %v6320
      %v6923 = vpop.permute.xlu0 %6922
      %6926 = vset.pattern.permute.xlu0 0
      %6927 = vperm.xlu0 %6926, %v6321
      %v6928 = vpop.permute.xlu0 %6927
      %6931 = vset.pattern.permute.xlu0 0
      %6932 = vperm.xlu0 %6931, %v6322
      %v6933 = vpop.permute.xlu0 %6932
      %6936 = vset.pattern.permute.xlu0 0
      %6937 = vperm.xlu0 %6936, %v6323
      %v6938 = vpop.permute.xlu0 %6937
      %6941 = vset.pattern.permute.xlu0 0
      %6942 = vperm.xlu0 %6941, %v6324
      %v6943 = vpop.permute.xlu0 %6942
      %6946 = vset.pattern.permute.xlu0 0
      %6947 = vperm.xlu0 %6946, %v6325
      %v6948 = vpop.permute.xlu0 %6947
      %6951 = vset.pattern.permute.xlu0 0
      %6952 = vperm.xlu0 %6951, %v6326
      %v6953 = vpop.permute.xlu0 %6952
      %6956 = vset.pattern.permute.xlu0 0
      %6957 = vperm.xlu0 %6956, %v6327
      %v6958 = vpop.permute.xlu0 %6957
      %6961 = vset.pattern.permute.xlu0 0
      %6962 = vperm.xlu0 %6961, %v6328
      %v6963 = vpop.permute.xlu0 %6962
      %6966 = vset.pattern.permute.xlu0 0
      %6967 = vperm.xlu0 %6966, %v6329
      %v6968 = vpop.permute.xlu0 %6967
      %6971 = vset.pattern.permute.xlu0 0
      %6972 = vperm.xlu0 %6971, %v6330
      %v6973 = vpop.permute.xlu0 %6972
      %6976 = vset.pattern.permute.xlu0 0
      %6977 = vperm.xlu0 %6976, %v6331
      %v6978 = vpop.permute.xlu0 %6977
      %6981 = vset.pattern.permute.xlu0 0
      %6982 = vperm.xlu0 %6981, %v6332
      %v6983 = vpop.permute.xlu0 %6982
      %6986 = vset.pattern.permute.xlu0 0
      %6987 = vperm.xlu0 %6986, %v6333
      %v6988 = vpop.permute.xlu0 %6987
      %6991 = vset.pattern.permute.xlu0 0
      %6992 = vperm.xlu0 %6991, %v6334
      %v6993 = vpop.permute.xlu0 %6992
      %6996 = vset.pattern.permute.xlu0 0
      %6997 = vperm.xlu0 %6996, %v6335
      %v6998 = vpop.permute.xlu0 %6997
      %7001 = vset.pattern.permute.xlu0 0
      %7002 = vperm.xlu0 %7001, %v6336
      %v7003 = vpop.permute.xlu0 %7002
      %7006 = vset.pattern.permute.xlu0 0
      %7007 = vperm.xlu0 %7006, %v6337
      %v7008 = vpop.permute.xlu0 %7007
      %7011 = vset.pattern.permute.xlu0 0
      %7012 = vperm.xlu0 %7011, %v6338
      %v7013 = vpop.permute.xlu0 %7012
      %7016 = vset.pattern.permute.xlu0 0
      %7017 = vperm.xlu0 %7016, %v6339
      %v7018 = vpop.permute.xlu0 %7017
      %7021 = vset.pattern.permute.xlu0 0
      %7022 = vperm.xlu0 %7021, %v6340
      %v7023 = vpop.permute.xlu0 %7022
      %7026 = vset.pattern.permute.xlu0 0
      %7027 = vperm.xlu0 %7026, %v6341
      %v7028 = vpop.permute.xlu0 %7027
      %7031 = vset.pattern.permute.xlu0 0
      %7032 = vperm.xlu0 %7031, %v6342
      %v7033 = vpop.permute.xlu0 %7032
      %7036 = vset.pattern.permute.xlu0 0
      %7037 = vperm.xlu0 %7036, %v6343
      %v7038 = vpop.permute.xlu0 %7037
      %7041 = vset.pattern.permute.xlu0 0
      %7042 = vperm.xlu0 %7041, %v6344
      %v7043 = vpop.permute.xlu0 %7042
      %7046 = vset.pattern.permute.xlu0 0
      %7047 = vperm.xlu0 %7046, %v6345
      %v7048 = vpop.permute.xlu0 %7047
      %7051 = vset.pattern.permute.xlu0 0
      %7052 = vperm.xlu0 %7051, %v6346
      %v7053 = vpop.permute.xlu0 %7052
      %7056 = vset.pattern.permute.xlu0 0
      %7057 = vperm.xlu0 %7056, %v6347
      %v7058 = vpop.permute.xlu0 %7057
      %7061 = vset.pattern.permute.xlu0 0
      %7062 = vperm.xlu0 %7061, %v6348
      %v7063 = vpop.permute.xlu0 %7062
      %7066 = vset.pattern.permute.xlu0 0
      %7067 = vperm.xlu0 %7066, %v6349
      %v7068 = vpop.permute.xlu0 %7067
      %v7070 = vmul.f32 %v3614, %v6353
      %v7071 = vmul.f32 %v3615, %v6358
      %v7072 = vmul.f32 %v3616, %v6363
      %v7073 = vmul.f32 %v3617, %v6368
      %v7074 = vmul.f32 %v3618, %v6373
      %v7075 = vmul.f32 %v3619, %v6378
      %v7076 = vmul.f32 %v3620, %v6383
      %v7077 = vmul.f32 %v3621, %v6388
      %v7078 = vmul.f32 %v3622, %v6393
      %v7079 = vmul.f32 %v3623, %v6398
      %v7080 = vmul.f32 %v3624, %v6403
      %v7081 = vmul.f32 %v3625, %v6408
      %v7082 = vmul.f32 %v3626, %v6413
      %v7083 = vmul.f32 %v3627, %v6418
      %v7084 = vmul.f32 %v3628, %v6423
      %v7085 = vmul.f32 %v3629, %v6428
      %v7086 = vmul.f32 %v3630, %v6433
      %v7087 = vmul.f32 %v3631, %v6438
      %v7088 = vmul.f32 %v3632, %v6443
      %v7089 = vmul.f32 %v3633, %v6448
      %v7090 = vmul.f32 %v3634, %v6453
      %v7091 = vmul.f32 %v3635, %v6458
      %v7092 = vmul.f32 %v3636, %v6463
      %v7093 = vmul.f32 %v3637, %v6468
      %v7094 = vmul.f32 %v3638, %v6473
      %v7095 = vmul.f32 %v3639, %v6478
      %v7096 = vmul.f32 %v3640, %v6483
      %v7097 = vmul.f32 %v3641, %v6488
      %v7098 = vmul.f32 %v3642, %v6493
      %v7099 = vmul.f32 %v3643, %v6498
      %v7100 = vmul.f32 %v3644, %v6503
      %v7101 = vmul.f32 %v3645, %v6508
      %v7102 = vmul.f32 %v3646, %v6513
      %v7103 = vmul.f32 %v3647, %v6518
      %v7104 = vmul.f32 %v3648, %v6523
      %v7105 = vmul.f32 %v3649, %v6528
      %v7106 = vmul.f32 %v3650, %v6533
      %v7107 = vmul.f32 %v3651, %v6538
      %v7108 = vmul.f32 %v3652, %v6543
      %v7109 = vmul.f32 %v3653, %v6548
      %v7110 = vmul.f32 %v3654, %v6553
      %v7111 = vmul.f32 %v3655, %v6558
      %v7112 = vmul.f32 %v3656, %v6563
      %v7113 = vmul.f32 %v3657, %v6568
      %v7114 = vmul.f32 %v3658, %v6573
      %v7115 = vmul.f32 %v3659, %v6578
      %v7116 = vmul.f32 %v3660, %v6583
      %v7117 = vmul.f32 %v3661, %v6588
      %v7118 = vmul.f32 %v3662, %v6593
      %v7119 = vmul.f32 %v3663, %v6598
      %v7120 = vmul.f32 %v3664, %v6603
      %v7121 = vmul.f32 %v3665, %v6608
      %v7122 = vmul.f32 %v3666, %v6613
      %v7123 = vmul.f32 %v3667, %v6618
      %v7124 = vmul.f32 %v3668, %v6623
      %v7125 = vmul.f32 %v3669, %v6628
      %v7126 = vmul.f32 %v3670, %v6633
      %v7127 = vmul.f32 %v3671, %v6638
      %v7128 = vmul.f32 %v3672, %v6643
      %v7129 = vmul.f32 %v3673, %v6648
      %v7130 = vmul.f32 %v3674, %v6653
      %v7131 = vmul.f32 %v3675, %v6658
      %v7132 = vmul.f32 %v3676, %v6663
      %v7133 = vmul.f32 %v3677, %v6668
      %v7134 = vmul.f32 %v3678, %v6673
      %v7135 = vmul.f32 %v3679, %v6678
      %v7136 = vmul.f32 %v3680, %v6683
      %v7137 = vmul.f32 %v3681, %v6688
      %v7138 = vmul.f32 %v3682, %v6693
      %v7139 = vmul.f32 %v3683, %v6698
      %v7140 = vmul.f32 %v3684, %v6703
      %v7141 = vmul.f32 %v3685, %v6708
      %v7142 = vmul.f32 %v3686, %v6713
      %v7143 = vmul.f32 %v3687, %v6718
      %v7144 = vmul.f32 %v3688, %v6723
      %v7145 = vmul.f32 %v3689, %v6728
      %v7146 = vmul.f32 %v3690, %v6733
      %v7147 = vmul.f32 %v3691, %v6738
      %v7148 = vmul.f32 %v3692, %v6743
      %v7149 = vmul.f32 %v3693, %v6748
      %v7150 = vmul.f32 %v3694, %v6753
      %v7151 = vmul.f32 %v3695, %v6758
      %v7152 = vmul.f32 %v3696, %v6763
      %v7153 = vmul.f32 %v3697, %v6768
      %v7154 = vmul.f32 %v3698, %v6773
      %v7155 = vmul.f32 %v3699, %v6778
      %v7156 = vmul.f32 %v3700, %v6783
      %v7157 = vmul.f32 %v3701, %v6788
      %v7158 = vmul.f32 %v3702, %v6793
      %v7159 = vmul.f32 %v3703, %v6798
      %v7160 = vmul.f32 %v3704, %v6803
      %v7161 = vmul.f32 %v3705, %v6808
      %v7162 = vmul.f32 %v3706, %v6813
      %v7163 = vmul.f32 %v3707, %v6818
      %v7164 = vmul.f32 %v3708, %v6823
      %v7165 = vmul.f32 %v3709, %v6828
      %v7166 = vmul.f32 %v3710, %v6833
      %v7167 = vmul.f32 %v3711, %v6838
      %v7168 = vmul.f32 %v3712, %v6843
      %v7169 = vmul.f32 %v3713, %v6848
      %v7170 = vmul.f32 %v3714, %v6853
      %v7171 = vmul.f32 %v3715, %v6858
      %v7172 = vmul.f32 %v3716, %v6863
      %v7173 = vmul.f32 %v3717, %v6868
      %v7174 = vmul.f32 %v3718, %v6873
      %v7175 = vmul.f32 %v3719, %v6878
      %v7176 = vmul.f32 %v3720, %v6883
      %v7177 = vmul.f32 %v3721, %v6888
      %v7178 = vmul.f32 %v3722, %v6893
      %v7179 = vmul.f32 %v3723, %v6898
      %v7180 = vmul.f32 %v3724, %v6903
      %v7181 = vmul.f32 %v3725, %v6908
      %v7182 = vmul.f32 %v3726, %v6913
      %v7183 = vmul.f32 %v3727, %v6918
      %v7184 = vmul.f32 %v3728, %v6923
      %v7185 = vmul.f32 %v3729, %v6928
      %v7186 = vmul.f32 %v3730, %v6933
      %v7187 = vmul.f32 %v3731, %v6938
      %v7188 = vmul.f32 %v3732, %v6943
      %v7189 = vmul.f32 %v3733, %v6948
      %v7190 = vmul.f32 %v3734, %v6953
      %v7191 = vmul.f32 %v3735, %v6958
      %v7192 = vmul.f32 %v3736, %v6963
      %v7193 = vmul.f32 %v3737, %v6968
      %v7194 = vmul.f32 %v3738, %v6973
      %v7195 = vmul.f32 %v3739, %v6978
      %v7196 = vmul.f32 %v3740, %v6983
      %v7197 = vmul.f32 %v3741, %v6988
      %v7198 = vmul.f32 %v3742, %v6993
      %v7199 = vmul.f32 %v3743, %v6998
      %v7200 = vmul.f32 %v3744, %v7003
      %v7201 = vmul.f32 %v3745, %v7008
      %v7202 = vmul.f32 %v3746, %v7013
      %v7203 = vmul.f32 %v3747, %v7018
      %v7204 = vmul.f32 %v3748, %v7023
      %v7205 = vmul.f32 %v3749, %v7028
      %v7206 = vmul.f32 %v3750, %v7033
      %v7207 = vmul.f32 %v3751, %v7038
      %v7208 = vmul.f32 %v3752, %v7043
      %v7209 = vmul.f32 %v3753, %v7048
      %v7210 = vmul.f32 %v3754, %v7053
      %v7211 = vmul.f32 %v3755, %v7058
      %v7212 = vmul.f32 %v3756, %v7063
      %v7213 = vmul.f32 %v3757, %v7068
      %7215 = vset.pattern.permute.xlu0 1
      %7216 = vperm.xlu0 %7215, %v4478
      %v7217 = vpop.permute.xlu0 %7216
      %7220 = vset.pattern.permute.xlu0 1
      %7221 = vperm.xlu0 %7220, %v4479
      %v7222 = vpop.permute.xlu0 %7221
      %7225 = vset.pattern.permute.xlu0 1
      %7226 = vperm.xlu0 %7225, %v4480
      %v7227 = vpop.permute.xlu0 %7226
      %7230 = vset.pattern.permute.xlu0 1
      %7231 = vperm.xlu0 %7230, %v4481
      %v7232 = vpop.permute.xlu0 %7231
      %7235 = vset.pattern.permute.xlu0 1
      %7236 = vperm.xlu0 %7235, %v4482
      %v7237 = vpop.permute.xlu0 %7236
      %7240 = vset.pattern.permute.xlu0 1
      %7241 = vperm.xlu0 %7240, %v4483
      %v7242 = vpop.permute.xlu0 %7241
      %7245 = vset.pattern.permute.xlu0 1
      %7246 = vperm.xlu0 %7245, %v4484
      %v7247 = vpop.permute.xlu0 %7246
      %7250 = vset.pattern.permute.xlu0 1
      %7251 = vperm.xlu0 %7250, %v4485
      %v7252 = vpop.permute.xlu0 %7251
      %7255 = vset.pattern.permute.xlu0 1
      %7256 = vperm.xlu0 %7255, %v4486
      %v7257 = vpop.permute.xlu0 %7256
      %7260 = vset.pattern.permute.xlu0 1
      %7261 = vperm.xlu0 %7260, %v4487
      %v7262 = vpop.permute.xlu0 %7261
      %7265 = vset.pattern.permute.xlu0 1
      %7266 = vperm.xlu0 %7265, %v4488
      %v7267 = vpop.permute.xlu0 %7266
      %7270 = vset.pattern.permute.xlu0 1
      %7271 = vperm.xlu0 %7270, %v4489
      %v7272 = vpop.permute.xlu0 %7271
      %7275 = vset.pattern.permute.xlu0 1
      %7276 = vperm.xlu0 %7275, %v4490
      %v7277 = vpop.permute.xlu0 %7276
      %7280 = vset.pattern.permute.xlu0 1
      %7281 = vperm.xlu0 %7280, %v4491
      %v7282 = vpop.permute.xlu0 %7281
      %7285 = vset.pattern.permute.xlu0 1
      %7286 = vperm.xlu0 %7285, %v4492
      %v7287 = vpop.permute.xlu0 %7286
      %7290 = vset.pattern.permute.xlu0 1
      %7291 = vperm.xlu0 %7290, %v4493
      %v7292 = vpop.permute.xlu0 %7291
      %7295 = vset.pattern.permute.xlu0 1
      %7296 = vperm.xlu0 %7295, %v4494
      %v7297 = vpop.permute.xlu0 %7296
      %7300 = vset.pattern.permute.xlu0 1
      %7301 = vperm.xlu0 %7300, %v4495
      %v7302 = vpop.permute.xlu0 %7301
      %7305 = vset.pattern.permute.xlu0 1
      %7306 = vperm.xlu0 %7305, %v4496
      %v7307 = vpop.permute.xlu0 %7306
      %7310 = vset.pattern.permute.xlu0 1
      %7311 = vperm.xlu0 %7310, %v4497
      %v7312 = vpop.permute.xlu0 %7311
      %7315 = vset.pattern.permute.xlu0 1
      %7316 = vperm.xlu0 %7315, %v4498
      %v7317 = vpop.permute.xlu0 %7316
      %7320 = vset.pattern.permute.xlu0 1
      %7321 = vperm.xlu0 %7320, %v4499
      %v7322 = vpop.permute.xlu0 %7321
      %7325 = vset.pattern.permute.xlu0 1
      %7326 = vperm.xlu0 %7325, %v4500
      %v7327 = vpop.permute.xlu0 %7326
      %7330 = vset.pattern.permute.xlu0 1
      %7331 = vperm.xlu0 %7330, %v4501
      %v7332 = vpop.permute.xlu0 %7331
      %7335 = vset.pattern.permute.xlu0 1
      %7336 = vperm.xlu0 %7335, %v4502
      %v7337 = vpop.permute.xlu0 %7336
      %7340 = vset.pattern.permute.xlu0 1
      %7341 = vperm.xlu0 %7340, %v4503
      %v7342 = vpop.permute.xlu0 %7341
      %7345 = vset.pattern.permute.xlu0 1
      %7346 = vperm.xlu0 %7345, %v4504
      %v7347 = vpop.permute.xlu0 %7346
      %7350 = vset.pattern.permute.xlu0 1
      %7351 = vperm.xlu0 %7350, %v4505
      %v7352 = vpop.permute.xlu0 %7351
      %7355 = vset.pattern.permute.xlu0 1
      %7356 = vperm.xlu0 %7355, %v4506
      %v7357 = vpop.permute.xlu0 %7356
      %7360 = vset.pattern.permute.xlu0 1
      %7361 = vperm.xlu0 %7360, %v4507
      %v7362 = vpop.permute.xlu0 %7361
      %7365 = vset.pattern.permute.xlu0 1
      %7366 = vperm.xlu0 %7365, %v4508
      %v7367 = vpop.permute.xlu0 %7366
      %7370 = vset.pattern.permute.xlu0 1
      %7371 = vperm.xlu0 %7370, %v4509
      %v7372 = vpop.permute.xlu0 %7371
      %7375 = vset.pattern.permute.xlu0 1
      %7376 = vperm.xlu0 %7375, %v4510
      %v7377 = vpop.permute.xlu0 %7376
      %7380 = vset.pattern.permute.xlu0 1
      %7381 = vperm.xlu0 %7380, %v4511
      %v7382 = vpop.permute.xlu0 %7381
      %7385 = vset.pattern.permute.xlu0 1
      %7386 = vperm.xlu0 %7385, %v4512
      %v7387 = vpop.permute.xlu0 %7386
      %7390 = vset.pattern.permute.xlu0 1
      %7391 = vperm.xlu0 %7390, %v4513
      %v7392 = vpop.permute.xlu0 %7391
      %7395 = vset.pattern.permute.xlu0 1
      %7396 = vperm.xlu0 %7395, %v4514
      %v7397 = vpop.permute.xlu0 %7396
      %7400 = vset.pattern.permute.xlu0 1
      %7401 = vperm.xlu0 %7400, %v4515
      %v7402 = vpop.permute.xlu0 %7401
      %7405 = vset.pattern.permute.xlu0 1
      %7406 = vperm.xlu0 %7405, %v4516
      %v7407 = vpop.permute.xlu0 %7406
      %7410 = vset.pattern.permute.xlu0 1
      %7411 = vperm.xlu0 %7410, %v4517
      %v7412 = vpop.permute.xlu0 %7411
      %7415 = vset.pattern.permute.xlu0 1
      %7416 = vperm.xlu0 %7415, %v4518
      %v7417 = vpop.permute.xlu0 %7416
      %7420 = vset.pattern.permute.xlu0 1
      %7421 = vperm.xlu0 %7420, %v4519
      %v7422 = vpop.permute.xlu0 %7421
      %7425 = vset.pattern.permute.xlu0 1
      %7426 = vperm.xlu0 %7425, %v4520
      %v7427 = vpop.permute.xlu0 %7426
      %7430 = vset.pattern.permute.xlu0 1
      %7431 = vperm.xlu0 %7430, %v4521
      %v7432 = vpop.permute.xlu0 %7431
      %7435 = vset.pattern.permute.xlu0 1
      %7436 = vperm.xlu0 %7435, %v4522
      %v7437 = vpop.permute.xlu0 %7436
      %7440 = vset.pattern.permute.xlu0 1
      %7441 = vperm.xlu0 %7440, %v4523
      %v7442 = vpop.permute.xlu0 %7441
      %7445 = vset.pattern.permute.xlu0 1
      %7446 = vperm.xlu0 %7445, %v4524
      %v7447 = vpop.permute.xlu0 %7446
      %7450 = vset.pattern.permute.xlu0 1
      %7451 = vperm.xlu0 %7450, %v4525
      %v7452 = vpop.permute.xlu0 %7451
      %7455 = vset.pattern.permute.xlu0 1
      %7456 = vperm.xlu0 %7455, %v4526
      %v7457 = vpop.permute.xlu0 %7456
      %7460 = vset.pattern.permute.xlu0 1
      %7461 = vperm.xlu0 %7460, %v4527
      %v7462 = vpop.permute.xlu0 %7461
      %7465 = vset.pattern.permute.xlu0 1
      %7466 = vperm.xlu0 %7465, %v4528
      %v7467 = vpop.permute.xlu0 %7466
      %7470 = vset.pattern.permute.xlu0 1
      %7471 = vperm.xlu0 %7470, %v4529
      %v7472 = vpop.permute.xlu0 %7471
      %7475 = vset.pattern.permute.xlu0 1
      %7476 = vperm.xlu0 %7475, %v4530
      %v7477 = vpop.permute.xlu0 %7476
      %7480 = vset.pattern.permute.xlu0 1
      %7481 = vperm.xlu0 %7480, %v4531
      %v7482 = vpop.permute.xlu0 %7481
      %7485 = vset.pattern.permute.xlu0 1
      %7486 = vperm.xlu0 %7485, %v4532
      %v7487 = vpop.permute.xlu0 %7486
      %7490 = vset.pattern.permute.xlu0 1
      %7491 = vperm.xlu0 %7490, %v4533
      %v7492 = vpop.permute.xlu0 %7491
      %7495 = vset.pattern.permute.xlu0 1
      %7496 = vperm.xlu0 %7495, %v4534
      %v7497 = vpop.permute.xlu0 %7496
      %7500 = vset.pattern.permute.xlu0 1
      %7501 = vperm.xlu0 %7500, %v4535
      %v7502 = vpop.permute.xlu0 %7501
      %7505 = vset.pattern.permute.xlu0 1
      %7506 = vperm.xlu0 %7505, %v4536
      %v7507 = vpop.permute.xlu0 %7506
      %7510 = vset.pattern.permute.xlu0 1
      %7511 = vperm.xlu0 %7510, %v4537
      %v7512 = vpop.permute.xlu0 %7511
      %7515 = vset.pattern.permute.xlu0 1
      %7516 = vperm.xlu0 %7515, %v4538
      %v7517 = vpop.permute.xlu0 %7516
      %7520 = vset.pattern.permute.xlu0 1
      %7521 = vperm.xlu0 %7520, %v4539
      %v7522 = vpop.permute.xlu0 %7521
      %7525 = vset.pattern.permute.xlu0 1
      %7526 = vperm.xlu0 %7525, %v4540
      %v7527 = vpop.permute.xlu0 %7526
      %7530 = vset.pattern.permute.xlu0 1
      %7531 = vperm.xlu0 %7530, %v4541
      %v7532 = vpop.permute.xlu0 %7531
      %7535 = vset.pattern.permute.xlu0 1
      %7536 = vperm.xlu0 %7535, %v4542
      %v7537 = vpop.permute.xlu0 %7536
      %7540 = vset.pattern.permute.xlu0 1
      %7541 = vperm.xlu0 %7540, %v4543
      %v7542 = vpop.permute.xlu0 %7541
      %7545 = vset.pattern.permute.xlu0 1
      %7546 = vperm.xlu0 %7545, %v4544
      %v7547 = vpop.permute.xlu0 %7546
      %7550 = vset.pattern.permute.xlu0 1
      %7551 = vperm.xlu0 %7550, %v4545
      %v7552 = vpop.permute.xlu0 %7551
      %7555 = vset.pattern.permute.xlu0 1
      %7556 = vperm.xlu0 %7555, %v4546
      %v7557 = vpop.permute.xlu0 %7556
      %7560 = vset.pattern.permute.xlu0 1
      %7561 = vperm.xlu0 %7560, %v4547
      %v7562 = vpop.permute.xlu0 %7561
      %7565 = vset.pattern.permute.xlu0 1
      %7566 = vperm.xlu0 %7565, %v4548
      %v7567 = vpop.permute.xlu0 %7566
      %7570 = vset.pattern.permute.xlu0 1
      %7571 = vperm.xlu0 %7570, %v4549
      %v7572 = vpop.permute.xlu0 %7571
      %7575 = vset.pattern.permute.xlu0 1
      %7576 = vperm.xlu0 %7575, %v4550
      %v7577 = vpop.permute.xlu0 %7576
      %7580 = vset.pattern.permute.xlu0 1
      %7581 = vperm.xlu0 %7580, %v4551
      %v7582 = vpop.permute.xlu0 %7581
      %7585 = vset.pattern.permute.xlu0 1
      %7586 = vperm.xlu0 %7585, %v4552
      %v7587 = vpop.permute.xlu0 %7586
      %7590 = vset.pattern.permute.xlu0 1
      %7591 = vperm.xlu0 %7590, %v4553
      %v7592 = vpop.permute.xlu0 %7591
      %7595 = vset.pattern.permute.xlu0 1
      %7596 = vperm.xlu0 %7595, %v4554
      %v7597 = vpop.permute.xlu0 %7596
      %7600 = vset.pattern.permute.xlu0 1
      %7601 = vperm.xlu0 %7600, %v4555
      %v7602 = vpop.permute.xlu0 %7601
      %7605 = vset.pattern.permute.xlu0 1
      %7606 = vperm.xlu0 %7605, %v4556
      %v7607 = vpop.permute.xlu0 %7606
      %7610 = vset.pattern.permute.xlu0 1
      %7611 = vperm.xlu0 %7610, %v4557
      %v7612 = vpop.permute.xlu0 %7611
      %7615 = vset.pattern.permute.xlu0 1
      %7616 = vperm.xlu0 %7615, %v4558
      %v7617 = vpop.permute.xlu0 %7616
      %7620 = vset.pattern.permute.xlu0 1
      %7621 = vperm.xlu0 %7620, %v4559
      %v7622 = vpop.permute.xlu0 %7621
      %7625 = vset.pattern.permute.xlu0 1
      %7626 = vperm.xlu0 %7625, %v4560
      %v7627 = vpop.permute.xlu0 %7626
      %7630 = vset.pattern.permute.xlu0 1
      %7631 = vperm.xlu0 %7630, %v4561
      %v7632 = vpop.permute.xlu0 %7631
      %7635 = vset.pattern.permute.xlu0 1
      %7636 = vperm.xlu0 %7635, %v4562
      %v7637 = vpop.permute.xlu0 %7636
      %7640 = vset.pattern.permute.xlu0 1
      %7641 = vperm.xlu0 %7640, %v4563
      %v7642 = vpop.permute.xlu0 %7641
      %7645 = vset.pattern.permute.xlu0 1
      %7646 = vperm.xlu0 %7645, %v4564
      %v7647 = vpop.permute.xlu0 %7646
      %7650 = vset.pattern.permute.xlu0 1
      %7651 = vperm.xlu0 %7650, %v4565
      %v7652 = vpop.permute.xlu0 %7651
      %7655 = vset.pattern.permute.xlu0 1
      %7656 = vperm.xlu0 %7655, %v4566
      %v7657 = vpop.permute.xlu0 %7656
      %7660 = vset.pattern.permute.xlu0 1
      %7661 = vperm.xlu0 %7660, %v4567
      %v7662 = vpop.permute.xlu0 %7661
      %7665 = vset.pattern.permute.xlu0 1
      %7666 = vperm.xlu0 %7665, %v4568
      %v7667 = vpop.permute.xlu0 %7666
      %7670 = vset.pattern.permute.xlu0 1
      %7671 = vperm.xlu0 %7670, %v4569
      %v7672 = vpop.permute.xlu0 %7671
      %7675 = vset.pattern.permute.xlu0 1
      %7676 = vperm.xlu0 %7675, %v4570
      %v7677 = vpop.permute.xlu0 %7676
      %7680 = vset.pattern.permute.xlu0 1
      %7681 = vperm.xlu0 %7680, %v4571
      %v7682 = vpop.permute.xlu0 %7681
      %7685 = vset.pattern.permute.xlu0 1
      %7686 = vperm.xlu0 %7685, %v4572
      %v7687 = vpop.permute.xlu0 %7686
      %7690 = vset.pattern.permute.xlu0 1
      %7691 = vperm.xlu0 %7690, %v4573
      %v7692 = vpop.permute.xlu0 %7691
      %7695 = vset.pattern.permute.xlu0 1
      %7696 = vperm.xlu0 %7695, %v4574
      %v7697 = vpop.permute.xlu0 %7696
      %7700 = vset.pattern.permute.xlu0 1
      %7701 = vperm.xlu0 %7700, %v4575
      %v7702 = vpop.permute.xlu0 %7701
      %7705 = vset.pattern.permute.xlu0 1
      %7706 = vperm.xlu0 %7705, %v4576
      %v7707 = vpop.permute.xlu0 %7706
      %7710 = vset.pattern.permute.xlu0 1
      %7711 = vperm.xlu0 %7710, %v4577
      %v7712 = vpop.permute.xlu0 %7711
      %7715 = vset.pattern.permute.xlu0 1
      %7716 = vperm.xlu0 %7715, %v4578
      %v7717 = vpop.permute.xlu0 %7716
      %7720 = vset.pattern.permute.xlu0 1
      %7721 = vperm.xlu0 %7720, %v4579
      %v7722 = vpop.permute.xlu0 %7721
      %7725 = vset.pattern.permute.xlu0 1
      %7726 = vperm.xlu0 %7725, %v4580
      %v7727 = vpop.permute.xlu0 %7726
      %7730 = vset.pattern.permute.xlu0 1
      %7731 = vperm.xlu0 %7730, %v4581
      %v7732 = vpop.permute.xlu0 %7731
      %7735 = vset.pattern.permute.xlu0 1
      %7736 = vperm.xlu0 %7735, %v4582
      %v7737 = vpop.permute.xlu0 %7736
      %7740 = vset.pattern.permute.xlu0 1
      %7741 = vperm.xlu0 %7740, %v4583
      %v7742 = vpop.permute.xlu0 %7741
      %7745 = vset.pattern.permute.xlu0 1
      %7746 = vperm.xlu0 %7745, %v4584
      %v7747 = vpop.permute.xlu0 %7746
      %7750 = vset.pattern.permute.xlu0 1
      %7751 = vperm.xlu0 %7750, %v4585
      %v7752 = vpop.permute.xlu0 %7751
      %7755 = vset.pattern.permute.xlu0 1
      %7756 = vperm.xlu0 %7755, %v4586
      %v7757 = vpop.permute.xlu0 %7756
      %7760 = vset.pattern.permute.xlu0 1
      %7761 = vperm.xlu0 %7760, %v4587
      %v7762 = vpop.permute.xlu0 %7761
      %7765 = vset.pattern.permute.xlu0 1
      %7766 = vperm.xlu0 %7765, %v4588
      %v7767 = vpop.permute.xlu0 %7766
      %7770 = vset.pattern.permute.xlu0 1
      %7771 = vperm.xlu0 %7770, %v4589
      %v7772 = vpop.permute.xlu0 %7771
      %7775 = vset.pattern.permute.xlu0 1
      %7776 = vperm.xlu0 %7775, %v4590
      %v7777 = vpop.permute.xlu0 %7776
      %7780 = vset.pattern.permute.xlu0 1
      %7781 = vperm.xlu0 %7780, %v4591
      %v7782 = vpop.permute.xlu0 %7781
      %7785 = vset.pattern.permute.xlu0 1
      %7786 = vperm.xlu0 %7785, %v4592
      %v7787 = vpop.permute.xlu0 %7786
      %7790 = vset.pattern.permute.xlu0 1
      %7791 = vperm.xlu0 %7790, %v4593
      %v7792 = vpop.permute.xlu0 %7791
      %7795 = vset.pattern.permute.xlu0 1
      %7796 = vperm.xlu0 %7795, %v4594
      %v7797 = vpop.permute.xlu0 %7796
      %7800 = vset.pattern.permute.xlu0 1
      %7801 = vperm.xlu0 %7800, %v4595
      %v7802 = vpop.permute.xlu0 %7801
      %7805 = vset.pattern.permute.xlu0 1
      %7806 = vperm.xlu0 %7805, %v4596
      %v7807 = vpop.permute.xlu0 %7806
      %7810 = vset.pattern.permute.xlu0 1
      %7811 = vperm.xlu0 %7810, %v4597
      %v7812 = vpop.permute.xlu0 %7811
      %7815 = vset.pattern.permute.xlu0 1
      %7816 = vperm.xlu0 %7815, %v4598
      %v7817 = vpop.permute.xlu0 %7816
      %7820 = vset.pattern.permute.xlu0 1
      %7821 = vperm.xlu0 %7820, %v4599
      %v7822 = vpop.permute.xlu0 %7821
      %7825 = vset.pattern.permute.xlu0 1
      %7826 = vperm.xlu0 %7825, %v4600
      %v7827 = vpop.permute.xlu0 %7826
      %7830 = vset.pattern.permute.xlu0 1
      %7831 = vperm.xlu0 %7830, %v4601
      %v7832 = vpop.permute.xlu0 %7831
      %7835 = vset.pattern.permute.xlu0 1
      %7836 = vperm.xlu0 %7835, %v4602
      %v7837 = vpop.permute.xlu0 %7836
      %7840 = vset.pattern.permute.xlu0 1
      %7841 = vperm.xlu0 %7840, %v4603
      %v7842 = vpop.permute.xlu0 %7841
      %7845 = vset.pattern.permute.xlu0 1
      %7846 = vperm.xlu0 %7845, %v4604
      %v7847 = vpop.permute.xlu0 %7846
      %7850 = vset.pattern.permute.xlu0 1
      %7851 = vperm.xlu0 %7850, %v4605
      %v7852 = vpop.permute.xlu0 %7851
      %7855 = vset.pattern.permute.xlu0 1
      %7856 = vperm.xlu0 %7855, %v4606
      %v7857 = vpop.permute.xlu0 %7856
      %7860 = vset.pattern.permute.xlu0 1
      %7861 = vperm.xlu0 %7860, %v4607
      %v7862 = vpop.permute.xlu0 %7861
      %7865 = vset.pattern.permute.xlu0 1
      %7866 = vperm.xlu0 %7865, %v4608
      %v7867 = vpop.permute.xlu0 %7866
      %7870 = vset.pattern.permute.xlu0 1
      %7871 = vperm.xlu0 %7870, %v4609
      %v7872 = vpop.permute.xlu0 %7871
      %7875 = vset.pattern.permute.xlu0 1
      %7876 = vperm.xlu0 %7875, %v4610
      %v7877 = vpop.permute.xlu0 %7876
      %7880 = vset.pattern.permute.xlu0 1
      %7881 = vperm.xlu0 %7880, %v4611
      %v7882 = vpop.permute.xlu0 %7881
      %7885 = vset.pattern.permute.xlu0 1
      %7886 = vperm.xlu0 %7885, %v4612
      %v7887 = vpop.permute.xlu0 %7886
      %7890 = vset.pattern.permute.xlu0 1
      %7891 = vperm.xlu0 %7890, %v4613
      %v7892 = vpop.permute.xlu0 %7891
      %7895 = vset.pattern.permute.xlu0 1
      %7896 = vperm.xlu0 %7895, %v4614
      %v7897 = vpop.permute.xlu0 %7896
      %7900 = vset.pattern.permute.xlu0 1
      %7901 = vperm.xlu0 %7900, %v4615
      %v7902 = vpop.permute.xlu0 %7901
      %7905 = vset.pattern.permute.xlu0 1
      %7906 = vperm.xlu0 %7905, %v4616
      %v7907 = vpop.permute.xlu0 %7906
      %7910 = vset.pattern.permute.xlu0 1
      %7911 = vperm.xlu0 %7910, %v4617
      %v7912 = vpop.permute.xlu0 %7911
      %7915 = vset.pattern.permute.xlu0 1
      %7916 = vperm.xlu0 %7915, %v4618
      %v7917 = vpop.permute.xlu0 %7916
      %7920 = vset.pattern.permute.xlu0 1
      %7921 = vperm.xlu0 %7920, %v4619
      %v7922 = vpop.permute.xlu0 %7921
      %7925 = vset.pattern.permute.xlu0 1
      %7926 = vperm.xlu0 %7925, %v4620
      %v7927 = vpop.permute.xlu0 %7926
      %7930 = vset.pattern.permute.xlu0 1
      %7931 = vperm.xlu0 %7930, %v4621
      %v7932 = vpop.permute.xlu0 %7931
      %v7934 = vadd.f32 %v7070, %v7217
      %v7935 = vadd.f32 %v7071, %v7222
      %v7936 = vadd.f32 %v7072, %v7227
      %v7937 = vadd.f32 %v7073, %v7232
      %v7938 = vadd.f32 %v7074, %v7237
      %v7939 = vadd.f32 %v7075, %v7242
      %v7940 = vadd.f32 %v7076, %v7247
      %v7941 = vadd.f32 %v7077, %v7252
      %v7942 = vadd.f32 %v7078, %v7257
      %v7943 = vadd.f32 %v7079, %v7262
      %v7944 = vadd.f32 %v7080, %v7267
      %v7945 = vadd.f32 %v7081, %v7272
      %v7946 = vadd.f32 %v7082, %v7277
      %v7947 = vadd.f32 %v7083, %v7282
      %v7948 = vadd.f32 %v7084, %v7287
      %v7949 = vadd.f32 %v7085, %v7292
      %v7950 = vadd.f32 %v7086, %v7297
      %v7951 = vadd.f32 %v7087, %v7302
      %v7952 = vadd.f32 %v7088, %v7307
      %v7953 = vadd.f32 %v7089, %v7312
      %v7954 = vadd.f32 %v7090, %v7317
      %v7955 = vadd.f32 %v7091, %v7322
      %v7956 = vadd.f32 %v7092, %v7327
      %v7957 = vadd.f32 %v7093, %v7332
      %v7958 = vadd.f32 %v7094, %v7337
      %v7959 = vadd.f32 %v7095, %v7342
      %v7960 = vadd.f32 %v7096, %v7347
      %v7961 = vadd.f32 %v7097, %v7352
      %v7962 = vadd.f32 %v7098, %v7357
      %v7963 = vadd.f32 %v7099, %v7362
      %v7964 = vadd.f32 %v7100, %v7367
      %v7965 = vadd.f32 %v7101, %v7372
      %v7966 = vadd.f32 %v7102, %v7377
      %v7967 = vadd.f32 %v7103, %v7382
      %v7968 = vadd.f32 %v7104, %v7387
      %v7969 = vadd.f32 %v7105, %v7392
      %v7970 = vadd.f32 %v7106, %v7397
      %v7971 = vadd.f32 %v7107, %v7402
      %v7972 = vadd.f32 %v7108, %v7407
      %v7973 = vadd.f32 %v7109, %v7412
      %v7974 = vadd.f32 %v7110, %v7417
      %v7975 = vadd.f32 %v7111, %v7422
      %v7976 = vadd.f32 %v7112, %v7427
      %v7977 = vadd.f32 %v7113, %v7432
      %v7978 = vadd.f32 %v7114, %v7437
      %v7979 = vadd.f32 %v7115, %v7442
      %v7980 = vadd.f32 %v7116, %v7447
      %v7981 = vadd.f32 %v7117, %v7452
      %v7982 = vadd.f32 %v7118, %v7457
      %v7983 = vadd.f32 %v7119, %v7462
      %v7984 = vadd.f32 %v7120, %v7467
      %v7985 = vadd.f32 %v7121, %v7472
      %v7986 = vadd.f32 %v7122, %v7477
      %v7987 = vadd.f32 %v7123, %v7482
      %v7988 = vadd.f32 %v7124, %v7487
      %v7989 = vadd.f32 %v7125, %v7492
      %v7990 = vadd.f32 %v7126, %v7497
      %v7991 = vadd.f32 %v7127, %v7502
      %v7992 = vadd.f32 %v7128, %v7507
      %v7993 = vadd.f32 %v7129, %v7512
      %v7994 = vadd.f32 %v7130, %v7517
      %v7995 = vadd.f32 %v7131, %v7522
      %v7996 = vadd.f32 %v7132, %v7527
      %v7997 = vadd.f32 %v7133, %v7532
      %v7998 = vadd.f32 %v7134, %v7537
      %v7999 = vadd.f32 %v7135, %v7542
      %v8000 = vadd.f32 %v7136, %v7547
      %v8001 = vadd.f32 %v7137, %v7552
      %v8002 = vadd.f32 %v7138, %v7557
      %v8003 = vadd.f32 %v7139, %v7562
      %v8004 = vadd.f32 %v7140, %v7567
      %v8005 = vadd.f32 %v7141, %v7572
      %v8006 = vadd.f32 %v7142, %v7577
      %v8007 = vadd.f32 %v7143, %v7582
      %v8008 = vadd.f32 %v7144, %v7587
      %v8009 = vadd.f32 %v7145, %v7592
      %v8010 = vadd.f32 %v7146, %v7597
      %v8011 = vadd.f32 %v7147, %v7602
      %v8012 = vadd.f32 %v7148, %v7607
      %v8013 = vadd.f32 %v7149, %v7612
      %v8014 = vadd.f32 %v7150, %v7617
      %v8015 = vadd.f32 %v7151, %v7622
      %v8016 = vadd.f32 %v7152, %v7627
      %v8017 = vadd.f32 %v7153, %v7632
      %v8018 = vadd.f32 %v7154, %v7637
      %v8019 = vadd.f32 %v7155, %v7642
      %v8020 = vadd.f32 %v7156, %v7647
      %v8021 = vadd.f32 %v7157, %v7652
      %v8022 = vadd.f32 %v7158, %v7657
      %v8023 = vadd.f32 %v7159, %v7662
      %v8024 = vadd.f32 %v7160, %v7667
      %v8025 = vadd.f32 %v7161, %v7672
      %v8026 = vadd.f32 %v7162, %v7677
      %v8027 = vadd.f32 %v7163, %v7682
      %v8028 = vadd.f32 %v7164, %v7687
      %v8029 = vadd.f32 %v7165, %v7692
      %v8030 = vadd.f32 %v7166, %v7697
      %v8031 = vadd.f32 %v7167, %v7702
      %v8032 = vadd.f32 %v7168, %v7707
      %v8033 = vadd.f32 %v7169, %v7712
      %v8034 = vadd.f32 %v7170, %v7717
      %v8035 = vadd.f32 %v7171, %v7722
      %v8036 = vadd.f32 %v7172, %v7727
      %v8037 = vadd.f32 %v7173, %v7732
      %v8038 = vadd.f32 %v7174, %v7737
      %v8039 = vadd.f32 %v7175, %v7742
      %v8040 = vadd.f32 %v7176, %v7747
      %v8041 = vadd.f32 %v7177, %v7752
      %v8042 = vadd.f32 %v7178, %v7757
      %v8043 = vadd.f32 %v7179, %v7762
      %v8044 = vadd.f32 %v7180, %v7767
      %v8045 = vadd.f32 %v7181, %v7772
      %v8046 = vadd.f32 %v7182, %v7777
      %v8047 = vadd.f32 %v7183, %v7782
      %v8048 = vadd.f32 %v7184, %v7787
      %v8049 = vadd.f32 %v7185, %v7792
      %v8050 = vadd.f32 %v7186, %v7797
      %v8051 = vadd.f32 %v7187, %v7802
      %v8052 = vadd.f32 %v7188, %v7807
      %v8053 = vadd.f32 %v7189, %v7812
      %v8054 = vadd.f32 %v7190, %v7817
      %v8055 = vadd.f32 %v7191, %v7822
      %v8056 = vadd.f32 %v7192, %v7827
      %v8057 = vadd.f32 %v7193, %v7832
      %v8058 = vadd.f32 %v7194, %v7837
      %v8059 = vadd.f32 %v7195, %v7842
      %v8060 = vadd.f32 %v7196, %v7847
      %v8061 = vadd.f32 %v7197, %v7852
      %v8062 = vadd.f32 %v7198, %v7857
      %v8063 = vadd.f32 %v7199, %v7862
      %v8064 = vadd.f32 %v7200, %v7867
      %v8065 = vadd.f32 %v7201, %v7872
      %v8066 = vadd.f32 %v7202, %v7877
      %v8067 = vadd.f32 %v7203, %v7882
      %v8068 = vadd.f32 %v7204, %v7887
      %v8069 = vadd.f32 %v7205, %v7892
      %v8070 = vadd.f32 %v7206, %v7897
      %v8071 = vadd.f32 %v7207, %v7902
      %v8072 = vadd.f32 %v7208, %v7907
      %v8073 = vadd.f32 %v7209, %v7912
      %v8074 = vadd.f32 %v7210, %v7917
      %v8075 = vadd.f32 %v7211, %v7922
      %v8076 = vadd.f32 %v7212, %v7927
      %v8077 = vadd.f32 %v7213, %v7932
      %8078 = vst.msk [vmem:[%s224] sm:$0xff] %vm3037, %v7934
      %8079 = vst.msk [vmem:[%s224 + $0x8] sm:$0xff] %vm3037, %v7935
      %8080 = vst.msk [vmem:[%s224 + $0x10] sm:$0xff] %vm3037, %v7936
      %8081 = vst.msk [vmem:[%s224 + $0x18] sm:$0xff] %vm3037, %v7937
      %8082 = vst.msk [vmem:[%s224 + $0x20] sm:$0xff] %vm3037, %v7938
      %8083 = vst.msk [vmem:[%s224 + $0x28] sm:$0xff] %vm3037, %v7939
      %8084 = vst.msk [vmem:[%s224 + $0x30] sm:$0xff] %vm3037, %v7940
      %8085 = vst.msk [vmem:[%s224 + $0x38] sm:$0xff] %vm3037, %v7941
      %8086 = vst.msk [vmem:[%s224 + $0x40] sm:$0xff] %vm3037, %v7942
      %8087 = vst.msk [vmem:[%s224 + $0x48] sm:$0xff] %vm3037, %v7943
      %8088 = vst.msk [vmem:[%s224 + $0x50] sm:$0xff] %vm3037, %v7944
      %8089 = vst.msk [vmem:[%s224 + $0x58] sm:$0xff] %vm3037, %v7945
      %8090 = vst.msk [vmem:[%s224 + $0x60] sm:$0xff] %vm3037, %v7946
      %8091 = vst.msk [vmem:[%s224 + $0x68] sm:$0xff] %vm3037, %v7947
      %8092 = vst.msk [vmem:[%s224 + $0x70] sm:$0xff] %vm3037, %v7948
      %8093 = vst.msk [vmem:[%s224 + $0x78] sm:$0xff] %vm3037, %v7949
      %8094 = vst.msk [vmem:[%s224 + $0x80] sm:$0xff] %vm3037, %v7950
      %8095 = vst.msk [vmem:[%s224 + $0x88] sm:$0xff] %vm3037, %v7951
      %8096 = vst.msk [vmem:[%s224 + $0x90] sm:$0xff] %vm3037, %v7952
      %8097 = vst.msk [vmem:[%s224 + $0x98] sm:$0xff] %vm3037, %v7953
      %8098 = vst.msk [vmem:[%s224 + $0xa0] sm:$0xff] %vm3037, %v7954
      %8099 = vst.msk [vmem:[%s224 + $0xa8] sm:$0xff] %vm3037, %v7955
      %8100 = vst.msk [vmem:[%s224 + $0xb0] sm:$0xff] %vm3037, %v7956
      %8101 = vst.msk [vmem:[%s224 + $0xb8] sm:$0xff] %vm3037, %v7957
      %8102 = vst.msk [vmem:[%s224 + $0xc0] sm:$0xff] %vm3037, %v7958
      %8103 = vst.msk [vmem:[%s224 + $0xc8] sm:$0xff] %vm3037, %v7959
      %8104 = vst.msk [vmem:[%s224 + $0xd0] sm:$0xff] %vm3037, %v7960
      %8105 = vst.msk [vmem:[%s224 + $0xd8] sm:$0xff] %vm3037, %v7961
      %8106 = vst.msk [vmem:[%s224 + $0xe0] sm:$0xff] %vm3037, %v7962
      %8107 = vst.msk [vmem:[%s224 + $0xe8] sm:$0xff] %vm3037, %v7963
      %8108 = vst.msk [vmem:[%s224 + $0xf0] sm:$0xff] %vm3037, %v7964
      %8109 = vst.msk [vmem:[%s224 + $0xf8] sm:$0xff] %vm3037, %v7965
      %8110 = vst.msk [vmem:[%s224 + $0x100] sm:$0xff] %vm3037, %v7966
      %8111 = vst.msk [vmem:[%s224 + $0x108] sm:$0xff] %vm3037, %v7967
      %8112 = vst.msk [vmem:[%s224 + $0x110] sm:$0xff] %vm3037, %v7968
      %8113 = vst.msk [vmem:[%s224 + $0x118] sm:$0xff] %vm3037, %v7969
      %8114 = vst.msk [vmem:[%s224 + $0x120] sm:$0xff] %vm3037, %v7970
      %8115 = vst.msk [vmem:[%s224 + $0x128] sm:$0xff] %vm3037, %v7971
      %8116 = vst.msk [vmem:[%s224 + $0x130] sm:$0xff] %vm3037, %v7972
      %8117 = vst.msk [vmem:[%s224 + $0x138] sm:$0xff] %vm3037, %v7973
      %8118 = vst.msk [vmem:[%s224 + $0x140] sm:$0xff] %vm3037, %v7974
      %8119 = vst.msk [vmem:[%s224 + $0x148] sm:$0xff] %vm3037, %v7975
      %8120 = vst.msk [vmem:[%s224 + $0x150] sm:$0xff] %vm3037, %v7976
      %8121 = vst.msk [vmem:[%s224 + $0x158] sm:$0xff] %vm3037, %v7977
      %8122 = vst.msk [vmem:[%s224 + $0x160] sm:$0xff] %vm3037, %v7978
      %8123 = vst.msk [vmem:[%s224 + $0x168] sm:$0xff] %vm3037, %v7979
      %8124 = vst.msk [vmem:[%s224 + $0x170] sm:$0xff] %vm3037, %v7980
      %8125 = vst.msk [vmem:[%s224 + $0x178] sm:$0xff] %vm3037, %v7981
      %8126 = vst.msk [vmem:[%s224 + $0x180] sm:$0xff] %vm3037, %v7982
      %8127 = vst.msk [vmem:[%s224 + $0x188] sm:$0xff] %vm3037, %v7983
      %8128 = vst.msk [vmem:[%s224 + $0x190] sm:$0xff] %vm3037, %v7984
      %8129 = vst.msk [vmem:[%s224 + $0x198] sm:$0xff] %vm3037, %v7985
      %8130 = vst.msk [vmem:[%s224 + $0x1a0] sm:$0xff] %vm3037, %v7986
      %8131 = vst.msk [vmem:[%s224 + $0x1a8] sm:$0xff] %vm3037, %v7987
      %8132 = vst.msk [vmem:[%s224 + $0x1b0] sm:$0xff] %vm3037, %v7988
      %8133 = vst.msk [vmem:[%s224 + $0x1b8] sm:$0xff] %vm3037, %v7989
      %8134 = vst.msk [vmem:[%s224 + $0x1c0] sm:$0xff] %vm3037, %v7990
      %8135 = vst.msk [vmem:[%s224 + $0x1c8] sm:$0xff] %vm3037, %v7991
      %8136 = vst.msk [vmem:[%s224 + $0x1d0] sm:$0xff] %vm3037, %v7992
      %8137 = vst.msk [vmem:[%s224 + $0x1d8] sm:$0xff] %vm3037, %v7993
      %8138 = vst.msk [vmem:[%s224 + $0x1e0] sm:$0xff] %vm3037, %v7994
      %8139 = vst.msk [vmem:[%s224 + $0x1e8] sm:$0xff] %vm3037, %v7995
      %8140 = vst.msk [vmem:[%s224 + $0x1f0] sm:$0xff] %vm3037, %v7996
      %8141 = vst.msk [vmem:[%s224 + $0x1f8] sm:$0xff] %vm3037, %v7997
      %8142 = vst.msk [vmem:[%s224 + $0x200] sm:$0xff] %vm3037, %v7998
      %8143 = vst.msk [vmem:[%s224 + $0x208] sm:$0xff] %vm3037, %v7999
      %8144 = vst.msk [vmem:[%s224 + $0x210] sm:$0xff] %vm3037, %v8000
      %8145 = vst.msk [vmem:[%s224 + $0x218] sm:$0xff] %vm3037, %v8001
      %8146 = vst.msk [vmem:[%s224 + $0x220] sm:$0xff] %vm3037, %v8002
      %8147 = vst.msk [vmem:[%s224 + $0x228] sm:$0xff] %vm3037, %v8003
      %8148 = vst.msk [vmem:[%s224 + $0x230] sm:$0xff] %vm3037, %v8004
      %8149 = vst.msk [vmem:[%s224 + $0x238] sm:$0xff] %vm3037, %v8005
      %8150 = vst.msk [vmem:[%s224 + $0x240] sm:$0xff] %vm3037, %v8006
      %8151 = vst.msk [vmem:[%s224 + $0x248] sm:$0xff] %vm3037, %v8007
      %8152 = vst.msk [vmem:[%s224 + $0x250] sm:$0xff] %vm3037, %v8008
      %8153 = vst.msk [vmem:[%s224 + $0x258] sm:$0xff] %vm3037, %v8009
      %8154 = vst.msk [vmem:[%s224 + $0x260] sm:$0xff] %vm3037, %v8010
      %8155 = vst.msk [vmem:[%s224 + $0x268] sm:$0xff] %vm3037, %v8011
      %8156 = vst.msk [vmem:[%s224 + $0x270] sm:$0xff] %vm3037, %v8012
      %8157 = vst.msk [vmem:[%s224 + $0x278] sm:$0xff] %vm3037, %v8013
      %8158 = vst.msk [vmem:[%s224 + $0x280] sm:$0xff] %vm3037, %v8014
      %8159 = vst.msk [vmem:[%s224 + $0x288] sm:$0xff] %vm3037, %v8015
      %8160 = vst.msk [vmem:[%s224 + $0x290] sm:$0xff] %vm3037, %v8016
      %8161 = vst.msk [vmem:[%s224 + $0x298] sm:$0xff] %vm3037, %v8017
      %8162 = vst.msk [vmem:[%s224 + $0x2a0] sm:$0xff] %vm3037, %v8018
      %8163 = vst.msk [vmem:[%s224 + $0x2a8] sm:$0xff] %vm3037, %v8019
      %8164 = vst.msk [vmem:[%s224 + $0x2b0] sm:$0xff] %vm3037, %v8020
      %8165 = vst.msk [vmem:[%s224 + $0x2b8] sm:$0xff] %vm3037, %v8021
      %8166 = vst.msk [vmem:[%s224 + $0x2c0] sm:$0xff] %vm3037, %v8022
      %8167 = vst.msk [vmem:[%s224 + $0x2c8] sm:$0xff] %vm3037, %v8023
      %8168 = vst.msk [vmem:[%s224 + $0x2d0] sm:$0xff] %vm3037, %v8024
      %8169 = vst.msk [vmem:[%s224 + $0x2d8] sm:$0xff] %vm3037, %v8025
      %8170 = vst.msk [vmem:[%s224 + $0x2e0] sm:$0xff] %vm3037, %v8026
      %8171 = vst.msk [vmem:[%s224 + $0x2e8] sm:$0xff] %vm3037, %v8027
      %8172 = vst.msk [vmem:[%s224 + $0x2f0] sm:$0xff] %vm3037, %v8028
      %8173 = vst.msk [vmem:[%s224 + $0x2f8] sm:$0xff] %vm3037, %v8029
      %8174 = vst.msk [vmem:[%s224 + $0x300] sm:$0xff] %vm3037, %v8030
      %8175 = vst.msk [vmem:[%s224 + $0x308] sm:$0xff] %vm3037, %v8031
      %8176 = vst.msk [vmem:[%s224 + $0x310] sm:$0xff] %vm3037, %v8032
      %8177 = vst.msk [vmem:[%s224 + $0x318] sm:$0xff] %vm3037, %v8033
      %8178 = vst.msk [vmem:[%s224 + $0x320] sm:$0xff] %vm3037, %v8034
      %8179 = vst.msk [vmem:[%s224 + $0x328] sm:$0xff] %vm3037, %v8035
      %8180 = vst.msk [vmem:[%s224 + $0x330] sm:$0xff] %vm3037, %v8036
      %8181 = vst.msk [vmem:[%s224 + $0x338] sm:$0xff] %vm3037, %v8037
      %8182 = vst.msk [vmem:[%s224 + $0x340] sm:$0xff] %vm3037, %v8038
      %8183 = vst.msk [vmem:[%s224 + $0x348] sm:$0xff] %vm3037, %v8039
      %8184 = vst.msk [vmem:[%s224 + $0x350] sm:$0xff] %vm3037, %v8040
      %8185 = vst.msk [vmem:[%s224 + $0x358] sm:$0xff] %vm3037, %v8041
      %8186 = vst.msk [vmem:[%s224 + $0x360] sm:$0xff] %vm3037, %v8042
      %8187 = vst.msk [vmem:[%s224 + $0x368] sm:$0xff] %vm3037, %v8043
      %8188 = vst.msk [vmem:[%s224 + $0x370] sm:$0xff] %vm3037, %v8044
      %8189 = vst.msk [vmem:[%s224 + $0x378] sm:$0xff] %vm3037, %v8045
      %8190 = vst.msk [vmem:[%s224 + $0x380] sm:$0xff] %vm3037, %v8046
      %8191 = vst.msk [vmem:[%s224 + $0x388] sm:$0xff] %vm3037, %v8047
      %8192 = vst.msk [vmem:[%s224 + $0x390] sm:$0xff] %vm3037, %v8048
      %8193 = vst.msk [vmem:[%s224 + $0x398] sm:$0xff] %vm3037, %v8049
      %8194 = vst.msk [vmem:[%s224 + $0x3a0] sm:$0xff] %vm3037, %v8050
      %8195 = vst.msk [vmem:[%s224 + $0x3a8] sm:$0xff] %vm3037, %v8051
      %8196 = vst.msk [vmem:[%s224 + $0x3b0] sm:$0xff] %vm3037, %v8052
      %8197 = vst.msk [vmem:[%s224 + $0x3b8] sm:$0xff] %vm3037, %v8053
      %8198 = vst.msk [vmem:[%s224 + $0x3c0] sm:$0xff] %vm3037, %v8054
      %8199 = vst.msk [vmem:[%s224 + $0x3c8] sm:$0xff] %vm3037, %v8055
      %8200 = vst.msk [vmem:[%s224 + $0x3d0] sm:$0xff] %vm3037, %v8056
      %8201 = vst.msk [vmem:[%s224 + $0x3d8] sm:$0xff] %vm3037, %v8057
      %8202 = vst.msk [vmem:[%s224 + $0x3e0] sm:$0xff] %vm3037, %v8058
      %8203 = vst.msk [vmem:[%s224 + $0x3e8] sm:$0xff] %vm3037, %v8059
      %8204 = vst.msk [vmem:[%s224 + $0x3f0] sm:$0xff] %vm3037, %v8060
      %8205 = vst.msk [vmem:[%s224 + $0x3f8] sm:$0xff] %vm3037, %v8061
      %8206 = vst.msk [vmem:[%s224 + $0x400] sm:$0xff] %vm3037, %v8062
      %8207 = vst.msk [vmem:[%s224 + $0x408] sm:$0xff] %vm3037, %v8063
      %8208 = vst.msk [vmem:[%s224 + $0x410] sm:$0xff] %vm3037, %v8064
      %8209 = vst.msk [vmem:[%s224 + $0x418] sm:$0xff] %vm3037, %v8065
      %8210 = vst.msk [vmem:[%s224 + $0x420] sm:$0xff] %vm3037, %v8066
      %8211 = vst.msk [vmem:[%s224 + $0x428] sm:$0xff] %vm3037, %v8067
      %8212 = vst.msk [vmem:[%s224 + $0x430] sm:$0xff] %vm3037, %v8068
      %8213 = vst.msk [vmem:[%s224 + $0x438] sm:$0xff] %vm3037, %v8069
      %8214 = vst.msk [vmem:[%s224 + $0x440] sm:$0xff] %vm3037, %v8070
      %8215 = vst.msk [vmem:[%s224 + $0x448] sm:$0xff] %vm3037, %v8071
      %8216 = vst.msk [vmem:[%s224 + $0x450] sm:$0xff] %vm3037, %v8072
      %8217 = vst.msk [vmem:[%s224 + $0x458] sm:$0xff] %vm3037, %v8073
      %8218 = vst.msk [vmem:[%s224 + $0x460] sm:$0xff] %vm3037, %v8074
      %8219 = vst.msk [vmem:[%s224 + $0x468] sm:$0xff] %vm3037, %v8075
      %8220 = vst.msk [vmem:[%s224 + $0x470] sm:$0xff] %vm3037, %v8076
      %8221 = vst.msk [vmem:[%s224 + $0x478] sm:$0xff] %vm3037, %v8077
      %s8222 = smul.u32 144, %s15
      %p8223 = scmp.lt.s32.totalorder %s8222, 287
      %s8224 = scalar_select %p8223, %s8222, 287
      %s8225 = smul.addr %s8224, 8
      %s8226 = scalar_lea.vmem %s4, %s8225
      // Predicated region
      $region37: #{fused_add_conv1x1_bn.1} parent=35 // pred_check
        %p8227 = pneg %p127
      $region38: #{fused_add_conv1x1_bn.1} parent=35 // pred_check_branch
        %8229 = sbr.rel (%p8227) target = $region40
      $region39: #{fused_add_conv1x1_bn.1} parent=35 // pred_region
        %s8230 = smul.u32 144, %s15
      $region40: #{fused_add_conv1x1_bn.1} parent=35 // pred_fallthru
        _
    $region36: #{fused_add_conv1x1_bn.1} parent=5 // pred_fallthru
      _
    %p8231 = scmp.le.s32.totalorder 2, %s10
    // Predicated region
    $region41: #{fused_add_conv1x1_bn.1} parent=5 // pred_check
      %p8232 = pneg %p8231
    $region42: #{fused_add_conv1x1_bn.1} parent=5 // pred_check_branch
      %8234 = sbr.rel (%p8232) target = $region44
    $region43: #{fused_add_conv1x1_bn.1} parent=5 // pred_region
      %s8235 = ssub.s32 %s10, 2
      // Predicated region
      $region45: #{fused_add_conv1x1_bn.1} parent=43 // pred_check
        %p8236 = pneg %p133
      $region46: #{fused_add_conv1x1_bn.1} parent=43 // pred_check_branch
        %8238 = sbr.rel (%p8236) target = $region48
      $region47: #{fused_add_conv1x1_bn.1} parent=43 // pred_region
        %s8239 = smul.u32 144, %s16
        %p8240 = scmp.lt.s32.totalorder %s8239, 287
        %s8241 = scalar_select %p8240, %s8239, 287
        %s8242 = smul.addr %s8241, 8
        %s8243 = scalar_lea.vmem %s4, %s8242
      $region48: #{fused_add_conv1x1_bn.1} parent=43 // pred_fallthru
        _
    $region44: #{fused_add_conv1x1_bn.1} parent=5 // pred_fallthru
      _
  $region6: #{fused_add_conv1x1_bn.1} parent=0 // loop_footer
    %s14 = sadd.s32 1, %s10
  $region7: #{fused_add_conv1x1_bn.1} parent=0 // loop_footer_branch
    %9 = sbr.rel target = $region3
  $region8: #{fused_add_conv1x1_bn.1} parent=0 // loop_exit
    _

</llo_original>
